<compile_context>
chip_gen: v6e
topology: v6e:2x2x1
jax: 0.10.0
libtpu: 0.0.40
codegen_flags: <defaults>
</compile_context>

<pallas_src>
import numpy as np
import jax
import jax.numpy as jnp
from jax import lax
from jax.experimental import pallas as pl
from jax.experimental.pallas import tpu as pltpu


# ----------------------------- geometry constants --------------------------------
LANES = 128                     # lane-dense width for all small channel/FC dims
CONV1_KP = 32                   # conv1 im2col contraction 25 -> 32
A1_FEATS = 14 * 14 * 6          # conv1 pooled output flattened (H, W, C) = 1176
A1_KP = 1280                    # 1176 padded up to a multiple of 128
CONV2_NP = 512                  # conv2 pooled+flattened output 400 -> 512
N_TAPS = 4                      # 2x2 max-pool taps


def _round_up(x, m):
    return ((x + m - 1) // m) * m


def _pick_tile(rows, cap):
    """Row tile (multiple of 8), capped, aiming for >=2 grid steps when possible
    so v7x's two TensorCores both get work from the 'parallel' grid axis."""
    r8 = _round_up(max(rows, 1), 8)
    tile = min(cap, r8)
    if r8 >= 16:
        tile = min(tile, _round_up((r8 + 1) // 2, 8))
    return tile


# ------------------------------ Pallas kernels ------------------------------------

def _conv_pool_relu_kernel(x_ref, w_ref, b_ref, o_ref):
    """conv (matmul over im2col rows) + 2x2 max-pool + bias + ReLU, one MXU dot.

    x_ref: (4, TM, KP) -- four 2x2-pool taps of this tile's patch rows.
    w_ref: (KP, 128); b_ref: (1, 128); o_ref: (TM, 128) lane-dense.
    """
    taps, tm, kp = x_ref.shape
    n = o_ref.shape[-1]
    lhs = x_ref[...].reshape(taps * tm, kp)     # merge taps into M; TM%8==0 -> layout no-op
    y = jnp.dot(lhs, w_ref[...], preferred_element_type=jnp.float32)
    y = y.reshape(taps, tm, n)
    m = jnp.maximum(jnp.maximum(y[0], y[1]), jnp.maximum(y[2], y[3]))
    # pool-before-bias/ReLU is exact: bias is tap-invariant and ReLU is monotone.
    o_ref[...] = jnp.maximum(m + b_ref[...], 0.0).astype(o_ref.dtype)


def _conv2_fc_kernel(a_ref, w2_ref, b2_ref, w3_ref, b3_ref, w4_ref, b4_ref,
                     w5_ref, b5_ref, o_ref):
    """Fused conv2(+pool+ReLU, as dense per-tap matmuls) -> fc1 -> fc2 -> fc3.

    a_ref : (TB, 1280)   conv1 activations flattened per image (zero padded).
    w2_ref: (1280, 2048) four pooling-tap dense conv2 matrices, concat along N.
    b2_ref: (1, 512); w3/w4/w5: (512,128)/(128,128)/(128,128); b*: (1, 128).
    """
    n2 = b2_ref.shape[-1]
    y = jnp.dot(a_ref[...], w2_ref[...], preferred_element_type=jnp.float32)  # (TB, 4*512)
    m = jnp.maximum(jnp.maximum(y[:, 0 * n2:1 * n2], y[:, 1 * n2:2 * n2]),
                    jnp.maximum(y[:, 2 * n2:3 * n2], y[:, 3 * n2:4 * n2]))
    h = jnp.maximum(m + b2_ref[...], 0.0)                                      # conv2+pool+relu
    h = jnp.maximum(jnp.dot(h, w3_ref[...], preferred_element_type=jnp.float32) + b3_ref[...], 0.0)
    h = jnp.maximum(jnp.dot(h, w4_ref[...], preferred_element_type=jnp.float32) + b4_ref[...], 0.0)
    o_ref[...] = (jnp.dot(h, w5_ref[...], preferred_element_type=jnp.float32)
                  + b5_ref[...]).astype(o_ref.dtype)


# ------------------------------ JAX glue ------------------------------------------

def _im2col_pooled_1ch(x_bhw, K):
    """Valid KxK patches of a 1-channel image batch, grouped by 2x2-pool tap.

    Returns (4, B*POH*POW, K*K): rows follow (B, POH, POW), columns follow
    PyTorch's (KH, KW) flatten order (C == 1)."""
    B, H, W = x_bhw.shape
    OH, OW = H - K + 1, W - K + 1
    POH, POW = OH // 2, OW // 2
    cols = [x_bhw[:, kh:kh + OH, kw:kw + OW] for kh in range(K) for kw in range(K)]
    p = jnp.stack(cols, axis=-1)                       # (B, OH, OW, K*K)
    p = p.reshape(B, POH, 2, POW, 2, K * K)
    p = jnp.transpose(p, (2, 4, 0, 1, 3, 5))           # (dh, dw, B, POH, POW, KK)
    return p.reshape(N_TAPS, B * POH * POW, K * K), POH, POW


def conv1_relu_pool(x_bhw, w1p, b1p, *, tile_cap=1024):
    """conv1(valid 5x5) + bias + ReLU + 2x2 maxpool, fused into one Pallas call."""
    patches, POH, POW = _im2col_pooled_1ch(x_bhw, 5)    # (4, M, 25)
    M = patches.shape[1]
    tm = _pick_tile(M, tile_cap)
    M_pad = _round_up(M, tm)
    patches = jnp.pad(patches, ((0, 0), (0, M_pad - M), (0, CONV1_KP - patches.shape[2])))

    out = pl.pallas_call(
        _conv_pool_relu_kernel,
        out_shape=jax.ShapeDtypeStruct((M_pad, LANES), jnp.float32),
        grid=(M_pad // tm,),
        in_specs=[
            pl.BlockSpec((N_TAPS, tm, CONV1_KP), lambda i: (0, i, 0)),
            pl.BlockSpec((CONV1_KP, LANES), lambda i: (0, 0)),
            pl.BlockSpec((1, LANES), lambda i: (0, 0)),
        ],
        out_specs=pl.BlockSpec((tm, LANES), lambda i: (i, 0)),
        compiler_params=pltpu.CompilerParams(dimension_semantics=("parallel",)),
    )(patches, w1p, b1p)
    return out, M, POH, POW


def conv2_fc_head(a1, packed, *, tile_cap=256):
    """Fused conv2(+pool+relu, dense per-tap) -> fc1+relu -> fc2+relu -> fc3."""
    B = a1.shape[0]
    tb = _pick_tile(B, tile_cap)
    B_pad = _round_up(B, tb)
    a1 = jnp.pad(a1, ((0, B_pad - B), (0, A1_KP - a1.shape[1])))

    out = pl.pallas_call(
        _conv2_fc_kernel,
        out_shape=jax.ShapeDtypeStruct((B_pad, LANES), jnp.float32),
        grid=(B_pad // tb,),
        in_specs=[
            pl.BlockSpec((tb, A1_KP), lambda i: (i, 0)),
            pl.BlockSpec((A1_KP, N_TAPS * CONV2_NP), lambda i: (0, 0)),
            pl.BlockSpec((1, CONV2_NP), lambda i: (0, 0)),
            pl.BlockSpec((CONV2_NP, LANES), lambda i: (0, 0)),
            pl.BlockSpec((1, LANES), lambda i: (0, 0)),
            pl.BlockSpec((LANES, LANES), lambda i: (0, 0)),
            pl.BlockSpec((1, LANES), lambda i: (0, 0)),
            pl.BlockSpec((LANES, LANES), lambda i: (0, 0)),
            pl.BlockSpec((1, LANES), lambda i: (0, 0)),
        ],
        out_specs=pl.BlockSpec((tb, LANES), lambda i: (i, 0)),
        compiler_params=pltpu.CompilerParams(
            dimension_semantics=("parallel",),
            # dense conv2 taps (~10.5 MiB) resident: above v5e's 16 MiB default
            # scoped VMEM, comfortably below v7x's 64 MiB physical VMEM.
            vmem_limit_bytes=48 * 1024 * 1024,
        ),
    )(a1, packed["w2d"], packed["b2d"], packed["fc1_w"], packed["fc1_b"],
      packed["fc2_w"], packed["fc2_b"], packed["fc3_w"], packed["fc3_b"])
    return out[:B, :10]


def net_forward(x_nchw, packed):
    B = x_nchw.shape[0]
    x = x_nchw.reshape(B, x_nchw.shape[2], x_nchw.shape[3])        # C == 1
    out1, M, POH, POW = conv1_relu_pool(x, packed["w1"], packed["b1"])
    # Flatten conv1's pooled activations per image in (H, W, C) order; the
    # prepacked dense conv2 matrices consume exactly this order.
    a1 = out1[:M, :6].reshape(B, POH * POW * 6)                    # (B, 1176)
    return conv2_fc_head(a1, packed)                               # (B, 10)


# ------------------------------ one-time weight prepack ---------------------------

def prepack_params(params):
    """Pack all weights/biases into kernel-ready layouts (runs once, in numpy)."""
    # conv1: (6,1,5,5) -> (25, 6) -> zero-padded (32, 128); (C,KH,KW)==(KH,KW) flatten.
    w1 = np.asarray(params["w1"], np.float32).reshape(6, 25).T
    w1 = np.pad(w1, ((0, CONV1_KP - 25), (0, LANES - 6)))
    b1 = np.pad(np.asarray(params["b1"], np.float32).reshape(1, 6), ((0, 0), (0, LANES - 6)))

    # conv2 expressed as 4 dense (1176 -> 400) matrices, one per 2x2-pool tap,
    # acting on conv1's flattened (14,14,6) HWC activations. Output columns follow
    # PyTorch's (C,H,W) flatten of the (16,5,5) pooled map so fc1 applies verbatim.
    w2 = np.asarray(params["w2"], np.float32)                      # (16, 6, 5, 5)
    dense = np.zeros((2, 2, 14, 14, 6, 16, 5, 5), np.float32)      # (dh,dw,ih,iw,ic,oc,ph,pw)
    r = np.arange(5)
    for dh in range(2):
        for dw in range(2):
            for kh in range(5):
                for kw in range(5):
                    ih = 2 * r + dh + kh
                    iw = 2 * r + dw + kw
                    dense[dh, dw, ih[:, None], iw[None, :], :, :, r[:, None], r[None, :]] = \
                        w2[:, :, kh, kw].T[None, None]
    dense = dense.reshape(N_TAPS, A1_FEATS, 400)
    dense = np.pad(dense, ((0, 0), (0, A1_KP - A1_FEATS), (0, CONV2_NP - 400)))
    w2d = np.concatenate(list(dense), axis=1)                      # (1280, 2048)
    b2d = np.repeat(np.asarray(params["b2"], np.float32), 25).reshape(1, 400)
    b2d = np.pad(b2d, ((0, 0), (0, CONV2_NP - 400)))

    def fc(w, b, k_pad, n_pad):
        w = np.asarray(w, np.float32).T
        w = np.pad(w, ((0, k_pad - w.shape[0]), (0, n_pad - w.shape[1])))
        b = np.asarray(b, np.float32).reshape(1, -1)
        b = np.pad(b, ((0, 0), (0, n_pad - b.shape[1])))
        return w, b

    fc1_w, fc1_b = fc(params["fc1_w"], params["fc1_b"], CONV2_NP, LANES)
    fc2_w, fc2_b = fc(params["fc2_w"], params["fc2_b"], LANES, LANES)
    fc3_w, fc3_b = fc(params["fc3_w"], params["fc3_b"], LANES, LANES)

    packed = dict(w1=w1, b1=b1, w2d=w2d, b2d=b2d,
                  fc1_w=fc1_w, fc1_b=fc1_b, fc2_w=fc2_w, fc2_b=fc2_b,
                  fc3_w=fc3_w, fc3_b=fc3_b)
    return {k: jnp.asarray(v) for k, v in packed.items()}


# ------------------------------ reference + init ----------------------------------

def net_reference(x, params):
    def conv(x, w, b):
        y = lax.conv_general_dilated(x, w, (1, 1), "VALID",
                                     dimension_numbers=("NCHW", "OIHW", "NCHW"))
        return y + b.reshape(1, -1, 1, 1)

    def pool(x):
        return lax.reduce_window(x, -jnp.inf, lax.max, (1, 1, 2, 2), (1, 1, 2, 2), "VALID")

    y = pool(jax.nn.relu(conv(x, params["w1"], params["b1"])))
    y = pool(jax.nn.relu(conv(y, params["w2"], params["b2"])))
    y = y.reshape(y.shape[0], -1)
    y = jax.nn.relu(y @ params["fc1_w"].T + params["fc1_b"])
    y = jax.nn.relu(y @ params["fc2_w"].T + params["fc2_b"])
    return y @ params["fc3_w"].T + params["fc3_b"]


def init_params(key):
    """Deterministic PyTorch-default-style U(-1/sqrt(fan_in), 1/sqrt(fan_in)) init."""
    def uni(k, shape, fan_in):
        bound = 1.0 / (fan_in ** 0.5)
        return jax.random.uniform(k, shape, jnp.float32, -bound, bound)

    ks = jax.random.split(key, 10)
    return {
        "w1": uni(ks[0], (6, 1, 5, 5), 1 * 5 * 5),
        "b1": uni(ks[1], (6,), 1 * 5 * 5),
        "w2": uni(ks[2], (16, 6, 5, 5), 6 * 5 * 5),
        "b2": uni(ks[3], (16,), 6 * 5 * 5),
        "fc1_w": uni(ks[4], (120, 16 * 5 * 5), 16 * 5 * 5),
        "fc1_b": uni(ks[5], (120,), 16 * 5 * 5),
        "fc2_w": uni(ks[6], (84, 120), 120),
        "fc2_b": uni(ks[7], (84,), 120),
        "fc3_w": uni(ks[8], (10, 84), 84),
        "fc3_b": uni(ks[9], (10,), 84),
    }


if __name__ == "__main__":
    key = jax.random.PRNGKey(0)
    k_x, k_p = jax.random.split(key)
    # Input geometry implied by the module: 32x32 single-channel images.
    x = jax.random.normal(k_x, (2, 1, 32, 32), dtype=jnp.float32)
    params = init_params(k_p)
    packed = prepack_params(params)      # one-time weight prepack, outside the jitted forward

    fwd = jax.jit(net_forward)
    out = jax.block_until_ready(fwd(x, packed))
    assert out.shape == (2, 10) and out.dtype == jnp.float32

    ref = jax.block_until_ready(jax.jit(net_reference)(x, params))
    assert np.allclose(np.asarray(out), np.asarray(ref), rtol=5e-2, atol=5e-2), (
        "max abs err = %g" % float(np.max(np.abs(np.asarray(out) - np.asarray(ref)))))
    print("KERNEL_OK")
</pallas_src>

<mosaic_0001>
module attributes {stable_mosaic.version = 11 : i64} {
  func.func @_conv_pool_relu_kernel(%arg0: i32, %arg1: memref<4x200x32xf32, #tpu.memory_space<vmem>>, %arg2: memref<32x128xf32, #tpu.memory_space<vmem>>, %arg3: memref<1x128xf32, #tpu.memory_space<vmem>>, %arg4: memref<200x128xf32, #tpu.memory_space<vmem>>) attributes {dimension_semantics = [#tpu.dimension_semantics<parallel>], iteration_bounds = array<i64: 2>, scalar_prefetch = 0 : i64, scratch_operands = 0 : i64, tpu.core_type = #tpu.core_type<tc>, window_params = [{transform_indices = @transform_0, window_bounds = array<i64: 4, 200, 32>}, {pipeline_mode = #tpu.pipeline_mode<synchronous>, transform_indices = @transform_1, window_bounds = array<i64: 32, 128>}, {pipeline_mode = #tpu.pipeline_mode<synchronous>, transform_indices = @transform_2, window_bounds = array<i64: 1, 128>}, {transform_indices = @transform_3, window_bounds = array<i64: 200, 128>}]} {
    %c0 = arith.constant 0 : index
    %c0_0 = arith.constant 0 : index
    %c0_1 = arith.constant 0 : index
    %0 = vector.load %arg1[%c0, %c0_0, %c0_1] : memref<4x200x32xf32, #tpu.memory_space<vmem>>, vector<4x200x32xf32>
    %1 = vector.shape_cast %0 : vector<4x200x32xf32> to vector<800x32xf32>
    %c0_2 = arith.constant 0 : index
    %c0_3 = arith.constant 0 : index
    %2 = vector.load %arg2[%c0_2, %c0_3] : memref<32x128xf32, #tpu.memory_space<vmem>>, vector<32x128xf32>
    %cst = arith.constant dense<0.000000e+00> : vector<800x128xf32>
    %3 = tpu.matmul %1, %2, %cst {dimension_numbers = #tpu.dot_dimension_numbers<[1], [0], [0], [1], [0, 0, 1, 1], [], []>} : vector<800x32xf32>, vector<32x128xf32>, vector<800x128xf32> -> vector<800x128xf32>
    %4 = vector.shape_cast %3 : vector<800x128xf32> to vector<4x200x128xf32>
    %5 = vector.extract_strided_slice %4 {offsets = [0, 0, 0], sizes = [1, 200, 128], strides = [1, 1, 1]} : vector<4x200x128xf32> to vector<1x200x128xf32>
    %6 = vector.shape_cast %5 : vector<1x200x128xf32> to vector<200x128xf32>
    %7 = vector.extract_strided_slice %4 {offsets = [1, 0, 0], sizes = [1, 200, 128], strides = [1, 1, 1]} : vector<4x200x128xf32> to vector<1x200x128xf32>
    %8 = vector.shape_cast %7 : vector<1x200x128xf32> to vector<200x128xf32>
    %9 = arith.maximumf %6, %8 : vector<200x128xf32>
    %10 = vector.extract_strided_slice %4 {offsets = [2, 0, 0], sizes = [1, 200, 128], strides = [1, 1, 1]} : vector<4x200x128xf32> to vector<1x200x128xf32>
    %11 = vector.shape_cast %10 : vector<1x200x128xf32> to vector<200x128xf32>
    %12 = vector.extract_strided_slice %4 {offsets = [3, 0, 0], sizes = [1, 200, 128], strides = [1, 1, 1]} : vector<4x200x128xf32> to vector<1x200x128xf32>
    %13 = vector.shape_cast %12 : vector<1x200x128xf32> to vector<200x128xf32>
    %14 = arith.maximumf %11, %13 : vector<200x128xf32>
    %15 = arith.maximumf %9, %14 : vector<200x128xf32>
    %c0_4 = arith.constant 0 : index
    %c0_5 = arith.constant 0 : index
    %16 = vector.load %arg3[%c0_4, %c0_5] : memref<1x128xf32, #tpu.memory_space<vmem>>, vector<1x128xf32>
    %17 = vector.broadcast %16 : vector<1x128xf32> to vector<200x128xf32>
    %18 = arith.addf %15, %17 : vector<200x128xf32>
    %cst_6 = arith.constant 0.000000e+00 : f32
    %19 = vector.broadcast %cst_6 : f32 to vector<200x128xf32>
    %20 = arith.maximumf %18, %19 : vector<200x128xf32>
    %c0_7 = arith.constant 0 : index
    %c0_8 = arith.constant 0 : index
    %21 = vector.load %arg4[%c0_7, %c0_8] : memref<200x128xf32, #tpu.memory_space<vmem>>, vector<200x128xf32>
    tpu.vector_store %arg4[%c0_7, %c0_8], %20 {strides = array<i32>} : memref<200x128xf32, #tpu.memory_space<vmem>>, vector<200x128xf32>,
    return
  }
  func.func @transform_0(%arg0: i32) -> (i32, i32, i32) {
    %c0_i32 = arith.constant 0 : i32
    %c0_i32_0 = arith.constant 0 : i32
    %c0_i32_1 = arith.constant 0 : i32
    return %c0_i32, %arg0, %c0_i32_0 : i32, i32, i32
  }
  func.func @transform_1(%arg0: i32) -> (i32, i32) {
    %c0_i32 = arith.constant 0 : i32
    %c0_i32_0 = arith.constant 0 : i32
    %c0_i32_1 = arith.constant 0 : i32
    return %c0_i32, %c0_i32_0 : i32, i32
  }
  func.func @transform_2(%arg0: i32) -> (i32, i32) {
    %c0_i32 = arith.constant 0 : i32
    %c0_i32_0 = arith.constant 0 : i32
    %c0_i32_1 = arith.constant 0 : i32
    return %c0_i32, %c0_i32_0 : i32, i32
  }
  func.func @transform_3(%arg0: i32) -> (i32, i32) {
    %c0_i32 = arith.constant 0 : i32
    %c0_i32_0 = arith.constant 0 : i32
    return %arg0, %c0_i32 : i32, i32
  }
}

module attributes {stable_mosaic.version = 11 : i64} {
  func.func @_conv2_fc_kernel(%arg0: i32, %arg1: memref<8x1280xf32, #tpu.memory_space<vmem>>, %arg2: memref<1280x2048xf32, #tpu.memory_space<vmem>>, %arg3: memref<1x512xf32, #tpu.memory_space<vmem>>, %arg4: memref<512x128xf32, #tpu.memory_space<vmem>>, %arg5: memref<1x128xf32, #tpu.memory_space<vmem>>, %arg6: memref<128x128xf32, #tpu.memory_space<vmem>>, %arg7: memref<1x128xf32, #tpu.memory_space<vmem>>, %arg8: memref<128x128xf32, #tpu.memory_space<vmem>>, %arg9: memref<1x128xf32, #tpu.memory_space<vmem>>, %arg10: memref<8x128xf32, #tpu.memory_space<vmem>>) attributes {dimension_semantics = [#tpu.dimension_semantics<parallel>], iteration_bounds = array<i64: 1>, scalar_prefetch = 0 : i64, scratch_operands = 0 : i64, tpu.core_type = #tpu.core_type<tc>, window_params = [{transform_indices = @transform_0, window_bounds = array<i64: 8, 1280>}, {pipeline_mode = #tpu.pipeline_mode<synchronous>, transform_indices = @transform_1, window_bounds = array<i64: 1280, 2048>}, {pipeline_mode = #tpu.pipeline_mode<synchronous>, transform_indices = @transform_2, window_bounds = array<i64: 1, 512>}, {pipeline_mode = #tpu.pipeline_mode<synchronous>, transform_indices = @transform_3, window_bounds = array<i64: 512, 128>}, {pipeline_mode = #tpu.pipeline_mode<synchronous>, transform_indices = @transform_4, window_bounds = array<i64: 1, 128>}, {pipeline_mode = #tpu.pipeline_mode<synchronous>, transform_indices = @transform_5, window_bounds = array<i64: 128, 128>}, {pipeline_mode = #tpu.pipeline_mode<synchronous>, transform_indices = @transform_6, window_bounds = array<i64: 1, 128>}, {pipeline_mode = #tpu.pipeline_mode<synchronous>, transform_indices = @transform_7, window_bounds = array<i64: 128, 128>}, {pipeline_mode = #tpu.pipeline_mode<synchronous>, transform_indices = @transform_8, window_bounds = array<i64: 1, 128>}, {transform_indices = @transform_9, window_bounds = array<i64: 8, 128>}]} {
    %c0 = arith.constant 0 : index
    %c0_0 = arith.constant 0 : index
    %0 = vector.load %arg1[%c0, %c0_0] : memref<8x1280xf32, #tpu.memory_space<vmem>>, vector<8x1280xf32>
    %c0_1 = arith.constant 0 : index
    %c0_2 = arith.constant 0 : index
    %1 = vector.load %arg2[%c0_1, %c0_2] : memref<1280x2048xf32, #tpu.memory_space<vmem>>, vector<1280x2048xf32>
    %cst = arith.constant dense<0.000000e+00> : vector<8x2048xf32>
    %2 = tpu.matmul %0, %1, %cst {dimension_numbers = #tpu.dot_dimension_numbers<[1], [0], [0], [1], [0, 0, 1, 1], [], []>} : vector<8x1280xf32>, vector<1280x2048xf32>, vector<8x2048xf32> -> vector<8x2048xf32>
    %3 = vector.extract_strided_slice %2 {offsets = [0, 0], sizes = [8, 512], strides = [1, 1]} : vector<8x2048xf32> to vector<8x512xf32>
    %4 = vector.extract_strided_slice %2 {offsets = [0, 512], sizes = [8, 512], strides = [1, 1]} : vector<8x2048xf32> to vector<8x512xf32>
    %5 = arith.maximumf %3, %4 : vector<8x512xf32>
    %6 = vector.extract_strided_slice %2 {offsets = [0, 1024], sizes = [8, 512], strides = [1, 1]} : vector<8x2048xf32> to vector<8x512xf32>
    %7 = vector.extract_strided_slice %2 {offsets = [0, 1536], sizes = [8, 512], strides = [1, 1]} : vector<8x2048xf32> to vector<8x512xf32>
    %8 = arith.maximumf %6, %7 : vector<8x512xf32>
    %9 = arith.maximumf %5, %8 : vector<8x512xf32>
    %c0_3 = arith.constant 0 : index
    %c0_4 = arith.constant 0 : index
    %10 = vector.load %arg3[%c0_3, %c0_4] : memref<1x512xf32, #tpu.memory_space<vmem>>, vector<1x512xf32>
    %11 = vector.broadcast %10 : vector<1x512xf32> to vector<8x512xf32>
    %12 = arith.addf %9, %11 : vector<8x512xf32>
    %cst_5 = arith.constant 0.000000e+00 : f32
    %13 = vector.broadcast %cst_5 : f32 to vector<8x512xf32>
    %14 = arith.maximumf %12, %13 : vector<8x512xf32>
    %c0_6 = arith.constant 0 : index
    %c0_7 = arith.constant 0 : index
    %15 = vector.load %arg4[%c0_6, %c0_7] : memref<512x128xf32, #tpu.memory_space<vmem>>, vector<512x128xf32>
    %cst_8 = arith.constant dense<0.000000e+00> : vector<8x128xf32>
    %16 = tpu.matmul %14, %15, %cst_8 {dimension_numbers = #tpu.dot_dimension_numbers<[1], [0], [0], [1], [0, 0, 1, 1], [], []>} : vector<8x512xf32>, vector<512x128xf32>, vector<8x128xf32> -> vector<8x128xf32>
    %c0_9 = arith.constant 0 : index
    %c0_10 = arith.constant 0 : index
    %17 = vector.load %arg5[%c0_9, %c0_10] : memref<1x128xf32, #tpu.memory_space<vmem>>, vector<1x128xf32>
    %18 = vector.broadcast %17 : vector<1x128xf32> to vector<8x128xf32>
    %19 = arith.addf %16, %18 : vector<8x128xf32>
    %cst_11 = arith.constant 0.000000e+00 : f32
    %20 = vector.broadcast %cst_11 : f32 to vector<8x128xf32>
    %21 = arith.maximumf %19, %20 : vector<8x128xf32>
    %c0_12 = arith.constant 0 : index
    %c0_13 = arith.constant 0 : index
    %22 = vector.load %arg6[%c0_12, %c0_13] : memref<128x128xf32, #tpu.memory_space<vmem>>, vector<128x128xf32>
    %cst_14 = arith.constant dense<0.000000e+00> : vector<8x128xf32>
    %23 = tpu.matmul %21, %22, %cst_14 {dimension_numbers = #tpu.dot_dimension_numbers<[1], [0], [0], [1], [0, 0, 1, 1], [], []>} : vector<8x128xf32>, vector<128x128xf32>, vector<8x128xf32> -> vector<8x128xf32>
    %c0_15 = arith.constant 0 : index
    %c0_16 = arith.constant 0 : index
    %24 = vector.load %arg7[%c0_15, %c0_16] : memref<1x128xf32, #tpu.memory_space<vmem>>, vector<1x128xf32>
    %25 = vector.broadcast %24 : vector<1x128xf32> to vector<8x128xf32>
    %26 = arith.addf %23, %25 : vector<8x128xf32>
    %cst_17 = arith.constant 0.000000e+00 : f32
    %27 = vector.broadcast %cst_17 : f32 to vector<8x128xf32>
    %28 = arith.maximumf %26, %27 : vector<8x128xf32>
    %c0_18 = arith.constant 0 : index
    %c0_19 = arith.constant 0 : index
    %29 = vector.load %arg8[%c0_18, %c0_19] : memref<128x128xf32, #tpu.memory_space<vmem>>, vector<128x128xf32>
    %cst_20 = arith.constant dense<0.000000e+00> : vector<8x128xf32>
    %30 = tpu.matmul %28, %29, %cst_20 {dimension_numbers = #tpu.dot_dimension_numbers<[1], [0], [0], [1], [0, 0, 1, 1], [], []>} : vector<8x128xf32>, vector<128x128xf32>, vector<8x128xf32> -> vector<8x128xf32>
    %c0_21 = arith.constant 0 : index
    %c0_22 = arith.constant 0 : index
    %31 = vector.load %arg9[%c0_21, %c0_22] : memref<1x128xf32, #tpu.memory_space<vmem>>, vector<1x128xf32>
    %32 = vector.broadcast %31 : vector<1x128xf32> to vector<8x128xf32>
    %33 = arith.addf %30, %32 : vector<8x128xf32>
    %c0_23 = arith.constant 0 : index
    %c0_24 = arith.constant 0 : index
    %34 = vector.load %arg10[%c0_23, %c0_24] : memref<8x128xf32, #tpu.memory_space<vmem>>, vector<8x128xf32>
    tpu.vector_store %arg10[%c0_23, %c0_24], %33 {strides = array<i32>} : memref<8x128xf32, #tpu.memory_space<vmem>>, vector<8x128xf32>,
    return
  }
  func.func @transform_0(%arg0: i32) -> (i32, i32) {
    %c0_i32 = arith.constant 0 : i32
    %c0_i32_0 = arith.constant 0 : i32
    return %arg0, %c0_i32 : i32, i32
  }
  func.func @transform_1(%arg0: i32) -> (i32, i32) {
    %c0_i32 = arith.constant 0 : i32
    %c0_i32_0 = arith.constant 0 : i32
    %c0_i32_1 = arith.constant 0 : i32
    return %c0_i32, %c0_i32_0 : i32, i32
  }
  func.func @transform_2(%arg0: i32) -> (i32, i32) {
    %c0_i32 = arith.constant 0 : i32
    %c0_i32_0 = arith.constant 0 : i32
    %c0_i32_1 = arith.constant 0 : i32
    return %c0_i32, %c0_i32_0 : i32, i32
  }
  func.func @transform_3(%arg0: i32) -> (i32, i32) {
    %c0_i32 = arith.constant 0 : i32
    %c0_i32_0 = arith.constant 0 : i32
    %c0_i32_1 = arith.constant 0 : i32
    return %c0_i32, %c0_i32_0 : i32, i32
  }
  func.func @transform_4(%arg0: i32) -> (i32, i32) {
    %c0_i32 = arith.constant 0 : i32
    %c0_i32_0 = arith.constant 0 : i32
    %c0_i32_1 = arith.constant 0 : i32
    return %c0_i32, %c0_i32_0 : i32, i32
  }
  func.func @transform_5(%arg0: i32) -> (i32, i32) {
    %c0_i32 = arith.constant 0 : i32
    %c0_i32_0 = arith.constant 0 : i32
    %c0_i32_1 = arith.constant 0 : i32
    return %c0_i32, %c0_i32_0 : i32, i32
  }
  func.func @transform_6(%arg0: i32) -> (i32, i32) {
    %c0_i32 = arith.constant 0 : i32
    %c0_i32_0 = arith.constant 0 : i32
    %c0_i32_1 = arith.constant 0 : i32
    return %c0_i32, %c0_i32_0 : i32, i32
  }
  func.func @transform_7(%arg0: i32) -> (i32, i32) {
    %c0_i32 = arith.constant 0 : i32
    %c0_i32_0 = arith.constant 0 : i32
    %c0_i32_1 = arith.constant 0 : i32
    return %c0_i32, %c0_i32_0 : i32, i32
  }
  func.func @transform_8(%arg0: i32) -> (i32, i32) {
    %c0_i32 = arith.constant 0 : i32
    %c0_i32_0 = arith.constant 0 : i32
    %c0_i32_1 = arith.constant 0 : i32
    return %c0_i32, %c0_i32_0 : i32, i32
  }
  func.func @transform_9(%arg0: i32) -> (i32, i32) {
    %c0_i32 = arith.constant 0 : i32
    %c0_i32_0 = arith.constant 0 : i32
    return %arg0, %c0_i32 : i32, i32
  }
}

</mosaic_0001>

<llo_original>
// kernel: net_forward.2
$region0: #{net_forward.2}
  #allocation0 [shape = 'u32[]', space=smem, size = 0x4, offset = 0x4, fixed_abs, tag = 'smem constant byte address 0x4 - core index']
  #allocation1 [shape = 'u32[144,128]{1,0:T(1,128)}', space=vmem, size = 0x12000, scoped, tag = 'internal scratch']
  %s0 = inlined_call_operand.vmem [shape: f32[4,400,32], index: 0, kind: input, shape index: {}]
  %s1 = inlined_call_operand.vmem [shape: f32[32,128], index: 1, kind: input, shape index: {}]
  %s2 = inlined_call_operand.vmem [shape: f32[1,128], index: 2, kind: input, shape index: {}]
  %s3 = inlined_call_operand.vmem [shape: f32[400,128], index: 3, kind: output, shape index: {}]
  %s4 = sld [smem:[#allocation0]]
  $region83: #{net_forward.2} parent=0
    _
  %s6 = ssub.s32 1, %s4
  %s7 = scalar_select 0, %s6, %s4
  $region1: #{net_forward.2} parent=0
    #allocation2 [shape = 'u8[819200]{0}', space=vmem, size = 0xc8000, scoped, tag = 'input window, operand 0']
    loop: start=0, step=1, limit=4
    $region2: #{net_forward.2} parent=1 // loop_pre_header
      _
    $region3: #{net_forward.2} parent=1 // loop_header
      %s9 = sphi 0, %s13
      %p10 = scmp.ge.s32.totalorder %s9, 4
      %s19 = sphi 0, %s21
      %s22 = sphi 0, %s19
      %s23 = sphi 0, %s22
      %s39 = sphi 0, %s23
      %s43 = sphi 0, %s43
      %s45 = sphi 0, %s43
      %s46 = sphi 0, %s45
      %s60 = sphi 0, %s46
      %s64 = sphi 0, %s64
      %s66 = sphi 0, %s64
      %s67 = sphi 0, %s66
      %s81 = sphi 0, %s67
      %s87 = sphi 0, %s89
      %s90 = sphi 0, %s87
      %s91 = sphi 0, %s90
      %s107 = sphi 0, %s91
    $region4: #{net_forward.2} parent=1 // loop_header_branch
      %12 = sbr.rel (%p10) target = $region8
    $region5: #{net_forward.2} parent=1 // loop_body
      %s14 = ssub.s32 %s9, 1
      %s15 = ssub.s32 %s9, 2
      %s16 = sadd.s32 %s9, 1
      %s17 = ssub.s32 %s9, %s16
      %p18 = scmp.eq.s32.totalorder %s17, 0
      %s20 = sadd.s32 %s19, 1
      %s21 = scalar_select %p18, %s19, %s20
      %p24 = pneg %p18
      %p25 = scmp.eq.s32.totalorder %s9, 1
      %p26 = por %p24, %p25
      %p27 = scmp.ne.s32.totalorder %s19, %s22
      %p28 = scmp.eq.s32.totalorder %s9, 0
      %p29 = por %p27, %p28
      %p30 = scmp.ne.s32.totalorder %s19, %s22
      %p31 = scmp.eq.s32.totalorder %s14, 1
      %p32 = por %p30, %p31
      %p33 = scmp.ne.s32.totalorder %s22, %s23
      %p34 = scmp.eq.s32.totalorder %s14, 0
      %p35 = por %p33, %p34
      %p36 = scmp.ne.s32.totalorder %s22, %s23
      %p37 = scmp.eq.s32.totalorder %s15, 1
      %p38 = por %p36, %p37
      %p40 = scmp.ne.s32.totalorder %s23, %s39
      %p41 = scmp.eq.s32.totalorder %s15, 0
      %p42 = por %p40, %p41
      %s44 = sadd.s32 %s43, 1
      %p47 = scmp.eq.s32.totalorder %s9, 1
      %p48 = scmp.ne.s32.totalorder %s43, %s45
      %p49 = scmp.eq.s32.totalorder %s9, 0
      %p50 = por %p48, %p49
      %p51 = scmp.ne.s32.totalorder %s43, %s45
      %p52 = scmp.eq.s32.totalorder %s14, 1
      %p53 = por %p51, %p52
      %p54 = scmp.ne.s32.totalorder %s45, %s46
      %p55 = scmp.eq.s32.totalorder %s14, 0
      %p56 = por %p54, %p55
      %p57 = scmp.ne.s32.totalorder %s45, %s46
      %p58 = scmp.eq.s32.totalorder %s15, 1
      %p59 = por %p57, %p58
      %p61 = scmp.ne.s32.totalorder %s46, %s60
      %p62 = scmp.eq.s32.totalorder %s15, 0
      %p63 = por %p61, %p62
      %s65 = sadd.s32 %s64, 1
      %p68 = scmp.eq.s32.totalorder %s9, 1
      %p69 = scmp.ne.s32.totalorder %s64, %s66
      %p70 = scmp.eq.s32.totalorder %s9, 0
      %p71 = por %p69, %p70
      %p72 = scmp.ne.s32.totalorder %s64, %s66
      %p73 = scmp.eq.s32.totalorder %s14, 1
      %p74 = por %p72, %p73
      %p75 = scmp.ne.s32.totalorder %s66, %s67
      %p76 = scmp.eq.s32.totalorder %s14, 0
      %p77 = por %p75, %p76
      %p78 = scmp.ne.s32.totalorder %s66, %s67
      %p79 = scmp.eq.s32.totalorder %s15, 1
      %p80 = por %p78, %p79
      %p82 = scmp.ne.s32.totalorder %s67, %s81
      %p83 = scmp.eq.s32.totalorder %s15, 0
      %p84 = por %p82, %p83
      %s85 = ssub.s32 %s9, %s16
      %p86 = scmp.eq.s32.totalorder %s85, 0
      %s88 = sadd.s32 %s87, 1
      %s89 = scalar_select %p86, %s87, %s88
      %p92 = pneg %p86
      %p93 = scmp.eq.s32.totalorder %s9, 1
      %p94 = por %p92, %p93
      %p95 = scmp.ne.s32.totalorder %s87, %s90
      %p96 = scmp.eq.s32.totalorder %s9, 0
      %p97 = por %p95, %p96
      %p98 = scmp.ne.s32.totalorder %s87, %s90
      %p99 = scmp.eq.s32.totalorder %s14, 1
      %p100 = por %p98, %p99
      %p101 = scmp.ne.s32.totalorder %s90, %s91
      %p102 = scmp.eq.s32.totalorder %s14, 0
      %p103 = por %p101, %p102
      %p104 = scmp.ne.s32.totalorder %s90, %s91
      %p105 = scmp.eq.s32.totalorder %s15, 1
      %p106 = por %p104, %p105
      %p108 = scmp.ne.s32.totalorder %s91, %s107
      %p109 = scmp.eq.s32.totalorder %s15, 0
      %p110 = por %p108, %p109
      %p111 = scmp.le.s32.totalorder 1, %s9
      %p112 = scmp.lt.s32.totalorder %s9, 3
      %p113 = pnand %p111, %p112
      %p114 = pneg %p113
      // Predicated region
      $region9: #{net_forward.2} parent=5 // pred_check
        _
      $region10: #{net_forward.2} parent=5 // pred_check_branch
        %116 = sbr.rel (%p113) target = $region12
      $region11: #{net_forward.2} parent=5 // pred_region
        %s117 = ssub.s32 %s9, 1
        // Predicated region
        $region13: #{net_forward.2} parent=11 // pred_check
          %p118 = pneg %p56
        $region14: #{net_forward.2} parent=11 // pred_check_branch
          %120 = sbr.rel (%p118) target = $region16
        $region15: #{net_forward.2} parent=11 // pred_region
          _
        $region16: #{net_forward.2} parent=11 // pred_fallthru
          _
        // Predicated region
        $region17: #{net_forward.2} parent=11 // pred_check
          %p121 = pneg %p77
        $region18: #{net_forward.2} parent=11 // pred_check_branch
          %123 = sbr.rel (%p121) target = $region20
        $region19: #{net_forward.2} parent=11 // pred_region
          _
        $region20: #{net_forward.2} parent=11 // pred_fallthru
          _
      $region12: #{net_forward.2} parent=5 // pred_fallthru
        _
      %p124 = scmp.lt.s32.totalorder %s9, 2
      // Predicated region
      $region21: #{net_forward.2} parent=5 // pred_check
        %p125 = pneg %p124
      $region22: #{net_forward.2} parent=5 // pred_check_branch
        %127 = sbr.rel (%p125) target = $region24
      $region23: #{net_forward.2} parent=5 // pred_region
        // Predicated region
        $region25: #{net_forward.2} parent=23 // pred_check
          %p128 = pneg %p29
        $region26: #{net_forward.2} parent=23 // pred_check_branch
          %130 = sbr.rel (%p128) target = $region28
        $region27: #{net_forward.2} parent=23 // pred_region
          %s131 = sand.u32 %s19, 1
          %s132 = sand.u32 %s19, 1
          %s133 = smul.addr %s132, 800
          %s134 = scalar_lea.vmem [#allocation2], %s133
          %s135 = smul.u32 25, %s9
          %s136 = smul.addr %s135, 8
          %s137 = scalar_lea.vmem %s0, %s136
          // Predicated region
          $region29: #{net_forward.2} parent=27 // pred_check
            _
          $region30: #{net_forward.2} parent=27 // pred_check_branch
            %139 = sbr.rel (0) target = $region32
          $region31: #{net_forward.2} parent=27 // pred_region
            // Predicated region
            $region33: #{net_forward.2} parent=31 // pred_check
              _
            $region34: #{net_forward.2} parent=31 // pred_check_branch
              %141 = sbr.rel (0) target = $region36
            $region35: #{net_forward.2} parent=31 // pred_region
              // Predicated region
              $region48: #{net_forward.2} parent=35 // pred_check
                _
              $region49: #{net_forward.2} parent=35 // pred_check_branch
                %355 = sbr.rel (0) target = $region51
              $region50: #{net_forward.2} parent=35 // pred_region
                loop: start=0, step=1, limit=1
                $region52: #{net_forward.2} parent=50 // loop_pre_header
                  _
                $region53: #{net_forward.2} parent=50 // loop_header
                  %s357 = sphi 0, %s361
                  %p358 = scmp.ge.s32.totalorder %s357, 1
                  %s362 = sphi %s137, %s137
                  %s363 = sphi %s134, %s134
                $region54: #{net_forward.2} parent=50 // loop_header_branch
                  %360 = sbr.rel (%p358) target = $region58
                $region55: #{net_forward.2} parent=50 // loop_body
                  %v364 = vld [vmem:[%s362] sm:$0xff]
                  %365 = vst [vmem:[%s363] sm:$0xff] %v364
                  %v366 = vld [vmem:[%s362 + $0x8] sm:$0xff]
                  %367 = vst [vmem:[%s363 + $0x8] sm:$0xff] %v366
                  %v368 = vld [vmem:[%s362 + $0x10] sm:$0xff]
                  %369 = vst [vmem:[%s363 + $0x10] sm:$0xff] %v368
                  %v370 = vld [vmem:[%s362 + $0x18] sm:$0xff]
                  %371 = vst [vmem:[%s363 + $0x18] sm:$0xff] %v370
                  %v372 = vld [vmem:[%s362 + $0x20] sm:$0xff]
                  %373 = vst [vmem:[%s363 + $0x20] sm:$0xff] %v372
                  %v374 = vld [vmem:[%s362 + $0x28] sm:$0xff]
                  %375 = vst [vmem:[%s363 + $0x28] sm:$0xff] %v374
                  %v376 = vld [vmem:[%s362 + $0x30] sm:$0xff]
                  %377 = vst [vmem:[%s363 + $0x30] sm:$0xff] %v376
                  %v378 = vld [vmem:[%s362 + $0x38] sm:$0xff]
                  %379 = vst [vmem:[%s363 + $0x38] sm:$0xff] %v378
                  %v380 = vld [vmem:[%s362 + $0x40] sm:$0xff]
                  %381 = vst [vmem:[%s363 + $0x40] sm:$0xff] %v380
                  %v382 = vld [vmem:[%s362 + $0x48] sm:$0xff]
                  %383 = vst [vmem:[%s363 + $0x48] sm:$0xff] %v382
                  %v384 = vld [vmem:[%s362 + $0x50] sm:$0xff]
                  %385 = vst [vmem:[%s363 + $0x50] sm:$0xff] %v384
                  %v386 = vld [vmem:[%s362 + $0x58] sm:$0xff]
                  %387 = vst [vmem:[%s363 + $0x58] sm:$0xff] %v386
                  %v388 = vld [vmem:[%s362 + $0x60] sm:$0xff]
                  %389 = vst [vmem:[%s363 + $0x60] sm:$0xff] %v388
                  %v390 = vld [vmem:[%s362 + $0x68] sm:$0xff]
                  %391 = vst [vmem:[%s363 + $0x68] sm:$0xff] %v390
                  %v392 = vld [vmem:[%s362 + $0x70] sm:$0xff]
                  %393 = vst [vmem:[%s363 + $0x70] sm:$0xff] %v392
                  %v394 = vld [vmem:[%s362 + $0x78] sm:$0xff]
                  %395 = vst [vmem:[%s363 + $0x78] sm:$0xff] %v394
                  %v396 = vld [vmem:[%s362 + $0x80] sm:$0xff]
                  %397 = vst [vmem:[%s363 + $0x80] sm:$0xff] %v396
                  %v398 = vld [vmem:[%s362 + $0x88] sm:$0xff]
                  %399 = vst [vmem:[%s363 + $0x88] sm:$0xff] %v398
                  %v400 = vld [vmem:[%s362 + $0x90] sm:$0xff]
                  %401 = vst [vmem:[%s363 + $0x90] sm:$0xff] %v400
                  %v402 = vld [vmem:[%s362 + $0x98] sm:$0xff]
                  %403 = vst [vmem:[%s363 + $0x98] sm:$0xff] %v402
                  %v404 = vld [vmem:[%s362 + $0xa0] sm:$0xff]
                  %405 = vst [vmem:[%s363 + $0xa0] sm:$0xff] %v404
                  %v406 = vld [vmem:[%s362 + $0xa8] sm:$0xff]
                  %407 = vst [vmem:[%s363 + $0xa8] sm:$0xff] %v406
                  %v408 = vld [vmem:[%s362 + $0xb0] sm:$0xff]
                  %409 = vst [vmem:[%s363 + $0xb0] sm:$0xff] %v408
                  %v410 = vld [vmem:[%s362 + $0xb8] sm:$0xff]
                  %411 = vst [vmem:[%s363 + $0xb8] sm:$0xff] %v410
                  %v412 = vld [vmem:[%s362 + $0xc0] sm:$0xff]
                  %413 = vst [vmem:[%s363 + $0xc0] sm:$0xff] %v412
                  %v414 = vld [vmem:[%s362 + $0x190] sm:$0xff]
                  %415 = vst [vmem:[%s363 + $0xc8] sm:$0xff] %v414
                  %v416 = vld [vmem:[%s362 + $0x198] sm:$0xff]
                  %417 = vst [vmem:[%s363 + $0xd0] sm:$0xff] %v416
                  %v418 = vld [vmem:[%s362 + $0x1a0] sm:$0xff]
                  %419 = vst [vmem:[%s363 + $0xd8] sm:$0xff] %v418
                  %v420 = vld [vmem:[%s362 + $0x1a8] sm:$0xff]
                  %421 = vst [vmem:[%s363 + $0xe0] sm:$0xff] %v420
                  %v422 = vld [vmem:[%s362 + $0x1b0] sm:$0xff]
                  %423 = vst [vmem:[%s363 + $0xe8] sm:$0xff] %v422
                  %v424 = vld [vmem:[%s362 + $0x1b8] sm:$0xff]
                  %425 = vst [vmem:[%s363 + $0xf0] sm:$0xff] %v424
                  %v426 = vld [vmem:[%s362 + $0x1c0] sm:$0xff]
                  %427 = vst [vmem:[%s363 + $0xf8] sm:$0xff] %v426
                  %v428 = vld [vmem:[%s362 + $0x1c8] sm:$0xff]
                  %429 = vst [vmem:[%s363 + $0x100] sm:$0xff] %v428
                  %v430 = vld [vmem:[%s362 + $0x1d0] sm:$0xff]
                  %431 = vst [vmem:[%s363 + $0x108] sm:$0xff] %v430
                  %v432 = vld [vmem:[%s362 + $0x1d8] sm:$0xff]
                  %433 = vst [vmem:[%s363 + $0x110] sm:$0xff] %v432
                  %v434 = vld [vmem:[%s362 + $0x1e0] sm:$0xff]
                  %435 = vst [vmem:[%s363 + $0x118] sm:$0xff] %v434
                  %v436 = vld [vmem:[%s362 + $0x1e8] sm:$0xff]
                  %437 = vst [vmem:[%s363 + $0x120] sm:$0xff] %v436
                  %v438 = vld [vmem:[%s362 + $0x1f0] sm:$0xff]
                  %439 = vst [vmem:[%s363 + $0x128] sm:$0xff] %v438
                  %v440 = vld [vmem:[%s362 + $0x1f8] sm:$0xff]
                  %441 = vst [vmem:[%s363 + $0x130] sm:$0xff] %v440
                  %v442 = vld [vmem:[%s362 + $0x200] sm:$0xff]
                  %443 = vst [vmem:[%s363 + $0x138] sm:$0xff] %v442
                  %v444 = vld [vmem:[%s362 + $0x208] sm:$0xff]
                  %445 = vst [vmem:[%s363 + $0x140] sm:$0xff] %v444
                  %v446 = vld [vmem:[%s362 + $0x210] sm:$0xff]
                  %447 = vst [vmem:[%s363 + $0x148] sm:$0xff] %v446
                  %v448 = vld [vmem:[%s362 + $0x218] sm:$0xff]
                  %449 = vst [vmem:[%s363 + $0x150] sm:$0xff] %v448
                  %v450 = vld [vmem:[%s362 + $0x220] sm:$0xff]
                  %451 = vst [vmem:[%s363 + $0x158] sm:$0xff] %v450
                  %v452 = vld [vmem:[%s362 + $0x228] sm:$0xff]
                  %453 = vst [vmem:[%s363 + $0x160] sm:$0xff] %v452
                  %v454 = vld [vmem:[%s362 + $0x230] sm:$0xff]
                  %455 = vst [vmem:[%s363 + $0x168] sm:$0xff] %v454
                  %v456 = vld [vmem:[%s362 + $0x238] sm:$0xff]
                  %457 = vst [vmem:[%s363 + $0x170] sm:$0xff] %v456
                  %v458 = vld [vmem:[%s362 + $0x240] sm:$0xff]
                  %459 = vst [vmem:[%s363 + $0x178] sm:$0xff] %v458
                  %v460 = vld [vmem:[%s362 + $0x248] sm:$0xff]
                  %461 = vst [vmem:[%s363 + $0x180] sm:$0xff] %v460
                  %v462 = vld [vmem:[%s362 + $0x250] sm:$0xff]
                  %463 = vst [vmem:[%s363 + $0x188] sm:$0xff] %v462
                  %v464 = vld [vmem:[%s362 + $0x320] sm:$0xff]
                  %465 = vst [vmem:[%s363 + $0x190] sm:$0xff] %v464
                  %v466 = vld [vmem:[%s362 + $0x328] sm:$0xff]
                  %467 = vst [vmem:[%s363 + $0x198] sm:$0xff] %v466
                  %v468 = vld [vmem:[%s362 + $0x330] sm:$0xff]
                  %469 = vst [vmem:[%s363 + $0x1a0] sm:$0xff] %v468
                  %v470 = vld [vmem:[%s362 + $0x338] sm:$0xff]
                  %471 = vst [vmem:[%s363 + $0x1a8] sm:$0xff] %v470
                  %v472 = vld [vmem:[%s362 + $0x340] sm:$0xff]
                  %473 = vst [vmem:[%s363 + $0x1b0] sm:$0xff] %v472
                  %v474 = vld [vmem:[%s362 + $0x348] sm:$0xff]
                  %475 = vst [vmem:[%s363 + $0x1b8] sm:$0xff] %v474
                  %v476 = vld [vmem:[%s362 + $0x350] sm:$0xff]
                  %477 = vst [vmem:[%s363 + $0x1c0] sm:$0xff] %v476
                  %v478 = vld [vmem:[%s362 + $0x358] sm:$0xff]
                  %479 = vst [vmem:[%s363 + $0x1c8] sm:$0xff] %v478
                  %v480 = vld [vmem:[%s362 + $0x360] sm:$0xff]
                  %481 = vst [vmem:[%s363 + $0x1d0] sm:$0xff] %v480
                  %v482 = vld [vmem:[%s362 + $0x368] sm:$0xff]
                  %483 = vst [vmem:[%s363 + $0x1d8] sm:$0xff] %v482
                  %v484 = vld [vmem:[%s362 + $0x370] sm:$0xff]
                  %485 = vst [vmem:[%s363 + $0x1e0] sm:$0xff] %v484
                  %v486 = vld [vmem:[%s362 + $0x378] sm:$0xff]
                  %487 = vst [vmem:[%s363 + $0x1e8] sm:$0xff] %v486
                  %v488 = vld [vmem:[%s362 + $0x380] sm:$0xff]
                  %489 = vst [vmem:[%s363 + $0x1f0] sm:$0xff] %v488
                  %v490 = vld [vmem:[%s362 + $0x388] sm:$0xff]
                  %491 = vst [vmem:[%s363 + $0x1f8] sm:$0xff] %v490
                  %v492 = vld [vmem:[%s362 + $0x390] sm:$0xff]
                  %493 = vst [vmem:[%s363 + $0x200] sm:$0xff] %v492
                  %v494 = vld [vmem:[%s362 + $0x398] sm:$0xff]
                  %495 = vst [vmem:[%s363 + $0x208] sm:$0xff] %v494
                  %v496 = vld [vmem:[%s362 + $0x3a0] sm:$0xff]
                  %497 = vst [vmem:[%s363 + $0x210] sm:$0xff] %v496
                  %v498 = vld [vmem:[%s362 + $0x3a8] sm:$0xff]
                  %499 = vst [vmem:[%s363 + $0x218] sm:$0xff] %v498
                  %v500 = vld [vmem:[%s362 + $0x3b0] sm:$0xff]
                  %501 = vst [vmem:[%s363 + $0x220] sm:$0xff] %v500
                  %v502 = vld [vmem:[%s362 + $0x3b8] sm:$0xff]
                  %503 = vst [vmem:[%s363 + $0x228] sm:$0xff] %v502
                  %v504 = vld [vmem:[%s362 + $0x3c0] sm:$0xff]
                  %505 = vst [vmem:[%s363 + $0x230] sm:$0xff] %v504
                  %v506 = vld [vmem:[%s362 + $0x3c8] sm:$0xff]
                  %507 = vst [vmem:[%s363 + $0x238] sm:$0xff] %v506
                  %v508 = vld [vmem:[%s362 + $0x3d0] sm:$0xff]
                  %509 = vst [vmem:[%s363 + $0x240] sm:$0xff] %v508
                  %v510 = vld [vmem:[%s362 + $0x3d8] sm:$0xff]
                  %511 = vst [vmem:[%s363 + $0x248] sm:$0xff] %v510
                  %v512 = vld [vmem:[%s362 + $0x3e0] sm:$0xff]
                  %513 = vst [vmem:[%s363 + $0x250] sm:$0xff] %v512
                  %v514 = vld [vmem:[%s362 + $0x4b0] sm:$0xff]
                  %515 = vst [vmem:[%s363 + $0x258] sm:$0xff] %v514
                  %v516 = vld [vmem:[%s362 + $0x4b8] sm:$0xff]
                  %517 = vst [vmem:[%s363 + $0x260] sm:$0xff] %v516
                  %v518 = vld [vmem:[%s362 + $0x4c0] sm:$0xff]
                  %519 = vst [vmem:[%s363 + $0x268] sm:$0xff] %v518
                  %v520 = vld [vmem:[%s362 + $0x4c8] sm:$0xff]
                  %521 = vst [vmem:[%s363 + $0x270] sm:$0xff] %v520
                  %v522 = vld [vmem:[%s362 + $0x4d0] sm:$0xff]
                  %523 = vst [vmem:[%s363 + $0x278] sm:$0xff] %v522
                  %v524 = vld [vmem:[%s362 + $0x4d8] sm:$0xff]
                  %525 = vst [vmem:[%s363 + $0x280] sm:$0xff] %v524
                  %v526 = vld [vmem:[%s362 + $0x4e0] sm:$0xff]
                  %527 = vst [vmem:[%s363 + $0x288] sm:$0xff] %v526
                  %v528 = vld [vmem:[%s362 + $0x4e8] sm:$0xff]
                  %529 = vst [vmem:[%s363 + $0x290] sm:$0xff] %v528
                  %v530 = vld [vmem:[%s362 + $0x4f0] sm:$0xff]
                  %531 = vst [vmem:[%s363 + $0x298] sm:$0xff] %v530
                  %v532 = vld [vmem:[%s362 + $0x4f8] sm:$0xff]
                  %533 = vst [vmem:[%s363 + $0x2a0] sm:$0xff] %v532
                  %v534 = vld [vmem:[%s362 + $0x500] sm:$0xff]
                  %535 = vst [vmem:[%s363 + $0x2a8] sm:$0xff] %v534
                  %v536 = vld [vmem:[%s362 + $0x508] sm:$0xff]
                  %537 = vst [vmem:[%s363 + $0x2b0] sm:$0xff] %v536
                  %v538 = vld [vmem:[%s362 + $0x510] sm:$0xff]
                  %539 = vst [vmem:[%s363 + $0x2b8] sm:$0xff] %v538
                  %v540 = vld [vmem:[%s362 + $0x518] sm:$0xff]
                  %541 = vst [vmem:[%s363 + $0x2c0] sm:$0xff] %v540
                  %v542 = vld [vmem:[%s362 + $0x520] sm:$0xff]
                  %543 = vst [vmem:[%s363 + $0x2c8] sm:$0xff] %v542
                  %v544 = vld [vmem:[%s362 + $0x528] sm:$0xff]
                  %545 = vst [vmem:[%s363 + $0x2d0] sm:$0xff] %v544
                  %v546 = vld [vmem:[%s362 + $0x530] sm:$0xff]
                  %547 = vst [vmem:[%s363 + $0x2d8] sm:$0xff] %v546
                  %v548 = vld [vmem:[%s362 + $0x538] sm:$0xff]
                  %549 = vst [vmem:[%s363 + $0x2e0] sm:$0xff] %v548
                  %v550 = vld [vmem:[%s362 + $0x540] sm:$0xff]
                  %551 = vst [vmem:[%s363 + $0x2e8] sm:$0xff] %v550
                  %v552 = vld [vmem:[%s362 + $0x548] sm:$0xff]
                  %553 = vst [vmem:[%s363 + $0x2f0] sm:$0xff] %v552
                  %v554 = vld [vmem:[%s362 + $0x550] sm:$0xff]
                  %555 = vst [vmem:[%s363 + $0x2f8] sm:$0xff] %v554
                  %v556 = vld [vmem:[%s362 + $0x558] sm:$0xff]
                  %557 = vst [vmem:[%s363 + $0x300] sm:$0xff] %v556
                  %v558 = vld [vmem:[%s362 + $0x560] sm:$0xff]
                  %559 = vst [vmem:[%s363 + $0x308] sm:$0xff] %v558
                  %v560 = vld [vmem:[%s362 + $0x568] sm:$0xff]
                  %561 = vst [vmem:[%s363 + $0x310] sm:$0xff] %v560
                  %v562 = vld [vmem:[%s362 + $0x570] sm:$0xff]
                  %563 = vst [vmem:[%s363 + $0x318] sm:$0xff] %v562
                $region56: #{net_forward.2} parent=50 // loop_footer
                  %s361 = sadd.s32 1, %s357
                $region57: #{net_forward.2} parent=50 // loop_footer_branch
                  %356 = sbr.rel target = $region53
                $region58: #{net_forward.2} parent=50 // loop_exit
                  _
              $region51: #{net_forward.2} parent=35 // pred_fallthru
                _
              // Predicated region
              $region59: #{net_forward.2} parent=35 // pred_check
                _
              $region60: #{net_forward.2} parent=35 // pred_check_branch
                %565 = sbr.rel target = $region62
              $region61: #{net_forward.2} parent=35 // pred_region
                _
              $region62: #{net_forward.2} parent=35 // pred_fallthru
                _
            $region36: #{net_forward.2} parent=31 // pred_fallthru
              _
            // Predicated region
            $region37: #{net_forward.2} parent=31 // pred_check
              _
            $region38: #{net_forward.2} parent=31 // pred_check_branch
              %143 = sbr.rel target = $region40
            $region39: #{net_forward.2} parent=31 // pred_region
              %s145 = ssub.s32 256, 1
              loop: start=0, step=1, limit=1
              $region41: #{net_forward.2} parent=39 // loop_pre_header
                _
              $region42: #{net_forward.2} parent=39 // loop_header
                %s147 = sphi 0, %s151
                %p148 = scmp.ge.s32.totalorder %s147, 1
                %s152 = sphi %s137, %s137
                %s153 = sphi %s134, %s134
              $region43: #{net_forward.2} parent=39 // loop_header_branch
                %150 = sbr.rel (%p148) target = $region47
              $region44: #{net_forward.2} parent=39 // loop_body
                %v154 = vld [vmem:[%s152] sm:%s145]
                %155 = vst [vmem:[%s153] sm:%s145] %v154
                %v156 = vld [vmem:[%s152 + $0x8] sm:%s145]
                %157 = vst [vmem:[%s153 + $0x8] sm:%s145] %v156
                %v158 = vld [vmem:[%s152 + $0x10] sm:%s145]
                %159 = vst [vmem:[%s153 + $0x10] sm:%s145] %v158
                %v160 = vld [vmem:[%s152 + $0x18] sm:%s145]
                %161 = vst [vmem:[%s153 + $0x18] sm:%s145] %v160
                %v162 = vld [vmem:[%s152 + $0x20] sm:%s145]
                %163 = vst [vmem:[%s153 + $0x20] sm:%s145] %v162
                %v164 = vld [vmem:[%s152 + $0x28] sm:%s145]
                %165 = vst [vmem:[%s153 + $0x28] sm:%s145] %v164
                %v166 = vld [vmem:[%s152 + $0x30] sm:%s145]
                %167 = vst [vmem:[%s153 + $0x30] sm:%s145] %v166
                %v168 = vld [vmem:[%s152 + $0x38] sm:%s145]
                %169 = vst [vmem:[%s153 + $0x38] sm:%s145] %v168
                %v170 = vld [vmem:[%s152 + $0x40] sm:%s145]
                %171 = vst [vmem:[%s153 + $0x40] sm:%s145] %v170
                %v172 = vld [vmem:[%s152 + $0x48] sm:%s145]
                %173 = vst [vmem:[%s153 + $0x48] sm:%s145] %v172
                %v174 = vld [vmem:[%s152 + $0x50] sm:%s145]
                %175 = vst [vmem:[%s153 + $0x50] sm:%s145] %v174
                %v176 = vld [vmem:[%s152 + $0x58] sm:%s145]
                %177 = vst [vmem:[%s153 + $0x58] sm:%s145] %v176
                %v178 = vld [vmem:[%s152 + $0x60] sm:%s145]
                %179 = vst [vmem:[%s153 + $0x60] sm:%s145] %v178
                %v180 = vld [vmem:[%s152 + $0x68] sm:%s145]
                %181 = vst [vmem:[%s153 + $0x68] sm:%s145] %v180
                %v182 = vld [vmem:[%s152 + $0x70] sm:%s145]
                %183 = vst [vmem:[%s153 + $0x70] sm:%s145] %v182
                %v184 = vld [vmem:[%s152 + $0x78] sm:%s145]
                %185 = vst [vmem:[%s153 + $0x78] sm:%s145] %v184
                %v186 = vld [vmem:[%s152 + $0x80] sm:%s145]
                %187 = vst [vmem:[%s153 + $0x80] sm:%s145] %v186
                %v188 = vld [vmem:[%s152 + $0x88] sm:%s145]
                %189 = vst [vmem:[%s153 + $0x88] sm:%s145] %v188
                %v190 = vld [vmem:[%s152 + $0x90] sm:%s145]
                %191 = vst [vmem:[%s153 + $0x90] sm:%s145] %v190
                %v192 = vld [vmem:[%s152 + $0x98] sm:%s145]
                %193 = vst [vmem:[%s153 + $0x98] sm:%s145] %v192
                %v194 = vld [vmem:[%s152 + $0xa0] sm:%s145]
                %195 = vst [vmem:[%s153 + $0xa0] sm:%s145] %v194
                %v196 = vld [vmem:[%s152 + $0xa8] sm:%s145]
                %197 = vst [vmem:[%s153 + $0xa8] sm:%s145] %v196
                %v198 = vld [vmem:[%s152 + $0xb0] sm:%s145]
                %199 = vst [vmem:[%s153 + $0xb0] sm:%s145] %v198
                %v200 = vld [vmem:[%s152 + $0xb8] sm:%s145]
                %201 = vst [vmem:[%s153 + $0xb8] sm:%s145] %v200
                %v202 = vld [vmem:[%s152 + $0xc0] sm:%s145]
                %203 = vst [vmem:[%s153 + $0xc0] sm:%s145] %v202
                %v204 = vld [vmem:[%s152 + $0x190] sm:%s145]
                %205 = vst [vmem:[%s153 + $0xc8] sm:%s145] %v204
                %v206 = vld [vmem:[%s152 + $0x198] sm:%s145]
                %207 = vst [vmem:[%s153 + $0xd0] sm:%s145] %v206
                %v208 = vld [vmem:[%s152 + $0x1a0] sm:%s145]
                %209 = vst [vmem:[%s153 + $0xd8] sm:%s145] %v208
                %v210 = vld [vmem:[%s152 + $0x1a8] sm:%s145]
                %211 = vst [vmem:[%s153 + $0xe0] sm:%s145] %v210
                %v212 = vld [vmem:[%s152 + $0x1b0] sm:%s145]
                %213 = vst [vmem:[%s153 + $0xe8] sm:%s145] %v212
                %v214 = vld [vmem:[%s152 + $0x1b8] sm:%s145]
                %215 = vst [vmem:[%s153 + $0xf0] sm:%s145] %v214
                %v216 = vld [vmem:[%s152 + $0x1c0] sm:%s145]
                %217 = vst [vmem:[%s153 + $0xf8] sm:%s145] %v216
                %v218 = vld [vmem:[%s152 + $0x1c8] sm:%s145]
                %219 = vst [vmem:[%s153 + $0x100] sm:%s145] %v218
                %v220 = vld [vmem:[%s152 + $0x1d0] sm:%s145]
                %221 = vst [vmem:[%s153 + $0x108] sm:%s145] %v220
                %v222 = vld [vmem:[%s152 + $0x1d8] sm:%s145]
                %223 = vst [vmem:[%s153 + $0x110] sm:%s145] %v222
                %v224 = vld [vmem:[%s152 + $0x1e0] sm:%s145]
                %225 = vst [vmem:[%s153 + $0x118] sm:%s145] %v224
                %v226 = vld [vmem:[%s152 + $0x1e8] sm:%s145]
                %227 = vst [vmem:[%s153 + $0x120] sm:%s145] %v226
                %v228 = vld [vmem:[%s152 + $0x1f0] sm:%s145]
                %229 = vst [vmem:[%s153 + $0x128] sm:%s145] %v228
                %v230 = vld [vmem:[%s152 + $0x1f8] sm:%s145]
                %231 = vst [vmem:[%s153 + $0x130] sm:%s145] %v230
                %v232 = vld [vmem:[%s152 + $0x200] sm:%s145]
                %233 = vst [vmem:[%s153 + $0x138] sm:%s145] %v232
                %v234 = vld [vmem:[%s152 + $0x208] sm:%s145]
                %235 = vst [vmem:[%s153 + $0x140] sm:%s145] %v234
                %v236 = vld [vmem:[%s152 + $0x210] sm:%s145]
                %237 = vst [vmem:[%s153 + $0x148] sm:%s145] %v236
                %v238 = vld [vmem:[%s152 + $0x218] sm:%s145]
                %239 = vst [vmem:[%s153 + $0x150] sm:%s145] %v238
                %v240 = vld [vmem:[%s152 + $0x220] sm:%s145]
                %241 = vst [vmem:[%s153 + $0x158] sm:%s145] %v240
                %v242 = vld [vmem:[%s152 + $0x228] sm:%s145]
                %243 = vst [vmem:[%s153 + $0x160] sm:%s145] %v242
                %v244 = vld [vmem:[%s152 + $0x230] sm:%s145]
                %245 = vst [vmem:[%s153 + $0x168] sm:%s145] %v244
                %v246 = vld [vmem:[%s152 + $0x238] sm:%s145]
                %247 = vst [vmem:[%s153 + $0x170] sm:%s145] %v246
                %v248 = vld [vmem:[%s152 + $0x240] sm:%s145]
                %249 = vst [vmem:[%s153 + $0x178] sm:%s145] %v248
                %v250 = vld [vmem:[%s152 + $0x248] sm:%s145]
                %251 = vst [vmem:[%s153 + $0x180] sm:%s145] %v250
                %v252 = vld [vmem:[%s152 + $0x250] sm:%s145]
                %253 = vst [vmem:[%s153 + $0x188] sm:%s145] %v252
                %v254 = vld [vmem:[%s152 + $0x320] sm:%s145]
                %255 = vst [vmem:[%s153 + $0x190] sm:%s145] %v254
                %v256 = vld [vmem:[%s152 + $0x328] sm:%s145]
                %257 = vst [vmem:[%s153 + $0x198] sm:%s145] %v256
                %v258 = vld [vmem:[%s152 + $0x330] sm:%s145]
                %259 = vst [vmem:[%s153 + $0x1a0] sm:%s145] %v258
                %v260 = vld [vmem:[%s152 + $0x338] sm:%s145]
                %261 = vst [vmem:[%s153 + $0x1a8] sm:%s145] %v260
                %v262 = vld [vmem:[%s152 + $0x340] sm:%s145]
                %263 = vst [vmem:[%s153 + $0x1b0] sm:%s145] %v262
                %v264 = vld [vmem:[%s152 + $0x348] sm:%s145]
                %265 = vst [vmem:[%s153 + $0x1b8] sm:%s145] %v264
                %v266 = vld [vmem:[%s152 + $0x350] sm:%s145]
                %267 = vst [vmem:[%s153 + $0x1c0] sm:%s145] %v266
                %v268 = vld [vmem:[%s152 + $0x358] sm:%s145]
                %269 = vst [vmem:[%s153 + $0x1c8] sm:%s145] %v268
                %v270 = vld [vmem:[%s152 + $0x360] sm:%s145]
                %271 = vst [vmem:[%s153 + $0x1d0] sm:%s145] %v270
                %v272 = vld [vmem:[%s152 + $0x368] sm:%s145]
                %273 = vst [vmem:[%s153 + $0x1d8] sm:%s145] %v272
                %v274 = vld [vmem:[%s152 + $0x370] sm:%s145]
                %275 = vst [vmem:[%s153 + $0x1e0] sm:%s145] %v274
                %v276 = vld [vmem:[%s152 + $0x378] sm:%s145]
                %277 = vst [vmem:[%s153 + $0x1e8] sm:%s145] %v276
                %v278 = vld [vmem:[%s152 + $0x380] sm:%s145]
                %279 = vst [vmem:[%s153 + $0x1f0] sm:%s145] %v278
                %v280 = vld [vmem:[%s152 + $0x388] sm:%s145]
                %281 = vst [vmem:[%s153 + $0x1f8] sm:%s145] %v280
                %v282 = vld [vmem:[%s152 + $0x390] sm:%s145]
                %283 = vst [vmem:[%s153 + $0x200] sm:%s145] %v282
                %v284 = vld [vmem:[%s152 + $0x398] sm:%s145]
                %285 = vst [vmem:[%s153 + $0x208] sm:%s145] %v284
                %v286 = vld [vmem:[%s152 + $0x3a0] sm:%s145]
                %287 = vst [vmem:[%s153 + $0x210] sm:%s145] %v286
                %v288 = vld [vmem:[%s152 + $0x3a8] sm:%s145]
                %289 = vst [vmem:[%s153 + $0x218] sm:%s145] %v288
                %v290 = vld [vmem:[%s152 + $0x3b0] sm:%s145]
                %291 = vst [vmem:[%s153 + $0x220] sm:%s145] %v290
                %v292 = vld [vmem:[%s152 + $0x3b8] sm:%s145]
                %293 = vst [vmem:[%s153 + $0x228] sm:%s145] %v292
                %v294 = vld [vmem:[%s152 + $0x3c0] sm:%s145]
                %295 = vst [vmem:[%s153 + $0x230] sm:%s145] %v294
                %v296 = vld [vmem:[%s152 + $0x3c8] sm:%s145]
                %297 = vst [vmem:[%s153 + $0x238] sm:%s145] %v296
                %v298 = vld [vmem:[%s152 + $0x3d0] sm:%s145]
                %299 = vst [vmem:[%s153 + $0x240] sm:%s145] %v298
                %v300 = vld [vmem:[%s152 + $0x3d8] sm:%s145]
                %301 = vst [vmem:[%s153 + $0x248] sm:%s145] %v300
                %v302 = vld [vmem:[%s152 + $0x3e0] sm:%s145]
                %303 = vst [vmem:[%s153 + $0x250] sm:%s145] %v302
                %v304 = vld [vmem:[%s152 + $0x4b0] sm:%s145]
                %305 = vst [vmem:[%s153 + $0x258] sm:%s145] %v304
                %v306 = vld [vmem:[%s152 + $0x4b8] sm:%s145]
                %307 = vst [vmem:[%s153 + $0x260] sm:%s145] %v306
                %v308 = vld [vmem:[%s152 + $0x4c0] sm:%s145]
                %309 = vst [vmem:[%s153 + $0x268] sm:%s145] %v308
                %v310 = vld [vmem:[%s152 + $0x4c8] sm:%s145]
                %311 = vst [vmem:[%s153 + $0x270] sm:%s145] %v310
                %v312 = vld [vmem:[%s152 + $0x4d0] sm:%s145]
                %313 = vst [vmem:[%s153 + $0x278] sm:%s145] %v312
                %v314 = vld [vmem:[%s152 + $0x4d8] sm:%s145]
                %315 = vst [vmem:[%s153 + $0x280] sm:%s145] %v314
                %v316 = vld [vmem:[%s152 + $0x4e0] sm:%s145]
                %317 = vst [vmem:[%s153 + $0x288] sm:%s145] %v316
                %v318 = vld [vmem:[%s152 + $0x4e8] sm:%s145]
                %319 = vst [vmem:[%s153 + $0x290] sm:%s145] %v318
                %v320 = vld [vmem:[%s152 + $0x4f0] sm:%s145]
                %321 = vst [vmem:[%s153 + $0x298] sm:%s145] %v320
                %v322 = vld [vmem:[%s152 + $0x4f8] sm:%s145]
                %323 = vst [vmem:[%s153 + $0x2a0] sm:%s145] %v322
                %v324 = vld [vmem:[%s152 + $0x500] sm:%s145]
                %325 = vst [vmem:[%s153 + $0x2a8] sm:%s145] %v324
                %v326 = vld [vmem:[%s152 + $0x508] sm:%s145]
                %327 = vst [vmem:[%s153 + $0x2b0] sm:%s145] %v326
                %v328 = vld [vmem:[%s152 + $0x510] sm:%s145]
                %329 = vst [vmem:[%s153 + $0x2b8] sm:%s145] %v328
                %v330 = vld [vmem:[%s152 + $0x518] sm:%s145]
                %331 = vst [vmem:[%s153 + $0x2c0] sm:%s145] %v330
                %v332 = vld [vmem:[%s152 + $0x520] sm:%s145]
                %333 = vst [vmem:[%s153 + $0x2c8] sm:%s145] %v332
                %v334 = vld [vmem:[%s152 + $0x528] sm:%s145]
                %335 = vst [vmem:[%s153 + $0x2d0] sm:%s145] %v334
                %v336 = vld [vmem:[%s152 + $0x530] sm:%s145]
                %337 = vst [vmem:[%s153 + $0x2d8] sm:%s145] %v336
                %v338 = vld [vmem:[%s152 + $0x538] sm:%s145]
                %339 = vst [vmem:[%s153 + $0x2e0] sm:%s145] %v338
                %v340 = vld [vmem:[%s152 + $0x540] sm:%s145]
                %341 = vst [vmem:[%s153 + $0x2e8] sm:%s145] %v340
                %v342 = vld [vmem:[%s152 + $0x548] sm:%s145]
                %343 = vst [vmem:[%s153 + $0x2f0] sm:%s145] %v342
                %v344 = vld [vmem:[%s152 + $0x550] sm:%s145]
                %345 = vst [vmem:[%s153 + $0x2f8] sm:%s145] %v344
                %v346 = vld [vmem:[%s152 + $0x558] sm:%s145]
                %347 = vst [vmem:[%s153 + $0x300] sm:%s145] %v346
                %v348 = vld [vmem:[%s152 + $0x560] sm:%s145]
                %349 = vst [vmem:[%s153 + $0x308] sm:%s145] %v348
                %v350 = vld [vmem:[%s152 + $0x568] sm:%s145]
                %351 = vst [vmem:[%s153 + $0x310] sm:%s145] %v350
                %v352 = vld [vmem:[%s152 + $0x570] sm:%s145]
                %353 = vst [vmem:[%s153 + $0x318] sm:%s145] %v352
              $region45: #{net_forward.2} parent=39 // loop_footer
                %s151 = sadd.s32 1, %s147
              $region46: #{net_forward.2} parent=39 // loop_footer_branch
                %146 = sbr.rel target = $region42
              $region47: #{net_forward.2} parent=39 // loop_exit
                _
            $region40: #{net_forward.2} parent=31 // pred_fallthru
              _
          $region32: #{net_forward.2} parent=27 // pred_fallthru
            _
          %566 = vnop
        $region28: #{net_forward.2} parent=23 // pred_fallthru
          _
      $region24: #{net_forward.2} parent=5 // pred_fallthru
        _
      %p567 = scmp.le.s32.totalorder 1, %s9
      %p568 = scmp.lt.s32.totalorder %s9, 3
      %p569 = pnand %p567, %p568
      %p570 = pneg %p569
      // Predicated region
      $region63: #{net_forward.2} parent=5 // pred_check
        _
      $region64: #{net_forward.2} parent=5 // pred_check_branch
        %572 = sbr.rel (%p569) target = $region66
      $region65: #{net_forward.2} parent=5 // pred_region
        %s573 = ssub.s32 %s9, 1
        %s574 = sand.u32 %s22, 1
        %s575 = sand.u32 %s22, 1
        %s576 = smul.addr %s575, 800
        %s577 = scalar_lea.vmem [#allocation2], %s576
        // Predicated region
        $region67: #{net_forward.2} parent=65 // pred_check
          %p578 = pneg %p35
        $region68: #{net_forward.2} parent=65 // pred_check_branch
          %580 = sbr.rel (%p578) target = $region70
        $region69: #{net_forward.2} parent=65 // pred_region
          _
        $region70: #{net_forward.2} parent=65 // pred_fallthru
          _
        %s581 = sand.u32 %s22, 1
        %s582 = sand.u32 %s22, 1
        %s583 = smul.addr %s582, 800
        %s584 = scalar_lea.vmem [#allocation2], %s583
        %p585 = pneg %p35
        %p586 = pneg %p32
        %p587 = pneg %p56
        %p588 = pneg %p53
        %p589 = pneg %p77
        %p590 = pneg %p74
        %p591 = pneg %p103
        %p592 = pneg %p100
        %s593 = smul.u32 25, %s14
        %p594 = scmp.lt.s32.totalorder %s593, 49
        %s595 = scalar_select %p594, %s593, 49
        %s596 = smul.addr %s595, 8
        %s597 = scalar_lea.vmem %s3, %s596
        %s598 = smul.u32 25, %s14
        %s599 = smul.u32 25, %s14
        %p600 = scmp.lt.s32.totalorder %s599, 49
        %s601 = scalar_select %p600, %s599, 49
        %s602 = smul.addr %s601, 8
        %s603 = scalar_lea.vmem %s3, %s602
        %s604 = smul.u32 25, %s14
        %v605 = vld [vmem:[%s577] sm:$0xff]
        %v606 = vld [vmem:[%s577 + $0x8] sm:$0xff]
        %v607 = vld [vmem:[%s577 + $0x10] sm:$0xff]
        %v608 = vld [vmem:[%s577 + $0x18] sm:$0xff]
        %v609 = vld [vmem:[%s577 + $0x20] sm:$0xff]
        %v610 = vld [vmem:[%s577 + $0x28] sm:$0xff]
        %v611 = vld [vmem:[%s577 + $0x30] sm:$0xff]
        %v612 = vld [vmem:[%s577 + $0x38] sm:$0xff]
        %v613 = vld [vmem:[%s577 + $0x40] sm:$0xff]
        %v614 = vld [vmem:[%s577 + $0x48] sm:$0xff]
        %v615 = vld [vmem:[%s577 + $0x50] sm:$0xff]
        %v616 = vld [vmem:[%s577 + $0x58] sm:$0xff]
        %v617 = vld [vmem:[%s577 + $0x60] sm:$0xff]
        %v618 = vld [vmem:[%s577 + $0x68] sm:$0xff]
        %v619 = vld [vmem:[%s577 + $0x70] sm:$0xff]
        %v620 = vld [vmem:[%s577 + $0x78] sm:$0xff]
        %v621 = vld [vmem:[%s577 + $0x80] sm:$0xff]
        %v622 = vld [vmem:[%s577 + $0x88] sm:$0xff]
        %v623 = vld [vmem:[%s577 + $0x90] sm:$0xff]
        %v624 = vld [vmem:[%s577 + $0x98] sm:$0xff]
        %v625 = vld [vmem:[%s577 + $0xa0] sm:$0xff]
        %v626 = vld [vmem:[%s577 + $0xa8] sm:$0xff]
        %v627 = vld [vmem:[%s577 + $0xb0] sm:$0xff]
        %v628 = vld [vmem:[%s577 + $0xb8] sm:$0xff]
        %v629 = vld [vmem:[%s577 + $0xc0] sm:$0xff]
        %v630 = vld [vmem:[%s577 + $0xc8] sm:$0xff]
        %v631 = vld [vmem:[%s577 + $0xd0] sm:$0xff]
        %v632 = vld [vmem:[%s577 + $0xd8] sm:$0xff]
        %v633 = vld [vmem:[%s577 + $0xe0] sm:$0xff]
        %v634 = vld [vmem:[%s577 + $0xe8] sm:$0xff]
        %v635 = vld [vmem:[%s577 + $0xf0] sm:$0xff]
        %v636 = vld [vmem:[%s577 + $0xf8] sm:$0xff]
        %v637 = vld [vmem:[%s577 + $0x100] sm:$0xff]
        %v638 = vld [vmem:[%s577 + $0x108] sm:$0xff]
        %v639 = vld [vmem:[%s577 + $0x110] sm:$0xff]
        %v640 = vld [vmem:[%s577 + $0x118] sm:$0xff]
        %v641 = vld [vmem:[%s577 + $0x120] sm:$0xff]
        %v642 = vld [vmem:[%s577 + $0x128] sm:$0xff]
        %v643 = vld [vmem:[%s577 + $0x130] sm:$0xff]
        %v644 = vld [vmem:[%s577 + $0x138] sm:$0xff]
        %v645 = vld [vmem:[%s577 + $0x140] sm:$0xff]
        %v646 = vld [vmem:[%s577 + $0x148] sm:$0xff]
        %v647 = vld [vmem:[%s577 + $0x150] sm:$0xff]
        %v648 = vld [vmem:[%s577 + $0x158] sm:$0xff]
        %v649 = vld [vmem:[%s577 + $0x160] sm:$0xff]
        %v650 = vld [vmem:[%s577 + $0x168] sm:$0xff]
        %v651 = vld [vmem:[%s577 + $0x170] sm:$0xff]
        %v652 = vld [vmem:[%s577 + $0x178] sm:$0xff]
        %v653 = vld [vmem:[%s577 + $0x180] sm:$0xff]
        %v654 = vld [vmem:[%s577 + $0x188] sm:$0xff]
        %v655 = vld [vmem:[%s577 + $0x190] sm:$0xff]
        %v656 = vld [vmem:[%s577 + $0x198] sm:$0xff]
        %v657 = vld [vmem:[%s577 + $0x1a0] sm:$0xff]
        %v658 = vld [vmem:[%s577 + $0x1a8] sm:$0xff]
        %v659 = vld [vmem:[%s577 + $0x1b0] sm:$0xff]
        %v660 = vld [vmem:[%s577 + $0x1b8] sm:$0xff]
        %v661 = vld [vmem:[%s577 + $0x1c0] sm:$0xff]
        %v662 = vld [vmem:[%s577 + $0x1c8] sm:$0xff]
        %v663 = vld [vmem:[%s577 + $0x1d0] sm:$0xff]
        %v664 = vld [vmem:[%s577 + $0x1d8] sm:$0xff]
        %v665 = vld [vmem:[%s577 + $0x1e0] sm:$0xff]
        %v666 = vld [vmem:[%s577 + $0x1e8] sm:$0xff]
        %v667 = vld [vmem:[%s577 + $0x1f0] sm:$0xff]
        %v668 = vld [vmem:[%s577 + $0x1f8] sm:$0xff]
        %v669 = vld [vmem:[%s577 + $0x200] sm:$0xff]
        %v670 = vld [vmem:[%s577 + $0x208] sm:$0xff]
        %v671 = vld [vmem:[%s577 + $0x210] sm:$0xff]
        %v672 = vld [vmem:[%s577 + $0x218] sm:$0xff]
        %v673 = vld [vmem:[%s577 + $0x220] sm:$0xff]
        %v674 = vld [vmem:[%s577 + $0x228] sm:$0xff]
        %v675 = vld [vmem:[%s577 + $0x230] sm:$0xff]
        %v676 = vld [vmem:[%s577 + $0x238] sm:$0xff]
        %v677 = vld [vmem:[%s577 + $0x240] sm:$0xff]
        %v678 = vld [vmem:[%s577 + $0x248] sm:$0xff]
        %v679 = vld [vmem:[%s577 + $0x250] sm:$0xff]
        %v680 = vld [vmem:[%s577 + $0x258] sm:$0xff]
        %v681 = vld [vmem:[%s577 + $0x260] sm:$0xff]
        %v682 = vld [vmem:[%s577 + $0x268] sm:$0xff]
        %v683 = vld [vmem:[%s577 + $0x270] sm:$0xff]
        %v684 = vld [vmem:[%s577 + $0x278] sm:$0xff]
        %v685 = vld [vmem:[%s577 + $0x280] sm:$0xff]
        %v686 = vld [vmem:[%s577 + $0x288] sm:$0xff]
        %v687 = vld [vmem:[%s577 + $0x290] sm:$0xff]
        %v688 = vld [vmem:[%s577 + $0x298] sm:$0xff]
        %v689 = vld [vmem:[%s577 + $0x2a0] sm:$0xff]
        %v690 = vld [vmem:[%s577 + $0x2a8] sm:$0xff]
        %v691 = vld [vmem:[%s577 + $0x2b0] sm:$0xff]
        %v692 = vld [vmem:[%s577 + $0x2b8] sm:$0xff]
        %v693 = vld [vmem:[%s577 + $0x2c0] sm:$0xff]
        %v694 = vld [vmem:[%s577 + $0x2c8] sm:$0xff]
        %v695 = vld [vmem:[%s577 + $0x2d0] sm:$0xff]
        %v696 = vld [vmem:[%s577 + $0x2d8] sm:$0xff]
        %v697 = vld [vmem:[%s577 + $0x2e0] sm:$0xff]
        %v698 = vld [vmem:[%s577 + $0x2e8] sm:$0xff]
        %v699 = vld [vmem:[%s577 + $0x2f0] sm:$0xff]
        %v700 = vld [vmem:[%s577 + $0x2f8] sm:$0xff]
        %v701 = vld [vmem:[%s577 + $0x300] sm:$0xff]
        %v702 = vld [vmem:[%s577 + $0x308] sm:$0xff]
        %v703 = vld [vmem:[%s577 + $0x310] sm:$0xff]
        %v704 = vld [vmem:[%s577 + $0x318] sm:$0xff]
        %v705 = vld [vmem:[%s1] sm:$0xff]
        %v706 = vld [vmem:[%s1 + $0x8] sm:$0xff]
        %v707 = vld [vmem:[%s1 + $0x10] sm:$0xff]
        %v708 = vld [vmem:[%s1 + $0x18] sm:$0xff]
        %vm709 = vcmask 261120
        %v711 = vsel %vm709, %v605, 0
        %v714 = vsel %vm709, %v606, 0
        %v717 = vsel %vm709, %v607, 0
        %v720 = vsel %vm709, %v608, 0
        %v723 = vsel %vm709, %v609, 0
        %v726 = vsel %vm709, %v610, 0
        %v729 = vsel %vm709, %v611, 0
        %v732 = vsel %vm709, %v612, 0
        %v735 = vsel %vm709, %v613, 0
        %v738 = vsel %vm709, %v614, 0
        %v741 = vsel %vm709, %v615, 0
        %v744 = vsel %vm709, %v616, 0
        %v747 = vsel %vm709, %v617, 0
        %v750 = vsel %vm709, %v618, 0
        %v753 = vsel %vm709, %v619, 0
        %v756 = vsel %vm709, %v620, 0
        %v759 = vsel %vm709, %v621, 0
        %v762 = vsel %vm709, %v622, 0
        %v765 = vsel %vm709, %v623, 0
        %v768 = vsel %vm709, %v624, 0
        %v771 = vsel %vm709, %v625, 0
        %v774 = vsel %vm709, %v626, 0
        %v777 = vsel %vm709, %v627, 0
        %v780 = vsel %vm709, %v628, 0
        %v783 = vsel %vm709, %v629, 0
        %v786 = vsel %vm709, %v630, 0
        %v789 = vsel %vm709, %v631, 0
        %v792 = vsel %vm709, %v632, 0
        %v795 = vsel %vm709, %v633, 0
        %v798 = vsel %vm709, %v634, 0
        %v801 = vsel %vm709, %v635, 0
        %v804 = vsel %vm709, %v636, 0
        %v807 = vsel %vm709, %v637, 0
        %v810 = vsel %vm709, %v638, 0
        %v813 = vsel %vm709, %v639, 0
        %v816 = vsel %vm709, %v640, 0
        %v819 = vsel %vm709, %v641, 0
        %v822 = vsel %vm709, %v642, 0
        %v825 = vsel %vm709, %v643, 0
        %v828 = vsel %vm709, %v644, 0
        %v831 = vsel %vm709, %v645, 0
        %v834 = vsel %vm709, %v646, 0
        %v837 = vsel %vm709, %v647, 0
        %v840 = vsel %vm709, %v648, 0
        %v843 = vsel %vm709, %v649, 0
        %v846 = vsel %vm709, %v650, 0
        %v849 = vsel %vm709, %v651, 0
        %v852 = vsel %vm709, %v652, 0
        %v855 = vsel %vm709, %v653, 0
        %v858 = vsel %vm709, %v654, 0
        %v861 = vsel %vm709, %v655, 0
        %v864 = vsel %vm709, %v656, 0
        %v867 = vsel %vm709, %v657, 0
        %v870 = vsel %vm709, %v658, 0
        %v873 = vsel %vm709, %v659, 0
        %v876 = vsel %vm709, %v660, 0
        %v879 = vsel %vm709, %v661, 0
        %v882 = vsel %vm709, %v662, 0
        %v885 = vsel %vm709, %v663, 0
        %v888 = vsel %vm709, %v664, 0
        %v891 = vsel %vm709, %v665, 0
        %v894 = vsel %vm709, %v666, 0
        %v897 = vsel %vm709, %v667, 0
        %v900 = vsel %vm709, %v668, 0
        %v903 = vsel %vm709, %v669, 0
        %v906 = vsel %vm709, %v670, 0
        %v909 = vsel %vm709, %v671, 0
        %v912 = vsel %vm709, %v672, 0
        %v915 = vsel %vm709, %v673, 0
        %v918 = vsel %vm709, %v674, 0
        %v921 = vsel %vm709, %v675, 0
        %v924 = vsel %vm709, %v676, 0
        %v927 = vsel %vm709, %v677, 0
        %v930 = vsel %vm709, %v678, 0
        %v933 = vsel %vm709, %v679, 0
        %v936 = vsel %vm709, %v680, 0
        %v939 = vsel %vm709, %v681, 0
        %v942 = vsel %vm709, %v682, 0
        %v945 = vsel %vm709, %v683, 0
        %v948 = vsel %vm709, %v684, 0
        %v951 = vsel %vm709, %v685, 0
        %v954 = vsel %vm709, %v686, 0
        %v957 = vsel %vm709, %v687, 0
        %v960 = vsel %vm709, %v688, 0
        %v963 = vsel %vm709, %v689, 0
        %v966 = vsel %vm709, %v690, 0
        %v969 = vsel %vm709, %v691, 0
        %v972 = vsel %vm709, %v692, 0
        %v975 = vsel %vm709, %v693, 0
        %v978 = vsel %vm709, %v694, 0
        %v981 = vsel %vm709, %v695, 0
        %v984 = vsel %vm709, %v696, 0
        %v987 = vsel %vm709, %v697, 0
        %v990 = vsel %vm709, %v698, 0
        %v993 = vsel %vm709, %v699, 0
        %v996 = vsel %vm709, %v700, 0
        %v999 = vsel %vm709, %v701, 0
        %v1002 = vsel %vm709, %v702, 0
        %v1005 = vsel %vm709, %v703, 0
        %v1008 = vsel %vm709, %v704, 0
        %1010 = vmatprep.subr.mxu0 0.0
        %1011 = vmatpush1.msra.mxu0 0.0
        %1012 = vmatprep.subr.mxu0 0.0
        %1013 = vmatpush1.msra.mxu0 0.0
        %1014 = vmatprep.subr.mxu0 0.0
        %1015 = vmatpush1.msra.mxu0 0.0
        %1016 = vmatprep.subr.mxu0 0.0
        %1017 = vmatpush1.msra.mxu0 0.0
        %1018 = vmatprep.subr.mxu0 0.0
        %1019 = vmatpush1.msra.mxu0 0.0
        %1020 = vmatprep.subr.mxu0 0.0
        %1021 = vmatpush1.msra.mxu0 0.0
        %1022 = vmatprep.subr.mxu0 0.0
        %1023 = vmatpush1.msra.mxu0 0.0
        %1024 = vmatprep.subr.mxu0 0.0
        %1025 = vmatpush1.msra.mxu0 0.0
        %1026 = vmatprep.subr.mxu0 0.0
        %1027 = vmatpush1.msra.mxu0 0.0
        %1028 = vmatprep.subr.mxu0 0.0
        %1029 = vmatpush1.msra.mxu0 0.0
        %1030 = vmatprep.subr.mxu0 0.0
        %1031 = vmatpush1.msra.mxu0 0.0
        %1032 = vmatprep.subr.mxu0 0.0
        %1033 = vmatpush1.msra.mxu0 0.0
        %1034 = vmatprep.subr.mxu0 0.0
        %1035 = vmatpush1.msra.mxu0 %v708
        %1036 = vmatprep.subr.mxu0 0.0
        %1037 = vmatpush1.msra.mxu0 %v707
        %1038 = vmatprep.subr.mxu0 0.0
        %1039 = vmatpush1.msra.mxu0 %v706
        %1040 = vmatprep.subr.mxu0 0.0
        %1041 = vmatpush1.msra.mxu0 %v705
        %1042 = vmatprep.subr.mxu0 0.0
        %1043 = vmatpush2.msra.mxu0 0.0
        %1044 = vmatprep.subr.mxu0 0.0
        %1045 = vmatpush2.msra.mxu0 0.0
        %1046 = vmatprep.subr.mxu0 0.0
        %1047 = vmatpush2.msra.mxu0 0.0
        %1048 = vmatprep.subr.mxu0 0.0
        %1049 = vmatpush2.msra.mxu0 0.0
        %1050 = vmatprep.subr.mxu0 0.0
        %1051 = vmatpush2.msra.mxu0 0.0
        %1052 = vmatprep.subr.mxu0 0.0
        %1053 = vmatpush2.msra.mxu0 0.0
        %1054 = vmatprep.subr.mxu0 0.0
        %1055 = vmatpush2.msra.mxu0 0.0
        %1056 = vmatprep.subr.mxu0 0.0
        %1057 = vmatpush2.msra.mxu0 0.0
        %1058 = vmatprep.subr.mxu0 0.0
        %1059 = vmatpush2.msra.mxu0 0.0
        %1060 = vmatprep.subr.mxu0 0.0
        %1061 = vmatpush2.msra.mxu0 0.0
        %1062 = vmatprep.subr.mxu0 0.0
        %1063 = vmatpush2.msra.mxu0 0.0
        %1064 = vmatprep.subr.mxu0 0.0
        %1065 = vmatpush2.msra.mxu0 0.0
        %1066 = vmatprep.subr.mxu0 0.0
        %1067 = vmatpush2.msra.mxu0 0.0
        %1068 = vmatprep.subr.mxu0 0.0
        %1069 = vmatpush2.msra.mxu0 0.0
        %1070 = vmatprep.subr.mxu0 0.0
        %1071 = vmatpush2.msra.mxu0 0.0
        %1072 = vmatprep.subr.mxu0 0.0
        %1073 = vmatpush2.msra.mxu0 0.0
        %1074 = vmatprep.mubr.f32.mxu0 0.0
        %1075 = vmatmul.mubr.f32.gmra.mxu0 %v711
        %v1076 = vpop.f32.mrf.mxu0
        %v1077 = vadd.f32 0.0, %v1076
        %v1078 = vpop.f32.mrf.mxu0
        %1079 = vmatprep.mubr.f32.mxu0 0.0
        %1080 = vmatmul.mubr.f32.gmra.mxu0 %v714
        %v1081 = vpop.f32.mrf.mxu0
        %v1082 = vadd.f32 0.0, %v1081
        %v1083 = vpop.f32.mrf.mxu0
        %1084 = vmatprep.mubr.f32.mxu0 0.0
        %1085 = vmatmul.mubr.f32.gmra.mxu0 %v717
        %v1086 = vpop.f32.mrf.mxu0
        %v1087 = vadd.f32 0.0, %v1086
        %v1088 = vpop.f32.mrf.mxu0
        %1089 = vmatprep.mubr.f32.mxu0 0.0
        %1090 = vmatmul.mubr.f32.gmra.mxu0 %v720
        %v1091 = vpop.f32.mrf.mxu0
        %v1092 = vadd.f32 0.0, %v1091
        %v1093 = vpop.f32.mrf.mxu0
        %1094 = vmatprep.mubr.f32.mxu0 0.0
        %1095 = vmatmul.mubr.f32.gmra.mxu0 %v723
        %v1096 = vpop.f32.mrf.mxu0
        %v1097 = vadd.f32 0.0, %v1096
        %v1098 = vpop.f32.mrf.mxu0
        %1099 = vmatprep.mubr.f32.mxu0 0.0
        %1100 = vmatmul.mubr.f32.gmra.mxu0 %v726
        %v1101 = vpop.f32.mrf.mxu0
        %v1102 = vadd.f32 0.0, %v1101
        %v1103 = vpop.f32.mrf.mxu0
        %1104 = vmatprep.mubr.f32.mxu0 0.0
        %1105 = vmatmul.mubr.f32.gmra.mxu0 %v729
        %v1106 = vpop.f32.mrf.mxu0
        %v1107 = vadd.f32 0.0, %v1106
        %v1108 = vpop.f32.mrf.mxu0
        %1109 = vmatprep.mubr.f32.mxu0 0.0
        %1110 = vmatmul.mubr.f32.gmra.mxu0 %v732
        %v1111 = vpop.f32.mrf.mxu0
        %v1112 = vadd.f32 0.0, %v1111
        %v1113 = vpop.f32.mrf.mxu0
        %1114 = vmatprep.mubr.f32.mxu0 0.0
        %1115 = vmatmul.mubr.f32.gmra.mxu0 %v735
        %v1116 = vpop.f32.mrf.mxu0
        %v1117 = vadd.f32 0.0, %v1116
        %v1118 = vpop.f32.mrf.mxu0
        %1119 = vmatprep.mubr.f32.mxu0 0.0
        %1120 = vmatmul.mubr.f32.gmra.mxu0 %v738
        %v1121 = vpop.f32.mrf.mxu0
        %v1122 = vadd.f32 0.0, %v1121
        %v1123 = vpop.f32.mrf.mxu0
        %1124 = vmatprep.mubr.f32.mxu0 0.0
        %1125 = vmatmul.mubr.f32.gmra.mxu0 %v741
        %v1126 = vpop.f32.mrf.mxu0
        %v1127 = vadd.f32 0.0, %v1126
        %v1128 = vpop.f32.mrf.mxu0
        %1129 = vmatprep.mubr.f32.mxu0 0.0
        %1130 = vmatmul.mubr.f32.gmra.mxu0 %v744
        %v1131 = vpop.f32.mrf.mxu0
        %v1132 = vadd.f32 0.0, %v1131
        %v1133 = vpop.f32.mrf.mxu0
        %1134 = vmatprep.mubr.f32.mxu0 0.0
        %1135 = vmatmul.mubr.f32.gmra.mxu0 %v747
        %v1136 = vpop.f32.mrf.mxu0
        %v1137 = vadd.f32 0.0, %v1136
        %v1138 = vpop.f32.mrf.mxu0
        %1139 = vmatprep.mubr.f32.mxu0 0.0
        %1140 = vmatmul.mubr.f32.gmra.mxu0 %v750
        %v1141 = vpop.f32.mrf.mxu0
        %v1142 = vadd.f32 0.0, %v1141
        %v1143 = vpop.f32.mrf.mxu0
        %1144 = vmatprep.mubr.f32.mxu0 0.0
        %1145 = vmatmul.mubr.f32.gmra.mxu0 %v753
        %v1146 = vpop.f32.mrf.mxu0
        %v1147 = vadd.f32 0.0, %v1146
        %v1148 = vpop.f32.mrf.mxu0
        %1149 = vmatprep.mubr.f32.mxu0 0.0
        %1150 = vmatmul.mubr.f32.gmra.mxu0 %v756
        %v1151 = vpop.f32.mrf.mxu0
        %v1152 = vadd.f32 0.0, %v1151
        %v1153 = vpop.f32.mrf.mxu0
        %1154 = vmatprep.mubr.f32.mxu0 0.0
        %1155 = vmatmul.mubr.f32.gmra.mxu0 %v759
        %v1156 = vpop.f32.mrf.mxu0
        %v1157 = vadd.f32 0.0, %v1156
        %v1158 = vpop.f32.mrf.mxu0
        %1159 = vmatprep.mubr.f32.mxu0 0.0
        %1160 = vmatmul.mubr.f32.gmra.mxu0 %v762
        %v1161 = vpop.f32.mrf.mxu0
        %v1162 = vadd.f32 0.0, %v1161
        %v1163 = vpop.f32.mrf.mxu0
        %1164 = vmatprep.mubr.f32.mxu0 0.0
        %1165 = vmatmul.mubr.f32.gmra.mxu0 %v765
        %v1166 = vpop.f32.mrf.mxu0
        %v1167 = vadd.f32 0.0, %v1166
        %v1168 = vpop.f32.mrf.mxu0
        %1169 = vmatprep.mubr.f32.mxu0 0.0
        %1170 = vmatmul.mubr.f32.gmra.mxu0 %v768
        %v1171 = vpop.f32.mrf.mxu0
        %v1172 = vadd.f32 0.0, %v1171
        %v1173 = vpop.f32.mrf.mxu0
        %1174 = vmatprep.mubr.f32.mxu0 0.0
        %1175 = vmatmul.mubr.f32.gmra.mxu0 %v771
        %v1176 = vpop.f32.mrf.mxu0
        %v1177 = vadd.f32 0.0, %v1176
        %v1178 = vpop.f32.mrf.mxu0
        %1179 = vmatprep.mubr.f32.mxu0 0.0
        %1180 = vmatmul.mubr.f32.gmra.mxu0 %v774
        %v1181 = vpop.f32.mrf.mxu0
        %v1182 = vadd.f32 0.0, %v1181
        %v1183 = vpop.f32.mrf.mxu0
        %1184 = vmatprep.mubr.f32.mxu0 0.0
        %1185 = vmatmul.mubr.f32.gmra.mxu0 %v777
        %v1186 = vpop.f32.mrf.mxu0
        %v1187 = vadd.f32 0.0, %v1186
        %v1188 = vpop.f32.mrf.mxu0
        %1189 = vmatprep.mubr.f32.mxu0 0.0
        %1190 = vmatmul.mubr.f32.gmra.mxu0 %v780
        %v1191 = vpop.f32.mrf.mxu0
        %v1192 = vadd.f32 0.0, %v1191
        %v1193 = vpop.f32.mrf.mxu0
        %1194 = vmatprep.mubr.f32.mxu0 0.0
        %1195 = vmatmul.mubr.f32.gmra.mxu0 %v783
        %v1196 = vpop.f32.mrf.mxu0
        %v1197 = vadd.f32 0.0, %v1196
        %v1198 = vpop.f32.mrf.mxu0
        %1199 = vmatprep.mubr.f32.mxu0 0.0
        %1200 = vmatmul.mubr.f32.gmra.mxu0 %v786
        %v1201 = vpop.f32.mrf.mxu0
        %v1202 = vadd.f32 0.0, %v1201
        %v1203 = vpop.f32.mrf.mxu0
        %1204 = vmatprep.mubr.f32.mxu0 0.0
        %1205 = vmatmul.mubr.f32.gmra.mxu0 %v789
        %v1206 = vpop.f32.mrf.mxu0
        %v1207 = vadd.f32 0.0, %v1206
        %v1208 = vpop.f32.mrf.mxu0
        %1209 = vmatprep.mubr.f32.mxu0 0.0
        %1210 = vmatmul.mubr.f32.gmra.mxu0 %v792
        %v1211 = vpop.f32.mrf.mxu0
        %v1212 = vadd.f32 0.0, %v1211
        %v1213 = vpop.f32.mrf.mxu0
        %1214 = vmatprep.mubr.f32.mxu0 0.0
        %1215 = vmatmul.mubr.f32.gmra.mxu0 %v795
        %v1216 = vpop.f32.mrf.mxu0
        %v1217 = vadd.f32 0.0, %v1216
        %v1218 = vpop.f32.mrf.mxu0
        %1219 = vmatprep.mubr.f32.mxu0 0.0
        %1220 = vmatmul.mubr.f32.gmra.mxu0 %v798
        %v1221 = vpop.f32.mrf.mxu0
        %v1222 = vadd.f32 0.0, %v1221
        %v1223 = vpop.f32.mrf.mxu0
        %1224 = vmatprep.mubr.f32.mxu0 0.0
        %1225 = vmatmul.mubr.f32.gmra.mxu0 %v801
        %v1226 = vpop.f32.mrf.mxu0
        %v1227 = vadd.f32 0.0, %v1226
        %v1228 = vpop.f32.mrf.mxu0
        %1229 = vmatprep.mubr.f32.mxu0 0.0
        %1230 = vmatmul.mubr.f32.gmra.mxu0 %v804
        %v1231 = vpop.f32.mrf.mxu0
        %v1232 = vadd.f32 0.0, %v1231
        %v1233 = vpop.f32.mrf.mxu0
        %1234 = vmatprep.mubr.f32.mxu0 0.0
        %1235 = vmatmul.mubr.f32.gmra.mxu0 %v807
        %v1236 = vpop.f32.mrf.mxu0
        %v1237 = vadd.f32 0.0, %v1236
        %v1238 = vpop.f32.mrf.mxu0
        %1239 = vmatprep.mubr.f32.mxu0 0.0
        %1240 = vmatmul.mubr.f32.gmra.mxu0 %v810
        %v1241 = vpop.f32.mrf.mxu0
        %v1242 = vadd.f32 0.0, %v1241
        %v1243 = vpop.f32.mrf.mxu0
        %1244 = vmatprep.mubr.f32.mxu0 0.0
        %1245 = vmatmul.mubr.f32.gmra.mxu0 %v813
        %v1246 = vpop.f32.mrf.mxu0
        %v1247 = vadd.f32 0.0, %v1246
        %v1248 = vpop.f32.mrf.mxu0
        %1249 = vmatprep.mubr.f32.mxu0 0.0
        %1250 = vmatmul.mubr.f32.gmra.mxu0 %v816
        %v1251 = vpop.f32.mrf.mxu0
        %v1252 = vadd.f32 0.0, %v1251
        %v1253 = vpop.f32.mrf.mxu0
        %1254 = vmatprep.mubr.f32.mxu0 0.0
        %1255 = vmatmul.mubr.f32.gmra.mxu0 %v819
        %v1256 = vpop.f32.mrf.mxu0
        %v1257 = vadd.f32 0.0, %v1256
        %v1258 = vpop.f32.mrf.mxu0
        %1259 = vmatprep.mubr.f32.mxu0 0.0
        %1260 = vmatmul.mubr.f32.gmra.mxu0 %v822
        %v1261 = vpop.f32.mrf.mxu0
        %v1262 = vadd.f32 0.0, %v1261
        %v1263 = vpop.f32.mrf.mxu0
        %1264 = vmatprep.mubr.f32.mxu0 0.0
        %1265 = vmatmul.mubr.f32.gmra.mxu0 %v825
        %v1266 = vpop.f32.mrf.mxu0
        %v1267 = vadd.f32 0.0, %v1266
        %v1268 = vpop.f32.mrf.mxu0
        %1269 = vmatprep.mubr.f32.mxu0 0.0
        %1270 = vmatmul.mubr.f32.gmra.mxu0 %v828
        %v1271 = vpop.f32.mrf.mxu0
        %v1272 = vadd.f32 0.0, %v1271
        %v1273 = vpop.f32.mrf.mxu0
        %1274 = vmatprep.mubr.f32.mxu0 0.0
        %1275 = vmatmul.mubr.f32.gmra.mxu0 %v831
        %v1276 = vpop.f32.mrf.mxu0
        %v1277 = vadd.f32 0.0, %v1276
        %v1278 = vpop.f32.mrf.mxu0
        %1279 = vmatprep.mubr.f32.mxu0 0.0
        %1280 = vmatmul.mubr.f32.gmra.mxu0 %v834
        %v1281 = vpop.f32.mrf.mxu0
        %v1282 = vadd.f32 0.0, %v1281
        %v1283 = vpop.f32.mrf.mxu0
        %1284 = vmatprep.mubr.f32.mxu0 0.0
        %1285 = vmatmul.mubr.f32.gmra.mxu0 %v837
        %v1286 = vpop.f32.mrf.mxu0
        %v1287 = vadd.f32 0.0, %v1286
        %v1288 = vpop.f32.mrf.mxu0
        %1289 = vmatprep.mubr.f32.mxu0 0.0
        %1290 = vmatmul.mubr.f32.gmra.mxu0 %v840
        %v1291 = vpop.f32.mrf.mxu0
        %v1292 = vadd.f32 0.0, %v1291
        %v1293 = vpop.f32.mrf.mxu0
        %1294 = vmatprep.mubr.f32.mxu0 0.0
        %1295 = vmatmul.mubr.f32.gmra.mxu0 %v843
        %v1296 = vpop.f32.mrf.mxu0
        %v1297 = vadd.f32 0.0, %v1296
        %v1298 = vpop.f32.mrf.mxu0
        %1299 = vmatprep.mubr.f32.mxu0 0.0
        %1300 = vmatmul.mubr.f32.gmra.mxu0 %v846
        %v1301 = vpop.f32.mrf.mxu0
        %v1302 = vadd.f32 0.0, %v1301
        %v1303 = vpop.f32.mrf.mxu0
        %1304 = vmatprep.mubr.f32.mxu0 0.0
        %1305 = vmatmul.mubr.f32.gmra.mxu0 %v849
        %v1306 = vpop.f32.mrf.mxu0
        %v1307 = vadd.f32 0.0, %v1306
        %v1308 = vpop.f32.mrf.mxu0
        %1309 = vmatprep.mubr.f32.mxu0 0.0
        %1310 = vmatmul.mubr.f32.gmra.mxu0 %v852
        %v1311 = vpop.f32.mrf.mxu0
        %v1312 = vadd.f32 0.0, %v1311
        %v1313 = vpop.f32.mrf.mxu0
        %1314 = vmatprep.mubr.f32.mxu0 0.0
        %1315 = vmatmul.mubr.f32.gmra.mxu0 %v855
        %v1316 = vpop.f32.mrf.mxu0
        %v1317 = vadd.f32 0.0, %v1316
        %v1318 = vpop.f32.mrf.mxu0
        %1319 = vmatprep.mubr.f32.mxu0 0.0
        %1320 = vmatmul.mubr.f32.gmra.mxu0 %v858
        %v1321 = vpop.f32.mrf.mxu0
        %v1322 = vadd.f32 0.0, %v1321
        %v1323 = vpop.f32.mrf.mxu0
        %1324 = vmatprep.mubr.f32.mxu0 0.0
        %1325 = vmatmul.mubr.f32.gmra.mxu0 %v861
        %v1326 = vpop.f32.mrf.mxu0
        %v1327 = vadd.f32 0.0, %v1326
        %v1328 = vpop.f32.mrf.mxu0
        %1329 = vmatprep.mubr.f32.mxu0 0.0
        %1330 = vmatmul.mubr.f32.gmra.mxu0 %v864
        %v1331 = vpop.f32.mrf.mxu0
        %v1332 = vadd.f32 0.0, %v1331
        %v1333 = vpop.f32.mrf.mxu0
        %1334 = vmatprep.mubr.f32.mxu0 0.0
        %1335 = vmatmul.mubr.f32.gmra.mxu0 %v867
        %v1336 = vpop.f32.mrf.mxu0
        %v1337 = vadd.f32 0.0, %v1336
        %v1338 = vpop.f32.mrf.mxu0
        %1339 = vmatprep.mubr.f32.mxu0 0.0
        %1340 = vmatmul.mubr.f32.gmra.mxu0 %v870
        %v1341 = vpop.f32.mrf.mxu0
        %v1342 = vadd.f32 0.0, %v1341
        %v1343 = vpop.f32.mrf.mxu0
        %1344 = vmatprep.mubr.f32.mxu0 0.0
        %1345 = vmatmul.mubr.f32.gmra.mxu0 %v873
        %v1346 = vpop.f32.mrf.mxu0
        %v1347 = vadd.f32 0.0, %v1346
        %v1348 = vpop.f32.mrf.mxu0
        %1349 = vmatprep.mubr.f32.mxu0 0.0
        %1350 = vmatmul.mubr.f32.gmra.mxu0 %v876
        %v1351 = vpop.f32.mrf.mxu0
        %v1352 = vadd.f32 0.0, %v1351
        %v1353 = vpop.f32.mrf.mxu0
        %1354 = vmatprep.mubr.f32.mxu0 0.0
        %1355 = vmatmul.mubr.f32.gmra.mxu0 %v879
        %v1356 = vpop.f32.mrf.mxu0
        %v1357 = vadd.f32 0.0, %v1356
        %v1358 = vpop.f32.mrf.mxu0
        %1359 = vmatprep.mubr.f32.mxu0 0.0
        %1360 = vmatmul.mubr.f32.gmra.mxu0 %v882
        %v1361 = vpop.f32.mrf.mxu0
        %v1362 = vadd.f32 0.0, %v1361
        %v1363 = vpop.f32.mrf.mxu0
        %1364 = vmatprep.mubr.f32.mxu0 0.0
        %1365 = vmatmul.mubr.f32.gmra.mxu0 %v885
        %v1366 = vpop.f32.mrf.mxu0
        %v1367 = vadd.f32 0.0, %v1366
        %v1368 = vpop.f32.mrf.mxu0
        %1369 = vmatprep.mubr.f32.mxu0 0.0
        %1370 = vmatmul.mubr.f32.gmra.mxu0 %v888
        %v1371 = vpop.f32.mrf.mxu0
        %v1372 = vadd.f32 0.0, %v1371
        %v1373 = vpop.f32.mrf.mxu0
        %1374 = vmatprep.mubr.f32.mxu0 0.0
        %1375 = vmatmul.mubr.f32.gmra.mxu0 %v891
        %v1376 = vpop.f32.mrf.mxu0
        %v1377 = vadd.f32 0.0, %v1376
        %v1378 = vpop.f32.mrf.mxu0
        %1379 = vmatprep.mubr.f32.mxu0 0.0
        %1380 = vmatmul.mubr.f32.gmra.mxu0 %v894
        %v1381 = vpop.f32.mrf.mxu0
        %v1382 = vadd.f32 0.0, %v1381
        %v1383 = vpop.f32.mrf.mxu0
        %1384 = vmatprep.mubr.f32.mxu0 0.0
        %1385 = vmatmul.mubr.f32.gmra.mxu0 %v897
        %v1386 = vpop.f32.mrf.mxu0
        %v1387 = vadd.f32 0.0, %v1386
        %v1388 = vpop.f32.mrf.mxu0
        %1389 = vmatprep.mubr.f32.mxu0 0.0
        %1390 = vmatmul.mubr.f32.gmra.mxu0 %v900
        %v1391 = vpop.f32.mrf.mxu0
        %v1392 = vadd.f32 0.0, %v1391
        %v1393 = vpop.f32.mrf.mxu0
        %1394 = vmatprep.mubr.f32.mxu0 0.0
        %1395 = vmatmul.mubr.f32.gmra.mxu0 %v903
        %v1396 = vpop.f32.mrf.mxu0
        %v1397 = vadd.f32 0.0, %v1396
        %v1398 = vpop.f32.mrf.mxu0
        %1399 = vmatprep.mubr.f32.mxu0 0.0
        %1400 = vmatmul.mubr.f32.gmra.mxu0 %v906
        %v1401 = vpop.f32.mrf.mxu0
        %v1402 = vadd.f32 0.0, %v1401
        %v1403 = vpop.f32.mrf.mxu0
        %1404 = vmatprep.mubr.f32.mxu0 0.0
        %1405 = vmatmul.mubr.f32.gmra.mxu0 %v909
        %v1406 = vpop.f32.mrf.mxu0
        %v1407 = vadd.f32 0.0, %v1406
        %v1408 = vpop.f32.mrf.mxu0
        %1409 = vmatprep.mubr.f32.mxu0 0.0
        %1410 = vmatmul.mubr.f32.gmra.mxu0 %v912
        %v1411 = vpop.f32.mrf.mxu0
        %v1412 = vadd.f32 0.0, %v1411
        %v1413 = vpop.f32.mrf.mxu0
        %1414 = vmatprep.mubr.f32.mxu0 0.0
        %1415 = vmatmul.mubr.f32.gmra.mxu0 %v915
        %v1416 = vpop.f32.mrf.mxu0
        %v1417 = vadd.f32 0.0, %v1416
        %v1418 = vpop.f32.mrf.mxu0
        %1419 = vmatprep.mubr.f32.mxu0 0.0
        %1420 = vmatmul.mubr.f32.gmra.mxu0 %v918
        %v1421 = vpop.f32.mrf.mxu0
        %v1422 = vadd.f32 0.0, %v1421
        %v1423 = vpop.f32.mrf.mxu0
        %1424 = vmatprep.mubr.f32.mxu0 0.0
        %1425 = vmatmul.mubr.f32.gmra.mxu0 %v921
        %v1426 = vpop.f32.mrf.mxu0
        %v1427 = vadd.f32 0.0, %v1426
        %v1428 = vpop.f32.mrf.mxu0
        %1429 = vmatprep.mubr.f32.mxu0 0.0
        %1430 = vmatmul.mubr.f32.gmra.mxu0 %v924
        %v1431 = vpop.f32.mrf.mxu0
        %v1432 = vadd.f32 0.0, %v1431
        %v1433 = vpop.f32.mrf.mxu0
        %1434 = vmatprep.mubr.f32.mxu0 0.0
        %1435 = vmatmul.mubr.f32.gmra.mxu0 %v927
        %v1436 = vpop.f32.mrf.mxu0
        %v1437 = vadd.f32 0.0, %v1436
        %v1438 = vpop.f32.mrf.mxu0
        %1439 = vmatprep.mubr.f32.mxu0 0.0
        %1440 = vmatmul.mubr.f32.gmra.mxu0 %v930
        %v1441 = vpop.f32.mrf.mxu0
        %v1442 = vadd.f32 0.0, %v1441
        %v1443 = vpop.f32.mrf.mxu0
        %1444 = vmatprep.mubr.f32.mxu0 0.0
        %1445 = vmatmul.mubr.f32.gmra.mxu0 %v933
        %v1446 = vpop.f32.mrf.mxu0
        %v1447 = vadd.f32 0.0, %v1446
        %v1448 = vpop.f32.mrf.mxu0
        %1449 = vmatprep.mubr.f32.mxu0 0.0
        %1450 = vmatmul.mubr.f32.gmra.mxu0 %v936
        %v1451 = vpop.f32.mrf.mxu0
        %v1452 = vadd.f32 0.0, %v1451
        %v1453 = vpop.f32.mrf.mxu0
        %1454 = vmatprep.mubr.f32.mxu0 0.0
        %1455 = vmatmul.mubr.f32.gmra.mxu0 %v939
        %v1456 = vpop.f32.mrf.mxu0
        %v1457 = vadd.f32 0.0, %v1456
        %v1458 = vpop.f32.mrf.mxu0
        %1459 = vmatprep.mubr.f32.mxu0 0.0
        %1460 = vmatmul.mubr.f32.gmra.mxu0 %v942
        %v1461 = vpop.f32.mrf.mxu0
        %v1462 = vadd.f32 0.0, %v1461
        %v1463 = vpop.f32.mrf.mxu0
        %1464 = vmatprep.mubr.f32.mxu0 0.0
        %1465 = vmatmul.mubr.f32.gmra.mxu0 %v945
        %v1466 = vpop.f32.mrf.mxu0
        %v1467 = vadd.f32 0.0, %v1466
        %v1468 = vpop.f32.mrf.mxu0
        %1469 = vmatprep.mubr.f32.mxu0 0.0
        %1470 = vmatmul.mubr.f32.gmra.mxu0 %v948
        %v1471 = vpop.f32.mrf.mxu0
        %v1472 = vadd.f32 0.0, %v1471
        %v1473 = vpop.f32.mrf.mxu0
        %1474 = vmatprep.mubr.f32.mxu0 0.0
        %1475 = vmatmul.mubr.f32.gmra.mxu0 %v951
        %v1476 = vpop.f32.mrf.mxu0
        %v1477 = vadd.f32 0.0, %v1476
        %v1478 = vpop.f32.mrf.mxu0
        %1479 = vmatprep.mubr.f32.mxu0 0.0
        %1480 = vmatmul.mubr.f32.gmra.mxu0 %v954
        %v1481 = vpop.f32.mrf.mxu0
        %v1482 = vadd.f32 0.0, %v1481
        %v1483 = vpop.f32.mrf.mxu0
        %1484 = vmatprep.mubr.f32.mxu0 0.0
        %1485 = vmatmul.mubr.f32.gmra.mxu0 %v957
        %v1486 = vpop.f32.mrf.mxu0
        %v1487 = vadd.f32 0.0, %v1486
        %v1488 = vpop.f32.mrf.mxu0
        %1489 = vmatprep.mubr.f32.mxu0 0.0
        %1490 = vmatmul.mubr.f32.gmra.mxu0 %v960
        %v1491 = vpop.f32.mrf.mxu0
        %v1492 = vadd.f32 0.0, %v1491
        %v1493 = vpop.f32.mrf.mxu0
        %1494 = vmatprep.mubr.f32.mxu0 0.0
        %1495 = vmatmul.mubr.f32.gmra.mxu0 %v963
        %v1496 = vpop.f32.mrf.mxu0
        %v1497 = vadd.f32 0.0, %v1496
        %v1498 = vpop.f32.mrf.mxu0
        %1499 = vmatprep.mubr.f32.mxu0 0.0
        %1500 = vmatmul.mubr.f32.gmra.mxu0 %v966
        %v1501 = vpop.f32.mrf.mxu0
        %v1502 = vadd.f32 0.0, %v1501
        %v1503 = vpop.f32.mrf.mxu0
        %1504 = vmatprep.mubr.f32.mxu0 0.0
        %1505 = vmatmul.mubr.f32.gmra.mxu0 %v969
        %v1506 = vpop.f32.mrf.mxu0
        %v1507 = vadd.f32 0.0, %v1506
        %v1508 = vpop.f32.mrf.mxu0
        %1509 = vmatprep.mubr.f32.mxu0 0.0
        %1510 = vmatmul.mubr.f32.gmra.mxu0 %v972
        %v1511 = vpop.f32.mrf.mxu0
        %v1512 = vadd.f32 0.0, %v1511
        %v1513 = vpop.f32.mrf.mxu0
        %1514 = vmatprep.mubr.f32.mxu0 0.0
        %1515 = vmatmul.mubr.f32.gmra.mxu0 %v975
        %v1516 = vpop.f32.mrf.mxu0
        %v1517 = vadd.f32 0.0, %v1516
        %v1518 = vpop.f32.mrf.mxu0
        %1519 = vmatprep.mubr.f32.mxu0 0.0
        %1520 = vmatmul.mubr.f32.gmra.mxu0 %v978
        %v1521 = vpop.f32.mrf.mxu0
        %v1522 = vadd.f32 0.0, %v1521
        %v1523 = vpop.f32.mrf.mxu0
        %1524 = vmatprep.mubr.f32.mxu0 0.0
        %1525 = vmatmul.mubr.f32.gmra.mxu0 %v981
        %v1526 = vpop.f32.mrf.mxu0
        %v1527 = vadd.f32 0.0, %v1526
        %v1528 = vpop.f32.mrf.mxu0
        %1529 = vmatprep.mubr.f32.mxu0 0.0
        %1530 = vmatmul.mubr.f32.gmra.mxu0 %v984
        %v1531 = vpop.f32.mrf.mxu0
        %v1532 = vadd.f32 0.0, %v1531
        %v1533 = vpop.f32.mrf.mxu0
        %1534 = vmatprep.mubr.f32.mxu0 0.0
        %1535 = vmatmul.mubr.f32.gmra.mxu0 %v987
        %v1536 = vpop.f32.mrf.mxu0
        %v1537 = vadd.f32 0.0, %v1536
        %v1538 = vpop.f32.mrf.mxu0
        %1539 = vmatprep.mubr.f32.mxu0 0.0
        %1540 = vmatmul.mubr.f32.gmra.mxu0 %v990
        %v1541 = vpop.f32.mrf.mxu0
        %v1542 = vadd.f32 0.0, %v1541
        %v1543 = vpop.f32.mrf.mxu0
        %1544 = vmatprep.mubr.f32.mxu0 0.0
        %1545 = vmatmul.mubr.f32.gmra.mxu0 %v993
        %v1546 = vpop.f32.mrf.mxu0
        %v1547 = vadd.f32 0.0, %v1546
        %v1548 = vpop.f32.mrf.mxu0
        %1549 = vmatprep.mubr.f32.mxu0 0.0
        %1550 = vmatmul.mubr.f32.gmra.mxu0 %v996
        %v1551 = vpop.f32.mrf.mxu0
        %v1552 = vadd.f32 0.0, %v1551
        %v1553 = vpop.f32.mrf.mxu0
        %1554 = vmatprep.mubr.f32.mxu0 0.0
        %1555 = vmatmul.mubr.f32.gmra.mxu0 %v999
        %v1556 = vpop.f32.mrf.mxu0
        %v1557 = vadd.f32 0.0, %v1556
        %v1558 = vpop.f32.mrf.mxu0
        %1559 = vmatprep.mubr.f32.mxu0 0.0
        %1560 = vmatmul.mubr.f32.gmra.mxu0 %v1002
        %v1561 = vpop.f32.mrf.mxu0
        %v1562 = vadd.f32 0.0, %v1561
        %v1563 = vpop.f32.mrf.mxu0
        %1564 = vmatprep.mubr.f32.mxu0 0.0
        %1565 = vmatmul.mubr.f32.gmra.mxu0 %v1005
        %v1566 = vpop.f32.mrf.mxu0
        %v1567 = vadd.f32 0.0, %v1566
        %v1568 = vpop.f32.mrf.mxu0
        %1569 = vmatprep.mubr.f32.mxu0 0.0
        %1570 = vmatmul.mubr.f32.gmra.mxu0 %v1008
        %v1571 = vpop.f32.mrf.mxu0
        %v1572 = vadd.f32 0.0, %v1571
        %v1573 = vpop.f32.mrf.mxu0
        %1574 = vdwg.mxu0
        %v1575 = vmax.f32 %v1077, %v1202
        %v1576 = vmax.f32 %v1082, %v1207
        %v1577 = vmax.f32 %v1087, %v1212
        %v1578 = vmax.f32 %v1092, %v1217
        %v1579 = vmax.f32 %v1097, %v1222
        %v1580 = vmax.f32 %v1102, %v1227
        %v1581 = vmax.f32 %v1107, %v1232
        %v1582 = vmax.f32 %v1112, %v1237
        %v1583 = vmax.f32 %v1117, %v1242
        %v1584 = vmax.f32 %v1122, %v1247
        %v1585 = vmax.f32 %v1127, %v1252
        %v1586 = vmax.f32 %v1132, %v1257
        %v1587 = vmax.f32 %v1137, %v1262
        %v1588 = vmax.f32 %v1142, %v1267
        %v1589 = vmax.f32 %v1147, %v1272
        %v1590 = vmax.f32 %v1152, %v1277
        %v1591 = vmax.f32 %v1157, %v1282
        %v1592 = vmax.f32 %v1162, %v1287
        %v1593 = vmax.f32 %v1167, %v1292
        %v1594 = vmax.f32 %v1172, %v1297
        %v1595 = vmax.f32 %v1177, %v1302
        %v1596 = vmax.f32 %v1182, %v1307
        %v1597 = vmax.f32 %v1187, %v1312
        %v1598 = vmax.f32 %v1192, %v1317
        %v1599 = vmax.f32 %v1197, %v1322
        %v1600 = vmax.f32 %v1327, %v1452
        %v1601 = vmax.f32 %v1332, %v1457
        %v1602 = vmax.f32 %v1337, %v1462
        %v1603 = vmax.f32 %v1342, %v1467
        %v1604 = vmax.f32 %v1347, %v1472
        %v1605 = vmax.f32 %v1352, %v1477
        %v1606 = vmax.f32 %v1357, %v1482
        %v1607 = vmax.f32 %v1362, %v1487
        %v1608 = vmax.f32 %v1367, %v1492
        %v1609 = vmax.f32 %v1372, %v1497
        %v1610 = vmax.f32 %v1377, %v1502
        %v1611 = vmax.f32 %v1382, %v1507
        %v1612 = vmax.f32 %v1387, %v1512
        %v1613 = vmax.f32 %v1392, %v1517
        %v1614 = vmax.f32 %v1397, %v1522
        %v1615 = vmax.f32 %v1402, %v1527
        %v1616 = vmax.f32 %v1407, %v1532
        %v1617 = vmax.f32 %v1412, %v1537
        %v1618 = vmax.f32 %v1417, %v1542
        %v1619 = vmax.f32 %v1422, %v1547
        %v1620 = vmax.f32 %v1427, %v1552
        %v1621 = vmax.f32 %v1432, %v1557
        %v1622 = vmax.f32 %v1437, %v1562
        %v1623 = vmax.f32 %v1442, %v1567
        %v1624 = vmax.f32 %v1447, %v1572
        %v1625 = vmax.f32 %v1575, %v1600
        %v1626 = vmax.f32 %v1576, %v1601
        %v1627 = vmax.f32 %v1577, %v1602
        %v1628 = vmax.f32 %v1578, %v1603
        %v1629 = vmax.f32 %v1579, %v1604
        %v1630 = vmax.f32 %v1580, %v1605
        %v1631 = vmax.f32 %v1581, %v1606
        %v1632 = vmax.f32 %v1582, %v1607
        %v1633 = vmax.f32 %v1583, %v1608
        %v1634 = vmax.f32 %v1584, %v1609
        %v1635 = vmax.f32 %v1585, %v1610
        %v1636 = vmax.f32 %v1586, %v1611
        %v1637 = vmax.f32 %v1587, %v1612
        %v1638 = vmax.f32 %v1588, %v1613
        %v1639 = vmax.f32 %v1589, %v1614
        %v1640 = vmax.f32 %v1590, %v1615
        %v1641 = vmax.f32 %v1591, %v1616
        %v1642 = vmax.f32 %v1592, %v1617
        %v1643 = vmax.f32 %v1593, %v1618
        %v1644 = vmax.f32 %v1594, %v1619
        %v1645 = vmax.f32 %v1595, %v1620
        %v1646 = vmax.f32 %v1596, %v1621
        %v1647 = vmax.f32 %v1597, %v1622
        %v1648 = vmax.f32 %v1598, %v1623
        %v1649 = vmax.f32 %v1599, %v1624
        %v1650 = vld [vmem:[%s2] sm:$0x1]
        %v1652 = vlaneseq
        %v1653 = vshrl.u32 %v1652, 7
        %v1654 = vsub.s32 0, %v1653
        %v1655 = vrot.slane %v1650, %v1654
        %v1657 = vadd.f32 %v1625, %v1655
        %v1658 = vadd.f32 %v1626, %v1655
        %v1659 = vadd.f32 %v1627, %v1655
        %v1660 = vadd.f32 %v1628, %v1655
        %v1661 = vadd.f32 %v1629, %v1655
        %v1662 = vadd.f32 %v1630, %v1655
        %v1663 = vadd.f32 %v1631, %v1655
        %v1664 = vadd.f32 %v1632, %v1655
        %v1665 = vadd.f32 %v1633, %v1655
        %v1666 = vadd.f32 %v1634, %v1655
        %v1667 = vadd.f32 %v1635, %v1655
        %v1668 = vadd.f32 %v1636, %v1655
        %v1669 = vadd.f32 %v1637, %v1655
        %v1670 = vadd.f32 %v1638, %v1655
        %v1671 = vadd.f32 %v1639, %v1655
        %v1672 = vadd.f32 %v1640, %v1655
        %v1673 = vadd.f32 %v1641, %v1655
        %v1674 = vadd.f32 %v1642, %v1655
        %v1675 = vadd.f32 %v1643, %v1655
        %v1676 = vadd.f32 %v1644, %v1655
        %v1677 = vadd.f32 %v1645, %v1655
        %v1678 = vadd.f32 %v1646, %v1655
        %v1679 = vadd.f32 %v1647, %v1655
        %v1680 = vadd.f32 %v1648, %v1655
        %v1681 = vadd.f32 %v1649, %v1655
        %v1682 = vmax.f32 %v1657, 0.0
        %v1683 = vmax.f32 %v1658, 0.0
        %v1684 = vmax.f32 %v1659, 0.0
        %v1685 = vmax.f32 %v1660, 0.0
        %v1686 = vmax.f32 %v1661, 0.0
        %v1687 = vmax.f32 %v1662, 0.0
        %v1688 = vmax.f32 %v1663, 0.0
        %v1689 = vmax.f32 %v1664, 0.0
        %v1690 = vmax.f32 %v1665, 0.0
        %v1691 = vmax.f32 %v1666, 0.0
        %v1692 = vmax.f32 %v1667, 0.0
        %v1693 = vmax.f32 %v1668, 0.0
        %v1694 = vmax.f32 %v1669, 0.0
        %v1695 = vmax.f32 %v1670, 0.0
        %v1696 = vmax.f32 %v1671, 0.0
        %v1697 = vmax.f32 %v1672, 0.0
        %v1698 = vmax.f32 %v1673, 0.0
        %v1699 = vmax.f32 %v1674, 0.0
        %v1700 = vmax.f32 %v1675, 0.0
        %v1701 = vmax.f32 %v1676, 0.0
        %v1702 = vmax.f32 %v1677, 0.0
        %v1703 = vmax.f32 %v1678, 0.0
        %v1704 = vmax.f32 %v1679, 0.0
        %v1705 = vmax.f32 %v1680, 0.0
        %v1706 = vmax.f32 %v1681, 0.0
        %1707 = vst [vmem:[%s603] sm:$0xff] %v1682
        %1708 = vst [vmem:[%s603 + $0x8] sm:$0xff] %v1683
        %1709 = vst [vmem:[%s603 + $0x10] sm:$0xff] %v1684
        %1710 = vst [vmem:[%s603 + $0x18] sm:$0xff] %v1685
        %1711 = vst [vmem:[%s603 + $0x20] sm:$0xff] %v1686
        %1712 = vst [vmem:[%s603 + $0x28] sm:$0xff] %v1687
        %1713 = vst [vmem:[%s603 + $0x30] sm:$0xff] %v1688
        %1714 = vst [vmem:[%s603 + $0x38] sm:$0xff] %v1689
        %1715 = vst [vmem:[%s603 + $0x40] sm:$0xff] %v1690
        %1716 = vst [vmem:[%s603 + $0x48] sm:$0xff] %v1691
        %1717 = vst [vmem:[%s603 + $0x50] sm:$0xff] %v1692
        %1718 = vst [vmem:[%s603 + $0x58] sm:$0xff] %v1693
        %1719 = vst [vmem:[%s603 + $0x60] sm:$0xff] %v1694
        %1720 = vst [vmem:[%s603 + $0x68] sm:$0xff] %v1695
        %1721 = vst [vmem:[%s603 + $0x70] sm:$0xff] %v1696
        %1722 = vst [vmem:[%s603 + $0x78] sm:$0xff] %v1697
        %1723 = vst [vmem:[%s603 + $0x80] sm:$0xff] %v1698
        %1724 = vst [vmem:[%s603 + $0x88] sm:$0xff] %v1699
        %1725 = vst [vmem:[%s603 + $0x90] sm:$0xff] %v1700
        %1726 = vst [vmem:[%s603 + $0x98] sm:$0xff] %v1701
        %1727 = vst [vmem:[%s603 + $0xa0] sm:$0xff] %v1702
        %1728 = vst [vmem:[%s603 + $0xa8] sm:$0xff] %v1703
        %1729 = vst [vmem:[%s603 + $0xb0] sm:$0xff] %v1704
        %1730 = vst [vmem:[%s603 + $0xb8] sm:$0xff] %v1705
        %1731 = vst [vmem:[%s603 + $0xc0] sm:$0xff] %v1706
        %s1732 = smul.u32 25, %s14
        %p1733 = scmp.lt.s32.totalorder %s1732, 49
        %s1734 = scalar_select %p1733, %s1732, 49
        %s1735 = smul.addr %s1734, 8
        %s1736 = scalar_lea.vmem %s3, %s1735
        // Predicated region
        $region71: #{net_forward.2} parent=65 // pred_check
          %p1737 = pneg %p100
        $region72: #{net_forward.2} parent=65 // pred_check_branch
          %1739 = sbr.rel (%p1737) target = $region74
        $region73: #{net_forward.2} parent=65 // pred_region
          %s1740 = smul.u32 25, %s14
        $region74: #{net_forward.2} parent=65 // pred_fallthru
          _
      $region66: #{net_forward.2} parent=5 // pred_fallthru
        _
      %p1741 = scmp.le.s32.totalorder 2, %s9
      // Predicated region
      $region75: #{net_forward.2} parent=5 // pred_check
        %p1742 = pneg %p1741
      $region76: #{net_forward.2} parent=5 // pred_check_branch
        %1744 = sbr.rel (%p1742) target = $region78
      $region77: #{net_forward.2} parent=5 // pred_region
        %s1745 = ssub.s32 %s9, 2
        // Predicated region
        $region79: #{net_forward.2} parent=77 // pred_check
          %p1746 = pneg %p106
        $region80: #{net_forward.2} parent=77 // pred_check_branch
          %1748 = sbr.rel (%p1746) target = $region82
        $region81: #{net_forward.2} parent=77 // pred_region
          %s1749 = smul.u32 25, %s15
          %p1750 = scmp.lt.s32.totalorder %s1749, 49
          %s1751 = scalar_select %p1750, %s1749, 49
          %s1752 = smul.addr %s1751, 8
          %s1753 = scalar_lea.vmem %s3, %s1752
        $region82: #{net_forward.2} parent=77 // pred_fallthru
          _
      $region78: #{net_forward.2} parent=5 // pred_fallthru
        _
    $region6: #{net_forward.2} parent=1 // loop_footer
      %s13 = sadd.s32 1, %s9
    $region7: #{net_forward.2} parent=1 // loop_footer_branch
      %8 = sbr.rel target = $region3
    $region8: #{net_forward.2} parent=1 // loop_exit
      _

// kernel: net_forward.3
$region0: #{net_forward.3}
  #allocation0 [shape = 'u32[]', space=smem, size = 0x4, offset = 0x4, fixed_abs, tag = 'smem constant byte address 0x4 - core index']
  #allocation1 [shape = 'u32[144,128]{1,0:T(1,128)}', space=vmem, size = 0x12000, scoped, tag = 'internal scratch']
  %s0 = inlined_call_operand.vmem [shape: f32[8,1280], index: 0, kind: input, shape index: {}]
  %s1 = inlined_call_operand.vmem [shape: f32[1280,2048], index: 1, kind: input, shape index: {}]
  %s2 = inlined_call_operand.vmem [shape: f32[1,512], index: 2, kind: input, shape index: {}]
  %s3 = inlined_call_operand.vmem [shape: f32[512,128], index: 3, kind: input, shape index: {}]
  %s4 = inlined_call_operand.vmem [shape: f32[1,128], index: 4, kind: input, shape index: {}]
  %s5 = inlined_call_operand.vmem [shape: f32[128,128], index: 5, kind: input, shape index: {}]
  %s6 = inlined_call_operand.vmem [shape: f32[1,128], index: 6, kind: input, shape index: {}]
  %s7 = inlined_call_operand.vmem [shape: f32[128,128], index: 7, kind: input, shape index: {}]
  %s8 = inlined_call_operand.vmem [shape: f32[1,128], index: 8, kind: input, shape index: {}]
  %s9 = inlined_call_operand.vmem [shape: f32[8,128], index: 9, kind: output, shape index: {}]
  %s10 = sld [smem:[#allocation0]]
  $region46: #{net_forward.3} parent=0
    _
  %s12 = ssub.s32 1, %s10
  %s13 = scalar_select 0, %s12, %s10
  // Predicated region
  $region2: #{net_forward.3} parent=0 // pred_check
    _
  $region3: #{net_forward.3} parent=0 // pred_check_branch
    %15 = sbr.rel (0) target = $region5
  $region4: #{net_forward.3} parent=0 // pred_region
    _
  $region5: #{net_forward.3} parent=0 // pred_fallthru
    _
  // Predicated region
  $region6: #{net_forward.3} parent=0 // pred_check
    _
  $region7: #{net_forward.3} parent=0 // pred_check_branch
    %17 = sbr.rel (0) target = $region9
  $region8: #{net_forward.3} parent=0 // pred_region
    _
  $region9: #{net_forward.3} parent=0 // pred_fallthru
    _
  // Predicated region
  $region10: #{net_forward.3} parent=0 // pred_check
    _
  $region11: #{net_forward.3} parent=0 // pred_check_branch
    %19 = sbr.rel (0) target = $region13
  $region12: #{net_forward.3} parent=0 // pred_region
    _
  $region13: #{net_forward.3} parent=0 // pred_fallthru
    _
  // Predicated region
  $region14: #{net_forward.3} parent=0 // pred_check
    _
  $region15: #{net_forward.3} parent=0 // pred_check_branch
    %21 = sbr.rel (0) target = $region17
  $region16: #{net_forward.3} parent=0 // pred_region
    _
  $region17: #{net_forward.3} parent=0 // pred_fallthru
    _
  // Predicated region
  $region18: #{net_forward.3} parent=0 // pred_check
    _
  $region19: #{net_forward.3} parent=0 // pred_check_branch
    %23 = sbr.rel (0) target = $region21
  $region20: #{net_forward.3} parent=0 // pred_region
    _
  $region21: #{net_forward.3} parent=0 // pred_fallthru
    _
  // Predicated region
  $region22: #{net_forward.3} parent=0 // pred_check
    _
  $region23: #{net_forward.3} parent=0 // pred_check_branch
    %25 = sbr.rel (0) target = $region25
  $region24: #{net_forward.3} parent=0 // pred_region
    _
  $region25: #{net_forward.3} parent=0 // pred_fallthru
    _
  // Predicated region
  $region26: #{net_forward.3} parent=0 // pred_check
    _
  $region27: #{net_forward.3} parent=0 // pred_check_branch
    %27 = sbr.rel (0) target = $region29
  $region28: #{net_forward.3} parent=0 // pred_region
    _
  $region29: #{net_forward.3} parent=0 // pred_fallthru
    _
  // Predicated region
  $region30: #{net_forward.3} parent=0 // pred_check
    _
  $region31: #{net_forward.3} parent=0 // pred_check_branch
    %29 = sbr.rel (0) target = $region33
  $region32: #{net_forward.3} parent=0 // pred_region
    _
  $region33: #{net_forward.3} parent=0 // pred_fallthru
    _
  // Predicated region
  $region34: #{net_forward.3} parent=0 // pred_check
    _
  $region35: #{net_forward.3} parent=0 // pred_check_branch
    %31 = sbr.rel (0) target = $region37
  $region36: #{net_forward.3} parent=0 // pred_region
    _
  $region37: #{net_forward.3} parent=0 // pred_fallthru
    _
  %v32 = vld [vmem:[%s0] sm:$0xff]
  %v33 = vld [vmem:[%s0 + $0x8] sm:$0xff]
  %v34 = vld [vmem:[%s0 + $0x10] sm:$0xff]
  %v35 = vld [vmem:[%s0 + $0x18] sm:$0xff]
  %v36 = vld [vmem:[%s0 + $0x20] sm:$0xff]
  %v37 = vld [vmem:[%s0 + $0x28] sm:$0xff]
  %v38 = vld [vmem:[%s0 + $0x30] sm:$0xff]
  %v39 = vld [vmem:[%s0 + $0x38] sm:$0xff]
  %v40 = vld [vmem:[%s0 + $0x40] sm:$0xff]
  %v41 = vld [vmem:[%s0 + $0x48] sm:$0xff]
  %v42 = vld [vmem:[%s1] sm:$0xff]
  %v43 = vld [vmem:[%s1 + $0x8] sm:$0xff]
  %v44 = vld [vmem:[%s1 + $0x10] sm:$0xff]
  %v45 = vld [vmem:[%s1 + $0x18] sm:$0xff]
  %v46 = vld [vmem:[%s1 + $0x20] sm:$0xff]
  %v47 = vld [vmem:[%s1 + $0x28] sm:$0xff]
  %v48 = vld [vmem:[%s1 + $0x30] sm:$0xff]
  %v49 = vld [vmem:[%s1 + $0x38] sm:$0xff]
  %v50 = vld [vmem:[%s1 + $0x40] sm:$0xff]
  %v51 = vld [vmem:[%s1 + $0x48] sm:$0xff]
  %v52 = vld [vmem:[%s1 + $0x50] sm:$0xff]
  %v53 = vld [vmem:[%s1 + $0x58] sm:$0xff]
  %v54 = vld [vmem:[%s1 + $0x60] sm:$0xff]
  %v55 = vld [vmem:[%s1 + $0x68] sm:$0xff]
  %v56 = vld [vmem:[%s1 + $0x70] sm:$0xff]
  %v57 = vld [vmem:[%s1 + $0x78] sm:$0xff]
  %v58 = vld [vmem:[%s1 + $0x80] sm:$0xff]
  %v59 = vld [vmem:[%s1 + $0x88] sm:$0xff]
  %v60 = vld [vmem:[%s1 + $0x90] sm:$0xff]
  %v61 = vld [vmem:[%s1 + $0x98] sm:$0xff]
  %v62 = vld [vmem:[%s1 + $0xa0] sm:$0xff]
  %v63 = vld [vmem:[%s1 + $0xa8] sm:$0xff]
  %v64 = vld [vmem:[%s1 + $0xb0] sm:$0xff]
  %v65 = vld [vmem:[%s1 + $0xb8] sm:$0xff]
  %v66 = vld [vmem:[%s1 + $0xc0] sm:$0xff]
  %v67 = vld [vmem:[%s1 + $0xc8] sm:$0xff]
  %v68 = vld [vmem:[%s1 + $0xd0] sm:$0xff]
  %v69 = vld [vmem:[%s1 + $0xd8] sm:$0xff]
  %v70 = vld [vmem:[%s1 + $0xe0] sm:$0xff]
  %v71 = vld [vmem:[%s1 + $0xe8] sm:$0xff]
  %v72 = vld [vmem:[%s1 + $0xf0] sm:$0xff]
  %v73 = vld [vmem:[%s1 + $0xf8] sm:$0xff]
  %v74 = vld [vmem:[%s1 + $0x100] sm:$0xff]
  %v75 = vld [vmem:[%s1 + $0x108] sm:$0xff]
  %v76 = vld [vmem:[%s1 + $0x110] sm:$0xff]
  %v77 = vld [vmem:[%s1 + $0x118] sm:$0xff]
  %v78 = vld [vmem:[%s1 + $0x120] sm:$0xff]
  %v79 = vld [vmem:[%s1 + $0x128] sm:$0xff]
  %v80 = vld [vmem:[%s1 + $0x130] sm:$0xff]
  %v81 = vld [vmem:[%s1 + $0x138] sm:$0xff]
  %v82 = vld [vmem:[%s1 + $0x140] sm:$0xff]
  %v83 = vld [vmem:[%s1 + $0x148] sm:$0xff]
  %v84 = vld [vmem:[%s1 + $0x150] sm:$0xff]
  %v85 = vld [vmem:[%s1 + $0x158] sm:$0xff]
  %v86 = vld [vmem:[%s1 + $0x160] sm:$0xff]
  %v87 = vld [vmem:[%s1 + $0x168] sm:$0xff]
  %v88 = vld [vmem:[%s1 + $0x170] sm:$0xff]
  %v89 = vld [vmem:[%s1 + $0x178] sm:$0xff]
  %v90 = vld [vmem:[%s1 + $0x180] sm:$0xff]
  %v91 = vld [vmem:[%s1 + $0x188] sm:$0xff]
  %v92 = vld [vmem:[%s1 + $0x190] sm:$0xff]
  %v93 = vld [vmem:[%s1 + $0x198] sm:$0xff]
  %v94 = vld [vmem:[%s1 + $0x1a0] sm:$0xff]
  %v95 = vld [vmem:[%s1 + $0x1a8] sm:$0xff]
  %v96 = vld [vmem:[%s1 + $0x1b0] sm:$0xff]
  %v97 = vld [vmem:[%s1 + $0x1b8] sm:$0xff]
  %v98 = vld [vmem:[%s1 + $0x1c0] sm:$0xff]
  %v99 = vld [vmem:[%s1 + $0x1c8] sm:$0xff]
  %v100 = vld [vmem:[%s1 + $0x1d0] sm:$0xff]
  %v101 = vld [vmem:[%s1 + $0x1d8] sm:$0xff]
  %v102 = vld [vmem:[%s1 + $0x1e0] sm:$0xff]
  %v103 = vld [vmem:[%s1 + $0x1e8] sm:$0xff]
  %v104 = vld [vmem:[%s1 + $0x1f0] sm:$0xff]
  %v105 = vld [vmem:[%s1 + $0x1f8] sm:$0xff]
  %v106 = vld [vmem:[%s1 + $0x200] sm:$0xff]
  %v107 = vld [vmem:[%s1 + $0x208] sm:$0xff]
  %v108 = vld [vmem:[%s1 + $0x210] sm:$0xff]
  %v109 = vld [vmem:[%s1 + $0x218] sm:$0xff]
  %v110 = vld [vmem:[%s1 + $0x220] sm:$0xff]
  %v111 = vld [vmem:[%s1 + $0x228] sm:$0xff]
  %v112 = vld [vmem:[%s1 + $0x230] sm:$0xff]
  %v113 = vld [vmem:[%s1 + $0x238] sm:$0xff]
  %v114 = vld [vmem:[%s1 + $0x240] sm:$0xff]
  %v115 = vld [vmem:[%s1 + $0x248] sm:$0xff]
  %v116 = vld [vmem:[%s1 + $0x250] sm:$0xff]
  %v117 = vld [vmem:[%s1 + $0x258] sm:$0xff]
  %v118 = vld [vmem:[%s1 + $0x260] sm:$0xff]
  %v119 = vld [vmem:[%s1 + $0x268] sm:$0xff]
  %v120 = vld [vmem:[%s1 + $0x270] sm:$0xff]
  %v121 = vld [vmem:[%s1 + $0x278] sm:$0xff]
  %v122 = vld [vmem:[%s1 + $0x280] sm:$0xff]
  %v123 = vld [vmem:[%s1 + $0x288] sm:$0xff]
  %v124 = vld [vmem:[%s1 + $0x290] sm:$0xff]
  %v125 = vld [vmem:[%s1 + $0x298] sm:$0xff]
  %v126 = vld [vmem:[%s1 + $0x2a0] sm:$0xff]
  %v127 = vld [vmem:[%s1 + $0x2a8] sm:$0xff]
  %v128 = vld [vmem:[%s1 + $0x2b0] sm:$0xff]
  %v129 = vld [vmem:[%s1 + $0x2b8] sm:$0xff]
  %v130 = vld [vmem:[%s1 + $0x2c0] sm:$0xff]
  %v131 = vld [vmem:[%s1 + $0x2c8] sm:$0xff]
  %v132 = vld [vmem:[%s1 + $0x2d0] sm:$0xff]
  %v133 = vld [vmem:[%s1 + $0x2d8] sm:$0xff]
  %v134 = vld [vmem:[%s1 + $0x2e0] sm:$0xff]
  %v135 = vld [vmem:[%s1 + $0x2e8] sm:$0xff]
  %v136 = vld [vmem:[%s1 + $0x2f0] sm:$0xff]
  %v137 = vld [vmem:[%s1 + $0x2f8] sm:$0xff]
  %v138 = vld [vmem:[%s1 + $0x300] sm:$0xff]
  %v139 = vld [vmem:[%s1 + $0x308] sm:$0xff]
  %v140 = vld [vmem:[%s1 + $0x310] sm:$0xff]
  %v141 = vld [vmem:[%s1 + $0x318] sm:$0xff]
  %v142 = vld [vmem:[%s1 + $0x320] sm:$0xff]
  %v143 = vld [vmem:[%s1 + $0x328] sm:$0xff]
  %v144 = vld [vmem:[%s1 + $0x330] sm:$0xff]
  %v145 = vld [vmem:[%s1 + $0x338] sm:$0xff]
  %v146 = vld [vmem:[%s1 + $0x340] sm:$0xff]
  %v147 = vld [vmem:[%s1 + $0x348] sm:$0xff]
  %v148 = vld [vmem:[%s1 + $0x350] sm:$0xff]
  %v149 = vld [vmem:[%s1 + $0x358] sm:$0xff]
  %v150 = vld [vmem:[%s1 + $0x360] sm:$0xff]
  %v151 = vld [vmem:[%s1 + $0x368] sm:$0xff]
  %v152 = vld [vmem:[%s1 + $0x370] sm:$0xff]
  %v153 = vld [vmem:[%s1 + $0x378] sm:$0xff]
  %v154 = vld [vmem:[%s1 + $0x380] sm:$0xff]
  %v155 = vld [vmem:[%s1 + $0x388] sm:$0xff]
  %v156 = vld [vmem:[%s1 + $0x390] sm:$0xff]
  %v157 = vld [vmem:[%s1 + $0x398] sm:$0xff]
  %v158 = vld [vmem:[%s1 + $0x3a0] sm:$0xff]
  %v159 = vld [vmem:[%s1 + $0x3a8] sm:$0xff]
  %v160 = vld [vmem:[%s1 + $0x3b0] sm:$0xff]
  %v161 = vld [vmem:[%s1 + $0x3b8] sm:$0xff]
  %v162 = vld [vmem:[%s1 + $0x3c0] sm:$0xff]
  %v163 = vld [vmem:[%s1 + $0x3c8] sm:$0xff]
  %v164 = vld [vmem:[%s1 + $0x3d0] sm:$0xff]
  %v165 = vld [vmem:[%s1 + $0x3d8] sm:$0xff]
  %v166 = vld [vmem:[%s1 + $0x3e0] sm:$0xff]
  %v167 = vld [vmem:[%s1 + $0x3e8] sm:$0xff]
  %v168 = vld [vmem:[%s1 + $0x3f0] sm:$0xff]
  %v169 = vld [vmem:[%s1 + $0x3f8] sm:$0xff]
  %v170 = vld [vmem:[%s1 + $0x400] sm:$0xff]
  %v171 = vld [vmem:[%s1 + $0x408] sm:$0xff]
  %v172 = vld [vmem:[%s1 + $0x410] sm:$0xff]
  %v173 = vld [vmem:[%s1 + $0x418] sm:$0xff]
  %v174 = vld [vmem:[%s1 + $0x420] sm:$0xff]
  %v175 = vld [vmem:[%s1 + $0x428] sm:$0xff]
  %v176 = vld [vmem:[%s1 + $0x430] sm:$0xff]
  %v177 = vld [vmem:[%s1 + $0x438] sm:$0xff]
  %v178 = vld [vmem:[%s1 + $0x440] sm:$0xff]
  %v179 = vld [vmem:[%s1 + $0x448] sm:$0xff]
  %v180 = vld [vmem:[%s1 + $0x450] sm:$0xff]
  %v181 = vld [vmem:[%s1 + $0x458] sm:$0xff]
  %v182 = vld [vmem:[%s1 + $0x460] sm:$0xff]
  %v183 = vld [vmem:[%s1 + $0x468] sm:$0xff]
  %v184 = vld [vmem:[%s1 + $0x470] sm:$0xff]
  %v185 = vld [vmem:[%s1 + $0x478] sm:$0xff]
  %v186 = vld [vmem:[%s1 + $0x480] sm:$0xff]
  %v187 = vld [vmem:[%s1 + $0x488] sm:$0xff]
  %v188 = vld [vmem:[%s1 + $0x490] sm:$0xff]
  %v189 = vld [vmem:[%s1 + $0x498] sm:$0xff]
  %v190 = vld [vmem:[%s1 + $0x4a0] sm:$0xff]
  %v191 = vld [vmem:[%s1 + $0x4a8] sm:$0xff]
  %v192 = vld [vmem:[%s1 + $0x4b0] sm:$0xff]
  %v193 = vld [vmem:[%s1 + $0x4b8] sm:$0xff]
  %v194 = vld [vmem:[%s1 + $0x4c0] sm:$0xff]
  %v195 = vld [vmem:[%s1 + $0x4c8] sm:$0xff]
  %v196 = vld [vmem:[%s1 + $0x4d0] sm:$0xff]
  %v197 = vld [vmem:[%s1 + $0x4d8] sm:$0xff]
  %v198 = vld [vmem:[%s1 + $0x4e0] sm:$0xff]
  %v199 = vld [vmem:[%s1 + $0x4e8] sm:$0xff]
  %v200 = vld [vmem:[%s1 + $0x4f0] sm:$0xff]
  %v201 = vld [vmem:[%s1 + $0x4f8] sm:$0xff]
  %v202 = vld [vmem:[%s1 + $0x500] sm:$0xff]
  %v203 = vld [vmem:[%s1 + $0x508] sm:$0xff]
  %v204 = vld [vmem:[%s1 + $0x510] sm:$0xff]
  %v205 = vld [vmem:[%s1 + $0x518] sm:$0xff]
  %v206 = vld [vmem:[%s1 + $0x520] sm:$0xff]
  %v207 = vld [vmem:[%s1 + $0x528] sm:$0xff]
  %v208 = vld [vmem:[%s1 + $0x530] sm:$0xff]
  %v209 = vld [vmem:[%s1 + $0x538] sm:$0xff]
  %v210 = vld [vmem:[%s1 + $0x540] sm:$0xff]
  %v211 = vld [vmem:[%s1 + $0x548] sm:$0xff]
  %v212 = vld [vmem:[%s1 + $0x550] sm:$0xff]
  %v213 = vld [vmem:[%s1 + $0x558] sm:$0xff]
  %v214 = vld [vmem:[%s1 + $0x560] sm:$0xff]
  %v215 = vld [vmem:[%s1 + $0x568] sm:$0xff]
  %v216 = vld [vmem:[%s1 + $0x570] sm:$0xff]
  %v217 = vld [vmem:[%s1 + $0x578] sm:$0xff]
  %v218 = vld [vmem:[%s1 + $0x580] sm:$0xff]
  %v219 = vld [vmem:[%s1 + $0x588] sm:$0xff]
  %v220 = vld [vmem:[%s1 + $0x590] sm:$0xff]
  %v221 = vld [vmem:[%s1 + $0x598] sm:$0xff]
  %v222 = vld [vmem:[%s1 + $0x5a0] sm:$0xff]
  %v223 = vld [vmem:[%s1 + $0x5a8] sm:$0xff]
  %v224 = vld [vmem:[%s1 + $0x5b0] sm:$0xff]
  %v225 = vld [vmem:[%s1 + $0x5b8] sm:$0xff]
  %v226 = vld [vmem:[%s1 + $0x5c0] sm:$0xff]
  %v227 = vld [vmem:[%s1 + $0x5c8] sm:$0xff]
  %v228 = vld [vmem:[%s1 + $0x5d0] sm:$0xff]
  %v229 = vld [vmem:[%s1 + $0x5d8] sm:$0xff]
  %v230 = vld [vmem:[%s1 + $0x5e0] sm:$0xff]
  %v231 = vld [vmem:[%s1 + $0x5e8] sm:$0xff]
  %v232 = vld [vmem:[%s1 + $0x5f0] sm:$0xff]
  %v233 = vld [vmem:[%s1 + $0x5f8] sm:$0xff]
  %v234 = vld [vmem:[%s1 + $0x600] sm:$0xff]
  %v235 = vld [vmem:[%s1 + $0x608] sm:$0xff]
  %v236 = vld [vmem:[%s1 + $0x610] sm:$0xff]
  %v237 = vld [vmem:[%s1 + $0x618] sm:$0xff]
  %v238 = vld [vmem:[%s1 + $0x620] sm:$0xff]
  %v239 = vld [vmem:[%s1 + $0x628] sm:$0xff]
  %v240 = vld [vmem:[%s1 + $0x630] sm:$0xff]
  %v241 = vld [vmem:[%s1 + $0x638] sm:$0xff]
  %v242 = vld [vmem:[%s1 + $0x640] sm:$0xff]
  %v243 = vld [vmem:[%s1 + $0x648] sm:$0xff]
  %v244 = vld [vmem:[%s1 + $0x650] sm:$0xff]
  %v245 = vld [vmem:[%s1 + $0x658] sm:$0xff]
  %v246 = vld [vmem:[%s1 + $0x660] sm:$0xff]
  %v247 = vld [vmem:[%s1 + $0x668] sm:$0xff]
  %v248 = vld [vmem:[%s1 + $0x670] sm:$0xff]
  %v249 = vld [vmem:[%s1 + $0x678] sm:$0xff]
  %v250 = vld [vmem:[%s1 + $0x680] sm:$0xff]
  %v251 = vld [vmem:[%s1 + $0x688] sm:$0xff]
  %v252 = vld [vmem:[%s1 + $0x690] sm:$0xff]
  %v253 = vld [vmem:[%s1 + $0x698] sm:$0xff]
  %v254 = vld [vmem:[%s1 + $0x6a0] sm:$0xff]
  %v255 = vld [vmem:[%s1 + $0x6a8] sm:$0xff]
  %v256 = vld [vmem:[%s1 + $0x6b0] sm:$0xff]
  %v257 = vld [vmem:[%s1 + $0x6b8] sm:$0xff]
  %v258 = vld [vmem:[%s1 + $0x6c0] sm:$0xff]
  %v259 = vld [vmem:[%s1 + $0x6c8] sm:$0xff]
  %v260 = vld [vmem:[%s1 + $0x6d0] sm:$0xff]
  %v261 = vld [vmem:[%s1 + $0x6d8] sm:$0xff]
  %v262 = vld [vmem:[%s1 + $0x6e0] sm:$0xff]
  %v263 = vld [vmem:[%s1 + $0x6e8] sm:$0xff]
  %v264 = vld [vmem:[%s1 + $0x6f0] sm:$0xff]
  %v265 = vld [vmem:[%s1 + $0x6f8] sm:$0xff]
  %v266 = vld [vmem:[%s1 + $0x700] sm:$0xff]
  %v267 = vld [vmem:[%s1 + $0x708] sm:$0xff]
  %v268 = vld [vmem:[%s1 + $0x710] sm:$0xff]
  %v269 = vld [vmem:[%s1 + $0x718] sm:$0xff]
  %v270 = vld [vmem:[%s1 + $0x720] sm:$0xff]
  %v271 = vld [vmem:[%s1 + $0x728] sm:$0xff]
  %v272 = vld [vmem:[%s1 + $0x730] sm:$0xff]
  %v273 = vld [vmem:[%s1 + $0x738] sm:$0xff]
  %v274 = vld [vmem:[%s1 + $0x740] sm:$0xff]
  %v275 = vld [vmem:[%s1 + $0x748] sm:$0xff]
  %v276 = vld [vmem:[%s1 + $0x750] sm:$0xff]
  %v277 = vld [vmem:[%s1 + $0x758] sm:$0xff]
  %v278 = vld [vmem:[%s1 + $0x760] sm:$0xff]
  %v279 = vld [vmem:[%s1 + $0x768] sm:$0xff]
  %v280 = vld [vmem:[%s1 + $0x770] sm:$0xff]
  %v281 = vld [vmem:[%s1 + $0x778] sm:$0xff]
  %v282 = vld [vmem:[%s1 + $0x780] sm:$0xff]
  %v283 = vld [vmem:[%s1 + $0x788] sm:$0xff]
  %v284 = vld [vmem:[%s1 + $0x790] sm:$0xff]
  %v285 = vld [vmem:[%s1 + $0x798] sm:$0xff]
  %v286 = vld [vmem:[%s1 + $0x7a0] sm:$0xff]
  %v287 = vld [vmem:[%s1 + $0x7a8] sm:$0xff]
  %v288 = vld [vmem:[%s1 + $0x7b0] sm:$0xff]
  %v289 = vld [vmem:[%s1 + $0x7b8] sm:$0xff]
  %v290 = vld [vmem:[%s1 + $0x7c0] sm:$0xff]
  %v291 = vld [vmem:[%s1 + $0x7c8] sm:$0xff]
  %v292 = vld [vmem:[%s1 + $0x7d0] sm:$0xff]
  %v293 = vld [vmem:[%s1 + $0x7d8] sm:$0xff]
  %v294 = vld [vmem:[%s1 + $0x7e0] sm:$0xff]
  %v295 = vld [vmem:[%s1 + $0x7e8] sm:$0xff]
  %v296 = vld [vmem:[%s1 + $0x7f0] sm:$0xff]
  %v297 = vld [vmem:[%s1 + $0x7f8] sm:$0xff]
  %v298 = vld [vmem:[%s1 + $0x800] sm:$0xff]
  %v299 = vld [vmem:[%s1 + $0x808] sm:$0xff]
  %v300 = vld [vmem:[%s1 + $0x810] sm:$0xff]
  %v301 = vld [vmem:[%s1 + $0x818] sm:$0xff]
  %v302 = vld [vmem:[%s1 + $0x820] sm:$0xff]
  %v303 = vld [vmem:[%s1 + $0x828] sm:$0xff]
  %v304 = vld [vmem:[%s1 + $0x830] sm:$0xff]
  %v305 = vld [vmem:[%s1 + $0x838] sm:$0xff]
  %v306 = vld [vmem:[%s1 + $0x840] sm:$0xff]
  %v307 = vld [vmem:[%s1 + $0x848] sm:$0xff]
  %v308 = vld [vmem:[%s1 + $0x850] sm:$0xff]
  %v309 = vld [vmem:[%s1 + $0x858] sm:$0xff]
  %v310 = vld [vmem:[%s1 + $0x860] sm:$0xff]
  %v311 = vld [vmem:[%s1 + $0x868] sm:$0xff]
  %v312 = vld [vmem:[%s1 + $0x870] sm:$0xff]
  %v313 = vld [vmem:[%s1 + $0x878] sm:$0xff]
  %v314 = vld [vmem:[%s1 + $0x880] sm:$0xff]
  %v315 = vld [vmem:[%s1 + $0x888] sm:$0xff]
  %v316 = vld [vmem:[%s1 + $0x890] sm:$0xff]
  %v317 = vld [vmem:[%s1 + $0x898] sm:$0xff]
  %v318 = vld [vmem:[%s1 + $0x8a0] sm:$0xff]
  %v319 = vld [vmem:[%s1 + $0x8a8] sm:$0xff]
  %v320 = vld [vmem:[%s1 + $0x8b0] sm:$0xff]
  %v321 = vld [vmem:[%s1 + $0x8b8] sm:$0xff]
  %v322 = vld [vmem:[%s1 + $0x8c0] sm:$0xff]
  %v323 = vld [vmem:[%s1 + $0x8c8] sm:$0xff]
  %v324 = vld [vmem:[%s1 + $0x8d0] sm:$0xff]
  %v325 = vld [vmem:[%s1 + $0x8d8] sm:$0xff]
  %v326 = vld [vmem:[%s1 + $0x8e0] sm:$0xff]
  %v327 = vld [vmem:[%s1 + $0x8e8] sm:$0xff]
  %v328 = vld [vmem:[%s1 + $0x8f0] sm:$0xff]
  %v329 = vld [vmem:[%s1 + $0x8f8] sm:$0xff]
  %v330 = vld [vmem:[%s1 + $0x900] sm:$0xff]
  %v331 = vld [vmem:[%s1 + $0x908] sm:$0xff]
  %v332 = vld [vmem:[%s1 + $0x910] sm:$0xff]
  %v333 = vld [vmem:[%s1 + $0x918] sm:$0xff]
  %v334 = vld [vmem:[%s1 + $0x920] sm:$0xff]
  %v335 = vld [vmem:[%s1 + $0x928] sm:$0xff]
  %v336 = vld [vmem:[%s1 + $0x930] sm:$0xff]
  %v337 = vld [vmem:[%s1 + $0x938] sm:$0xff]
  %v338 = vld [vmem:[%s1 + $0x940] sm:$0xff]
  %v339 = vld [vmem:[%s1 + $0x948] sm:$0xff]
  %v340 = vld [vmem:[%s1 + $0x950] sm:$0xff]
  %v341 = vld [vmem:[%s1 + $0x958] sm:$0xff]
  %v342 = vld [vmem:[%s1 + $0x960] sm:$0xff]
  %v343 = vld [vmem:[%s1 + $0x968] sm:$0xff]
  %v344 = vld [vmem:[%s1 + $0x970] sm:$0xff]
  %v345 = vld [vmem:[%s1 + $0x978] sm:$0xff]
  %v346 = vld [vmem:[%s1 + $0x980] sm:$0xff]
  %v347 = vld [vmem:[%s1 + $0x988] sm:$0xff]
  %v348 = vld [vmem:[%s1 + $0x990] sm:$0xff]
  %v349 = vld [vmem:[%s1 + $0x998] sm:$0xff]
  %v350 = vld [vmem:[%s1 + $0x9a0] sm:$0xff]
  %v351 = vld [vmem:[%s1 + $0x9a8] sm:$0xff]
  %v352 = vld [vmem:[%s1 + $0x9b0] sm:$0xff]
  %v353 = vld [vmem:[%s1 + $0x9b8] sm:$0xff]
  %v354 = vld [vmem:[%s1 + $0x9c0] sm:$0xff]
  %v355 = vld [vmem:[%s1 + $0x9c8] sm:$0xff]
  %v356 = vld [vmem:[%s1 + $0x9d0] sm:$0xff]
  %v357 = vld [vmem:[%s1 + $0x9d8] sm:$0xff]
  %v358 = vld [vmem:[%s1 + $0x9e0] sm:$0xff]
  %v359 = vld [vmem:[%s1 + $0x9e8] sm:$0xff]
  %v360 = vld [vmem:[%s1 + $0x9f0] sm:$0xff]
  %v361 = vld [vmem:[%s1 + $0x9f8] sm:$0xff]
  %v362 = vld [vmem:[%s1 + $0xa00] sm:$0xff]
  %v363 = vld [vmem:[%s1 + $0xa08] sm:$0xff]
  %v364 = vld [vmem:[%s1 + $0xa10] sm:$0xff]
  %v365 = vld [vmem:[%s1 + $0xa18] sm:$0xff]
  %v366 = vld [vmem:[%s1 + $0xa20] sm:$0xff]
  %v367 = vld [vmem:[%s1 + $0xa28] sm:$0xff]
  %v368 = vld [vmem:[%s1 + $0xa30] sm:$0xff]
  %v369 = vld [vmem:[%s1 + $0xa38] sm:$0xff]
  %v370 = vld [vmem:[%s1 + $0xa40] sm:$0xff]
  %v371 = vld [vmem:[%s1 + $0xa48] sm:$0xff]
  %v372 = vld [vmem:[%s1 + $0xa50] sm:$0xff]
  %v373 = vld [vmem:[%s1 + $0xa58] sm:$0xff]
  %v374 = vld [vmem:[%s1 + $0xa60] sm:$0xff]
  %v375 = vld [vmem:[%s1 + $0xa68] sm:$0xff]
  %v376 = vld [vmem:[%s1 + $0xa70] sm:$0xff]
  %v377 = vld [vmem:[%s1 + $0xa78] sm:$0xff]
  %v378 = vld [vmem:[%s1 + $0xa80] sm:$0xff]
  %v379 = vld [vmem:[%s1 + $0xa88] sm:$0xff]
  %v380 = vld [vmem:[%s1 + $0xa90] sm:$0xff]
  %v381 = vld [vmem:[%s1 + $0xa98] sm:$0xff]
  %v382 = vld [vmem:[%s1 + $0xaa0] sm:$0xff]
  %v383 = vld [vmem:[%s1 + $0xaa8] sm:$0xff]
  %v384 = vld [vmem:[%s1 + $0xab0] sm:$0xff]
  %v385 = vld [vmem:[%s1 + $0xab8] sm:$0xff]
  %v386 = vld [vmem:[%s1 + $0xac0] sm:$0xff]
  %v387 = vld [vmem:[%s1 + $0xac8] sm:$0xff]
  %v388 = vld [vmem:[%s1 + $0xad0] sm:$0xff]
  %v389 = vld [vmem:[%s1 + $0xad8] sm:$0xff]
  %v390 = vld [vmem:[%s1 + $0xae0] sm:$0xff]
  %v391 = vld [vmem:[%s1 + $0xae8] sm:$0xff]
  %v392 = vld [vmem:[%s1 + $0xaf0] sm:$0xff]
  %v393 = vld [vmem:[%s1 + $0xaf8] sm:$0xff]
  %v394 = vld [vmem:[%s1 + $0xb00] sm:$0xff]
  %v395 = vld [vmem:[%s1 + $0xb08] sm:$0xff]
  %v396 = vld [vmem:[%s1 + $0xb10] sm:$0xff]
  %v397 = vld [vmem:[%s1 + $0xb18] sm:$0xff]
  %v398 = vld [vmem:[%s1 + $0xb20] sm:$0xff]
  %v399 = vld [vmem:[%s1 + $0xb28] sm:$0xff]
  %v400 = vld [vmem:[%s1 + $0xb30] sm:$0xff]
  %v401 = vld [vmem:[%s1 + $0xb38] sm:$0xff]
  %v402 = vld [vmem:[%s1 + $0xb40] sm:$0xff]
  %v403 = vld [vmem:[%s1 + $0xb48] sm:$0xff]
  %v404 = vld [vmem:[%s1 + $0xb50] sm:$0xff]
  %v405 = vld [vmem:[%s1 + $0xb58] sm:$0xff]
  %v406 = vld [vmem:[%s1 + $0xb60] sm:$0xff]
  %v407 = vld [vmem:[%s1 + $0xb68] sm:$0xff]
  %v408 = vld [vmem:[%s1 + $0xb70] sm:$0xff]
  %v409 = vld [vmem:[%s1 + $0xb78] sm:$0xff]
  %v410 = vld [vmem:[%s1 + $0xb80] sm:$0xff]
  %v411 = vld [vmem:[%s1 + $0xb88] sm:$0xff]
  %v412 = vld [vmem:[%s1 + $0xb90] sm:$0xff]
  %v413 = vld [vmem:[%s1 + $0xb98] sm:$0xff]
  %v414 = vld [vmem:[%s1 + $0xba0] sm:$0xff]
  %v415 = vld [vmem:[%s1 + $0xba8] sm:$0xff]
  %v416 = vld [vmem:[%s1 + $0xbb0] sm:$0xff]
  %v417 = vld [vmem:[%s1 + $0xbb8] sm:$0xff]
  %v418 = vld [vmem:[%s1 + $0xbc0] sm:$0xff]
  %v419 = vld [vmem:[%s1 + $0xbc8] sm:$0xff]
  %v420 = vld [vmem:[%s1 + $0xbd0] sm:$0xff]
  %v421 = vld [vmem:[%s1 + $0xbd8] sm:$0xff]
  %v422 = vld [vmem:[%s1 + $0xbe0] sm:$0xff]
  %v423 = vld [vmem:[%s1 + $0xbe8] sm:$0xff]
  %v424 = vld [vmem:[%s1 + $0xbf0] sm:$0xff]
  %v425 = vld [vmem:[%s1 + $0xbf8] sm:$0xff]
  %v426 = vld [vmem:[%s1 + $0xc00] sm:$0xff]
  %v427 = vld [vmem:[%s1 + $0xc08] sm:$0xff]
  %v428 = vld [vmem:[%s1 + $0xc10] sm:$0xff]
  %v429 = vld [vmem:[%s1 + $0xc18] sm:$0xff]
  %v430 = vld [vmem:[%s1 + $0xc20] sm:$0xff]
  %v431 = vld [vmem:[%s1 + $0xc28] sm:$0xff]
  %v432 = vld [vmem:[%s1 + $0xc30] sm:$0xff]
  %v433 = vld [vmem:[%s1 + $0xc38] sm:$0xff]
  %v434 = vld [vmem:[%s1 + $0xc40] sm:$0xff]
  %v435 = vld [vmem:[%s1 + $0xc48] sm:$0xff]
  %v436 = vld [vmem:[%s1 + $0xc50] sm:$0xff]
  %v437 = vld [vmem:[%s1 + $0xc58] sm:$0xff]
  %v438 = vld [vmem:[%s1 + $0xc60] sm:$0xff]
  %v439 = vld [vmem:[%s1 + $0xc68] sm:$0xff]
  %v440 = vld [vmem:[%s1 + $0xc70] sm:$0xff]
  %v441 = vld [vmem:[%s1 + $0xc78] sm:$0xff]
  %v442 = vld [vmem:[%s1 + $0xc80] sm:$0xff]
  %v443 = vld [vmem:[%s1 + $0xc88] sm:$0xff]
  %v444 = vld [vmem:[%s1 + $0xc90] sm:$0xff]
  %v445 = vld [vmem:[%s1 + $0xc98] sm:$0xff]
  %v446 = vld [vmem:[%s1 + $0xca0] sm:$0xff]
  %v447 = vld [vmem:[%s1 + $0xca8] sm:$0xff]
  %v448 = vld [vmem:[%s1 + $0xcb0] sm:$0xff]
  %v449 = vld [vmem:[%s1 + $0xcb8] sm:$0xff]
  %v450 = vld [vmem:[%s1 + $0xcc0] sm:$0xff]
  %v451 = vld [vmem:[%s1 + $0xcc8] sm:$0xff]
  %v452 = vld [vmem:[%s1 + $0xcd0] sm:$0xff]
  %v453 = vld [vmem:[%s1 + $0xcd8] sm:$0xff]
  %v454 = vld [vmem:[%s1 + $0xce0] sm:$0xff]
  %v455 = vld [vmem:[%s1 + $0xce8] sm:$0xff]
  %v456 = vld [vmem:[%s1 + $0xcf0] sm:$0xff]
  %v457 = vld [vmem:[%s1 + $0xcf8] sm:$0xff]
  %v458 = vld [vmem:[%s1 + $0xd00] sm:$0xff]
  %v459 = vld [vmem:[%s1 + $0xd08] sm:$0xff]
  %v460 = vld [vmem:[%s1 + $0xd10] sm:$0xff]
  %v461 = vld [vmem:[%s1 + $0xd18] sm:$0xff]
  %v462 = vld [vmem:[%s1 + $0xd20] sm:$0xff]
  %v463 = vld [vmem:[%s1 + $0xd28] sm:$0xff]
  %v464 = vld [vmem:[%s1 + $0xd30] sm:$0xff]
  %v465 = vld [vmem:[%s1 + $0xd38] sm:$0xff]
  %v466 = vld [vmem:[%s1 + $0xd40] sm:$0xff]
  %v467 = vld [vmem:[%s1 + $0xd48] sm:$0xff]
  %v468 = vld [vmem:[%s1 + $0xd50] sm:$0xff]
  %v469 = vld [vmem:[%s1 + $0xd58] sm:$0xff]
  %v470 = vld [vmem:[%s1 + $0xd60] sm:$0xff]
  %v471 = vld [vmem:[%s1 + $0xd68] sm:$0xff]
  %v472 = vld [vmem:[%s1 + $0xd70] sm:$0xff]
  %v473 = vld [vmem:[%s1 + $0xd78] sm:$0xff]
  %v474 = vld [vmem:[%s1 + $0xd80] sm:$0xff]
  %v475 = vld [vmem:[%s1 + $0xd88] sm:$0xff]
  %v476 = vld [vmem:[%s1 + $0xd90] sm:$0xff]
  %v477 = vld [vmem:[%s1 + $0xd98] sm:$0xff]
  %v478 = vld [vmem:[%s1 + $0xda0] sm:$0xff]
  %v479 = vld [vmem:[%s1 + $0xda8] sm:$0xff]
  %v480 = vld [vmem:[%s1 + $0xdb0] sm:$0xff]
  %v481 = vld [vmem:[%s1 + $0xdb8] sm:$0xff]
  %v482 = vld [vmem:[%s1 + $0xdc0] sm:$0xff]
  %v483 = vld [vmem:[%s1 + $0xdc8] sm:$0xff]
  %v484 = vld [vmem:[%s1 + $0xdd0] sm:$0xff]
  %v485 = vld [vmem:[%s1 + $0xdd8] sm:$0xff]
  %v486 = vld [vmem:[%s1 + $0xde0] sm:$0xff]
  %v487 = vld [vmem:[%s1 + $0xde8] sm:$0xff]
  %v488 = vld [vmem:[%s1 + $0xdf0] sm:$0xff]
  %v489 = vld [vmem:[%s1 + $0xdf8] sm:$0xff]
  %v490 = vld [vmem:[%s1 + $0xe00] sm:$0xff]
  %v491 = vld [vmem:[%s1 + $0xe08] sm:$0xff]
  %v492 = vld [vmem:[%s1 + $0xe10] sm:$0xff]
  %v493 = vld [vmem:[%s1 + $0xe18] sm:$0xff]
  %v494 = vld [vmem:[%s1 + $0xe20] sm:$0xff]
  %v495 = vld [vmem:[%s1 + $0xe28] sm:$0xff]
  %v496 = vld [vmem:[%s1 + $0xe30] sm:$0xff]
  %v497 = vld [vmem:[%s1 + $0xe38] sm:$0xff]
  %v498 = vld [vmem:[%s1 + $0xe40] sm:$0xff]
  %v499 = vld [vmem:[%s1 + $0xe48] sm:$0xff]
  %v500 = vld [vmem:[%s1 + $0xe50] sm:$0xff]
  %v501 = vld [vmem:[%s1 + $0xe58] sm:$0xff]
  %v502 = vld [vmem:[%s1 + $0xe60] sm:$0xff]
  %v503 = vld [vmem:[%s1 + $0xe68] sm:$0xff]
  %v504 = vld [vmem:[%s1 + $0xe70] sm:$0xff]
  %v505 = vld [vmem:[%s1 + $0xe78] sm:$0xff]
  %v506 = vld [vmem:[%s1 + $0xe80] sm:$0xff]
  %v507 = vld [vmem:[%s1 + $0xe88] sm:$0xff]
  %v508 = vld [vmem:[%s1 + $0xe90] sm:$0xff]
  %v509 = vld [vmem:[%s1 + $0xe98] sm:$0xff]
  %v510 = vld [vmem:[%s1 + $0xea0] sm:$0xff]
  %v511 = vld [vmem:[%s1 + $0xea8] sm:$0xff]
  %v512 = vld [vmem:[%s1 + $0xeb0] sm:$0xff]
  %v513 = vld [vmem:[%s1 + $0xeb8] sm:$0xff]
  %v514 = vld [vmem:[%s1 + $0xec0] sm:$0xff]
  %v515 = vld [vmem:[%s1 + $0xec8] sm:$0xff]
  %v516 = vld [vmem:[%s1 + $0xed0] sm:$0xff]
  %v517 = vld [vmem:[%s1 + $0xed8] sm:$0xff]
  %v518 = vld [vmem:[%s1 + $0xee0] sm:$0xff]
  %v519 = vld [vmem:[%s1 + $0xee8] sm:$0xff]
  %v520 = vld [vmem:[%s1 + $0xef0] sm:$0xff]
  %v521 = vld [vmem:[%s1 + $0xef8] sm:$0xff]
  %v522 = vld [vmem:[%s1 + $0xf00] sm:$0xff]
  %v523 = vld [vmem:[%s1 + $0xf08] sm:$0xff]
  %v524 = vld [vmem:[%s1 + $0xf10] sm:$0xff]
  %v525 = vld [vmem:[%s1 + $0xf18] sm:$0xff]
  %v526 = vld [vmem:[%s1 + $0xf20] sm:$0xff]
  %v527 = vld [vmem:[%s1 + $0xf28] sm:$0xff]
  %v528 = vld [vmem:[%s1 + $0xf30] sm:$0xff]
  %v529 = vld [vmem:[%s1 + $0xf38] sm:$0xff]
  %v530 = vld [vmem:[%s1 + $0xf40] sm:$0xff]
  %v531 = vld [vmem:[%s1 + $0xf48] sm:$0xff]
  %v532 = vld [vmem:[%s1 + $0xf50] sm:$0xff]
  %v533 = vld [vmem:[%s1 + $0xf58] sm:$0xff]
  %v534 = vld [vmem:[%s1 + $0xf60] sm:$0xff]
  %v535 = vld [vmem:[%s1 + $0xf68] sm:$0xff]
  %v536 = vld [vmem:[%s1 + $0xf70] sm:$0xff]
  %v537 = vld [vmem:[%s1 + $0xf78] sm:$0xff]
  %v538 = vld [vmem:[%s1 + $0xf80] sm:$0xff]
  %v539 = vld [vmem:[%s1 + $0xf88] sm:$0xff]
  %v540 = vld [vmem:[%s1 + $0xf90] sm:$0xff]
  %v541 = vld [vmem:[%s1 + $0xf98] sm:$0xff]
  %v542 = vld [vmem:[%s1 + $0xfa0] sm:$0xff]
  %v543 = vld [vmem:[%s1 + $0xfa8] sm:$0xff]
  %v544 = vld [vmem:[%s1 + $0xfb0] sm:$0xff]
  %v545 = vld [vmem:[%s1 + $0xfb8] sm:$0xff]
  %v546 = vld [vmem:[%s1 + $0xfc0] sm:$0xff]
  %v547 = vld [vmem:[%s1 + $0xfc8] sm:$0xff]
  %v548 = vld [vmem:[%s1 + $0xfd0] sm:$0xff]
  %v549 = vld [vmem:[%s1 + $0xfd8] sm:$0xff]
  %v550 = vld [vmem:[%s1 + $0xfe0] sm:$0xff]
  %v551 = vld [vmem:[%s1 + $0xfe8] sm:$0xff]
  %v552 = vld [vmem:[%s1 + $0xff0] sm:$0xff]
  %v553 = vld [vmem:[%s1 + $0xff8] sm:$0xff]
  %v554 = vld [vmem:[%s1 + $0x1000] sm:$0xff]
  %v555 = vld [vmem:[%s1 + $0x1008] sm:$0xff]
  %v556 = vld [vmem:[%s1 + $0x1010] sm:$0xff]
  %v557 = vld [vmem:[%s1 + $0x1018] sm:$0xff]
  %v558 = vld [vmem:[%s1 + $0x1020] sm:$0xff]
  %v559 = vld [vmem:[%s1 + $0x1028] sm:$0xff]
  %v560 = vld [vmem:[%s1 + $0x1030] sm:$0xff]
  %v561 = vld [vmem:[%s1 + $0x1038] sm:$0xff]
  %v562 = vld [vmem:[%s1 + $0x1040] sm:$0xff]
  %v563 = vld [vmem:[%s1 + $0x1048] sm:$0xff]
  %v564 = vld [vmem:[%s1 + $0x1050] sm:$0xff]
  %v565 = vld [vmem:[%s1 + $0x1058] sm:$0xff]
  %v566 = vld [vmem:[%s1 + $0x1060] sm:$0xff]
  %v567 = vld [vmem:[%s1 + $0x1068] sm:$0xff]
  %v568 = vld [vmem:[%s1 + $0x1070] sm:$0xff]
  %v569 = vld [vmem:[%s1 + $0x1078] sm:$0xff]
  %v570 = vld [vmem:[%s1 + $0x1080] sm:$0xff]
  %v571 = vld [vmem:[%s1 + $0x1088] sm:$0xff]
  %v572 = vld [vmem:[%s1 + $0x1090] sm:$0xff]
  %v573 = vld [vmem:[%s1 + $0x1098] sm:$0xff]
  %v574 = vld [vmem:[%s1 + $0x10a0] sm:$0xff]
  %v575 = vld [vmem:[%s1 + $0x10a8] sm:$0xff]
  %v576 = vld [vmem:[%s1 + $0x10b0] sm:$0xff]
  %v577 = vld [vmem:[%s1 + $0x10b8] sm:$0xff]
  %v578 = vld [vmem:[%s1 + $0x10c0] sm:$0xff]
  %v579 = vld [vmem:[%s1 + $0x10c8] sm:$0xff]
  %v580 = vld [vmem:[%s1 + $0x10d0] sm:$0xff]
  %v581 = vld [vmem:[%s1 + $0x10d8] sm:$0xff]
  %v582 = vld [vmem:[%s1 + $0x10e0] sm:$0xff]
  %v583 = vld [vmem:[%s1 + $0x10e8] sm:$0xff]
  %v584 = vld [vmem:[%s1 + $0x10f0] sm:$0xff]
  %v585 = vld [vmem:[%s1 + $0x10f8] sm:$0xff]
  %v586 = vld [vmem:[%s1 + $0x1100] sm:$0xff]
  %v587 = vld [vmem:[%s1 + $0x1108] sm:$0xff]
  %v588 = vld [vmem:[%s1 + $0x1110] sm:$0xff]
  %v589 = vld [vmem:[%s1 + $0x1118] sm:$0xff]
  %v590 = vld [vmem:[%s1 + $0x1120] sm:$0xff]
  %v591 = vld [vmem:[%s1 + $0x1128] sm:$0xff]
  %v592 = vld [vmem:[%s1 + $0x1130] sm:$0xff]
  %v593 = vld [vmem:[%s1 + $0x1138] sm:$0xff]
  %v594 = vld [vmem:[%s1 + $0x1140] sm:$0xff]
  %v595 = vld [vmem:[%s1 + $0x1148] sm:$0xff]
  %v596 = vld [vmem:[%s1 + $0x1150] sm:$0xff]
  %v597 = vld [vmem:[%s1 + $0x1158] sm:$0xff]
  %v598 = vld [vmem:[%s1 + $0x1160] sm:$0xff]
  %v599 = vld [vmem:[%s1 + $0x1168] sm:$0xff]
  %v600 = vld [vmem:[%s1 + $0x1170] sm:$0xff]
  %v601 = vld [vmem:[%s1 + $0x1178] sm:$0xff]
  %v602 = vld [vmem:[%s1 + $0x1180] sm:$0xff]
  %v603 = vld [vmem:[%s1 + $0x1188] sm:$0xff]
  %v604 = vld [vmem:[%s1 + $0x1190] sm:$0xff]
  %v605 = vld [vmem:[%s1 + $0x1198] sm:$0xff]
  %v606 = vld [vmem:[%s1 + $0x11a0] sm:$0xff]
  %v607 = vld [vmem:[%s1 + $0x11a8] sm:$0xff]
  %v608 = vld [vmem:[%s1 + $0x11b0] sm:$0xff]
  %v609 = vld [vmem:[%s1 + $0x11b8] sm:$0xff]
  %v610 = vld [vmem:[%s1 + $0x11c0] sm:$0xff]
  %v611 = vld [vmem:[%s1 + $0x11c8] sm:$0xff]
  %v612 = vld [vmem:[%s1 + $0x11d0] sm:$0xff]
  %v613 = vld [vmem:[%s1 + $0x11d8] sm:$0xff]
  %v614 = vld [vmem:[%s1 + $0x11e0] sm:$0xff]
  %v615 = vld [vmem:[%s1 + $0x11e8] sm:$0xff]
  %v616 = vld [vmem:[%s1 + $0x11f0] sm:$0xff]
  %v617 = vld [vmem:[%s1 + $0x11f8] sm:$0xff]
  %v618 = vld [vmem:[%s1 + $0x1200] sm:$0xff]
  %v619 = vld [vmem:[%s1 + $0x1208] sm:$0xff]
  %v620 = vld [vmem:[%s1 + $0x1210] sm:$0xff]
  %v621 = vld [vmem:[%s1 + $0x1218] sm:$0xff]
  %v622 = vld [vmem:[%s1 + $0x1220] sm:$0xff]
  %v623 = vld [vmem:[%s1 + $0x1228] sm:$0xff]
  %v624 = vld [vmem:[%s1 + $0x1230] sm:$0xff]
  %v625 = vld [vmem:[%s1 + $0x1238] sm:$0xff]
  %v626 = vld [vmem:[%s1 + $0x1240] sm:$0xff]
  %v627 = vld [vmem:[%s1 + $0x1248] sm:$0xff]
  %v628 = vld [vmem:[%s1 + $0x1250] sm:$0xff]
  %v629 = vld [vmem:[%s1 + $0x1258] sm:$0xff]
  %v630 = vld [vmem:[%s1 + $0x1260] sm:$0xff]
  %v631 = vld [vmem:[%s1 + $0x1268] sm:$0xff]
  %v632 = vld [vmem:[%s1 + $0x1270] sm:$0xff]
  %v633 = vld [vmem:[%s1 + $0x1278] sm:$0xff]
  %v634 = vld [vmem:[%s1 + $0x1280] sm:$0xff]
  %v635 = vld [vmem:[%s1 + $0x1288] sm:$0xff]
  %v636 = vld [vmem:[%s1 + $0x1290] sm:$0xff]
  %v637 = vld [vmem:[%s1 + $0x1298] sm:$0xff]
  %v638 = vld [vmem:[%s1 + $0x12a0] sm:$0xff]
  %v639 = vld [vmem:[%s1 + $0x12a8] sm:$0xff]
  %v640 = vld [vmem:[%s1 + $0x12b0] sm:$0xff]
  %v641 = vld [vmem:[%s1 + $0x12b8] sm:$0xff]
  %v642 = vld [vmem:[%s1 + $0x12c0] sm:$0xff]
  %v643 = vld [vmem:[%s1 + $0x12c8] sm:$0xff]
  %v644 = vld [vmem:[%s1 + $0x12d0] sm:$0xff]
  %v645 = vld [vmem:[%s1 + $0x12d8] sm:$0xff]
  %v646 = vld [vmem:[%s1 + $0x12e0] sm:$0xff]
  %v647 = vld [vmem:[%s1 + $0x12e8] sm:$0xff]
  %v648 = vld [vmem:[%s1 + $0x12f0] sm:$0xff]
  %v649 = vld [vmem:[%s1 + $0x12f8] sm:$0xff]
  %v650 = vld [vmem:[%s1 + $0x1300] sm:$0xff]
  %v651 = vld [vmem:[%s1 + $0x1308] sm:$0xff]
  %v652 = vld [vmem:[%s1 + $0x1310] sm:$0xff]
  %v653 = vld [vmem:[%s1 + $0x1318] sm:$0xff]
  %v654 = vld [vmem:[%s1 + $0x1320] sm:$0xff]
  %v655 = vld [vmem:[%s1 + $0x1328] sm:$0xff]
  %v656 = vld [vmem:[%s1 + $0x1330] sm:$0xff]
  %v657 = vld [vmem:[%s1 + $0x1338] sm:$0xff]
  %v658 = vld [vmem:[%s1 + $0x1340] sm:$0xff]
  %v659 = vld [vmem:[%s1 + $0x1348] sm:$0xff]
  %v660 = vld [vmem:[%s1 + $0x1350] sm:$0xff]
  %v661 = vld [vmem:[%s1 + $0x1358] sm:$0xff]
  %v662 = vld [vmem:[%s1 + $0x1360] sm:$0xff]
  %v663 = vld [vmem:[%s1 + $0x1368] sm:$0xff]
  %v664 = vld [vmem:[%s1 + $0x1370] sm:$0xff]
  %v665 = vld [vmem:[%s1 + $0x1378] sm:$0xff]
  %v666 = vld [vmem:[%s1 + $0x1380] sm:$0xff]
  %v667 = vld [vmem:[%s1 + $0x1388] sm:$0xff]
  %v668 = vld [vmem:[%s1 + $0x1390] sm:$0xff]
  %v669 = vld [vmem:[%s1 + $0x1398] sm:$0xff]
  %v670 = vld [vmem:[%s1 + $0x13a0] sm:$0xff]
  %v671 = vld [vmem:[%s1 + $0x13a8] sm:$0xff]
  %v672 = vld [vmem:[%s1 + $0x13b0] sm:$0xff]
  %v673 = vld [vmem:[%s1 + $0x13b8] sm:$0xff]
  %v674 = vld [vmem:[%s1 + $0x13c0] sm:$0xff]
  %v675 = vld [vmem:[%s1 + $0x13c8] sm:$0xff]
  %v676 = vld [vmem:[%s1 + $0x13d0] sm:$0xff]
  %v677 = vld [vmem:[%s1 + $0x13d8] sm:$0xff]
  %v678 = vld [vmem:[%s1 + $0x13e0] sm:$0xff]
  %v679 = vld [vmem:[%s1 + $0x13e8] sm:$0xff]
  %v680 = vld [vmem:[%s1 + $0x13f0] sm:$0xff]
  %v681 = vld [vmem:[%s1 + $0x13f8] sm:$0xff]
  %v682 = vld [vmem:[%s1 + $0x1400] sm:$0xff]
  %v683 = vld [vmem:[%s1 + $0x1408] sm:$0xff]
  %v684 = vld [vmem:[%s1 + $0x1410] sm:$0xff]
  %v685 = vld [vmem:[%s1 + $0x1418] sm:$0xff]
  %v686 = vld [vmem:[%s1 + $0x1420] sm:$0xff]
  %v687 = vld [vmem:[%s1 + $0x1428] sm:$0xff]
  %v688 = vld [vmem:[%s1 + $0x1430] sm:$0xff]
  %v689 = vld [vmem:[%s1 + $0x1438] sm:$0xff]
  %v690 = vld [vmem:[%s1 + $0x1440] sm:$0xff]
  %v691 = vld [vmem:[%s1 + $0x1448] sm:$0xff]
  %v692 = vld [vmem:[%s1 + $0x1450] sm:$0xff]
  %v693 = vld [vmem:[%s1 + $0x1458] sm:$0xff]
  %v694 = vld [vmem:[%s1 + $0x1460] sm:$0xff]
  %v695 = vld [vmem:[%s1 + $0x1468] sm:$0xff]
  %v696 = vld [vmem:[%s1 + $0x1470] sm:$0xff]
  %v697 = vld [vmem:[%s1 + $0x1478] sm:$0xff]
  %v698 = vld [vmem:[%s1 + $0x1480] sm:$0xff]
  %v699 = vld [vmem:[%s1 + $0x1488] sm:$0xff]
  %v700 = vld [vmem:[%s1 + $0x1490] sm:$0xff]
  %v701 = vld [vmem:[%s1 + $0x1498] sm:$0xff]
  %v702 = vld [vmem:[%s1 + $0x14a0] sm:$0xff]
  %v703 = vld [vmem:[%s1 + $0x14a8] sm:$0xff]
  %v704 = vld [vmem:[%s1 + $0x14b0] sm:$0xff]
  %v705 = vld [vmem:[%s1 + $0x14b8] sm:$0xff]
  %v706 = vld [vmem:[%s1 + $0x14c0] sm:$0xff]
  %v707 = vld [vmem:[%s1 + $0x14c8] sm:$0xff]
  %v708 = vld [vmem:[%s1 + $0x14d0] sm:$0xff]
  %v709 = vld [vmem:[%s1 + $0x14d8] sm:$0xff]
  %v710 = vld [vmem:[%s1 + $0x14e0] sm:$0xff]
  %v711 = vld [vmem:[%s1 + $0x14e8] sm:$0xff]
  %v712 = vld [vmem:[%s1 + $0x14f0] sm:$0xff]
  %v713 = vld [vmem:[%s1 + $0x14f8] sm:$0xff]
  %v714 = vld [vmem:[%s1 + $0x1500] sm:$0xff]
  %v715 = vld [vmem:[%s1 + $0x1508] sm:$0xff]
  %v716 = vld [vmem:[%s1 + $0x1510] sm:$0xff]
  %v717 = vld [vmem:[%s1 + $0x1518] sm:$0xff]
  %v718 = vld [vmem:[%s1 + $0x1520] sm:$0xff]
  %v719 = vld [vmem:[%s1 + $0x1528] sm:$0xff]
  %v720 = vld [vmem:[%s1 + $0x1530] sm:$0xff]
  %v721 = vld [vmem:[%s1 + $0x1538] sm:$0xff]
  %v722 = vld [vmem:[%s1 + $0x1540] sm:$0xff]
  %v723 = vld [vmem:[%s1 + $0x1548] sm:$0xff]
  %v724 = vld [vmem:[%s1 + $0x1550] sm:$0xff]
  %v725 = vld [vmem:[%s1 + $0x1558] sm:$0xff]
  %v726 = vld [vmem:[%s1 + $0x1560] sm:$0xff]
  %v727 = vld [vmem:[%s1 + $0x1568] sm:$0xff]
  %v728 = vld [vmem:[%s1 + $0x1570] sm:$0xff]
  %v729 = vld [vmem:[%s1 + $0x1578] sm:$0xff]
  %v730 = vld [vmem:[%s1 + $0x1580] sm:$0xff]
  %v731 = vld [vmem:[%s1 + $0x1588] sm:$0xff]
  %v732 = vld [vmem:[%s1 + $0x1590] sm:$0xff]
  %v733 = vld [vmem:[%s1 + $0x1598] sm:$0xff]
  %v734 = vld [vmem:[%s1 + $0x15a0] sm:$0xff]
  %v735 = vld [vmem:[%s1 + $0x15a8] sm:$0xff]
  %v736 = vld [vmem:[%s1 + $0x15b0] sm:$0xff]
  %v737 = vld [vmem:[%s1 + $0x15b8] sm:$0xff]
  %v738 = vld [vmem:[%s1 + $0x15c0] sm:$0xff]
  %v739 = vld [vmem:[%s1 + $0x15c8] sm:$0xff]
  %v740 = vld [vmem:[%s1 + $0x15d0] sm:$0xff]
  %v741 = vld [vmem:[%s1 + $0x15d8] sm:$0xff]
  %v742 = vld [vmem:[%s1 + $0x15e0] sm:$0xff]
  %v743 = vld [vmem:[%s1 + $0x15e8] sm:$0xff]
  %v744 = vld [vmem:[%s1 + $0x15f0] sm:$0xff]
  %v745 = vld [vmem:[%s1 + $0x15f8] sm:$0xff]
  %v746 = vld [vmem:[%s1 + $0x1600] sm:$0xff]
  %v747 = vld [vmem:[%s1 + $0x1608] sm:$0xff]
  %v748 = vld [vmem:[%s1 + $0x1610] sm:$0xff]
  %v749 = vld [vmem:[%s1 + $0x1618] sm:$0xff]
  %v750 = vld [vmem:[%s1 + $0x1620] sm:$0xff]
  %v751 = vld [vmem:[%s1 + $0x1628] sm:$0xff]
  %v752 = vld [vmem:[%s1 + $0x1630] sm:$0xff]
  %v753 = vld [vmem:[%s1 + $0x1638] sm:$0xff]
  %v754 = vld [vmem:[%s1 + $0x1640] sm:$0xff]
  %v755 = vld [vmem:[%s1 + $0x1648] sm:$0xff]
  %v756 = vld [vmem:[%s1 + $0x1650] sm:$0xff]
  %v757 = vld [vmem:[%s1 + $0x1658] sm:$0xff]
  %v758 = vld [vmem:[%s1 + $0x1660] sm:$0xff]
  %v759 = vld [vmem:[%s1 + $0x1668] sm:$0xff]
  %v760 = vld [vmem:[%s1 + $0x1670] sm:$0xff]
  %v761 = vld [vmem:[%s1 + $0x1678] sm:$0xff]
  %v762 = vld [vmem:[%s1 + $0x1680] sm:$0xff]
  %v763 = vld [vmem:[%s1 + $0x1688] sm:$0xff]
  %v764 = vld [vmem:[%s1 + $0x1690] sm:$0xff]
  %v765 = vld [vmem:[%s1 + $0x1698] sm:$0xff]
  %v766 = vld [vmem:[%s1 + $0x16a0] sm:$0xff]
  %v767 = vld [vmem:[%s1 + $0x16a8] sm:$0xff]
  %v768 = vld [vmem:[%s1 + $0x16b0] sm:$0xff]
  %v769 = vld [vmem:[%s1 + $0x16b8] sm:$0xff]
  %v770 = vld [vmem:[%s1 + $0x16c0] sm:$0xff]
  %v771 = vld [vmem:[%s1 + $0x16c8] sm:$0xff]
  %v772 = vld [vmem:[%s1 + $0x16d0] sm:$0xff]
  %v773 = vld [vmem:[%s1 + $0x16d8] sm:$0xff]
  %v774 = vld [vmem:[%s1 + $0x16e0] sm:$0xff]
  %v775 = vld [vmem:[%s1 + $0x16e8] sm:$0xff]
  %v776 = vld [vmem:[%s1 + $0x16f0] sm:$0xff]
  %v777 = vld [vmem:[%s1 + $0x16f8] sm:$0xff]
  %v778 = vld [vmem:[%s1 + $0x1700] sm:$0xff]
  %v779 = vld [vmem:[%s1 + $0x1708] sm:$0xff]
  %v780 = vld [vmem:[%s1 + $0x1710] sm:$0xff]
  %v781 = vld [vmem:[%s1 + $0x1718] sm:$0xff]
  %v782 = vld [vmem:[%s1 + $0x1720] sm:$0xff]
  %v783 = vld [vmem:[%s1 + $0x1728] sm:$0xff]
  %v784 = vld [vmem:[%s1 + $0x1730] sm:$0xff]
  %v785 = vld [vmem:[%s1 + $0x1738] sm:$0xff]
  %v786 = vld [vmem:[%s1 + $0x1740] sm:$0xff]
  %v787 = vld [vmem:[%s1 + $0x1748] sm:$0xff]
  %v788 = vld [vmem:[%s1 + $0x1750] sm:$0xff]
  %v789 = vld [vmem:[%s1 + $0x1758] sm:$0xff]
  %v790 = vld [vmem:[%s1 + $0x1760] sm:$0xff]
  %v791 = vld [vmem:[%s1 + $0x1768] sm:$0xff]
  %v792 = vld [vmem:[%s1 + $0x1770] sm:$0xff]
  %v793 = vld [vmem:[%s1 + $0x1778] sm:$0xff]
  %v794 = vld [vmem:[%s1 + $0x1780] sm:$0xff]
  %v795 = vld [vmem:[%s1 + $0x1788] sm:$0xff]
  %v796 = vld [vmem:[%s1 + $0x1790] sm:$0xff]
  %v797 = vld [vmem:[%s1 + $0x1798] sm:$0xff]
  %v798 = vld [vmem:[%s1 + $0x17a0] sm:$0xff]
  %v799 = vld [vmem:[%s1 + $0x17a8] sm:$0xff]
  %v800 = vld [vmem:[%s1 + $0x17b0] sm:$0xff]
  %v801 = vld [vmem:[%s1 + $0x17b8] sm:$0xff]
  %v802 = vld [vmem:[%s1 + $0x17c0] sm:$0xff]
  %v803 = vld [vmem:[%s1 + $0x17c8] sm:$0xff]
  %v804 = vld [vmem:[%s1 + $0x17d0] sm:$0xff]
  %v805 = vld [vmem:[%s1 + $0x17d8] sm:$0xff]
  %v806 = vld [vmem:[%s1 + $0x17e0] sm:$0xff]
  %v807 = vld [vmem:[%s1 + $0x17e8] sm:$0xff]
  %v808 = vld [vmem:[%s1 + $0x17f0] sm:$0xff]
  %v809 = vld [vmem:[%s1 + $0x17f8] sm:$0xff]
  %v810 = vld [vmem:[%s1 + $0x1800] sm:$0xff]
  %v811 = vld [vmem:[%s1 + $0x1808] sm:$0xff]
  %v812 = vld [vmem:[%s1 + $0x1810] sm:$0xff]
  %v813 = vld [vmem:[%s1 + $0x1818] sm:$0xff]
  %v814 = vld [vmem:[%s1 + $0x1820] sm:$0xff]
  %v815 = vld [vmem:[%s1 + $0x1828] sm:$0xff]
  %v816 = vld [vmem:[%s1 + $0x1830] sm:$0xff]
  %v817 = vld [vmem:[%s1 + $0x1838] sm:$0xff]
  %v818 = vld [vmem:[%s1 + $0x1840] sm:$0xff]
  %v819 = vld [vmem:[%s1 + $0x1848] sm:$0xff]
  %v820 = vld [vmem:[%s1 + $0x1850] sm:$0xff]
  %v821 = vld [vmem:[%s1 + $0x1858] sm:$0xff]
  %v822 = vld [vmem:[%s1 + $0x1860] sm:$0xff]
  %v823 = vld [vmem:[%s1 + $0x1868] sm:$0xff]
  %v824 = vld [vmem:[%s1 + $0x1870] sm:$0xff]
  %v825 = vld [vmem:[%s1 + $0x1878] sm:$0xff]
  %v826 = vld [vmem:[%s1 + $0x1880] sm:$0xff]
  %v827 = vld [vmem:[%s1 + $0x1888] sm:$0xff]
  %v828 = vld [vmem:[%s1 + $0x1890] sm:$0xff]
  %v829 = vld [vmem:[%s1 + $0x1898] sm:$0xff]
  %v830 = vld [vmem:[%s1 + $0x18a0] sm:$0xff]
  %v831 = vld [vmem:[%s1 + $0x18a8] sm:$0xff]
  %v832 = vld [vmem:[%s1 + $0x18b0] sm:$0xff]
  %v833 = vld [vmem:[%s1 + $0x18b8] sm:$0xff]
  %v834 = vld [vmem:[%s1 + $0x18c0] sm:$0xff]
  %v835 = vld [vmem:[%s1 + $0x18c8] sm:$0xff]
  %v836 = vld [vmem:[%s1 + $0x18d0] sm:$0xff]
  %v837 = vld [vmem:[%s1 + $0x18d8] sm:$0xff]
  %v838 = vld [vmem:[%s1 + $0x18e0] sm:$0xff]
  %v839 = vld [vmem:[%s1 + $0x18e8] sm:$0xff]
  %v840 = vld [vmem:[%s1 + $0x18f0] sm:$0xff]
  %v841 = vld [vmem:[%s1 + $0x18f8] sm:$0xff]
  %v842 = vld [vmem:[%s1 + $0x1900] sm:$0xff]
  %v843 = vld [vmem:[%s1 + $0x1908] sm:$0xff]
  %v844 = vld [vmem:[%s1 + $0x1910] sm:$0xff]
  %v845 = vld [vmem:[%s1 + $0x1918] sm:$0xff]
  %v846 = vld [vmem:[%s1 + $0x1920] sm:$0xff]
  %v847 = vld [vmem:[%s1 + $0x1928] sm:$0xff]
  %v848 = vld [vmem:[%s1 + $0x1930] sm:$0xff]
  %v849 = vld [vmem:[%s1 + $0x1938] sm:$0xff]
  %v850 = vld [vmem:[%s1 + $0x1940] sm:$0xff]
  %v851 = vld [vmem:[%s1 + $0x1948] sm:$0xff]
  %v852 = vld [vmem:[%s1 + $0x1950] sm:$0xff]
  %v853 = vld [vmem:[%s1 + $0x1958] sm:$0xff]
  %v854 = vld [vmem:[%s1 + $0x1960] sm:$0xff]
  %v855 = vld [vmem:[%s1 + $0x1968] sm:$0xff]
  %v856 = vld [vmem:[%s1 + $0x1970] sm:$0xff]
  %v857 = vld [vmem:[%s1 + $0x1978] sm:$0xff]
  %v858 = vld [vmem:[%s1 + $0x1980] sm:$0xff]
  %v859 = vld [vmem:[%s1 + $0x1988] sm:$0xff]
  %v860 = vld [vmem:[%s1 + $0x1990] sm:$0xff]
  %v861 = vld [vmem:[%s1 + $0x1998] sm:$0xff]
  %v862 = vld [vmem:[%s1 + $0x19a0] sm:$0xff]
  %v863 = vld [vmem:[%s1 + $0x19a8] sm:$0xff]
  %v864 = vld [vmem:[%s1 + $0x19b0] sm:$0xff]
  %v865 = vld [vmem:[%s1 + $0x19b8] sm:$0xff]
  %v866 = vld [vmem:[%s1 + $0x19c0] sm:$0xff]
  %v867 = vld [vmem:[%s1 + $0x19c8] sm:$0xff]
  %v868 = vld [vmem:[%s1 + $0x19d0] sm:$0xff]
  %v869 = vld [vmem:[%s1 + $0x19d8] sm:$0xff]
  %v870 = vld [vmem:[%s1 + $0x19e0] sm:$0xff]
  %v871 = vld [vmem:[%s1 + $0x19e8] sm:$0xff]
  %v872 = vld [vmem:[%s1 + $0x19f0] sm:$0xff]
  %v873 = vld [vmem:[%s1 + $0x19f8] sm:$0xff]
  %v874 = vld [vmem:[%s1 + $0x1a00] sm:$0xff]
  %v875 = vld [vmem:[%s1 + $0x1a08] sm:$0xff]
  %v876 = vld [vmem:[%s1 + $0x1a10] sm:$0xff]
  %v877 = vld [vmem:[%s1 + $0x1a18] sm:$0xff]
  %v878 = vld [vmem:[%s1 + $0x1a20] sm:$0xff]
  %v879 = vld [vmem:[%s1 + $0x1a28] sm:$0xff]
  %v880 = vld [vmem:[%s1 + $0x1a30] sm:$0xff]
  %v881 = vld [vmem:[%s1 + $0x1a38] sm:$0xff]
  %v882 = vld [vmem:[%s1 + $0x1a40] sm:$0xff]
  %v883 = vld [vmem:[%s1 + $0x1a48] sm:$0xff]
  %v884 = vld [vmem:[%s1 + $0x1a50] sm:$0xff]
  %v885 = vld [vmem:[%s1 + $0x1a58] sm:$0xff]
  %v886 = vld [vmem:[%s1 + $0x1a60] sm:$0xff]
  %v887 = vld [vmem:[%s1 + $0x1a68] sm:$0xff]
  %v888 = vld [vmem:[%s1 + $0x1a70] sm:$0xff]
  %v889 = vld [vmem:[%s1 + $0x1a78] sm:$0xff]
  %v890 = vld [vmem:[%s1 + $0x1a80] sm:$0xff]
  %v891 = vld [vmem:[%s1 + $0x1a88] sm:$0xff]
  %v892 = vld [vmem:[%s1 + $0x1a90] sm:$0xff]
  %v893 = vld [vmem:[%s1 + $0x1a98] sm:$0xff]
  %v894 = vld [vmem:[%s1 + $0x1aa0] sm:$0xff]
  %v895 = vld [vmem:[%s1 + $0x1aa8] sm:$0xff]
  %v896 = vld [vmem:[%s1 + $0x1ab0] sm:$0xff]
  %v897 = vld [vmem:[%s1 + $0x1ab8] sm:$0xff]
  %v898 = vld [vmem:[%s1 + $0x1ac0] sm:$0xff]
  %v899 = vld [vmem:[%s1 + $0x1ac8] sm:$0xff]
  %v900 = vld [vmem:[%s1 + $0x1ad0] sm:$0xff]
  %v901 = vld [vmem:[%s1 + $0x1ad8] sm:$0xff]
  %v902 = vld [vmem:[%s1 + $0x1ae0] sm:$0xff]
  %v903 = vld [vmem:[%s1 + $0x1ae8] sm:$0xff]
  %v904 = vld [vmem:[%s1 + $0x1af0] sm:$0xff]
  %v905 = vld [vmem:[%s1 + $0x1af8] sm:$0xff]
  %v906 = vld [vmem:[%s1 + $0x1b00] sm:$0xff]
  %v907 = vld [vmem:[%s1 + $0x1b08] sm:$0xff]
  %v908 = vld [vmem:[%s1 + $0x1b10] sm:$0xff]
  %v909 = vld [vmem:[%s1 + $0x1b18] sm:$0xff]
  %v910 = vld [vmem:[%s1 + $0x1b20] sm:$0xff]
  %v911 = vld [vmem:[%s1 + $0x1b28] sm:$0xff]
  %v912 = vld [vmem:[%s1 + $0x1b30] sm:$0xff]
  %v913 = vld [vmem:[%s1 + $0x1b38] sm:$0xff]
  %v914 = vld [vmem:[%s1 + $0x1b40] sm:$0xff]
  %v915 = vld [vmem:[%s1 + $0x1b48] sm:$0xff]
  %v916 = vld [vmem:[%s1 + $0x1b50] sm:$0xff]
  %v917 = vld [vmem:[%s1 + $0x1b58] sm:$0xff]
  %v918 = vld [vmem:[%s1 + $0x1b60] sm:$0xff]
  %v919 = vld [vmem:[%s1 + $0x1b68] sm:$0xff]
  %v920 = vld [vmem:[%s1 + $0x1b70] sm:$0xff]
  %v921 = vld [vmem:[%s1 + $0x1b78] sm:$0xff]
  %v922 = vld [vmem:[%s1 + $0x1b80] sm:$0xff]
  %v923 = vld [vmem:[%s1 + $0x1b88] sm:$0xff]
  %v924 = vld [vmem:[%s1 + $0x1b90] sm:$0xff]
  %v925 = vld [vmem:[%s1 + $0x1b98] sm:$0xff]
  %v926 = vld [vmem:[%s1 + $0x1ba0] sm:$0xff]
  %v927 = vld [vmem:[%s1 + $0x1ba8] sm:$0xff]
  %v928 = vld [vmem:[%s1 + $0x1bb0] sm:$0xff]
  %v929 = vld [vmem:[%s1 + $0x1bb8] sm:$0xff]
  %v930 = vld [vmem:[%s1 + $0x1bc0] sm:$0xff]
  %v931 = vld [vmem:[%s1 + $0x1bc8] sm:$0xff]
  %v932 = vld [vmem:[%s1 + $0x1bd0] sm:$0xff]
  %v933 = vld [vmem:[%s1 + $0x1bd8] sm:$0xff]
  %v934 = vld [vmem:[%s1 + $0x1be0] sm:$0xff]
  %v935 = vld [vmem:[%s1 + $0x1be8] sm:$0xff]
  %v936 = vld [vmem:[%s1 + $0x1bf0] sm:$0xff]
  %v937 = vld [vmem:[%s1 + $0x1bf8] sm:$0xff]
  %v938 = vld [vmem:[%s1 + $0x1c00] sm:$0xff]
  %v939 = vld [vmem:[%s1 + $0x1c08] sm:$0xff]
  %v940 = vld [vmem:[%s1 + $0x1c10] sm:$0xff]
  %v941 = vld [vmem:[%s1 + $0x1c18] sm:$0xff]
  %v942 = vld [vmem:[%s1 + $0x1c20] sm:$0xff]
  %v943 = vld [vmem:[%s1 + $0x1c28] sm:$0xff]
  %v944 = vld [vmem:[%s1 + $0x1c30] sm:$0xff]
  %v945 = vld [vmem:[%s1 + $0x1c38] sm:$0xff]
  %v946 = vld [vmem:[%s1 + $0x1c40] sm:$0xff]
  %v947 = vld [vmem:[%s1 + $0x1c48] sm:$0xff]
  %v948 = vld [vmem:[%s1 + $0x1c50] sm:$0xff]
  %v949 = vld [vmem:[%s1 + $0x1c58] sm:$0xff]
  %v950 = vld [vmem:[%s1 + $0x1c60] sm:$0xff]
  %v951 = vld [vmem:[%s1 + $0x1c68] sm:$0xff]
  %v952 = vld [vmem:[%s1 + $0x1c70] sm:$0xff]
  %v953 = vld [vmem:[%s1 + $0x1c78] sm:$0xff]
  %v954 = vld [vmem:[%s1 + $0x1c80] sm:$0xff]
  %v955 = vld [vmem:[%s1 + $0x1c88] sm:$0xff]
  %v956 = vld [vmem:[%s1 + $0x1c90] sm:$0xff]
  %v957 = vld [vmem:[%s1 + $0x1c98] sm:$0xff]
  %v958 = vld [vmem:[%s1 + $0x1ca0] sm:$0xff]
  %v959 = vld [vmem:[%s1 + $0x1ca8] sm:$0xff]
  %v960 = vld [vmem:[%s1 + $0x1cb0] sm:$0xff]
  %v961 = vld [vmem:[%s1 + $0x1cb8] sm:$0xff]
  %v962 = vld [vmem:[%s1 + $0x1cc0] sm:$0xff]
  %v963 = vld [vmem:[%s1 + $0x1cc8] sm:$0xff]
  %v964 = vld [vmem:[%s1 + $0x1cd0] sm:$0xff]
  %v965 = vld [vmem:[%s1 + $0x1cd8] sm:$0xff]
  %v966 = vld [vmem:[%s1 + $0x1ce0] sm:$0xff]
  %v967 = vld [vmem:[%s1 + $0x1ce8] sm:$0xff]
  %v968 = vld [vmem:[%s1 + $0x1cf0] sm:$0xff]
  %v969 = vld [vmem:[%s1 + $0x1cf8] sm:$0xff]
  %v970 = vld [vmem:[%s1 + $0x1d00] sm:$0xff]
  %v971 = vld [vmem:[%s1 + $0x1d08] sm:$0xff]
  %v972 = vld [vmem:[%s1 + $0x1d10] sm:$0xff]
  %v973 = vld [vmem:[%s1 + $0x1d18] sm:$0xff]
  %v974 = vld [vmem:[%s1 + $0x1d20] sm:$0xff]
  %v975 = vld [vmem:[%s1 + $0x1d28] sm:$0xff]
  %v976 = vld [vmem:[%s1 + $0x1d30] sm:$0xff]
  %v977 = vld [vmem:[%s1 + $0x1d38] sm:$0xff]
  %v978 = vld [vmem:[%s1 + $0x1d40] sm:$0xff]
  %v979 = vld [vmem:[%s1 + $0x1d48] sm:$0xff]
  %v980 = vld [vmem:[%s1 + $0x1d50] sm:$0xff]
  %v981 = vld [vmem:[%s1 + $0x1d58] sm:$0xff]
  %v982 = vld [vmem:[%s1 + $0x1d60] sm:$0xff]
  %v983 = vld [vmem:[%s1 + $0x1d68] sm:$0xff]
  %v984 = vld [vmem:[%s1 + $0x1d70] sm:$0xff]
  %v985 = vld [vmem:[%s1 + $0x1d78] sm:$0xff]
  %v986 = vld [vmem:[%s1 + $0x1d80] sm:$0xff]
  %v987 = vld [vmem:[%s1 + $0x1d88] sm:$0xff]
  %v988 = vld [vmem:[%s1 + $0x1d90] sm:$0xff]
  %v989 = vld [vmem:[%s1 + $0x1d98] sm:$0xff]
  %v990 = vld [vmem:[%s1 + $0x1da0] sm:$0xff]
  %v991 = vld [vmem:[%s1 + $0x1da8] sm:$0xff]
  %v992 = vld [vmem:[%s1 + $0x1db0] sm:$0xff]
  %v993 = vld [vmem:[%s1 + $0x1db8] sm:$0xff]
  %v994 = vld [vmem:[%s1 + $0x1dc0] sm:$0xff]
  %v995 = vld [vmem:[%s1 + $0x1dc8] sm:$0xff]
  %v996 = vld [vmem:[%s1 + $0x1dd0] sm:$0xff]
  %v997 = vld [vmem:[%s1 + $0x1dd8] sm:$0xff]
  %v998 = vld [vmem:[%s1 + $0x1de0] sm:$0xff]
  %v999 = vld [vmem:[%s1 + $0x1de8] sm:$0xff]
  %v1000 = vld [vmem:[%s1 + $0x1df0] sm:$0xff]
  %v1001 = vld [vmem:[%s1 + $0x1df8] sm:$0xff]
  %v1002 = vld [vmem:[%s1 + $0x1e00] sm:$0xff]
  %v1003 = vld [vmem:[%s1 + $0x1e08] sm:$0xff]
  %v1004 = vld [vmem:[%s1 + $0x1e10] sm:$0xff]
  %v1005 = vld [vmem:[%s1 + $0x1e18] sm:$0xff]
  %v1006 = vld [vmem:[%s1 + $0x1e20] sm:$0xff]
  %v1007 = vld [vmem:[%s1 + $0x1e28] sm:$0xff]
  %v1008 = vld [vmem:[%s1 + $0x1e30] sm:$0xff]
  %v1009 = vld [vmem:[%s1 + $0x1e38] sm:$0xff]
  %v1010 = vld [vmem:[%s1 + $0x1e40] sm:$0xff]
  %v1011 = vld [vmem:[%s1 + $0x1e48] sm:$0xff]
  %v1012 = vld [vmem:[%s1 + $0x1e50] sm:$0xff]
  %v1013 = vld [vmem:[%s1 + $0x1e58] sm:$0xff]
  %v1014 = vld [vmem:[%s1 + $0x1e60] sm:$0xff]
  %v1015 = vld [vmem:[%s1 + $0x1e68] sm:$0xff]
  %v1016 = vld [vmem:[%s1 + $0x1e70] sm:$0xff]
  %v1017 = vld [vmem:[%s1 + $0x1e78] sm:$0xff]
  %v1018 = vld [vmem:[%s1 + $0x1e80] sm:$0xff]
  %v1019 = vld [vmem:[%s1 + $0x1e88] sm:$0xff]
  %v1020 = vld [vmem:[%s1 + $0x1e90] sm:$0xff]
  %v1021 = vld [vmem:[%s1 + $0x1e98] sm:$0xff]
  %v1022 = vld [vmem:[%s1 + $0x1ea0] sm:$0xff]
  %v1023 = vld [vmem:[%s1 + $0x1ea8] sm:$0xff]
  %v1024 = vld [vmem:[%s1 + $0x1eb0] sm:$0xff]
  %v1025 = vld [vmem:[%s1 + $0x1eb8] sm:$0xff]
  %v1026 = vld [vmem:[%s1 + $0x1ec0] sm:$0xff]
  %v1027 = vld [vmem:[%s1 + $0x1ec8] sm:$0xff]
  %v1028 = vld [vmem:[%s1 + $0x1ed0] sm:$0xff]
  %v1029 = vld [vmem:[%s1 + $0x1ed8] sm:$0xff]
  %v1030 = vld [vmem:[%s1 + $0x1ee0] sm:$0xff]
  %v1031 = vld [vmem:[%s1 + $0x1ee8] sm:$0xff]
  %v1032 = vld [vmem:[%s1 + $0x1ef0] sm:$0xff]
  %v1033 = vld [vmem:[%s1 + $0x1ef8] sm:$0xff]
  %v1034 = vld [vmem:[%s1 + $0x1f00] sm:$0xff]
  %v1035 = vld [vmem:[%s1 + $0x1f08] sm:$0xff]
  %v1036 = vld [vmem:[%s1 + $0x1f10] sm:$0xff]
  %v1037 = vld [vmem:[%s1 + $0x1f18] sm:$0xff]
  %v1038 = vld [vmem:[%s1 + $0x1f20] sm:$0xff]
  %v1039 = vld [vmem:[%s1 + $0x1f28] sm:$0xff]
  %v1040 = vld [vmem:[%s1 + $0x1f30] sm:$0xff]
  %v1041 = vld [vmem:[%s1 + $0x1f38] sm:$0xff]
  %v1042 = vld [vmem:[%s1 + $0x1f40] sm:$0xff]
  %v1043 = vld [vmem:[%s1 + $0x1f48] sm:$0xff]
  %v1044 = vld [vmem:[%s1 + $0x1f50] sm:$0xff]
  %v1045 = vld [vmem:[%s1 + $0x1f58] sm:$0xff]
  %v1046 = vld [vmem:[%s1 + $0x1f60] sm:$0xff]
  %v1047 = vld [vmem:[%s1 + $0x1f68] sm:$0xff]
  %v1048 = vld [vmem:[%s1 + $0x1f70] sm:$0xff]
  %v1049 = vld [vmem:[%s1 + $0x1f78] sm:$0xff]
  %v1050 = vld [vmem:[%s1 + $0x1f80] sm:$0xff]
  %v1051 = vld [vmem:[%s1 + $0x1f88] sm:$0xff]
  %v1052 = vld [vmem:[%s1 + $0x1f90] sm:$0xff]
  %v1053 = vld [vmem:[%s1 + $0x1f98] sm:$0xff]
  %v1054 = vld [vmem:[%s1 + $0x1fa0] sm:$0xff]
  %v1055 = vld [vmem:[%s1 + $0x1fa8] sm:$0xff]
  %v1056 = vld [vmem:[%s1 + $0x1fb0] sm:$0xff]
  %v1057 = vld [vmem:[%s1 + $0x1fb8] sm:$0xff]
  %v1058 = vld [vmem:[%s1 + $0x1fc0] sm:$0xff]
  %v1059 = vld [vmem:[%s1 + $0x1fc8] sm:$0xff]
  %v1060 = vld [vmem:[%s1 + $0x1fd0] sm:$0xff]
  %v1061 = vld [vmem:[%s1 + $0x1fd8] sm:$0xff]
  %v1062 = vld [vmem:[%s1 + $0x1fe0] sm:$0xff]
  %v1063 = vld [vmem:[%s1 + $0x1fe8] sm:$0xff]
  %v1064 = vld [vmem:[%s1 + $0x1ff0] sm:$0xff]
  %v1065 = vld [vmem:[%s1 + $0x1ff8] sm:$0xff]
  %v1066 = vld [vmem:[%s1 + $0x2000] sm:$0xff]
  %v1067 = vld [vmem:[%s1 + $0x2008] sm:$0xff]
  %v1068 = vld [vmem:[%s1 + $0x2010] sm:$0xff]
  %v1069 = vld [vmem:[%s1 + $0x2018] sm:$0xff]
  %v1070 = vld [vmem:[%s1 + $0x2020] sm:$0xff]
  %v1071 = vld [vmem:[%s1 + $0x2028] sm:$0xff]
  %v1072 = vld [vmem:[%s1 + $0x2030] sm:$0xff]
  %v1073 = vld [vmem:[%s1 + $0x2038] sm:$0xff]
  %v1074 = vld [vmem:[%s1 + $0x2040] sm:$0xff]
  %v1075 = vld [vmem:[%s1 + $0x2048] sm:$0xff]
  %v1076 = vld [vmem:[%s1 + $0x2050] sm:$0xff]
  %v1077 = vld [vmem:[%s1 + $0x2058] sm:$0xff]
  %v1078 = vld [vmem:[%s1 + $0x2060] sm:$0xff]
  %v1079 = vld [vmem:[%s1 + $0x2068] sm:$0xff]
  %v1080 = vld [vmem:[%s1 + $0x2070] sm:$0xff]
  %v1081 = vld [vmem:[%s1 + $0x2078] sm:$0xff]
  %v1082 = vld [vmem:[%s1 + $0x2080] sm:$0xff]
  %v1083 = vld [vmem:[%s1 + $0x2088] sm:$0xff]
  %v1084 = vld [vmem:[%s1 + $0x2090] sm:$0xff]
  %v1085 = vld [vmem:[%s1 + $0x2098] sm:$0xff]
  %v1086 = vld [vmem:[%s1 + $0x20a0] sm:$0xff]
  %v1087 = vld [vmem:[%s1 + $0x20a8] sm:$0xff]
  %v1088 = vld [vmem:[%s1 + $0x20b0] sm:$0xff]
  %v1089 = vld [vmem:[%s1 + $0x20b8] sm:$0xff]
  %v1090 = vld [vmem:[%s1 + $0x20c0] sm:$0xff]
  %v1091 = vld [vmem:[%s1 + $0x20c8] sm:$0xff]
  %v1092 = vld [vmem:[%s1 + $0x20d0] sm:$0xff]
  %v1093 = vld [vmem:[%s1 + $0x20d8] sm:$0xff]
  %v1094 = vld [vmem:[%s1 + $0x20e0] sm:$0xff]
  %v1095 = vld [vmem:[%s1 + $0x20e8] sm:$0xff]
  %v1096 = vld [vmem:[%s1 + $0x20f0] sm:$0xff]
  %v1097 = vld [vmem:[%s1 + $0x20f8] sm:$0xff]
  %v1098 = vld [vmem:[%s1 + $0x2100] sm:$0xff]
  %v1099 = vld [vmem:[%s1 + $0x2108] sm:$0xff]
  %v1100 = vld [vmem:[%s1 + $0x2110] sm:$0xff]
  %v1101 = vld [vmem:[%s1 + $0x2118] sm:$0xff]
  %v1102 = vld [vmem:[%s1 + $0x2120] sm:$0xff]
  %v1103 = vld [vmem:[%s1 + $0x2128] sm:$0xff]
  %v1104 = vld [vmem:[%s1 + $0x2130] sm:$0xff]
  %v1105 = vld [vmem:[%s1 + $0x2138] sm:$0xff]
  %v1106 = vld [vmem:[%s1 + $0x2140] sm:$0xff]
  %v1107 = vld [vmem:[%s1 + $0x2148] sm:$0xff]
  %v1108 = vld [vmem:[%s1 + $0x2150] sm:$0xff]
  %v1109 = vld [vmem:[%s1 + $0x2158] sm:$0xff]
  %v1110 = vld [vmem:[%s1 + $0x2160] sm:$0xff]
  %v1111 = vld [vmem:[%s1 + $0x2168] sm:$0xff]
  %v1112 = vld [vmem:[%s1 + $0x2170] sm:$0xff]
  %v1113 = vld [vmem:[%s1 + $0x2178] sm:$0xff]
  %v1114 = vld [vmem:[%s1 + $0x2180] sm:$0xff]
  %v1115 = vld [vmem:[%s1 + $0x2188] sm:$0xff]
  %v1116 = vld [vmem:[%s1 + $0x2190] sm:$0xff]
  %v1117 = vld [vmem:[%s1 + $0x2198] sm:$0xff]
  %v1118 = vld [vmem:[%s1 + $0x21a0] sm:$0xff]
  %v1119 = vld [vmem:[%s1 + $0x21a8] sm:$0xff]
  %v1120 = vld [vmem:[%s1 + $0x21b0] sm:$0xff]
  %v1121 = vld [vmem:[%s1 + $0x21b8] sm:$0xff]
  %v1122 = vld [vmem:[%s1 + $0x21c0] sm:$0xff]
  %v1123 = vld [vmem:[%s1 + $0x21c8] sm:$0xff]
  %v1124 = vld [vmem:[%s1 + $0x21d0] sm:$0xff]
  %v1125 = vld [vmem:[%s1 + $0x21d8] sm:$0xff]
  %v1126 = vld [vmem:[%s1 + $0x21e0] sm:$0xff]
  %v1127 = vld [vmem:[%s1 + $0x21e8] sm:$0xff]
  %v1128 = vld [vmem:[%s1 + $0x21f0] sm:$0xff]
  %v1129 = vld [vmem:[%s1 + $0x21f8] sm:$0xff]
  %v1130 = vld [vmem:[%s1 + $0x2200] sm:$0xff]
  %v1131 = vld [vmem:[%s1 + $0x2208] sm:$0xff]
  %v1132 = vld [vmem:[%s1 + $0x2210] sm:$0xff]
  %v1133 = vld [vmem:[%s1 + $0x2218] sm:$0xff]
  %v1134 = vld [vmem:[%s1 + $0x2220] sm:$0xff]
  %v1135 = vld [vmem:[%s1 + $0x2228] sm:$0xff]
  %v1136 = vld [vmem:[%s1 + $0x2230] sm:$0xff]
  %v1137 = vld [vmem:[%s1 + $0x2238] sm:$0xff]
  %v1138 = vld [vmem:[%s1 + $0x2240] sm:$0xff]
  %v1139 = vld [vmem:[%s1 + $0x2248] sm:$0xff]
  %v1140 = vld [vmem:[%s1 + $0x2250] sm:$0xff]
  %v1141 = vld [vmem:[%s1 + $0x2258] sm:$0xff]
  %v1142 = vld [vmem:[%s1 + $0x2260] sm:$0xff]
  %v1143 = vld [vmem:[%s1 + $0x2268] sm:$0xff]
  %v1144 = vld [vmem:[%s1 + $0x2270] sm:$0xff]
  %v1145 = vld [vmem:[%s1 + $0x2278] sm:$0xff]
  %v1146 = vld [vmem:[%s1 + $0x2280] sm:$0xff]
  %v1147 = vld [vmem:[%s1 + $0x2288] sm:$0xff]
  %v1148 = vld [vmem:[%s1 + $0x2290] sm:$0xff]
  %v1149 = vld [vmem:[%s1 + $0x2298] sm:$0xff]
  %v1150 = vld [vmem:[%s1 + $0x22a0] sm:$0xff]
  %v1151 = vld [vmem:[%s1 + $0x22a8] sm:$0xff]
  %v1152 = vld [vmem:[%s1 + $0x22b0] sm:$0xff]
  %v1153 = vld [vmem:[%s1 + $0x22b8] sm:$0xff]
  %v1154 = vld [vmem:[%s1 + $0x22c0] sm:$0xff]
  %v1155 = vld [vmem:[%s1 + $0x22c8] sm:$0xff]
  %v1156 = vld [vmem:[%s1 + $0x22d0] sm:$0xff]
  %v1157 = vld [vmem:[%s1 + $0x22d8] sm:$0xff]
  %v1158 = vld [vmem:[%s1 + $0x22e0] sm:$0xff]
  %v1159 = vld [vmem:[%s1 + $0x22e8] sm:$0xff]
  %v1160 = vld [vmem:[%s1 + $0x22f0] sm:$0xff]
  %v1161 = vld [vmem:[%s1 + $0x22f8] sm:$0xff]
  %v1162 = vld [vmem:[%s1 + $0x2300] sm:$0xff]
  %v1163 = vld [vmem:[%s1 + $0x2308] sm:$0xff]
  %v1164 = vld [vmem:[%s1 + $0x2310] sm:$0xff]
  %v1165 = vld [vmem:[%s1 + $0x2318] sm:$0xff]
  %v1166 = vld [vmem:[%s1 + $0x2320] sm:$0xff]
  %v1167 = vld [vmem:[%s1 + $0x2328] sm:$0xff]
  %v1168 = vld [vmem:[%s1 + $0x2330] sm:$0xff]
  %v1169 = vld [vmem:[%s1 + $0x2338] sm:$0xff]
  %v1170 = vld [vmem:[%s1 + $0x2340] sm:$0xff]
  %v1171 = vld [vmem:[%s1 + $0x2348] sm:$0xff]
  %v1172 = vld [vmem:[%s1 + $0x2350] sm:$0xff]
  %v1173 = vld [vmem:[%s1 + $0x2358] sm:$0xff]
  %v1174 = vld [vmem:[%s1 + $0x2360] sm:$0xff]
  %v1175 = vld [vmem:[%s1 + $0x2368] sm:$0xff]
  %v1176 = vld [vmem:[%s1 + $0x2370] sm:$0xff]
  %v1177 = vld [vmem:[%s1 + $0x2378] sm:$0xff]
  %v1178 = vld [vmem:[%s1 + $0x2380] sm:$0xff]
  %v1179 = vld [vmem:[%s1 + $0x2388] sm:$0xff]
  %v1180 = vld [vmem:[%s1 + $0x2390] sm:$0xff]
  %v1181 = vld [vmem:[%s1 + $0x2398] sm:$0xff]
  %v1182 = vld [vmem:[%s1 + $0x23a0] sm:$0xff]
  %v1183 = vld [vmem:[%s1 + $0x23a8] sm:$0xff]
  %v1184 = vld [vmem:[%s1 + $0x23b0] sm:$0xff]
  %v1185 = vld [vmem:[%s1 + $0x23b8] sm:$0xff]
  %v1186 = vld [vmem:[%s1 + $0x23c0] sm:$0xff]
  %v1187 = vld [vmem:[%s1 + $0x23c8] sm:$0xff]
  %v1188 = vld [vmem:[%s1 + $0x23d0] sm:$0xff]
  %v1189 = vld [vmem:[%s1 + $0x23d8] sm:$0xff]
  %v1190 = vld [vmem:[%s1 + $0x23e0] sm:$0xff]
  %v1191 = vld [vmem:[%s1 + $0x23e8] sm:$0xff]
  %v1192 = vld [vmem:[%s1 + $0x23f0] sm:$0xff]
  %v1193 = vld [vmem:[%s1 + $0x23f8] sm:$0xff]
  %v1194 = vld [vmem:[%s1 + $0x2400] sm:$0xff]
  %v1195 = vld [vmem:[%s1 + $0x2408] sm:$0xff]
  %v1196 = vld [vmem:[%s1 + $0x2410] sm:$0xff]
  %v1197 = vld [vmem:[%s1 + $0x2418] sm:$0xff]
  %v1198 = vld [vmem:[%s1 + $0x2420] sm:$0xff]
  %v1199 = vld [vmem:[%s1 + $0x2428] sm:$0xff]
  %v1200 = vld [vmem:[%s1 + $0x2430] sm:$0xff]
  %v1201 = vld [vmem:[%s1 + $0x2438] sm:$0xff]
  %v1202 = vld [vmem:[%s1 + $0x2440] sm:$0xff]
  %v1203 = vld [vmem:[%s1 + $0x2448] sm:$0xff]
  %v1204 = vld [vmem:[%s1 + $0x2450] sm:$0xff]
  %v1205 = vld [vmem:[%s1 + $0x2458] sm:$0xff]
  %v1206 = vld [vmem:[%s1 + $0x2460] sm:$0xff]
  %v1207 = vld [vmem:[%s1 + $0x2468] sm:$0xff]
  %v1208 = vld [vmem:[%s1 + $0x2470] sm:$0xff]
  %v1209 = vld [vmem:[%s1 + $0x2478] sm:$0xff]
  %v1210 = vld [vmem:[%s1 + $0x2480] sm:$0xff]
  %v1211 = vld [vmem:[%s1 + $0x2488] sm:$0xff]
  %v1212 = vld [vmem:[%s1 + $0x2490] sm:$0xff]
  %v1213 = vld [vmem:[%s1 + $0x2498] sm:$0xff]
  %v1214 = vld [vmem:[%s1 + $0x24a0] sm:$0xff]
  %v1215 = vld [vmem:[%s1 + $0x24a8] sm:$0xff]
  %v1216 = vld [vmem:[%s1 + $0x24b0] sm:$0xff]
  %v1217 = vld [vmem:[%s1 + $0x24b8] sm:$0xff]
  %v1218 = vld [vmem:[%s1 + $0x24c0] sm:$0xff]
  %v1219 = vld [vmem:[%s1 + $0x24c8] sm:$0xff]
  %v1220 = vld [vmem:[%s1 + $0x24d0] sm:$0xff]
  %v1221 = vld [vmem:[%s1 + $0x24d8] sm:$0xff]
  %v1222 = vld [vmem:[%s1 + $0x24e0] sm:$0xff]
  %v1223 = vld [vmem:[%s1 + $0x24e8] sm:$0xff]
  %v1224 = vld [vmem:[%s1 + $0x24f0] sm:$0xff]
  %v1225 = vld [vmem:[%s1 + $0x24f8] sm:$0xff]
  %v1226 = vld [vmem:[%s1 + $0x2500] sm:$0xff]
  %v1227 = vld [vmem:[%s1 + $0x2508] sm:$0xff]
  %v1228 = vld [vmem:[%s1 + $0x2510] sm:$0xff]
  %v1229 = vld [vmem:[%s1 + $0x2518] sm:$0xff]
  %v1230 = vld [vmem:[%s1 + $0x2520] sm:$0xff]
  %v1231 = vld [vmem:[%s1 + $0x2528] sm:$0xff]
  %v1232 = vld [vmem:[%s1 + $0x2530] sm:$0xff]
  %v1233 = vld [vmem:[%s1 + $0x2538] sm:$0xff]
  %v1234 = vld [vmem:[%s1 + $0x2540] sm:$0xff]
  %v1235 = vld [vmem:[%s1 + $0x2548] sm:$0xff]
  %v1236 = vld [vmem:[%s1 + $0x2550] sm:$0xff]
  %v1237 = vld [vmem:[%s1 + $0x2558] sm:$0xff]
  %v1238 = vld [vmem:[%s1 + $0x2560] sm:$0xff]
  %v1239 = vld [vmem:[%s1 + $0x2568] sm:$0xff]
  %v1240 = vld [vmem:[%s1 + $0x2570] sm:$0xff]
  %v1241 = vld [vmem:[%s1 + $0x2578] sm:$0xff]
  %v1242 = vld [vmem:[%s1 + $0x2580] sm:$0xff]
  %v1243 = vld [vmem:[%s1 + $0x2588] sm:$0xff]
  %v1244 = vld [vmem:[%s1 + $0x2590] sm:$0xff]
  %v1245 = vld [vmem:[%s1 + $0x2598] sm:$0xff]
  %v1246 = vld [vmem:[%s1 + $0x25a0] sm:$0xff]
  %v1247 = vld [vmem:[%s1 + $0x25a8] sm:$0xff]
  %v1248 = vld [vmem:[%s1 + $0x25b0] sm:$0xff]
  %v1249 = vld [vmem:[%s1 + $0x25b8] sm:$0xff]
  %v1250 = vld [vmem:[%s1 + $0x25c0] sm:$0xff]
  %v1251 = vld [vmem:[%s1 + $0x25c8] sm:$0xff]
  %v1252 = vld [vmem:[%s1 + $0x25d0] sm:$0xff]
  %v1253 = vld [vmem:[%s1 + $0x25d8] sm:$0xff]
  %v1254 = vld [vmem:[%s1 + $0x25e0] sm:$0xff]
  %v1255 = vld [vmem:[%s1 + $0x25e8] sm:$0xff]
  %v1256 = vld [vmem:[%s1 + $0x25f0] sm:$0xff]
  %v1257 = vld [vmem:[%s1 + $0x25f8] sm:$0xff]
  %v1258 = vld [vmem:[%s1 + $0x2600] sm:$0xff]
  %v1259 = vld [vmem:[%s1 + $0x2608] sm:$0xff]
  %v1260 = vld [vmem:[%s1 + $0x2610] sm:$0xff]
  %v1261 = vld [vmem:[%s1 + $0x2618] sm:$0xff]
  %v1262 = vld [vmem:[%s1 + $0x2620] sm:$0xff]
  %v1263 = vld [vmem:[%s1 + $0x2628] sm:$0xff]
  %v1264 = vld [vmem:[%s1 + $0x2630] sm:$0xff]
  %v1265 = vld [vmem:[%s1 + $0x2638] sm:$0xff]
  %v1266 = vld [vmem:[%s1 + $0x2640] sm:$0xff]
  %v1267 = vld [vmem:[%s1 + $0x2648] sm:$0xff]
  %v1268 = vld [vmem:[%s1 + $0x2650] sm:$0xff]
  %v1269 = vld [vmem:[%s1 + $0x2658] sm:$0xff]
  %v1270 = vld [vmem:[%s1 + $0x2660] sm:$0xff]
  %v1271 = vld [vmem:[%s1 + $0x2668] sm:$0xff]
  %v1272 = vld [vmem:[%s1 + $0x2670] sm:$0xff]
  %v1273 = vld [vmem:[%s1 + $0x2678] sm:$0xff]
  %v1274 = vld [vmem:[%s1 + $0x2680] sm:$0xff]
  %v1275 = vld [vmem:[%s1 + $0x2688] sm:$0xff]
  %v1276 = vld [vmem:[%s1 + $0x2690] sm:$0xff]
  %v1277 = vld [vmem:[%s1 + $0x2698] sm:$0xff]
  %v1278 = vld [vmem:[%s1 + $0x26a0] sm:$0xff]
  %v1279 = vld [vmem:[%s1 + $0x26a8] sm:$0xff]
  %v1280 = vld [vmem:[%s1 + $0x26b0] sm:$0xff]
  %v1281 = vld [vmem:[%s1 + $0x26b8] sm:$0xff]
  %v1282 = vld [vmem:[%s1 + $0x26c0] sm:$0xff]
  %v1283 = vld [vmem:[%s1 + $0x26c8] sm:$0xff]
  %v1284 = vld [vmem:[%s1 + $0x26d0] sm:$0xff]
  %v1285 = vld [vmem:[%s1 + $0x26d8] sm:$0xff]
  %v1286 = vld [vmem:[%s1 + $0x26e0] sm:$0xff]
  %v1287 = vld [vmem:[%s1 + $0x26e8] sm:$0xff]
  %v1288 = vld [vmem:[%s1 + $0x26f0] sm:$0xff]
  %v1289 = vld [vmem:[%s1 + $0x26f8] sm:$0xff]
  %v1290 = vld [vmem:[%s1 + $0x2700] sm:$0xff]
  %v1291 = vld [vmem:[%s1 + $0x2708] sm:$0xff]
  %v1292 = vld [vmem:[%s1 + $0x2710] sm:$0xff]
  %v1293 = vld [vmem:[%s1 + $0x2718] sm:$0xff]
  %v1294 = vld [vmem:[%s1 + $0x2720] sm:$0xff]
  %v1295 = vld [vmem:[%s1 + $0x2728] sm:$0xff]
  %v1296 = vld [vmem:[%s1 + $0x2730] sm:$0xff]
  %v1297 = vld [vmem:[%s1 + $0x2738] sm:$0xff]
  %v1298 = vld [vmem:[%s1 + $0x2740] sm:$0xff]
  %v1299 = vld [vmem:[%s1 + $0x2748] sm:$0xff]
  %v1300 = vld [vmem:[%s1 + $0x2750] sm:$0xff]
  %v1301 = vld [vmem:[%s1 + $0x2758] sm:$0xff]
  %v1302 = vld [vmem:[%s1 + $0x2760] sm:$0xff]
  %v1303 = vld [vmem:[%s1 + $0x2768] sm:$0xff]
  %v1304 = vld [vmem:[%s1 + $0x2770] sm:$0xff]
  %v1305 = vld [vmem:[%s1 + $0x2778] sm:$0xff]
  %v1306 = vld [vmem:[%s1 + $0x2780] sm:$0xff]
  %v1307 = vld [vmem:[%s1 + $0x2788] sm:$0xff]
  %v1308 = vld [vmem:[%s1 + $0x2790] sm:$0xff]
  %v1309 = vld [vmem:[%s1 + $0x2798] sm:$0xff]
  %v1310 = vld [vmem:[%s1 + $0x27a0] sm:$0xff]
  %v1311 = vld [vmem:[%s1 + $0x27a8] sm:$0xff]
  %v1312 = vld [vmem:[%s1 + $0x27b0] sm:$0xff]
  %v1313 = vld [vmem:[%s1 + $0x27b8] sm:$0xff]
  %v1314 = vld [vmem:[%s1 + $0x27c0] sm:$0xff]
  %v1315 = vld [vmem:[%s1 + $0x27c8] sm:$0xff]
  %v1316 = vld [vmem:[%s1 + $0x27d0] sm:$0xff]
  %v1317 = vld [vmem:[%s1 + $0x27d8] sm:$0xff]
  %v1318 = vld [vmem:[%s1 + $0x27e0] sm:$0xff]
  %v1319 = vld [vmem:[%s1 + $0x27e8] sm:$0xff]
  %v1320 = vld [vmem:[%s1 + $0x27f0] sm:$0xff]
  %v1321 = vld [vmem:[%s1 + $0x27f8] sm:$0xff]
  %v1322 = vld [vmem:[%s1 + $0x2800] sm:$0xff]
  %v1323 = vld [vmem:[%s1 + $0x2808] sm:$0xff]
  %v1324 = vld [vmem:[%s1 + $0x2810] sm:$0xff]
  %v1325 = vld [vmem:[%s1 + $0x2818] sm:$0xff]
  %v1326 = vld [vmem:[%s1 + $0x2820] sm:$0xff]
  %v1327 = vld [vmem:[%s1 + $0x2828] sm:$0xff]
  %v1328 = vld [vmem:[%s1 + $0x2830] sm:$0xff]
  %v1329 = vld [vmem:[%s1 + $0x2838] sm:$0xff]
  %v1330 = vld [vmem:[%s1 + $0x2840] sm:$0xff]
  %v1331 = vld [vmem:[%s1 + $0x2848] sm:$0xff]
  %v1332 = vld [vmem:[%s1 + $0x2850] sm:$0xff]
  %v1333 = vld [vmem:[%s1 + $0x2858] sm:$0xff]
  %v1334 = vld [vmem:[%s1 + $0x2860] sm:$0xff]
  %v1335 = vld [vmem:[%s1 + $0x2868] sm:$0xff]
  %v1336 = vld [vmem:[%s1 + $0x2870] sm:$0xff]
  %v1337 = vld [vmem:[%s1 + $0x2878] sm:$0xff]
  %v1338 = vld [vmem:[%s1 + $0x2880] sm:$0xff]
  %v1339 = vld [vmem:[%s1 + $0x2888] sm:$0xff]
  %v1340 = vld [vmem:[%s1 + $0x2890] sm:$0xff]
  %v1341 = vld [vmem:[%s1 + $0x2898] sm:$0xff]
  %v1342 = vld [vmem:[%s1 + $0x28a0] sm:$0xff]
  %v1343 = vld [vmem:[%s1 + $0x28a8] sm:$0xff]
  %v1344 = vld [vmem:[%s1 + $0x28b0] sm:$0xff]
  %v1345 = vld [vmem:[%s1 + $0x28b8] sm:$0xff]
  %v1346 = vld [vmem:[%s1 + $0x28c0] sm:$0xff]
  %v1347 = vld [vmem:[%s1 + $0x28c8] sm:$0xff]
  %v1348 = vld [vmem:[%s1 + $0x28d0] sm:$0xff]
  %v1349 = vld [vmem:[%s1 + $0x28d8] sm:$0xff]
  %v1350 = vld [vmem:[%s1 + $0x28e0] sm:$0xff]
  %v1351 = vld [vmem:[%s1 + $0x28e8] sm:$0xff]
  %v1352 = vld [vmem:[%s1 + $0x28f0] sm:$0xff]
  %v1353 = vld [vmem:[%s1 + $0x28f8] sm:$0xff]
  %v1354 = vld [vmem:[%s1 + $0x2900] sm:$0xff]
  %v1355 = vld [vmem:[%s1 + $0x2908] sm:$0xff]
  %v1356 = vld [vmem:[%s1 + $0x2910] sm:$0xff]
  %v1357 = vld [vmem:[%s1 + $0x2918] sm:$0xff]
  %v1358 = vld [vmem:[%s1 + $0x2920] sm:$0xff]
  %v1359 = vld [vmem:[%s1 + $0x2928] sm:$0xff]
  %v1360 = vld [vmem:[%s1 + $0x2930] sm:$0xff]
  %v1361 = vld [vmem:[%s1 + $0x2938] sm:$0xff]
  %v1362 = vld [vmem:[%s1 + $0x2940] sm:$0xff]
  %v1363 = vld [vmem:[%s1 + $0x2948] sm:$0xff]
  %v1364 = vld [vmem:[%s1 + $0x2950] sm:$0xff]
  %v1365 = vld [vmem:[%s1 + $0x2958] sm:$0xff]
  %v1366 = vld [vmem:[%s1 + $0x2960] sm:$0xff]
  %v1367 = vld [vmem:[%s1 + $0x2968] sm:$0xff]
  %v1368 = vld [vmem:[%s1 + $0x2970] sm:$0xff]
  %v1369 = vld [vmem:[%s1 + $0x2978] sm:$0xff]
  %v1370 = vld [vmem:[%s1 + $0x2980] sm:$0xff]
  %v1371 = vld [vmem:[%s1 + $0x2988] sm:$0xff]
  %v1372 = vld [vmem:[%s1 + $0x2990] sm:$0xff]
  %v1373 = vld [vmem:[%s1 + $0x2998] sm:$0xff]
  %v1374 = vld [vmem:[%s1 + $0x29a0] sm:$0xff]
  %v1375 = vld [vmem:[%s1 + $0x29a8] sm:$0xff]
  %v1376 = vld [vmem:[%s1 + $0x29b0] sm:$0xff]
  %v1377 = vld [vmem:[%s1 + $0x29b8] sm:$0xff]
  %v1378 = vld [vmem:[%s1 + $0x29c0] sm:$0xff]
  %v1379 = vld [vmem:[%s1 + $0x29c8] sm:$0xff]
  %v1380 = vld [vmem:[%s1 + $0x29d0] sm:$0xff]
  %v1381 = vld [vmem:[%s1 + $0x29d8] sm:$0xff]
  %v1382 = vld [vmem:[%s1 + $0x29e0] sm:$0xff]
  %v1383 = vld [vmem:[%s1 + $0x29e8] sm:$0xff]
  %v1384 = vld [vmem:[%s1 + $0x29f0] sm:$0xff]
  %v1385 = vld [vmem:[%s1 + $0x29f8] sm:$0xff]
  %v1386 = vld [vmem:[%s1 + $0x2a00] sm:$0xff]
  %v1387 = vld [vmem:[%s1 + $0x2a08] sm:$0xff]
  %v1388 = vld [vmem:[%s1 + $0x2a10] sm:$0xff]
  %v1389 = vld [vmem:[%s1 + $0x2a18] sm:$0xff]
  %v1390 = vld [vmem:[%s1 + $0x2a20] sm:$0xff]
  %v1391 = vld [vmem:[%s1 + $0x2a28] sm:$0xff]
  %v1392 = vld [vmem:[%s1 + $0x2a30] sm:$0xff]
  %v1393 = vld [vmem:[%s1 + $0x2a38] sm:$0xff]
  %v1394 = vld [vmem:[%s1 + $0x2a40] sm:$0xff]
  %v1395 = vld [vmem:[%s1 + $0x2a48] sm:$0xff]
  %v1396 = vld [vmem:[%s1 + $0x2a50] sm:$0xff]
  %v1397 = vld [vmem:[%s1 + $0x2a58] sm:$0xff]
  %v1398 = vld [vmem:[%s1 + $0x2a60] sm:$0xff]
  %v1399 = vld [vmem:[%s1 + $0x2a68] sm:$0xff]
  %v1400 = vld [vmem:[%s1 + $0x2a70] sm:$0xff]
  %v1401 = vld [vmem:[%s1 + $0x2a78] sm:$0xff]
  %v1402 = vld [vmem:[%s1 + $0x2a80] sm:$0xff]
  %v1403 = vld [vmem:[%s1 + $0x2a88] sm:$0xff]
  %v1404 = vld [vmem:[%s1 + $0x2a90] sm:$0xff]
  %v1405 = vld [vmem:[%s1 + $0x2a98] sm:$0xff]
  %v1406 = vld [vmem:[%s1 + $0x2aa0] sm:$0xff]
  %v1407 = vld [vmem:[%s1 + $0x2aa8] sm:$0xff]
  %v1408 = vld [vmem:[%s1 + $0x2ab0] sm:$0xff]
  %v1409 = vld [vmem:[%s1 + $0x2ab8] sm:$0xff]
  %v1410 = vld [vmem:[%s1 + $0x2ac0] sm:$0xff]
  %v1411 = vld [vmem:[%s1 + $0x2ac8] sm:$0xff]
  %v1412 = vld [vmem:[%s1 + $0x2ad0] sm:$0xff]
  %v1413 = vld [vmem:[%s1 + $0x2ad8] sm:$0xff]
  %v1414 = vld [vmem:[%s1 + $0x2ae0] sm:$0xff]
  %v1415 = vld [vmem:[%s1 + $0x2ae8] sm:$0xff]
  %v1416 = vld [vmem:[%s1 + $0x2af0] sm:$0xff]
  %v1417 = vld [vmem:[%s1 + $0x2af8] sm:$0xff]
  %v1418 = vld [vmem:[%s1 + $0x2b00] sm:$0xff]
  %v1419 = vld [vmem:[%s1 + $0x2b08] sm:$0xff]
  %v1420 = vld [vmem:[%s1 + $0x2b10] sm:$0xff]
  %v1421 = vld [vmem:[%s1 + $0x2b18] sm:$0xff]
  %v1422 = vld [vmem:[%s1 + $0x2b20] sm:$0xff]
  %v1423 = vld [vmem:[%s1 + $0x2b28] sm:$0xff]
  %v1424 = vld [vmem:[%s1 + $0x2b30] sm:$0xff]
  %v1425 = vld [vmem:[%s1 + $0x2b38] sm:$0xff]
  %v1426 = vld [vmem:[%s1 + $0x2b40] sm:$0xff]
  %v1427 = vld [vmem:[%s1 + $0x2b48] sm:$0xff]
  %v1428 = vld [vmem:[%s1 + $0x2b50] sm:$0xff]
  %v1429 = vld [vmem:[%s1 + $0x2b58] sm:$0xff]
  %v1430 = vld [vmem:[%s1 + $0x2b60] sm:$0xff]
  %v1431 = vld [vmem:[%s1 + $0x2b68] sm:$0xff]
  %v1432 = vld [vmem:[%s1 + $0x2b70] sm:$0xff]
  %v1433 = vld [vmem:[%s1 + $0x2b78] sm:$0xff]
  %v1434 = vld [vmem:[%s1 + $0x2b80] sm:$0xff]
  %v1435 = vld [vmem:[%s1 + $0x2b88] sm:$0xff]
  %v1436 = vld [vmem:[%s1 + $0x2b90] sm:$0xff]
  %v1437 = vld [vmem:[%s1 + $0x2b98] sm:$0xff]
  %v1438 = vld [vmem:[%s1 + $0x2ba0] sm:$0xff]
  %v1439 = vld [vmem:[%s1 + $0x2ba8] sm:$0xff]
  %v1440 = vld [vmem:[%s1 + $0x2bb0] sm:$0xff]
  %v1441 = vld [vmem:[%s1 + $0x2bb8] sm:$0xff]
  %v1442 = vld [vmem:[%s1 + $0x2bc0] sm:$0xff]
  %v1443 = vld [vmem:[%s1 + $0x2bc8] sm:$0xff]
  %v1444 = vld [vmem:[%s1 + $0x2bd0] sm:$0xff]
  %v1445 = vld [vmem:[%s1 + $0x2bd8] sm:$0xff]
  %v1446 = vld [vmem:[%s1 + $0x2be0] sm:$0xff]
  %v1447 = vld [vmem:[%s1 + $0x2be8] sm:$0xff]
  %v1448 = vld [vmem:[%s1 + $0x2bf0] sm:$0xff]
  %v1449 = vld [vmem:[%s1 + $0x2bf8] sm:$0xff]
  %v1450 = vld [vmem:[%s1 + $0x2c00] sm:$0xff]
  %v1451 = vld [vmem:[%s1 + $0x2c08] sm:$0xff]
  %v1452 = vld [vmem:[%s1 + $0x2c10] sm:$0xff]
  %v1453 = vld [vmem:[%s1 + $0x2c18] sm:$0xff]
  %v1454 = vld [vmem:[%s1 + $0x2c20] sm:$0xff]
  %v1455 = vld [vmem:[%s1 + $0x2c28] sm:$0xff]
  %v1456 = vld [vmem:[%s1 + $0x2c30] sm:$0xff]
  %v1457 = vld [vmem:[%s1 + $0x2c38] sm:$0xff]
  %v1458 = vld [vmem:[%s1 + $0x2c40] sm:$0xff]
  %v1459 = vld [vmem:[%s1 + $0x2c48] sm:$0xff]
  %v1460 = vld [vmem:[%s1 + $0x2c50] sm:$0xff]
  %v1461 = vld [vmem:[%s1 + $0x2c58] sm:$0xff]
  %v1462 = vld [vmem:[%s1 + $0x2c60] sm:$0xff]
  %v1463 = vld [vmem:[%s1 + $0x2c68] sm:$0xff]
  %v1464 = vld [vmem:[%s1 + $0x2c70] sm:$0xff]
  %v1465 = vld [vmem:[%s1 + $0x2c78] sm:$0xff]
  %v1466 = vld [vmem:[%s1 + $0x2c80] sm:$0xff]
  %v1467 = vld [vmem:[%s1 + $0x2c88] sm:$0xff]
  %v1468 = vld [vmem:[%s1 + $0x2c90] sm:$0xff]
  %v1469 = vld [vmem:[%s1 + $0x2c98] sm:$0xff]
  %v1470 = vld [vmem:[%s1 + $0x2ca0] sm:$0xff]
  %v1471 = vld [vmem:[%s1 + $0x2ca8] sm:$0xff]
  %v1472 = vld [vmem:[%s1 + $0x2cb0] sm:$0xff]
  %v1473 = vld [vmem:[%s1 + $0x2cb8] sm:$0xff]
  %v1474 = vld [vmem:[%s1 + $0x2cc0] sm:$0xff]
  %v1475 = vld [vmem:[%s1 + $0x2cc8] sm:$0xff]
  %v1476 = vld [vmem:[%s1 + $0x2cd0] sm:$0xff]
  %v1477 = vld [vmem:[%s1 + $0x2cd8] sm:$0xff]
  %v1478 = vld [vmem:[%s1 + $0x2ce0] sm:$0xff]
  %v1479 = vld [vmem:[%s1 + $0x2ce8] sm:$0xff]
  %v1480 = vld [vmem:[%s1 + $0x2cf0] sm:$0xff]
  %v1481 = vld [vmem:[%s1 + $0x2cf8] sm:$0xff]
  %v1482 = vld [vmem:[%s1 + $0x2d00] sm:$0xff]
  %v1483 = vld [vmem:[%s1 + $0x2d08] sm:$0xff]
  %v1484 = vld [vmem:[%s1 + $0x2d10] sm:$0xff]
  %v1485 = vld [vmem:[%s1 + $0x2d18] sm:$0xff]
  %v1486 = vld [vmem:[%s1 + $0x2d20] sm:$0xff]
  %v1487 = vld [vmem:[%s1 + $0x2d28] sm:$0xff]
  %v1488 = vld [vmem:[%s1 + $0x2d30] sm:$0xff]
  %v1489 = vld [vmem:[%s1 + $0x2d38] sm:$0xff]
  %v1490 = vld [vmem:[%s1 + $0x2d40] sm:$0xff]
  %v1491 = vld [vmem:[%s1 + $0x2d48] sm:$0xff]
  %v1492 = vld [vmem:[%s1 + $0x2d50] sm:$0xff]
  %v1493 = vld [vmem:[%s1 + $0x2d58] sm:$0xff]
  %v1494 = vld [vmem:[%s1 + $0x2d60] sm:$0xff]
  %v1495 = vld [vmem:[%s1 + $0x2d68] sm:$0xff]
  %v1496 = vld [vmem:[%s1 + $0x2d70] sm:$0xff]
  %v1497 = vld [vmem:[%s1 + $0x2d78] sm:$0xff]
  %v1498 = vld [vmem:[%s1 + $0x2d80] sm:$0xff]
  %v1499 = vld [vmem:[%s1 + $0x2d88] sm:$0xff]
  %v1500 = vld [vmem:[%s1 + $0x2d90] sm:$0xff]
  %v1501 = vld [vmem:[%s1 + $0x2d98] sm:$0xff]
  %v1502 = vld [vmem:[%s1 + $0x2da0] sm:$0xff]
  %v1503 = vld [vmem:[%s1 + $0x2da8] sm:$0xff]
  %v1504 = vld [vmem:[%s1 + $0x2db0] sm:$0xff]
  %v1505 = vld [vmem:[%s1 + $0x2db8] sm:$0xff]
  %v1506 = vld [vmem:[%s1 + $0x2dc0] sm:$0xff]
  %v1507 = vld [vmem:[%s1 + $0x2dc8] sm:$0xff]
  %v1508 = vld [vmem:[%s1 + $0x2dd0] sm:$0xff]
  %v1509 = vld [vmem:[%s1 + $0x2dd8] sm:$0xff]
  %v1510 = vld [vmem:[%s1 + $0x2de0] sm:$0xff]
  %v1511 = vld [vmem:[%s1 + $0x2de8] sm:$0xff]
  %v1512 = vld [vmem:[%s1 + $0x2df0] sm:$0xff]
  %v1513 = vld [vmem:[%s1 + $0x2df8] sm:$0xff]
  %v1514 = vld [vmem:[%s1 + $0x2e00] sm:$0xff]
  %v1515 = vld [vmem:[%s1 + $0x2e08] sm:$0xff]
  %v1516 = vld [vmem:[%s1 + $0x2e10] sm:$0xff]
  %v1517 = vld [vmem:[%s1 + $0x2e18] sm:$0xff]
  %v1518 = vld [vmem:[%s1 + $0x2e20] sm:$0xff]
  %v1519 = vld [vmem:[%s1 + $0x2e28] sm:$0xff]
  %v1520 = vld [vmem:[%s1 + $0x2e30] sm:$0xff]
  %v1521 = vld [vmem:[%s1 + $0x2e38] sm:$0xff]
  %v1522 = vld [vmem:[%s1 + $0x2e40] sm:$0xff]
  %v1523 = vld [vmem:[%s1 + $0x2e48] sm:$0xff]
  %v1524 = vld [vmem:[%s1 + $0x2e50] sm:$0xff]
  %v1525 = vld [vmem:[%s1 + $0x2e58] sm:$0xff]
  %v1526 = vld [vmem:[%s1 + $0x2e60] sm:$0xff]
  %v1527 = vld [vmem:[%s1 + $0x2e68] sm:$0xff]
  %v1528 = vld [vmem:[%s1 + $0x2e70] sm:$0xff]
  %v1529 = vld [vmem:[%s1 + $0x2e78] sm:$0xff]
  %v1530 = vld [vmem:[%s1 + $0x2e80] sm:$0xff]
  %v1531 = vld [vmem:[%s1 + $0x2e88] sm:$0xff]
  %v1532 = vld [vmem:[%s1 + $0x2e90] sm:$0xff]
  %v1533 = vld [vmem:[%s1 + $0x2e98] sm:$0xff]
  %v1534 = vld [vmem:[%s1 + $0x2ea0] sm:$0xff]
  %v1535 = vld [vmem:[%s1 + $0x2ea8] sm:$0xff]
  %v1536 = vld [vmem:[%s1 + $0x2eb0] sm:$0xff]
  %v1537 = vld [vmem:[%s1 + $0x2eb8] sm:$0xff]
  %v1538 = vld [vmem:[%s1 + $0x2ec0] sm:$0xff]
  %v1539 = vld [vmem:[%s1 + $0x2ec8] sm:$0xff]
  %v1540 = vld [vmem:[%s1 + $0x2ed0] sm:$0xff]
  %v1541 = vld [vmem:[%s1 + $0x2ed8] sm:$0xff]
  %v1542 = vld [vmem:[%s1 + $0x2ee0] sm:$0xff]
  %v1543 = vld [vmem:[%s1 + $0x2ee8] sm:$0xff]
  %v1544 = vld [vmem:[%s1 + $0x2ef0] sm:$0xff]
  %v1545 = vld [vmem:[%s1 + $0x2ef8] sm:$0xff]
  %v1546 = vld [vmem:[%s1 + $0x2f00] sm:$0xff]
  %v1547 = vld [vmem:[%s1 + $0x2f08] sm:$0xff]
  %v1548 = vld [vmem:[%s1 + $0x2f10] sm:$0xff]
  %v1549 = vld [vmem:[%s1 + $0x2f18] sm:$0xff]
  %v1550 = vld [vmem:[%s1 + $0x2f20] sm:$0xff]
  %v1551 = vld [vmem:[%s1 + $0x2f28] sm:$0xff]
  %v1552 = vld [vmem:[%s1 + $0x2f30] sm:$0xff]
  %v1553 = vld [vmem:[%s1 + $0x2f38] sm:$0xff]
  %v1554 = vld [vmem:[%s1 + $0x2f40] sm:$0xff]
  %v1555 = vld [vmem:[%s1 + $0x2f48] sm:$0xff]
  %v1556 = vld [vmem:[%s1 + $0x2f50] sm:$0xff]
  %v1557 = vld [vmem:[%s1 + $0x2f58] sm:$0xff]
  %v1558 = vld [vmem:[%s1 + $0x2f60] sm:$0xff]
  %v1559 = vld [vmem:[%s1 + $0x2f68] sm:$0xff]
  %v1560 = vld [vmem:[%s1 + $0x2f70] sm:$0xff]
  %v1561 = vld [vmem:[%s1 + $0x2f78] sm:$0xff]
  %v1562 = vld [vmem:[%s1 + $0x2f80] sm:$0xff]
  %v1563 = vld [vmem:[%s1 + $0x2f88] sm:$0xff]
  %v1564 = vld [vmem:[%s1 + $0x2f90] sm:$0xff]
  %v1565 = vld [vmem:[%s1 + $0x2f98] sm:$0xff]
  %v1566 = vld [vmem:[%s1 + $0x2fa0] sm:$0xff]
  %v1567 = vld [vmem:[%s1 + $0x2fa8] sm:$0xff]
  %v1568 = vld [vmem:[%s1 + $0x2fb0] sm:$0xff]
  %v1569 = vld [vmem:[%s1 + $0x2fb8] sm:$0xff]
  %v1570 = vld [vmem:[%s1 + $0x2fc0] sm:$0xff]
  %v1571 = vld [vmem:[%s1 + $0x2fc8] sm:$0xff]
  %v1572 = vld [vmem:[%s1 + $0x2fd0] sm:$0xff]
  %v1573 = vld [vmem:[%s1 + $0x2fd8] sm:$0xff]
  %v1574 = vld [vmem:[%s1 + $0x2fe0] sm:$0xff]
  %v1575 = vld [vmem:[%s1 + $0x2fe8] sm:$0xff]
  %v1576 = vld [vmem:[%s1 + $0x2ff0] sm:$0xff]
  %v1577 = vld [vmem:[%s1 + $0x2ff8] sm:$0xff]
  %v1578 = vld [vmem:[%s1 + $0x3000] sm:$0xff]
  %v1579 = vld [vmem:[%s1 + $0x3008] sm:$0xff]
  %v1580 = vld [vmem:[%s1 + $0x3010] sm:$0xff]
  %v1581 = vld [vmem:[%s1 + $0x3018] sm:$0xff]
  %v1582 = vld [vmem:[%s1 + $0x3020] sm:$0xff]
  %v1583 = vld [vmem:[%s1 + $0x3028] sm:$0xff]
  %v1584 = vld [vmem:[%s1 + $0x3030] sm:$0xff]
  %v1585 = vld [vmem:[%s1 + $0x3038] sm:$0xff]
  %v1586 = vld [vmem:[%s1 + $0x3040] sm:$0xff]
  %v1587 = vld [vmem:[%s1 + $0x3048] sm:$0xff]
  %v1588 = vld [vmem:[%s1 + $0x3050] sm:$0xff]
  %v1589 = vld [vmem:[%s1 + $0x3058] sm:$0xff]
  %v1590 = vld [vmem:[%s1 + $0x3060] sm:$0xff]
  %v1591 = vld [vmem:[%s1 + $0x3068] sm:$0xff]
  %v1592 = vld [vmem:[%s1 + $0x3070] sm:$0xff]
  %v1593 = vld [vmem:[%s1 + $0x3078] sm:$0xff]
  %v1594 = vld [vmem:[%s1 + $0x3080] sm:$0xff]
  %v1595 = vld [vmem:[%s1 + $0x3088] sm:$0xff]
  %v1596 = vld [vmem:[%s1 + $0x3090] sm:$0xff]
  %v1597 = vld [vmem:[%s1 + $0x3098] sm:$0xff]
  %v1598 = vld [vmem:[%s1 + $0x30a0] sm:$0xff]
  %v1599 = vld [vmem:[%s1 + $0x30a8] sm:$0xff]
  %v1600 = vld [vmem:[%s1 + $0x30b0] sm:$0xff]
  %v1601 = vld [vmem:[%s1 + $0x30b8] sm:$0xff]
  %v1602 = vld [vmem:[%s1 + $0x30c0] sm:$0xff]
  %v1603 = vld [vmem:[%s1 + $0x30c8] sm:$0xff]
  %v1604 = vld [vmem:[%s1 + $0x30d0] sm:$0xff]
  %v1605 = vld [vmem:[%s1 + $0x30d8] sm:$0xff]
  %v1606 = vld [vmem:[%s1 + $0x30e0] sm:$0xff]
  %v1607 = vld [vmem:[%s1 + $0x30e8] sm:$0xff]
  %v1608 = vld [vmem:[%s1 + $0x30f0] sm:$0xff]
  %v1609 = vld [vmem:[%s1 + $0x30f8] sm:$0xff]
  %v1610 = vld [vmem:[%s1 + $0x3100] sm:$0xff]
  %v1611 = vld [vmem:[%s1 + $0x3108] sm:$0xff]
  %v1612 = vld [vmem:[%s1 + $0x3110] sm:$0xff]
  %v1613 = vld [vmem:[%s1 + $0x3118] sm:$0xff]
  %v1614 = vld [vmem:[%s1 + $0x3120] sm:$0xff]
  %v1615 = vld [vmem:[%s1 + $0x3128] sm:$0xff]
  %v1616 = vld [vmem:[%s1 + $0x3130] sm:$0xff]
  %v1617 = vld [vmem:[%s1 + $0x3138] sm:$0xff]
  %v1618 = vld [vmem:[%s1 + $0x3140] sm:$0xff]
  %v1619 = vld [vmem:[%s1 + $0x3148] sm:$0xff]
  %v1620 = vld [vmem:[%s1 + $0x3150] sm:$0xff]
  %v1621 = vld [vmem:[%s1 + $0x3158] sm:$0xff]
  %v1622 = vld [vmem:[%s1 + $0x3160] sm:$0xff]
  %v1623 = vld [vmem:[%s1 + $0x3168] sm:$0xff]
  %v1624 = vld [vmem:[%s1 + $0x3170] sm:$0xff]
  %v1625 = vld [vmem:[%s1 + $0x3178] sm:$0xff]
  %v1626 = vld [vmem:[%s1 + $0x3180] sm:$0xff]
  %v1627 = vld [vmem:[%s1 + $0x3188] sm:$0xff]
  %v1628 = vld [vmem:[%s1 + $0x3190] sm:$0xff]
  %v1629 = vld [vmem:[%s1 + $0x3198] sm:$0xff]
  %v1630 = vld [vmem:[%s1 + $0x31a0] sm:$0xff]
  %v1631 = vld [vmem:[%s1 + $0x31a8] sm:$0xff]
  %v1632 = vld [vmem:[%s1 + $0x31b0] sm:$0xff]
  %v1633 = vld [vmem:[%s1 + $0x31b8] sm:$0xff]
  %v1634 = vld [vmem:[%s1 + $0x31c0] sm:$0xff]
  %v1635 = vld [vmem:[%s1 + $0x31c8] sm:$0xff]
  %v1636 = vld [vmem:[%s1 + $0x31d0] sm:$0xff]
  %v1637 = vld [vmem:[%s1 + $0x31d8] sm:$0xff]
  %v1638 = vld [vmem:[%s1 + $0x31e0] sm:$0xff]
  %v1639 = vld [vmem:[%s1 + $0x31e8] sm:$0xff]
  %v1640 = vld [vmem:[%s1 + $0x31f0] sm:$0xff]
  %v1641 = vld [vmem:[%s1 + $0x31f8] sm:$0xff]
  %v1642 = vld [vmem:[%s1 + $0x3200] sm:$0xff]
  %v1643 = vld [vmem:[%s1 + $0x3208] sm:$0xff]
  %v1644 = vld [vmem:[%s1 + $0x3210] sm:$0xff]
  %v1645 = vld [vmem:[%s1 + $0x3218] sm:$0xff]
  %v1646 = vld [vmem:[%s1 + $0x3220] sm:$0xff]
  %v1647 = vld [vmem:[%s1 + $0x3228] sm:$0xff]
  %v1648 = vld [vmem:[%s1 + $0x3230] sm:$0xff]
  %v1649 = vld [vmem:[%s1 + $0x3238] sm:$0xff]
  %v1650 = vld [vmem:[%s1 + $0x3240] sm:$0xff]
  %v1651 = vld [vmem:[%s1 + $0x3248] sm:$0xff]
  %v1652 = vld [vmem:[%s1 + $0x3250] sm:$0xff]
  %v1653 = vld [vmem:[%s1 + $0x3258] sm:$0xff]
  %v1654 = vld [vmem:[%s1 + $0x3260] sm:$0xff]
  %v1655 = vld [vmem:[%s1 + $0x3268] sm:$0xff]
  %v1656 = vld [vmem:[%s1 + $0x3270] sm:$0xff]
  %v1657 = vld [vmem:[%s1 + $0x3278] sm:$0xff]
  %v1658 = vld [vmem:[%s1 + $0x3280] sm:$0xff]
  %v1659 = vld [vmem:[%s1 + $0x3288] sm:$0xff]
  %v1660 = vld [vmem:[%s1 + $0x3290] sm:$0xff]
  %v1661 = vld [vmem:[%s1 + $0x3298] sm:$0xff]
  %v1662 = vld [vmem:[%s1 + $0x32a0] sm:$0xff]
  %v1663 = vld [vmem:[%s1 + $0x32a8] sm:$0xff]
  %v1664 = vld [vmem:[%s1 + $0x32b0] sm:$0xff]
  %v1665 = vld [vmem:[%s1 + $0x32b8] sm:$0xff]
  %v1666 = vld [vmem:[%s1 + $0x32c0] sm:$0xff]
  %v1667 = vld [vmem:[%s1 + $0x32c8] sm:$0xff]
  %v1668 = vld [vmem:[%s1 + $0x32d0] sm:$0xff]
  %v1669 = vld [vmem:[%s1 + $0x32d8] sm:$0xff]
  %v1670 = vld [vmem:[%s1 + $0x32e0] sm:$0xff]
  %v1671 = vld [vmem:[%s1 + $0x32e8] sm:$0xff]
  %v1672 = vld [vmem:[%s1 + $0x32f0] sm:$0xff]
  %v1673 = vld [vmem:[%s1 + $0x32f8] sm:$0xff]
  %v1674 = vld [vmem:[%s1 + $0x3300] sm:$0xff]
  %v1675 = vld [vmem:[%s1 + $0x3308] sm:$0xff]
  %v1676 = vld [vmem:[%s1 + $0x3310] sm:$0xff]
  %v1677 = vld [vmem:[%s1 + $0x3318] sm:$0xff]
  %v1678 = vld [vmem:[%s1 + $0x3320] sm:$0xff]
  %v1679 = vld [vmem:[%s1 + $0x3328] sm:$0xff]
  %v1680 = vld [vmem:[%s1 + $0x3330] sm:$0xff]
  %v1681 = vld [vmem:[%s1 + $0x3338] sm:$0xff]
  %v1682 = vld [vmem:[%s1 + $0x3340] sm:$0xff]
  %v1683 = vld [vmem:[%s1 + $0x3348] sm:$0xff]
  %v1684 = vld [vmem:[%s1 + $0x3350] sm:$0xff]
  %v1685 = vld [vmem:[%s1 + $0x3358] sm:$0xff]
  %v1686 = vld [vmem:[%s1 + $0x3360] sm:$0xff]
  %v1687 = vld [vmem:[%s1 + $0x3368] sm:$0xff]
  %v1688 = vld [vmem:[%s1 + $0x3370] sm:$0xff]
  %v1689 = vld [vmem:[%s1 + $0x3378] sm:$0xff]
  %v1690 = vld [vmem:[%s1 + $0x3380] sm:$0xff]
  %v1691 = vld [vmem:[%s1 + $0x3388] sm:$0xff]
  %v1692 = vld [vmem:[%s1 + $0x3390] sm:$0xff]
  %v1693 = vld [vmem:[%s1 + $0x3398] sm:$0xff]
  %v1694 = vld [vmem:[%s1 + $0x33a0] sm:$0xff]
  %v1695 = vld [vmem:[%s1 + $0x33a8] sm:$0xff]
  %v1696 = vld [vmem:[%s1 + $0x33b0] sm:$0xff]
  %v1697 = vld [vmem:[%s1 + $0x33b8] sm:$0xff]
  %v1698 = vld [vmem:[%s1 + $0x33c0] sm:$0xff]
  %v1699 = vld [vmem:[%s1 + $0x33c8] sm:$0xff]
  %v1700 = vld [vmem:[%s1 + $0x33d0] sm:$0xff]
  %v1701 = vld [vmem:[%s1 + $0x33d8] sm:$0xff]
  %v1702 = vld [vmem:[%s1 + $0x33e0] sm:$0xff]
  %v1703 = vld [vmem:[%s1 + $0x33e8] sm:$0xff]
  %v1704 = vld [vmem:[%s1 + $0x33f0] sm:$0xff]
  %v1705 = vld [vmem:[%s1 + $0x33f8] sm:$0xff]
  %v1706 = vld [vmem:[%s1 + $0x3400] sm:$0xff]
  %v1707 = vld [vmem:[%s1 + $0x3408] sm:$0xff]
  %v1708 = vld [vmem:[%s1 + $0x3410] sm:$0xff]
  %v1709 = vld [vmem:[%s1 + $0x3418] sm:$0xff]
  %v1710 = vld [vmem:[%s1 + $0x3420] sm:$0xff]
  %v1711 = vld [vmem:[%s1 + $0x3428] sm:$0xff]
  %v1712 = vld [vmem:[%s1 + $0x3430] sm:$0xff]
  %v1713 = vld [vmem:[%s1 + $0x3438] sm:$0xff]
  %v1714 = vld [vmem:[%s1 + $0x3440] sm:$0xff]
  %v1715 = vld [vmem:[%s1 + $0x3448] sm:$0xff]
  %v1716 = vld [vmem:[%s1 + $0x3450] sm:$0xff]
  %v1717 = vld [vmem:[%s1 + $0x3458] sm:$0xff]
  %v1718 = vld [vmem:[%s1 + $0x3460] sm:$0xff]
  %v1719 = vld [vmem:[%s1 + $0x3468] sm:$0xff]
  %v1720 = vld [vmem:[%s1 + $0x3470] sm:$0xff]
  %v1721 = vld [vmem:[%s1 + $0x3478] sm:$0xff]
  %v1722 = vld [vmem:[%s1 + $0x3480] sm:$0xff]
  %v1723 = vld [vmem:[%s1 + $0x3488] sm:$0xff]
  %v1724 = vld [vmem:[%s1 + $0x3490] sm:$0xff]
  %v1725 = vld [vmem:[%s1 + $0x3498] sm:$0xff]
  %v1726 = vld [vmem:[%s1 + $0x34a0] sm:$0xff]
  %v1727 = vld [vmem:[%s1 + $0x34a8] sm:$0xff]
  %v1728 = vld [vmem:[%s1 + $0x34b0] sm:$0xff]
  %v1729 = vld [vmem:[%s1 + $0x34b8] sm:$0xff]
  %v1730 = vld [vmem:[%s1 + $0x34c0] sm:$0xff]
  %v1731 = vld [vmem:[%s1 + $0x34c8] sm:$0xff]
  %v1732 = vld [vmem:[%s1 + $0x34d0] sm:$0xff]
  %v1733 = vld [vmem:[%s1 + $0x34d8] sm:$0xff]
  %v1734 = vld [vmem:[%s1 + $0x34e0] sm:$0xff]
  %v1735 = vld [vmem:[%s1 + $0x34e8] sm:$0xff]
  %v1736 = vld [vmem:[%s1 + $0x34f0] sm:$0xff]
  %v1737 = vld [vmem:[%s1 + $0x34f8] sm:$0xff]
  %v1738 = vld [vmem:[%s1 + $0x3500] sm:$0xff]
  %v1739 = vld [vmem:[%s1 + $0x3508] sm:$0xff]
  %v1740 = vld [vmem:[%s1 + $0x3510] sm:$0xff]
  %v1741 = vld [vmem:[%s1 + $0x3518] sm:$0xff]
  %v1742 = vld [vmem:[%s1 + $0x3520] sm:$0xff]
  %v1743 = vld [vmem:[%s1 + $0x3528] sm:$0xff]
  %v1744 = vld [vmem:[%s1 + $0x3530] sm:$0xff]
  %v1745 = vld [vmem:[%s1 + $0x3538] sm:$0xff]
  %v1746 = vld [vmem:[%s1 + $0x3540] sm:$0xff]
  %v1747 = vld [vmem:[%s1 + $0x3548] sm:$0xff]
  %v1748 = vld [vmem:[%s1 + $0x3550] sm:$0xff]
  %v1749 = vld [vmem:[%s1 + $0x3558] sm:$0xff]
  %v1750 = vld [vmem:[%s1 + $0x3560] sm:$0xff]
  %v1751 = vld [vmem:[%s1 + $0x3568] sm:$0xff]
  %v1752 = vld [vmem:[%s1 + $0x3570] sm:$0xff]
  %v1753 = vld [vmem:[%s1 + $0x3578] sm:$0xff]
  %v1754 = vld [vmem:[%s1 + $0x3580] sm:$0xff]
  %v1755 = vld [vmem:[%s1 + $0x3588] sm:$0xff]
  %v1756 = vld [vmem:[%s1 + $0x3590] sm:$0xff]
  %v1757 = vld [vmem:[%s1 + $0x3598] sm:$0xff]
  %v1758 = vld [vmem:[%s1 + $0x35a0] sm:$0xff]
  %v1759 = vld [vmem:[%s1 + $0x35a8] sm:$0xff]
  %v1760 = vld [vmem:[%s1 + $0x35b0] sm:$0xff]
  %v1761 = vld [vmem:[%s1 + $0x35b8] sm:$0xff]
  %v1762 = vld [vmem:[%s1 + $0x35c0] sm:$0xff]
  %v1763 = vld [vmem:[%s1 + $0x35c8] sm:$0xff]
  %v1764 = vld [vmem:[%s1 + $0x35d0] sm:$0xff]
  %v1765 = vld [vmem:[%s1 + $0x35d8] sm:$0xff]
  %v1766 = vld [vmem:[%s1 + $0x35e0] sm:$0xff]
  %v1767 = vld [vmem:[%s1 + $0x35e8] sm:$0xff]
  %v1768 = vld [vmem:[%s1 + $0x35f0] sm:$0xff]
  %v1769 = vld [vmem:[%s1 + $0x35f8] sm:$0xff]
  %v1770 = vld [vmem:[%s1 + $0x3600] sm:$0xff]
  %v1771 = vld [vmem:[%s1 + $0x3608] sm:$0xff]
  %v1772 = vld [vmem:[%s1 + $0x3610] sm:$0xff]
  %v1773 = vld [vmem:[%s1 + $0x3618] sm:$0xff]
  %v1774 = vld [vmem:[%s1 + $0x3620] sm:$0xff]
  %v1775 = vld [vmem:[%s1 + $0x3628] sm:$0xff]
  %v1776 = vld [vmem:[%s1 + $0x3630] sm:$0xff]
  %v1777 = vld [vmem:[%s1 + $0x3638] sm:$0xff]
  %v1778 = vld [vmem:[%s1 + $0x3640] sm:$0xff]
  %v1779 = vld [vmem:[%s1 + $0x3648] sm:$0xff]
  %v1780 = vld [vmem:[%s1 + $0x3650] sm:$0xff]
  %v1781 = vld [vmem:[%s1 + $0x3658] sm:$0xff]
  %v1782 = vld [vmem:[%s1 + $0x3660] sm:$0xff]
  %v1783 = vld [vmem:[%s1 + $0x3668] sm:$0xff]
  %v1784 = vld [vmem:[%s1 + $0x3670] sm:$0xff]
  %v1785 = vld [vmem:[%s1 + $0x3678] sm:$0xff]
  %v1786 = vld [vmem:[%s1 + $0x3680] sm:$0xff]
  %v1787 = vld [vmem:[%s1 + $0x3688] sm:$0xff]
  %v1788 = vld [vmem:[%s1 + $0x3690] sm:$0xff]
  %v1789 = vld [vmem:[%s1 + $0x3698] sm:$0xff]
  %v1790 = vld [vmem:[%s1 + $0x36a0] sm:$0xff]
  %v1791 = vld [vmem:[%s1 + $0x36a8] sm:$0xff]
  %v1792 = vld [vmem:[%s1 + $0x36b0] sm:$0xff]
  %v1793 = vld [vmem:[%s1 + $0x36b8] sm:$0xff]
  %v1794 = vld [vmem:[%s1 + $0x36c0] sm:$0xff]
  %v1795 = vld [vmem:[%s1 + $0x36c8] sm:$0xff]
  %v1796 = vld [vmem:[%s1 + $0x36d0] sm:$0xff]
  %v1797 = vld [vmem:[%s1 + $0x36d8] sm:$0xff]
  %v1798 = vld [vmem:[%s1 + $0x36e0] sm:$0xff]
  %v1799 = vld [vmem:[%s1 + $0x36e8] sm:$0xff]
  %v1800 = vld [vmem:[%s1 + $0x36f0] sm:$0xff]
  %v1801 = vld [vmem:[%s1 + $0x36f8] sm:$0xff]
  %v1802 = vld [vmem:[%s1 + $0x3700] sm:$0xff]
  %v1803 = vld [vmem:[%s1 + $0x3708] sm:$0xff]
  %v1804 = vld [vmem:[%s1 + $0x3710] sm:$0xff]
  %v1805 = vld [vmem:[%s1 + $0x3718] sm:$0xff]
  %v1806 = vld [vmem:[%s1 + $0x3720] sm:$0xff]
  %v1807 = vld [vmem:[%s1 + $0x3728] sm:$0xff]
  %v1808 = vld [vmem:[%s1 + $0x3730] sm:$0xff]
  %v1809 = vld [vmem:[%s1 + $0x3738] sm:$0xff]
  %v1810 = vld [vmem:[%s1 + $0x3740] sm:$0xff]
  %v1811 = vld [vmem:[%s1 + $0x3748] sm:$0xff]
  %v1812 = vld [vmem:[%s1 + $0x3750] sm:$0xff]
  %v1813 = vld [vmem:[%s1 + $0x3758] sm:$0xff]
  %v1814 = vld [vmem:[%s1 + $0x3760] sm:$0xff]
  %v1815 = vld [vmem:[%s1 + $0x3768] sm:$0xff]
  %v1816 = vld [vmem:[%s1 + $0x3770] sm:$0xff]
  %v1817 = vld [vmem:[%s1 + $0x3778] sm:$0xff]
  %v1818 = vld [vmem:[%s1 + $0x3780] sm:$0xff]
  %v1819 = vld [vmem:[%s1 + $0x3788] sm:$0xff]
  %v1820 = vld [vmem:[%s1 + $0x3790] sm:$0xff]
  %v1821 = vld [vmem:[%s1 + $0x3798] sm:$0xff]
  %v1822 = vld [vmem:[%s1 + $0x37a0] sm:$0xff]
  %v1823 = vld [vmem:[%s1 + $0x37a8] sm:$0xff]
  %v1824 = vld [vmem:[%s1 + $0x37b0] sm:$0xff]
  %v1825 = vld [vmem:[%s1 + $0x37b8] sm:$0xff]
  %v1826 = vld [vmem:[%s1 + $0x37c0] sm:$0xff]
  %v1827 = vld [vmem:[%s1 + $0x37c8] sm:$0xff]
  %v1828 = vld [vmem:[%s1 + $0x37d0] sm:$0xff]
  %v1829 = vld [vmem:[%s1 + $0x37d8] sm:$0xff]
  %v1830 = vld [vmem:[%s1 + $0x37e0] sm:$0xff]
  %v1831 = vld [vmem:[%s1 + $0x37e8] sm:$0xff]
  %v1832 = vld [vmem:[%s1 + $0x37f0] sm:$0xff]
  %v1833 = vld [vmem:[%s1 + $0x37f8] sm:$0xff]
  %v1834 = vld [vmem:[%s1 + $0x3800] sm:$0xff]
  %v1835 = vld [vmem:[%s1 + $0x3808] sm:$0xff]
  %v1836 = vld [vmem:[%s1 + $0x3810] sm:$0xff]
  %v1837 = vld [vmem:[%s1 + $0x3818] sm:$0xff]
  %v1838 = vld [vmem:[%s1 + $0x3820] sm:$0xff]
  %v1839 = vld [vmem:[%s1 + $0x3828] sm:$0xff]
  %v1840 = vld [vmem:[%s1 + $0x3830] sm:$0xff]
  %v1841 = vld [vmem:[%s1 + $0x3838] sm:$0xff]
  %v1842 = vld [vmem:[%s1 + $0x3840] sm:$0xff]
  %v1843 = vld [vmem:[%s1 + $0x3848] sm:$0xff]
  %v1844 = vld [vmem:[%s1 + $0x3850] sm:$0xff]
  %v1845 = vld [vmem:[%s1 + $0x3858] sm:$0xff]
  %v1846 = vld [vmem:[%s1 + $0x3860] sm:$0xff]
  %v1847 = vld [vmem:[%s1 + $0x3868] sm:$0xff]
  %v1848 = vld [vmem:[%s1 + $0x3870] sm:$0xff]
  %v1849 = vld [vmem:[%s1 + $0x3878] sm:$0xff]
  %v1850 = vld [vmem:[%s1 + $0x3880] sm:$0xff]
  %v1851 = vld [vmem:[%s1 + $0x3888] sm:$0xff]
  %v1852 = vld [vmem:[%s1 + $0x3890] sm:$0xff]
  %v1853 = vld [vmem:[%s1 + $0x3898] sm:$0xff]
  %v1854 = vld [vmem:[%s1 + $0x38a0] sm:$0xff]
  %v1855 = vld [vmem:[%s1 + $0x38a8] sm:$0xff]
  %v1856 = vld [vmem:[%s1 + $0x38b0] sm:$0xff]
  %v1857 = vld [vmem:[%s1 + $0x38b8] sm:$0xff]
  %v1858 = vld [vmem:[%s1 + $0x38c0] sm:$0xff]
  %v1859 = vld [vmem:[%s1 + $0x38c8] sm:$0xff]
  %v1860 = vld [vmem:[%s1 + $0x38d0] sm:$0xff]
  %v1861 = vld [vmem:[%s1 + $0x38d8] sm:$0xff]
  %v1862 = vld [vmem:[%s1 + $0x38e0] sm:$0xff]
  %v1863 = vld [vmem:[%s1 + $0x38e8] sm:$0xff]
  %v1864 = vld [vmem:[%s1 + $0x38f0] sm:$0xff]
  %v1865 = vld [vmem:[%s1 + $0x38f8] sm:$0xff]
  %v1866 = vld [vmem:[%s1 + $0x3900] sm:$0xff]
  %v1867 = vld [vmem:[%s1 + $0x3908] sm:$0xff]
  %v1868 = vld [vmem:[%s1 + $0x3910] sm:$0xff]
  %v1869 = vld [vmem:[%s1 + $0x3918] sm:$0xff]
  %v1870 = vld [vmem:[%s1 + $0x3920] sm:$0xff]
  %v1871 = vld [vmem:[%s1 + $0x3928] sm:$0xff]
  %v1872 = vld [vmem:[%s1 + $0x3930] sm:$0xff]
  %v1873 = vld [vmem:[%s1 + $0x3938] sm:$0xff]
  %v1874 = vld [vmem:[%s1 + $0x3940] sm:$0xff]
  %v1875 = vld [vmem:[%s1 + $0x3948] sm:$0xff]
  %v1876 = vld [vmem:[%s1 + $0x3950] sm:$0xff]
  %v1877 = vld [vmem:[%s1 + $0x3958] sm:$0xff]
  %v1878 = vld [vmem:[%s1 + $0x3960] sm:$0xff]
  %v1879 = vld [vmem:[%s1 + $0x3968] sm:$0xff]
  %v1880 = vld [vmem:[%s1 + $0x3970] sm:$0xff]
  %v1881 = vld [vmem:[%s1 + $0x3978] sm:$0xff]
  %v1882 = vld [vmem:[%s1 + $0x3980] sm:$0xff]
  %v1883 = vld [vmem:[%s1 + $0x3988] sm:$0xff]
  %v1884 = vld [vmem:[%s1 + $0x3990] sm:$0xff]
  %v1885 = vld [vmem:[%s1 + $0x3998] sm:$0xff]
  %v1886 = vld [vmem:[%s1 + $0x39a0] sm:$0xff]
  %v1887 = vld [vmem:[%s1 + $0x39a8] sm:$0xff]
  %v1888 = vld [vmem:[%s1 + $0x39b0] sm:$0xff]
  %v1889 = vld [vmem:[%s1 + $0x39b8] sm:$0xff]
  %v1890 = vld [vmem:[%s1 + $0x39c0] sm:$0xff]
  %v1891 = vld [vmem:[%s1 + $0x39c8] sm:$0xff]
  %v1892 = vld [vmem:[%s1 + $0x39d0] sm:$0xff]
  %v1893 = vld [vmem:[%s1 + $0x39d8] sm:$0xff]
  %v1894 = vld [vmem:[%s1 + $0x39e0] sm:$0xff]
  %v1895 = vld [vmem:[%s1 + $0x39e8] sm:$0xff]
  %v1896 = vld [vmem:[%s1 + $0x39f0] sm:$0xff]
  %v1897 = vld [vmem:[%s1 + $0x39f8] sm:$0xff]
  %v1898 = vld [vmem:[%s1 + $0x3a00] sm:$0xff]
  %v1899 = vld [vmem:[%s1 + $0x3a08] sm:$0xff]
  %v1900 = vld [vmem:[%s1 + $0x3a10] sm:$0xff]
  %v1901 = vld [vmem:[%s1 + $0x3a18] sm:$0xff]
  %v1902 = vld [vmem:[%s1 + $0x3a20] sm:$0xff]
  %v1903 = vld [vmem:[%s1 + $0x3a28] sm:$0xff]
  %v1904 = vld [vmem:[%s1 + $0x3a30] sm:$0xff]
  %v1905 = vld [vmem:[%s1 + $0x3a38] sm:$0xff]
  %v1906 = vld [vmem:[%s1 + $0x3a40] sm:$0xff]
  %v1907 = vld [vmem:[%s1 + $0x3a48] sm:$0xff]
  %v1908 = vld [vmem:[%s1 + $0x3a50] sm:$0xff]
  %v1909 = vld [vmem:[%s1 + $0x3a58] sm:$0xff]
  %v1910 = vld [vmem:[%s1 + $0x3a60] sm:$0xff]
  %v1911 = vld [vmem:[%s1 + $0x3a68] sm:$0xff]
  %v1912 = vld [vmem:[%s1 + $0x3a70] sm:$0xff]
  %v1913 = vld [vmem:[%s1 + $0x3a78] sm:$0xff]
  %v1914 = vld [vmem:[%s1 + $0x3a80] sm:$0xff]
  %v1915 = vld [vmem:[%s1 + $0x3a88] sm:$0xff]
  %v1916 = vld [vmem:[%s1 + $0x3a90] sm:$0xff]
  %v1917 = vld [vmem:[%s1 + $0x3a98] sm:$0xff]
  %v1918 = vld [vmem:[%s1 + $0x3aa0] sm:$0xff]
  %v1919 = vld [vmem:[%s1 + $0x3aa8] sm:$0xff]
  %v1920 = vld [vmem:[%s1 + $0x3ab0] sm:$0xff]
  %v1921 = vld [vmem:[%s1 + $0x3ab8] sm:$0xff]
  %v1922 = vld [vmem:[%s1 + $0x3ac0] sm:$0xff]
  %v1923 = vld [vmem:[%s1 + $0x3ac8] sm:$0xff]
  %v1924 = vld [vmem:[%s1 + $0x3ad0] sm:$0xff]
  %v1925 = vld [vmem:[%s1 + $0x3ad8] sm:$0xff]
  %v1926 = vld [vmem:[%s1 + $0x3ae0] sm:$0xff]
  %v1927 = vld [vmem:[%s1 + $0x3ae8] sm:$0xff]
  %v1928 = vld [vmem:[%s1 + $0x3af0] sm:$0xff]
  %v1929 = vld [vmem:[%s1 + $0x3af8] sm:$0xff]
  %v1930 = vld [vmem:[%s1 + $0x3b00] sm:$0xff]
  %v1931 = vld [vmem:[%s1 + $0x3b08] sm:$0xff]
  %v1932 = vld [vmem:[%s1 + $0x3b10] sm:$0xff]
  %v1933 = vld [vmem:[%s1 + $0x3b18] sm:$0xff]
  %v1934 = vld [vmem:[%s1 + $0x3b20] sm:$0xff]
  %v1935 = vld [vmem:[%s1 + $0x3b28] sm:$0xff]
  %v1936 = vld [vmem:[%s1 + $0x3b30] sm:$0xff]
  %v1937 = vld [vmem:[%s1 + $0x3b38] sm:$0xff]
  %v1938 = vld [vmem:[%s1 + $0x3b40] sm:$0xff]
  %v1939 = vld [vmem:[%s1 + $0x3b48] sm:$0xff]
  %v1940 = vld [vmem:[%s1 + $0x3b50] sm:$0xff]
  %v1941 = vld [vmem:[%s1 + $0x3b58] sm:$0xff]
  %v1942 = vld [vmem:[%s1 + $0x3b60] sm:$0xff]
  %v1943 = vld [vmem:[%s1 + $0x3b68] sm:$0xff]
  %v1944 = vld [vmem:[%s1 + $0x3b70] sm:$0xff]
  %v1945 = vld [vmem:[%s1 + $0x3b78] sm:$0xff]
  %v1946 = vld [vmem:[%s1 + $0x3b80] sm:$0xff]
  %v1947 = vld [vmem:[%s1 + $0x3b88] sm:$0xff]
  %v1948 = vld [vmem:[%s1 + $0x3b90] sm:$0xff]
  %v1949 = vld [vmem:[%s1 + $0x3b98] sm:$0xff]
  %v1950 = vld [vmem:[%s1 + $0x3ba0] sm:$0xff]
  %v1951 = vld [vmem:[%s1 + $0x3ba8] sm:$0xff]
  %v1952 = vld [vmem:[%s1 + $0x3bb0] sm:$0xff]
  %v1953 = vld [vmem:[%s1 + $0x3bb8] sm:$0xff]
  %v1954 = vld [vmem:[%s1 + $0x3bc0] sm:$0xff]
  %v1955 = vld [vmem:[%s1 + $0x3bc8] sm:$0xff]
  %v1956 = vld [vmem:[%s1 + $0x3bd0] sm:$0xff]
  %v1957 = vld [vmem:[%s1 + $0x3bd8] sm:$0xff]
  %v1958 = vld [vmem:[%s1 + $0x3be0] sm:$0xff]
  %v1959 = vld [vmem:[%s1 + $0x3be8] sm:$0xff]
  %v1960 = vld [vmem:[%s1 + $0x3bf0] sm:$0xff]
  %v1961 = vld [vmem:[%s1 + $0x3bf8] sm:$0xff]
  %v1962 = vld [vmem:[%s1 + $0x3c00] sm:$0xff]
  %v1963 = vld [vmem:[%s1 + $0x3c08] sm:$0xff]
  %v1964 = vld [vmem:[%s1 + $0x3c10] sm:$0xff]
  %v1965 = vld [vmem:[%s1 + $0x3c18] sm:$0xff]
  %v1966 = vld [vmem:[%s1 + $0x3c20] sm:$0xff]
  %v1967 = vld [vmem:[%s1 + $0x3c28] sm:$0xff]
  %v1968 = vld [vmem:[%s1 + $0x3c30] sm:$0xff]
  %v1969 = vld [vmem:[%s1 + $0x3c38] sm:$0xff]
  %v1970 = vld [vmem:[%s1 + $0x3c40] sm:$0xff]
  %v1971 = vld [vmem:[%s1 + $0x3c48] sm:$0xff]
  %v1972 = vld [vmem:[%s1 + $0x3c50] sm:$0xff]
  %v1973 = vld [vmem:[%s1 + $0x3c58] sm:$0xff]
  %v1974 = vld [vmem:[%s1 + $0x3c60] sm:$0xff]
  %v1975 = vld [vmem:[%s1 + $0x3c68] sm:$0xff]
  %v1976 = vld [vmem:[%s1 + $0x3c70] sm:$0xff]
  %v1977 = vld [vmem:[%s1 + $0x3c78] sm:$0xff]
  %v1978 = vld [vmem:[%s1 + $0x3c80] sm:$0xff]
  %v1979 = vld [vmem:[%s1 + $0x3c88] sm:$0xff]
  %v1980 = vld [vmem:[%s1 + $0x3c90] sm:$0xff]
  %v1981 = vld [vmem:[%s1 + $0x3c98] sm:$0xff]
  %v1982 = vld [vmem:[%s1 + $0x3ca0] sm:$0xff]
  %v1983 = vld [vmem:[%s1 + $0x3ca8] sm:$0xff]
  %v1984 = vld [vmem:[%s1 + $0x3cb0] sm:$0xff]
  %v1985 = vld [vmem:[%s1 + $0x3cb8] sm:$0xff]
  %v1986 = vld [vmem:[%s1 + $0x3cc0] sm:$0xff]
  %v1987 = vld [vmem:[%s1 + $0x3cc8] sm:$0xff]
  %v1988 = vld [vmem:[%s1 + $0x3cd0] sm:$0xff]
  %v1989 = vld [vmem:[%s1 + $0x3cd8] sm:$0xff]
  %v1990 = vld [vmem:[%s1 + $0x3ce0] sm:$0xff]
  %v1991 = vld [vmem:[%s1 + $0x3ce8] sm:$0xff]
  %v1992 = vld [vmem:[%s1 + $0x3cf0] sm:$0xff]
  %v1993 = vld [vmem:[%s1 + $0x3cf8] sm:$0xff]
  %v1994 = vld [vmem:[%s1 + $0x3d00] sm:$0xff]
  %v1995 = vld [vmem:[%s1 + $0x3d08] sm:$0xff]
  %v1996 = vld [vmem:[%s1 + $0x3d10] sm:$0xff]
  %v1997 = vld [vmem:[%s1 + $0x3d18] sm:$0xff]
  %v1998 = vld [vmem:[%s1 + $0x3d20] sm:$0xff]
  %v1999 = vld [vmem:[%s1 + $0x3d28] sm:$0xff]
  %v2000 = vld [vmem:[%s1 + $0x3d30] sm:$0xff]
  %v2001 = vld [vmem:[%s1 + $0x3d38] sm:$0xff]
  %v2002 = vld [vmem:[%s1 + $0x3d40] sm:$0xff]
  %v2003 = vld [vmem:[%s1 + $0x3d48] sm:$0xff]
  %v2004 = vld [vmem:[%s1 + $0x3d50] sm:$0xff]
  %v2005 = vld [vmem:[%s1 + $0x3d58] sm:$0xff]
  %v2006 = vld [vmem:[%s1 + $0x3d60] sm:$0xff]
  %v2007 = vld [vmem:[%s1 + $0x3d68] sm:$0xff]
  %v2008 = vld [vmem:[%s1 + $0x3d70] sm:$0xff]
  %v2009 = vld [vmem:[%s1 + $0x3d78] sm:$0xff]
  %v2010 = vld [vmem:[%s1 + $0x3d80] sm:$0xff]
  %v2011 = vld [vmem:[%s1 + $0x3d88] sm:$0xff]
  %v2012 = vld [vmem:[%s1 + $0x3d90] sm:$0xff]
  %v2013 = vld [vmem:[%s1 + $0x3d98] sm:$0xff]
  %v2014 = vld [vmem:[%s1 + $0x3da0] sm:$0xff]
  %v2015 = vld [vmem:[%s1 + $0x3da8] sm:$0xff]
  %v2016 = vld [vmem:[%s1 + $0x3db0] sm:$0xff]
  %v2017 = vld [vmem:[%s1 + $0x3db8] sm:$0xff]
  %v2018 = vld [vmem:[%s1 + $0x3dc0] sm:$0xff]
  %v2019 = vld [vmem:[%s1 + $0x3dc8] sm:$0xff]
  %v2020 = vld [vmem:[%s1 + $0x3dd0] sm:$0xff]
  %v2021 = vld [vmem:[%s1 + $0x3dd8] sm:$0xff]
  %v2022 = vld [vmem:[%s1 + $0x3de0] sm:$0xff]
  %v2023 = vld [vmem:[%s1 + $0x3de8] sm:$0xff]
  %v2024 = vld [vmem:[%s1 + $0x3df0] sm:$0xff]
  %v2025 = vld [vmem:[%s1 + $0x3df8] sm:$0xff]
  %v2026 = vld [vmem:[%s1 + $0x3e00] sm:$0xff]
  %v2027 = vld [vmem:[%s1 + $0x3e08] sm:$0xff]
  %v2028 = vld [vmem:[%s1 + $0x3e10] sm:$0xff]
  %v2029 = vld [vmem:[%s1 + $0x3e18] sm:$0xff]
  %v2030 = vld [vmem:[%s1 + $0x3e20] sm:$0xff]
  %v2031 = vld [vmem:[%s1 + $0x3e28] sm:$0xff]
  %v2032 = vld [vmem:[%s1 + $0x3e30] sm:$0xff]
  %v2033 = vld [vmem:[%s1 + $0x3e38] sm:$0xff]
  %v2034 = vld [vmem:[%s1 + $0x3e40] sm:$0xff]
  %v2035 = vld [vmem:[%s1 + $0x3e48] sm:$0xff]
  %v2036 = vld [vmem:[%s1 + $0x3e50] sm:$0xff]
  %v2037 = vld [vmem:[%s1 + $0x3e58] sm:$0xff]
  %v2038 = vld [vmem:[%s1 + $0x3e60] sm:$0xff]
  %v2039 = vld [vmem:[%s1 + $0x3e68] sm:$0xff]
  %v2040 = vld [vmem:[%s1 + $0x3e70] sm:$0xff]
  %v2041 = vld [vmem:[%s1 + $0x3e78] sm:$0xff]
  %v2042 = vld [vmem:[%s1 + $0x3e80] sm:$0xff]
  %v2043 = vld [vmem:[%s1 + $0x3e88] sm:$0xff]
  %v2044 = vld [vmem:[%s1 + $0x3e90] sm:$0xff]
  %v2045 = vld [vmem:[%s1 + $0x3e98] sm:$0xff]
  %v2046 = vld [vmem:[%s1 + $0x3ea0] sm:$0xff]
  %v2047 = vld [vmem:[%s1 + $0x3ea8] sm:$0xff]
  %v2048 = vld [vmem:[%s1 + $0x3eb0] sm:$0xff]
  %v2049 = vld [vmem:[%s1 + $0x3eb8] sm:$0xff]
  %v2050 = vld [vmem:[%s1 + $0x3ec0] sm:$0xff]
  %v2051 = vld [vmem:[%s1 + $0x3ec8] sm:$0xff]
  %v2052 = vld [vmem:[%s1 + $0x3ed0] sm:$0xff]
  %v2053 = vld [vmem:[%s1 + $0x3ed8] sm:$0xff]
  %v2054 = vld [vmem:[%s1 + $0x3ee0] sm:$0xff]
  %v2055 = vld [vmem:[%s1 + $0x3ee8] sm:$0xff]
  %v2056 = vld [vmem:[%s1 + $0x3ef0] sm:$0xff]
  %v2057 = vld [vmem:[%s1 + $0x3ef8] sm:$0xff]
  %v2058 = vld [vmem:[%s1 + $0x3f00] sm:$0xff]
  %v2059 = vld [vmem:[%s1 + $0x3f08] sm:$0xff]
  %v2060 = vld [vmem:[%s1 + $0x3f10] sm:$0xff]
  %v2061 = vld [vmem:[%s1 + $0x3f18] sm:$0xff]
  %v2062 = vld [vmem:[%s1 + $0x3f20] sm:$0xff]
  %v2063 = vld [vmem:[%s1 + $0x3f28] sm:$0xff]
  %v2064 = vld [vmem:[%s1 + $0x3f30] sm:$0xff]
  %v2065 = vld [vmem:[%s1 + $0x3f38] sm:$0xff]
  %v2066 = vld [vmem:[%s1 + $0x3f40] sm:$0xff]
  %v2067 = vld [vmem:[%s1 + $0x3f48] sm:$0xff]
  %v2068 = vld [vmem:[%s1 + $0x3f50] sm:$0xff]
  %v2069 = vld [vmem:[%s1 + $0x3f58] sm:$0xff]
  %v2070 = vld [vmem:[%s1 + $0x3f60] sm:$0xff]
  %v2071 = vld [vmem:[%s1 + $0x3f68] sm:$0xff]
  %v2072 = vld [vmem:[%s1 + $0x3f70] sm:$0xff]
  %v2073 = vld [vmem:[%s1 + $0x3f78] sm:$0xff]
  %v2074 = vld [vmem:[%s1 + $0x3f80] sm:$0xff]
  %v2075 = vld [vmem:[%s1 + $0x3f88] sm:$0xff]
  %v2076 = vld [vmem:[%s1 + $0x3f90] sm:$0xff]
  %v2077 = vld [vmem:[%s1 + $0x3f98] sm:$0xff]
  %v2078 = vld [vmem:[%s1 + $0x3fa0] sm:$0xff]
  %v2079 = vld [vmem:[%s1 + $0x3fa8] sm:$0xff]
  %v2080 = vld [vmem:[%s1 + $0x3fb0] sm:$0xff]
  %v2081 = vld [vmem:[%s1 + $0x3fb8] sm:$0xff]
  %v2082 = vld [vmem:[%s1 + $0x3fc0] sm:$0xff]
  %v2083 = vld [vmem:[%s1 + $0x3fc8] sm:$0xff]
  %v2084 = vld [vmem:[%s1 + $0x3fd0] sm:$0xff]
  %v2085 = vld [vmem:[%s1 + $0x3fd8] sm:$0xff]
  %v2086 = vld [vmem:[%s1 + $0x3fe0] sm:$0xff]
  %v2087 = vld [vmem:[%s1 + $0x3fe8] sm:$0xff]
  %v2088 = vld [vmem:[%s1 + $0x3ff0] sm:$0xff]
  %v2089 = vld [vmem:[%s1 + $0x3ff8] sm:$0xff]
  %v2090 = vld [vmem:[%s1 + $0x4000] sm:$0xff]
  %v2091 = vld [vmem:[%s1 + $0x4008] sm:$0xff]
  %v2092 = vld [vmem:[%s1 + $0x4010] sm:$0xff]
  %v2093 = vld [vmem:[%s1 + $0x4018] sm:$0xff]
  %v2094 = vld [vmem:[%s1 + $0x4020] sm:$0xff]
  %v2095 = vld [vmem:[%s1 + $0x4028] sm:$0xff]
  %v2096 = vld [vmem:[%s1 + $0x4030] sm:$0xff]
  %v2097 = vld [vmem:[%s1 + $0x4038] sm:$0xff]
  %v2098 = vld [vmem:[%s1 + $0x4040] sm:$0xff]
  %v2099 = vld [vmem:[%s1 + $0x4048] sm:$0xff]
  %v2100 = vld [vmem:[%s1 + $0x4050] sm:$0xff]
  %v2101 = vld [vmem:[%s1 + $0x4058] sm:$0xff]
  %v2102 = vld [vmem:[%s1 + $0x4060] sm:$0xff]
  %v2103 = vld [vmem:[%s1 + $0x4068] sm:$0xff]
  %v2104 = vld [vmem:[%s1 + $0x4070] sm:$0xff]
  %v2105 = vld [vmem:[%s1 + $0x4078] sm:$0xff]
  %v2106 = vld [vmem:[%s1 + $0x4080] sm:$0xff]
  %v2107 = vld [vmem:[%s1 + $0x4088] sm:$0xff]
  %v2108 = vld [vmem:[%s1 + $0x4090] sm:$0xff]
  %v2109 = vld [vmem:[%s1 + $0x4098] sm:$0xff]
  %v2110 = vld [vmem:[%s1 + $0x40a0] sm:$0xff]
  %v2111 = vld [vmem:[%s1 + $0x40a8] sm:$0xff]
  %v2112 = vld [vmem:[%s1 + $0x40b0] sm:$0xff]
  %v2113 = vld [vmem:[%s1 + $0x40b8] sm:$0xff]
  %v2114 = vld [vmem:[%s1 + $0x40c0] sm:$0xff]
  %v2115 = vld [vmem:[%s1 + $0x40c8] sm:$0xff]
  %v2116 = vld [vmem:[%s1 + $0x40d0] sm:$0xff]
  %v2117 = vld [vmem:[%s1 + $0x40d8] sm:$0xff]
  %v2118 = vld [vmem:[%s1 + $0x40e0] sm:$0xff]
  %v2119 = vld [vmem:[%s1 + $0x40e8] sm:$0xff]
  %v2120 = vld [vmem:[%s1 + $0x40f0] sm:$0xff]
  %v2121 = vld [vmem:[%s1 + $0x40f8] sm:$0xff]
  %v2122 = vld [vmem:[%s1 + $0x4100] sm:$0xff]
  %v2123 = vld [vmem:[%s1 + $0x4108] sm:$0xff]
  %v2124 = vld [vmem:[%s1 + $0x4110] sm:$0xff]
  %v2125 = vld [vmem:[%s1 + $0x4118] sm:$0xff]
  %v2126 = vld [vmem:[%s1 + $0x4120] sm:$0xff]
  %v2127 = vld [vmem:[%s1 + $0x4128] sm:$0xff]
  %v2128 = vld [vmem:[%s1 + $0x4130] sm:$0xff]
  %v2129 = vld [vmem:[%s1 + $0x4138] sm:$0xff]
  %v2130 = vld [vmem:[%s1 + $0x4140] sm:$0xff]
  %v2131 = vld [vmem:[%s1 + $0x4148] sm:$0xff]
  %v2132 = vld [vmem:[%s1 + $0x4150] sm:$0xff]
  %v2133 = vld [vmem:[%s1 + $0x4158] sm:$0xff]
  %v2134 = vld [vmem:[%s1 + $0x4160] sm:$0xff]
  %v2135 = vld [vmem:[%s1 + $0x4168] sm:$0xff]
  %v2136 = vld [vmem:[%s1 + $0x4170] sm:$0xff]
  %v2137 = vld [vmem:[%s1 + $0x4178] sm:$0xff]
  %v2138 = vld [vmem:[%s1 + $0x4180] sm:$0xff]
  %v2139 = vld [vmem:[%s1 + $0x4188] sm:$0xff]
  %v2140 = vld [vmem:[%s1 + $0x4190] sm:$0xff]
  %v2141 = vld [vmem:[%s1 + $0x4198] sm:$0xff]
  %v2142 = vld [vmem:[%s1 + $0x41a0] sm:$0xff]
  %v2143 = vld [vmem:[%s1 + $0x41a8] sm:$0xff]
  %v2144 = vld [vmem:[%s1 + $0x41b0] sm:$0xff]
  %v2145 = vld [vmem:[%s1 + $0x41b8] sm:$0xff]
  %v2146 = vld [vmem:[%s1 + $0x41c0] sm:$0xff]
  %v2147 = vld [vmem:[%s1 + $0x41c8] sm:$0xff]
  %v2148 = vld [vmem:[%s1 + $0x41d0] sm:$0xff]
  %v2149 = vld [vmem:[%s1 + $0x41d8] sm:$0xff]
  %v2150 = vld [vmem:[%s1 + $0x41e0] sm:$0xff]
  %v2151 = vld [vmem:[%s1 + $0x41e8] sm:$0xff]
  %v2152 = vld [vmem:[%s1 + $0x41f0] sm:$0xff]
  %v2153 = vld [vmem:[%s1 + $0x41f8] sm:$0xff]
  %v2154 = vld [vmem:[%s1 + $0x4200] sm:$0xff]
  %v2155 = vld [vmem:[%s1 + $0x4208] sm:$0xff]
  %v2156 = vld [vmem:[%s1 + $0x4210] sm:$0xff]
  %v2157 = vld [vmem:[%s1 + $0x4218] sm:$0xff]
  %v2158 = vld [vmem:[%s1 + $0x4220] sm:$0xff]
  %v2159 = vld [vmem:[%s1 + $0x4228] sm:$0xff]
  %v2160 = vld [vmem:[%s1 + $0x4230] sm:$0xff]
  %v2161 = vld [vmem:[%s1 + $0x4238] sm:$0xff]
  %v2162 = vld [vmem:[%s1 + $0x4240] sm:$0xff]
  %v2163 = vld [vmem:[%s1 + $0x4248] sm:$0xff]
  %v2164 = vld [vmem:[%s1 + $0x4250] sm:$0xff]
  %v2165 = vld [vmem:[%s1 + $0x4258] sm:$0xff]
  %v2166 = vld [vmem:[%s1 + $0x4260] sm:$0xff]
  %v2167 = vld [vmem:[%s1 + $0x4268] sm:$0xff]
  %v2168 = vld [vmem:[%s1 + $0x4270] sm:$0xff]
  %v2169 = vld [vmem:[%s1 + $0x4278] sm:$0xff]
  %v2170 = vld [vmem:[%s1 + $0x4280] sm:$0xff]
  %v2171 = vld [vmem:[%s1 + $0x4288] sm:$0xff]
  %v2172 = vld [vmem:[%s1 + $0x4290] sm:$0xff]
  %v2173 = vld [vmem:[%s1 + $0x4298] sm:$0xff]
  %v2174 = vld [vmem:[%s1 + $0x42a0] sm:$0xff]
  %v2175 = vld [vmem:[%s1 + $0x42a8] sm:$0xff]
  %v2176 = vld [vmem:[%s1 + $0x42b0] sm:$0xff]
  %v2177 = vld [vmem:[%s1 + $0x42b8] sm:$0xff]
  %v2178 = vld [vmem:[%s1 + $0x42c0] sm:$0xff]
  %v2179 = vld [vmem:[%s1 + $0x42c8] sm:$0xff]
  %v2180 = vld [vmem:[%s1 + $0x42d0] sm:$0xff]
  %v2181 = vld [vmem:[%s1 + $0x42d8] sm:$0xff]
  %v2182 = vld [vmem:[%s1 + $0x42e0] sm:$0xff]
  %v2183 = vld [vmem:[%s1 + $0x42e8] sm:$0xff]
  %v2184 = vld [vmem:[%s1 + $0x42f0] sm:$0xff]
  %v2185 = vld [vmem:[%s1 + $0x42f8] sm:$0xff]
  %v2186 = vld [vmem:[%s1 + $0x4300] sm:$0xff]
  %v2187 = vld [vmem:[%s1 + $0x4308] sm:$0xff]
  %v2188 = vld [vmem:[%s1 + $0x4310] sm:$0xff]
  %v2189 = vld [vmem:[%s1 + $0x4318] sm:$0xff]
  %v2190 = vld [vmem:[%s1 + $0x4320] sm:$0xff]
  %v2191 = vld [vmem:[%s1 + $0x4328] sm:$0xff]
  %v2192 = vld [vmem:[%s1 + $0x4330] sm:$0xff]
  %v2193 = vld [vmem:[%s1 + $0x4338] sm:$0xff]
  %v2194 = vld [vmem:[%s1 + $0x4340] sm:$0xff]
  %v2195 = vld [vmem:[%s1 + $0x4348] sm:$0xff]
  %v2196 = vld [vmem:[%s1 + $0x4350] sm:$0xff]
  %v2197 = vld [vmem:[%s1 + $0x4358] sm:$0xff]
  %v2198 = vld [vmem:[%s1 + $0x4360] sm:$0xff]
  %v2199 = vld [vmem:[%s1 + $0x4368] sm:$0xff]
  %v2200 = vld [vmem:[%s1 + $0x4370] sm:$0xff]
  %v2201 = vld [vmem:[%s1 + $0x4378] sm:$0xff]
  %v2202 = vld [vmem:[%s1 + $0x4380] sm:$0xff]
  %v2203 = vld [vmem:[%s1 + $0x4388] sm:$0xff]
  %v2204 = vld [vmem:[%s1 + $0x4390] sm:$0xff]
  %v2205 = vld [vmem:[%s1 + $0x4398] sm:$0xff]
  %v2206 = vld [vmem:[%s1 + $0x43a0] sm:$0xff]
  %v2207 = vld [vmem:[%s1 + $0x43a8] sm:$0xff]
  %v2208 = vld [vmem:[%s1 + $0x43b0] sm:$0xff]
  %v2209 = vld [vmem:[%s1 + $0x43b8] sm:$0xff]
  %v2210 = vld [vmem:[%s1 + $0x43c0] sm:$0xff]
  %v2211 = vld [vmem:[%s1 + $0x43c8] sm:$0xff]
  %v2212 = vld [vmem:[%s1 + $0x43d0] sm:$0xff]
  %v2213 = vld [vmem:[%s1 + $0x43d8] sm:$0xff]
  %v2214 = vld [vmem:[%s1 + $0x43e0] sm:$0xff]
  %v2215 = vld [vmem:[%s1 + $0x43e8] sm:$0xff]
  %v2216 = vld [vmem:[%s1 + $0x43f0] sm:$0xff]
  %v2217 = vld [vmem:[%s1 + $0x43f8] sm:$0xff]
  %v2218 = vld [vmem:[%s1 + $0x4400] sm:$0xff]
  %v2219 = vld [vmem:[%s1 + $0x4408] sm:$0xff]
  %v2220 = vld [vmem:[%s1 + $0x4410] sm:$0xff]
  %v2221 = vld [vmem:[%s1 + $0x4418] sm:$0xff]
  %v2222 = vld [vmem:[%s1 + $0x4420] sm:$0xff]
  %v2223 = vld [vmem:[%s1 + $0x4428] sm:$0xff]
  %v2224 = vld [vmem:[%s1 + $0x4430] sm:$0xff]
  %v2225 = vld [vmem:[%s1 + $0x4438] sm:$0xff]
  %v2226 = vld [vmem:[%s1 + $0x4440] sm:$0xff]
  %v2227 = vld [vmem:[%s1 + $0x4448] sm:$0xff]
  %v2228 = vld [vmem:[%s1 + $0x4450] sm:$0xff]
  %v2229 = vld [vmem:[%s1 + $0x4458] sm:$0xff]
  %v2230 = vld [vmem:[%s1 + $0x4460] sm:$0xff]
  %v2231 = vld [vmem:[%s1 + $0x4468] sm:$0xff]
  %v2232 = vld [vmem:[%s1 + $0x4470] sm:$0xff]
  %v2233 = vld [vmem:[%s1 + $0x4478] sm:$0xff]
  %v2234 = vld [vmem:[%s1 + $0x4480] sm:$0xff]
  %v2235 = vld [vmem:[%s1 + $0x4488] sm:$0xff]
  %v2236 = vld [vmem:[%s1 + $0x4490] sm:$0xff]
  %v2237 = vld [vmem:[%s1 + $0x4498] sm:$0xff]
  %v2238 = vld [vmem:[%s1 + $0x44a0] sm:$0xff]
  %v2239 = vld [vmem:[%s1 + $0x44a8] sm:$0xff]
  %v2240 = vld [vmem:[%s1 + $0x44b0] sm:$0xff]
  %v2241 = vld [vmem:[%s1 + $0x44b8] sm:$0xff]
  %v2242 = vld [vmem:[%s1 + $0x44c0] sm:$0xff]
  %v2243 = vld [vmem:[%s1 + $0x44c8] sm:$0xff]
  %v2244 = vld [vmem:[%s1 + $0x44d0] sm:$0xff]
  %v2245 = vld [vmem:[%s1 + $0x44d8] sm:$0xff]
  %v2246 = vld [vmem:[%s1 + $0x44e0] sm:$0xff]
  %v2247 = vld [vmem:[%s1 + $0x44e8] sm:$0xff]
  %v2248 = vld [vmem:[%s1 + $0x44f0] sm:$0xff]
  %v2249 = vld [vmem:[%s1 + $0x44f8] sm:$0xff]
  %v2250 = vld [vmem:[%s1 + $0x4500] sm:$0xff]
  %v2251 = vld [vmem:[%s1 + $0x4508] sm:$0xff]
  %v2252 = vld [vmem:[%s1 + $0x4510] sm:$0xff]
  %v2253 = vld [vmem:[%s1 + $0x4518] sm:$0xff]
  %v2254 = vld [vmem:[%s1 + $0x4520] sm:$0xff]
  %v2255 = vld [vmem:[%s1 + $0x4528] sm:$0xff]
  %v2256 = vld [vmem:[%s1 + $0x4530] sm:$0xff]
  %v2257 = vld [vmem:[%s1 + $0x4538] sm:$0xff]
  %v2258 = vld [vmem:[%s1 + $0x4540] sm:$0xff]
  %v2259 = vld [vmem:[%s1 + $0x4548] sm:$0xff]
  %v2260 = vld [vmem:[%s1 + $0x4550] sm:$0xff]
  %v2261 = vld [vmem:[%s1 + $0x4558] sm:$0xff]
  %v2262 = vld [vmem:[%s1 + $0x4560] sm:$0xff]
  %v2263 = vld [vmem:[%s1 + $0x4568] sm:$0xff]
  %v2264 = vld [vmem:[%s1 + $0x4570] sm:$0xff]
  %v2265 = vld [vmem:[%s1 + $0x4578] sm:$0xff]
  %v2266 = vld [vmem:[%s1 + $0x4580] sm:$0xff]
  %v2267 = vld [vmem:[%s1 + $0x4588] sm:$0xff]
  %v2268 = vld [vmem:[%s1 + $0x4590] sm:$0xff]
  %v2269 = vld [vmem:[%s1 + $0x4598] sm:$0xff]
  %v2270 = vld [vmem:[%s1 + $0x45a0] sm:$0xff]
  %v2271 = vld [vmem:[%s1 + $0x45a8] sm:$0xff]
  %v2272 = vld [vmem:[%s1 + $0x45b0] sm:$0xff]
  %v2273 = vld [vmem:[%s1 + $0x45b8] sm:$0xff]
  %v2274 = vld [vmem:[%s1 + $0x45c0] sm:$0xff]
  %v2275 = vld [vmem:[%s1 + $0x45c8] sm:$0xff]
  %v2276 = vld [vmem:[%s1 + $0x45d0] sm:$0xff]
  %v2277 = vld [vmem:[%s1 + $0x45d8] sm:$0xff]
  %v2278 = vld [vmem:[%s1 + $0x45e0] sm:$0xff]
  %v2279 = vld [vmem:[%s1 + $0x45e8] sm:$0xff]
  %v2280 = vld [vmem:[%s1 + $0x45f0] sm:$0xff]
  %v2281 = vld [vmem:[%s1 + $0x45f8] sm:$0xff]
  %v2282 = vld [vmem:[%s1 + $0x4600] sm:$0xff]
  %v2283 = vld [vmem:[%s1 + $0x4608] sm:$0xff]
  %v2284 = vld [vmem:[%s1 + $0x4610] sm:$0xff]
  %v2285 = vld [vmem:[%s1 + $0x4618] sm:$0xff]
  %v2286 = vld [vmem:[%s1 + $0x4620] sm:$0xff]
  %v2287 = vld [vmem:[%s1 + $0x4628] sm:$0xff]
  %v2288 = vld [vmem:[%s1 + $0x4630] sm:$0xff]
  %v2289 = vld [vmem:[%s1 + $0x4638] sm:$0xff]
  %v2290 = vld [vmem:[%s1 + $0x4640] sm:$0xff]
  %v2291 = vld [vmem:[%s1 + $0x4648] sm:$0xff]
  %v2292 = vld [vmem:[%s1 + $0x4650] sm:$0xff]
  %v2293 = vld [vmem:[%s1 + $0x4658] sm:$0xff]
  %v2294 = vld [vmem:[%s1 + $0x4660] sm:$0xff]
  %v2295 = vld [vmem:[%s1 + $0x4668] sm:$0xff]
  %v2296 = vld [vmem:[%s1 + $0x4670] sm:$0xff]
  %v2297 = vld [vmem:[%s1 + $0x4678] sm:$0xff]
  %v2298 = vld [vmem:[%s1 + $0x4680] sm:$0xff]
  %v2299 = vld [vmem:[%s1 + $0x4688] sm:$0xff]
  %v2300 = vld [vmem:[%s1 + $0x4690] sm:$0xff]
  %v2301 = vld [vmem:[%s1 + $0x4698] sm:$0xff]
  %v2302 = vld [vmem:[%s1 + $0x46a0] sm:$0xff]
  %v2303 = vld [vmem:[%s1 + $0x46a8] sm:$0xff]
  %v2304 = vld [vmem:[%s1 + $0x46b0] sm:$0xff]
  %v2305 = vld [vmem:[%s1 + $0x46b8] sm:$0xff]
  %v2306 = vld [vmem:[%s1 + $0x46c0] sm:$0xff]
  %v2307 = vld [vmem:[%s1 + $0x46c8] sm:$0xff]
  %v2308 = vld [vmem:[%s1 + $0x46d0] sm:$0xff]
  %v2309 = vld [vmem:[%s1 + $0x46d8] sm:$0xff]
  %v2310 = vld [vmem:[%s1 + $0x46e0] sm:$0xff]
  %v2311 = vld [vmem:[%s1 + $0x46e8] sm:$0xff]
  %v2312 = vld [vmem:[%s1 + $0x46f0] sm:$0xff]
  %v2313 = vld [vmem:[%s1 + $0x46f8] sm:$0xff]
  %v2314 = vld [vmem:[%s1 + $0x4700] sm:$0xff]
  %v2315 = vld [vmem:[%s1 + $0x4708] sm:$0xff]
  %v2316 = vld [vmem:[%s1 + $0x4710] sm:$0xff]
  %v2317 = vld [vmem:[%s1 + $0x4718] sm:$0xff]
  %v2318 = vld [vmem:[%s1 + $0x4720] sm:$0xff]
  %v2319 = vld [vmem:[%s1 + $0x4728] sm:$0xff]
  %v2320 = vld [vmem:[%s1 + $0x4730] sm:$0xff]
  %v2321 = vld [vmem:[%s1 + $0x4738] sm:$0xff]
  %v2322 = vld [vmem:[%s1 + $0x4740] sm:$0xff]
  %v2323 = vld [vmem:[%s1 + $0x4748] sm:$0xff]
  %v2324 = vld [vmem:[%s1 + $0x4750] sm:$0xff]
  %v2325 = vld [vmem:[%s1 + $0x4758] sm:$0xff]
  %v2326 = vld [vmem:[%s1 + $0x4760] sm:$0xff]
  %v2327 = vld [vmem:[%s1 + $0x4768] sm:$0xff]
  %v2328 = vld [vmem:[%s1 + $0x4770] sm:$0xff]
  %v2329 = vld [vmem:[%s1 + $0x4778] sm:$0xff]
  %v2330 = vld [vmem:[%s1 + $0x4780] sm:$0xff]
  %v2331 = vld [vmem:[%s1 + $0x4788] sm:$0xff]
  %v2332 = vld [vmem:[%s1 + $0x4790] sm:$0xff]
  %v2333 = vld [vmem:[%s1 + $0x4798] sm:$0xff]
  %v2334 = vld [vmem:[%s1 + $0x47a0] sm:$0xff]
  %v2335 = vld [vmem:[%s1 + $0x47a8] sm:$0xff]
  %v2336 = vld [vmem:[%s1 + $0x47b0] sm:$0xff]
  %v2337 = vld [vmem:[%s1 + $0x47b8] sm:$0xff]
  %v2338 = vld [vmem:[%s1 + $0x47c0] sm:$0xff]
  %v2339 = vld [vmem:[%s1 + $0x47c8] sm:$0xff]
  %v2340 = vld [vmem:[%s1 + $0x47d0] sm:$0xff]
  %v2341 = vld [vmem:[%s1 + $0x47d8] sm:$0xff]
  %v2342 = vld [vmem:[%s1 + $0x47e0] sm:$0xff]
  %v2343 = vld [vmem:[%s1 + $0x47e8] sm:$0xff]
  %v2344 = vld [vmem:[%s1 + $0x47f0] sm:$0xff]
  %v2345 = vld [vmem:[%s1 + $0x47f8] sm:$0xff]
  %v2346 = vld [vmem:[%s1 + $0x4800] sm:$0xff]
  %v2347 = vld [vmem:[%s1 + $0x4808] sm:$0xff]
  %v2348 = vld [vmem:[%s1 + $0x4810] sm:$0xff]
  %v2349 = vld [vmem:[%s1 + $0x4818] sm:$0xff]
  %v2350 = vld [vmem:[%s1 + $0x4820] sm:$0xff]
  %v2351 = vld [vmem:[%s1 + $0x4828] sm:$0xff]
  %v2352 = vld [vmem:[%s1 + $0x4830] sm:$0xff]
  %v2353 = vld [vmem:[%s1 + $0x4838] sm:$0xff]
  %v2354 = vld [vmem:[%s1 + $0x4840] sm:$0xff]
  %v2355 = vld [vmem:[%s1 + $0x4848] sm:$0xff]
  %v2356 = vld [vmem:[%s1 + $0x4850] sm:$0xff]
  %v2357 = vld [vmem:[%s1 + $0x4858] sm:$0xff]
  %v2358 = vld [vmem:[%s1 + $0x4860] sm:$0xff]
  %v2359 = vld [vmem:[%s1 + $0x4868] sm:$0xff]
  %v2360 = vld [vmem:[%s1 + $0x4870] sm:$0xff]
  %v2361 = vld [vmem:[%s1 + $0x4878] sm:$0xff]
  %v2362 = vld [vmem:[%s1 + $0x4880] sm:$0xff]
  %v2363 = vld [vmem:[%s1 + $0x4888] sm:$0xff]
  %v2364 = vld [vmem:[%s1 + $0x4890] sm:$0xff]
  %v2365 = vld [vmem:[%s1 + $0x4898] sm:$0xff]
  %v2366 = vld [vmem:[%s1 + $0x48a0] sm:$0xff]
  %v2367 = vld [vmem:[%s1 + $0x48a8] sm:$0xff]
  %v2368 = vld [vmem:[%s1 + $0x48b0] sm:$0xff]
  %v2369 = vld [vmem:[%s1 + $0x48b8] sm:$0xff]
  %v2370 = vld [vmem:[%s1 + $0x48c0] sm:$0xff]
  %v2371 = vld [vmem:[%s1 + $0x48c8] sm:$0xff]
  %v2372 = vld [vmem:[%s1 + $0x48d0] sm:$0xff]
  %v2373 = vld [vmem:[%s1 + $0x48d8] sm:$0xff]
  %v2374 = vld [vmem:[%s1 + $0x48e0] sm:$0xff]
  %v2375 = vld [vmem:[%s1 + $0x48e8] sm:$0xff]
  %v2376 = vld [vmem:[%s1 + $0x48f0] sm:$0xff]
  %v2377 = vld [vmem:[%s1 + $0x48f8] sm:$0xff]
  %v2378 = vld [vmem:[%s1 + $0x4900] sm:$0xff]
  %v2379 = vld [vmem:[%s1 + $0x4908] sm:$0xff]
  %v2380 = vld [vmem:[%s1 + $0x4910] sm:$0xff]
  %v2381 = vld [vmem:[%s1 + $0x4918] sm:$0xff]
  %v2382 = vld [vmem:[%s1 + $0x4920] sm:$0xff]
  %v2383 = vld [vmem:[%s1 + $0x4928] sm:$0xff]
  %v2384 = vld [vmem:[%s1 + $0x4930] sm:$0xff]
  %v2385 = vld [vmem:[%s1 + $0x4938] sm:$0xff]
  %v2386 = vld [vmem:[%s1 + $0x4940] sm:$0xff]
  %v2387 = vld [vmem:[%s1 + $0x4948] sm:$0xff]
  %v2388 = vld [vmem:[%s1 + $0x4950] sm:$0xff]
  %v2389 = vld [vmem:[%s1 + $0x4958] sm:$0xff]
  %v2390 = vld [vmem:[%s1 + $0x4960] sm:$0xff]
  %v2391 = vld [vmem:[%s1 + $0x4968] sm:$0xff]
  %v2392 = vld [vmem:[%s1 + $0x4970] sm:$0xff]
  %v2393 = vld [vmem:[%s1 + $0x4978] sm:$0xff]
  %v2394 = vld [vmem:[%s1 + $0x4980] sm:$0xff]
  %v2395 = vld [vmem:[%s1 + $0x4988] sm:$0xff]
  %v2396 = vld [vmem:[%s1 + $0x4990] sm:$0xff]
  %v2397 = vld [vmem:[%s1 + $0x4998] sm:$0xff]
  %v2398 = vld [vmem:[%s1 + $0x49a0] sm:$0xff]
  %v2399 = vld [vmem:[%s1 + $0x49a8] sm:$0xff]
  %v2400 = vld [vmem:[%s1 + $0x49b0] sm:$0xff]
  %v2401 = vld [vmem:[%s1 + $0x49b8] sm:$0xff]
  %v2402 = vld [vmem:[%s1 + $0x49c0] sm:$0xff]
  %v2403 = vld [vmem:[%s1 + $0x49c8] sm:$0xff]
  %v2404 = vld [vmem:[%s1 + $0x49d0] sm:$0xff]
  %v2405 = vld [vmem:[%s1 + $0x49d8] sm:$0xff]
  %v2406 = vld [vmem:[%s1 + $0x49e0] sm:$0xff]
  %v2407 = vld [vmem:[%s1 + $0x49e8] sm:$0xff]
  %v2408 = vld [vmem:[%s1 + $0x49f0] sm:$0xff]
  %v2409 = vld [vmem:[%s1 + $0x49f8] sm:$0xff]
  %v2410 = vld [vmem:[%s1 + $0x4a00] sm:$0xff]
  %v2411 = vld [vmem:[%s1 + $0x4a08] sm:$0xff]
  %v2412 = vld [vmem:[%s1 + $0x4a10] sm:$0xff]
  %v2413 = vld [vmem:[%s1 + $0x4a18] sm:$0xff]
  %v2414 = vld [vmem:[%s1 + $0x4a20] sm:$0xff]
  %v2415 = vld [vmem:[%s1 + $0x4a28] sm:$0xff]
  %v2416 = vld [vmem:[%s1 + $0x4a30] sm:$0xff]
  %v2417 = vld [vmem:[%s1 + $0x4a38] sm:$0xff]
  %v2418 = vld [vmem:[%s1 + $0x4a40] sm:$0xff]
  %v2419 = vld [vmem:[%s1 + $0x4a48] sm:$0xff]
  %v2420 = vld [vmem:[%s1 + $0x4a50] sm:$0xff]
  %v2421 = vld [vmem:[%s1 + $0x4a58] sm:$0xff]
  %v2422 = vld [vmem:[%s1 + $0x4a60] sm:$0xff]
  %v2423 = vld [vmem:[%s1 + $0x4a68] sm:$0xff]
  %v2424 = vld [vmem:[%s1 + $0x4a70] sm:$0xff]
  %v2425 = vld [vmem:[%s1 + $0x4a78] sm:$0xff]
  %v2426 = vld [vmem:[%s1 + $0x4a80] sm:$0xff]
  %v2427 = vld [vmem:[%s1 + $0x4a88] sm:$0xff]
  %v2428 = vld [vmem:[%s1 + $0x4a90] sm:$0xff]
  %v2429 = vld [vmem:[%s1 + $0x4a98] sm:$0xff]
  %v2430 = vld [vmem:[%s1 + $0x4aa0] sm:$0xff]
  %v2431 = vld [vmem:[%s1 + $0x4aa8] sm:$0xff]
  %v2432 = vld [vmem:[%s1 + $0x4ab0] sm:$0xff]
  %v2433 = vld [vmem:[%s1 + $0x4ab8] sm:$0xff]
  %v2434 = vld [vmem:[%s1 + $0x4ac0] sm:$0xff]
  %v2435 = vld [vmem:[%s1 + $0x4ac8] sm:$0xff]
  %v2436 = vld [vmem:[%s1 + $0x4ad0] sm:$0xff]
  %v2437 = vld [vmem:[%s1 + $0x4ad8] sm:$0xff]
  %v2438 = vld [vmem:[%s1 + $0x4ae0] sm:$0xff]
  %v2439 = vld [vmem:[%s1 + $0x4ae8] sm:$0xff]
  %v2440 = vld [vmem:[%s1 + $0x4af0] sm:$0xff]
  %v2441 = vld [vmem:[%s1 + $0x4af8] sm:$0xff]
  %v2442 = vld [vmem:[%s1 + $0x4b00] sm:$0xff]
  %v2443 = vld [vmem:[%s1 + $0x4b08] sm:$0xff]
  %v2444 = vld [vmem:[%s1 + $0x4b10] sm:$0xff]
  %v2445 = vld [vmem:[%s1 + $0x4b18] sm:$0xff]
  %v2446 = vld [vmem:[%s1 + $0x4b20] sm:$0xff]
  %v2447 = vld [vmem:[%s1 + $0x4b28] sm:$0xff]
  %v2448 = vld [vmem:[%s1 + $0x4b30] sm:$0xff]
  %v2449 = vld [vmem:[%s1 + $0x4b38] sm:$0xff]
  %v2450 = vld [vmem:[%s1 + $0x4b40] sm:$0xff]
  %v2451 = vld [vmem:[%s1 + $0x4b48] sm:$0xff]
  %v2452 = vld [vmem:[%s1 + $0x4b50] sm:$0xff]
  %v2453 = vld [vmem:[%s1 + $0x4b58] sm:$0xff]
  %v2454 = vld [vmem:[%s1 + $0x4b60] sm:$0xff]
  %v2455 = vld [vmem:[%s1 + $0x4b68] sm:$0xff]
  %v2456 = vld [vmem:[%s1 + $0x4b70] sm:$0xff]
  %v2457 = vld [vmem:[%s1 + $0x4b78] sm:$0xff]
  %v2458 = vld [vmem:[%s1 + $0x4b80] sm:$0xff]
  %v2459 = vld [vmem:[%s1 + $0x4b88] sm:$0xff]
  %v2460 = vld [vmem:[%s1 + $0x4b90] sm:$0xff]
  %v2461 = vld [vmem:[%s1 + $0x4b98] sm:$0xff]
  %v2462 = vld [vmem:[%s1 + $0x4ba0] sm:$0xff]
  %v2463 = vld [vmem:[%s1 + $0x4ba8] sm:$0xff]
  %v2464 = vld [vmem:[%s1 + $0x4bb0] sm:$0xff]
  %v2465 = vld [vmem:[%s1 + $0x4bb8] sm:$0xff]
  %v2466 = vld [vmem:[%s1 + $0x4bc0] sm:$0xff]
  %v2467 = vld [vmem:[%s1 + $0x4bc8] sm:$0xff]
  %v2468 = vld [vmem:[%s1 + $0x4bd0] sm:$0xff]
  %v2469 = vld [vmem:[%s1 + $0x4bd8] sm:$0xff]
  %v2470 = vld [vmem:[%s1 + $0x4be0] sm:$0xff]
  %v2471 = vld [vmem:[%s1 + $0x4be8] sm:$0xff]
  %v2472 = vld [vmem:[%s1 + $0x4bf0] sm:$0xff]
  %v2473 = vld [vmem:[%s1 + $0x4bf8] sm:$0xff]
  %v2474 = vld [vmem:[%s1 + $0x4c00] sm:$0xff]
  %v2475 = vld [vmem:[%s1 + $0x4c08] sm:$0xff]
  %v2476 = vld [vmem:[%s1 + $0x4c10] sm:$0xff]
  %v2477 = vld [vmem:[%s1 + $0x4c18] sm:$0xff]
  %v2478 = vld [vmem:[%s1 + $0x4c20] sm:$0xff]
  %v2479 = vld [vmem:[%s1 + $0x4c28] sm:$0xff]
  %v2480 = vld [vmem:[%s1 + $0x4c30] sm:$0xff]
  %v2481 = vld [vmem:[%s1 + $0x4c38] sm:$0xff]
  %v2482 = vld [vmem:[%s1 + $0x4c40] sm:$0xff]
  %v2483 = vld [vmem:[%s1 + $0x4c48] sm:$0xff]
  %v2484 = vld [vmem:[%s1 + $0x4c50] sm:$0xff]
  %v2485 = vld [vmem:[%s1 + $0x4c58] sm:$0xff]
  %v2486 = vld [vmem:[%s1 + $0x4c60] sm:$0xff]
  %v2487 = vld [vmem:[%s1 + $0x4c68] sm:$0xff]
  %v2488 = vld [vmem:[%s1 + $0x4c70] sm:$0xff]
  %v2489 = vld [vmem:[%s1 + $0x4c78] sm:$0xff]
  %v2490 = vld [vmem:[%s1 + $0x4c80] sm:$0xff]
  %v2491 = vld [vmem:[%s1 + $0x4c88] sm:$0xff]
  %v2492 = vld [vmem:[%s1 + $0x4c90] sm:$0xff]
  %v2493 = vld [vmem:[%s1 + $0x4c98] sm:$0xff]
  %v2494 = vld [vmem:[%s1 + $0x4ca0] sm:$0xff]
  %v2495 = vld [vmem:[%s1 + $0x4ca8] sm:$0xff]
  %v2496 = vld [vmem:[%s1 + $0x4cb0] sm:$0xff]
  %v2497 = vld [vmem:[%s1 + $0x4cb8] sm:$0xff]
  %v2498 = vld [vmem:[%s1 + $0x4cc0] sm:$0xff]
  %v2499 = vld [vmem:[%s1 + $0x4cc8] sm:$0xff]
  %v2500 = vld [vmem:[%s1 + $0x4cd0] sm:$0xff]
  %v2501 = vld [vmem:[%s1 + $0x4cd8] sm:$0xff]
  %v2502 = vld [vmem:[%s1 + $0x4ce0] sm:$0xff]
  %v2503 = vld [vmem:[%s1 + $0x4ce8] sm:$0xff]
  %v2504 = vld [vmem:[%s1 + $0x4cf0] sm:$0xff]
  %v2505 = vld [vmem:[%s1 + $0x4cf8] sm:$0xff]
  %v2506 = vld [vmem:[%s1 + $0x4d00] sm:$0xff]
  %v2507 = vld [vmem:[%s1 + $0x4d08] sm:$0xff]
  %v2508 = vld [vmem:[%s1 + $0x4d10] sm:$0xff]
  %v2509 = vld [vmem:[%s1 + $0x4d18] sm:$0xff]
  %v2510 = vld [vmem:[%s1 + $0x4d20] sm:$0xff]
  %v2511 = vld [vmem:[%s1 + $0x4d28] sm:$0xff]
  %v2512 = vld [vmem:[%s1 + $0x4d30] sm:$0xff]
  %v2513 = vld [vmem:[%s1 + $0x4d38] sm:$0xff]
  %v2514 = vld [vmem:[%s1 + $0x4d40] sm:$0xff]
  %v2515 = vld [vmem:[%s1 + $0x4d48] sm:$0xff]
  %v2516 = vld [vmem:[%s1 + $0x4d50] sm:$0xff]
  %v2517 = vld [vmem:[%s1 + $0x4d58] sm:$0xff]
  %v2518 = vld [vmem:[%s1 + $0x4d60] sm:$0xff]
  %v2519 = vld [vmem:[%s1 + $0x4d68] sm:$0xff]
  %v2520 = vld [vmem:[%s1 + $0x4d70] sm:$0xff]
  %v2521 = vld [vmem:[%s1 + $0x4d78] sm:$0xff]
  %v2522 = vld [vmem:[%s1 + $0x4d80] sm:$0xff]
  %v2523 = vld [vmem:[%s1 + $0x4d88] sm:$0xff]
  %v2524 = vld [vmem:[%s1 + $0x4d90] sm:$0xff]
  %v2525 = vld [vmem:[%s1 + $0x4d98] sm:$0xff]
  %v2526 = vld [vmem:[%s1 + $0x4da0] sm:$0xff]
  %v2527 = vld [vmem:[%s1 + $0x4da8] sm:$0xff]
  %v2528 = vld [vmem:[%s1 + $0x4db0] sm:$0xff]
  %v2529 = vld [vmem:[%s1 + $0x4db8] sm:$0xff]
  %v2530 = vld [vmem:[%s1 + $0x4dc0] sm:$0xff]
  %v2531 = vld [vmem:[%s1 + $0x4dc8] sm:$0xff]
  %v2532 = vld [vmem:[%s1 + $0x4dd0] sm:$0xff]
  %v2533 = vld [vmem:[%s1 + $0x4dd8] sm:$0xff]
  %v2534 = vld [vmem:[%s1 + $0x4de0] sm:$0xff]
  %v2535 = vld [vmem:[%s1 + $0x4de8] sm:$0xff]
  %v2536 = vld [vmem:[%s1 + $0x4df0] sm:$0xff]
  %v2537 = vld [vmem:[%s1 + $0x4df8] sm:$0xff]
  %v2538 = vld [vmem:[%s1 + $0x4e00] sm:$0xff]
  %v2539 = vld [vmem:[%s1 + $0x4e08] sm:$0xff]
  %v2540 = vld [vmem:[%s1 + $0x4e10] sm:$0xff]
  %v2541 = vld [vmem:[%s1 + $0x4e18] sm:$0xff]
  %v2542 = vld [vmem:[%s1 + $0x4e20] sm:$0xff]
  %v2543 = vld [vmem:[%s1 + $0x4e28] sm:$0xff]
  %v2544 = vld [vmem:[%s1 + $0x4e30] sm:$0xff]
  %v2545 = vld [vmem:[%s1 + $0x4e38] sm:$0xff]
  %v2546 = vld [vmem:[%s1 + $0x4e40] sm:$0xff]
  %v2547 = vld [vmem:[%s1 + $0x4e48] sm:$0xff]
  %v2548 = vld [vmem:[%s1 + $0x4e50] sm:$0xff]
  %v2549 = vld [vmem:[%s1 + $0x4e58] sm:$0xff]
  %v2550 = vld [vmem:[%s1 + $0x4e60] sm:$0xff]
  %v2551 = vld [vmem:[%s1 + $0x4e68] sm:$0xff]
  %v2552 = vld [vmem:[%s1 + $0x4e70] sm:$0xff]
  %v2553 = vld [vmem:[%s1 + $0x4e78] sm:$0xff]
  %v2554 = vld [vmem:[%s1 + $0x4e80] sm:$0xff]
  %v2555 = vld [vmem:[%s1 + $0x4e88] sm:$0xff]
  %v2556 = vld [vmem:[%s1 + $0x4e90] sm:$0xff]
  %v2557 = vld [vmem:[%s1 + $0x4e98] sm:$0xff]
  %v2558 = vld [vmem:[%s1 + $0x4ea0] sm:$0xff]
  %v2559 = vld [vmem:[%s1 + $0x4ea8] sm:$0xff]
  %v2560 = vld [vmem:[%s1 + $0x4eb0] sm:$0xff]
  %v2561 = vld [vmem:[%s1 + $0x4eb8] sm:$0xff]
  %v2562 = vld [vmem:[%s1 + $0x4ec0] sm:$0xff]
  %v2563 = vld [vmem:[%s1 + $0x4ec8] sm:$0xff]
  %v2564 = vld [vmem:[%s1 + $0x4ed0] sm:$0xff]
  %v2565 = vld [vmem:[%s1 + $0x4ed8] sm:$0xff]
  %v2566 = vld [vmem:[%s1 + $0x4ee0] sm:$0xff]
  %v2567 = vld [vmem:[%s1 + $0x4ee8] sm:$0xff]
  %v2568 = vld [vmem:[%s1 + $0x4ef0] sm:$0xff]
  %v2569 = vld [vmem:[%s1 + $0x4ef8] sm:$0xff]
  %v2570 = vld [vmem:[%s1 + $0x4f00] sm:$0xff]
  %v2571 = vld [vmem:[%s1 + $0x4f08] sm:$0xff]
  %v2572 = vld [vmem:[%s1 + $0x4f10] sm:$0xff]
  %v2573 = vld [vmem:[%s1 + $0x4f18] sm:$0xff]
  %v2574 = vld [vmem:[%s1 + $0x4f20] sm:$0xff]
  %v2575 = vld [vmem:[%s1 + $0x4f28] sm:$0xff]
  %v2576 = vld [vmem:[%s1 + $0x4f30] sm:$0xff]
  %v2577 = vld [vmem:[%s1 + $0x4f38] sm:$0xff]
  %v2578 = vld [vmem:[%s1 + $0x4f40] sm:$0xff]
  %v2579 = vld [vmem:[%s1 + $0x4f48] sm:$0xff]
  %v2580 = vld [vmem:[%s1 + $0x4f50] sm:$0xff]
  %v2581 = vld [vmem:[%s1 + $0x4f58] sm:$0xff]
  %v2582 = vld [vmem:[%s1 + $0x4f60] sm:$0xff]
  %v2583 = vld [vmem:[%s1 + $0x4f68] sm:$0xff]
  %v2584 = vld [vmem:[%s1 + $0x4f70] sm:$0xff]
  %v2585 = vld [vmem:[%s1 + $0x4f78] sm:$0xff]
  %v2586 = vld [vmem:[%s1 + $0x4f80] sm:$0xff]
  %v2587 = vld [vmem:[%s1 + $0x4f88] sm:$0xff]
  %v2588 = vld [vmem:[%s1 + $0x4f90] sm:$0xff]
  %v2589 = vld [vmem:[%s1 + $0x4f98] sm:$0xff]
  %v2590 = vld [vmem:[%s1 + $0x4fa0] sm:$0xff]
  %v2591 = vld [vmem:[%s1 + $0x4fa8] sm:$0xff]
  %v2592 = vld [vmem:[%s1 + $0x4fb0] sm:$0xff]
  %v2593 = vld [vmem:[%s1 + $0x4fb8] sm:$0xff]
  %v2594 = vld [vmem:[%s1 + $0x4fc0] sm:$0xff]
  %v2595 = vld [vmem:[%s1 + $0x4fc8] sm:$0xff]
  %v2596 = vld [vmem:[%s1 + $0x4fd0] sm:$0xff]
  %v2597 = vld [vmem:[%s1 + $0x4fd8] sm:$0xff]
  %v2598 = vld [vmem:[%s1 + $0x4fe0] sm:$0xff]
  %v2599 = vld [vmem:[%s1 + $0x4fe8] sm:$0xff]
  %v2600 = vld [vmem:[%s1 + $0x4ff0] sm:$0xff]
  %v2601 = vld [vmem:[%s1 + $0x4ff8] sm:$0xff]
  %2602 = vmatprep.subr.mxu0 %v283
  %2603 = vmatpush1.msra.mxu0 %v282
  %2604 = vmatprep.subr.mxu0 %v267
  %2605 = vmatpush1.msra.mxu0 %v266
  %2606 = vmatprep.subr.mxu0 %v251
  %2607 = vmatpush1.msra.mxu0 %v250
  %2608 = vmatprep.subr.mxu0 %v235
  %2609 = vmatpush1.msra.mxu0 %v234
  %2610 = vmatprep.subr.mxu0 %v219
  %2611 = vmatpush1.msra.mxu0 %v218
  %2612 = vmatprep.subr.mxu0 %v203
  %2613 = vmatpush1.msra.mxu0 %v202
  %2614 = vmatprep.subr.mxu0 %v187
  %2615 = vmatpush1.msra.mxu0 %v186
  %2616 = vmatprep.subr.mxu0 %v171
  %2617 = vmatpush1.msra.mxu0 %v170
  %2618 = vmatprep.subr.mxu0 %v155
  %2619 = vmatpush1.msra.mxu0 %v154
  %2620 = vmatprep.subr.mxu0 %v139
  %2621 = vmatpush1.msra.mxu0 %v138
  %2622 = vmatprep.subr.mxu0 %v123
  %2623 = vmatpush1.msra.mxu0 %v122
  %2624 = vmatprep.subr.mxu0 %v107
  %2625 = vmatpush1.msra.mxu0 %v106
  %2626 = vmatprep.subr.mxu0 %v91
  %2627 = vmatpush1.msra.mxu0 %v90
  %2628 = vmatprep.subr.mxu0 %v75
  %2629 = vmatpush1.msra.mxu0 %v74
  %2630 = vmatprep.subr.mxu0 %v59
  %2631 = vmatpush1.msra.mxu0 %v58
  %2632 = vmatprep.subr.mxu0 %v43
  %2633 = vmatpush1.msra.mxu0 %v42
  %2634 = vmatprep.subr.mxu0 %v539
  %2635 = vmatpush2.msra.mxu0 %v538
  %2636 = vmatprep.subr.mxu0 %v523
  %2637 = vmatpush2.msra.mxu0 %v522
  %2638 = vmatprep.subr.mxu0 %v507
  %2639 = vmatpush2.msra.mxu0 %v506
  %2640 = vmatprep.subr.mxu0 %v491
  %2641 = vmatpush2.msra.mxu0 %v490
  %2642 = vmatprep.subr.mxu0 %v475
  %2643 = vmatpush2.msra.mxu0 %v474
  %2644 = vmatprep.subr.mxu0 %v459
  %2645 = vmatpush2.msra.mxu0 %v458
  %2646 = vmatprep.subr.mxu0 %v443
  %2647 = vmatpush2.msra.mxu0 %v442
  %2648 = vmatprep.subr.mxu0 %v427
  %2649 = vmatpush2.msra.mxu0 %v426
  %2650 = vmatprep.subr.mxu0 %v411
  %2651 = vmatpush2.msra.mxu0 %v410
  %2652 = vmatprep.subr.mxu0 %v395
  %2653 = vmatpush2.msra.mxu0 %v394
  %2654 = vmatprep.subr.mxu0 %v379
  %2655 = vmatpush2.msra.mxu0 %v378
  %2656 = vmatprep.subr.mxu0 %v363
  %2657 = vmatpush2.msra.mxu0 %v362
  %2658 = vmatprep.subr.mxu0 %v347
  %2659 = vmatpush2.msra.mxu0 %v346
  %2660 = vmatprep.subr.mxu0 %v331
  %2661 = vmatpush2.msra.mxu0 %v330
  %2662 = vmatprep.subr.mxu0 %v315
  %2663 = vmatpush2.msra.mxu0 %v314
  %2664 = vmatprep.subr.mxu0 %v299
  %2665 = vmatpush2.msra.mxu0 %v298
  %2666 = vmatprep.mubr.f32.mxu0 %v33
  %2667 = vmatmul.mubr.f32.gmra.mxu0 %v32
  %v2668 = vpop.f32.mrf.mxu0
  %v2669 = vadd.f32 0.0, %v2668
  %v2670 = vpop.f32.mrf.mxu0
  %v2671 = vadd.f32 0.0, %v2670
  %2672 = vdwg.mxu0
  %2673 = vmatprep.subr.mxu0 %v795
  %2674 = vmatpush1.msra.mxu0 %v794
  %2675 = vmatprep.subr.mxu0 %v779
  %2676 = vmatpush1.msra.mxu0 %v778
  %2677 = vmatprep.subr.mxu0 %v763
  %2678 = vmatpush1.msra.mxu0 %v762
  %2679 = vmatprep.subr.mxu0 %v747
  %2680 = vmatpush1.msra.mxu0 %v746
  %2681 = vmatprep.subr.mxu0 %v731
  %2682 = vmatpush1.msra.mxu0 %v730
  %2683 = vmatprep.subr.mxu0 %v715
  %2684 = vmatpush1.msra.mxu0 %v714
  %2685 = vmatprep.subr.mxu0 %v699
  %2686 = vmatpush1.msra.mxu0 %v698
  %2687 = vmatprep.subr.mxu0 %v683
  %2688 = vmatpush1.msra.mxu0 %v682
  %2689 = vmatprep.subr.mxu0 %v667
  %2690 = vmatpush1.msra.mxu0 %v666
  %2691 = vmatprep.subr.mxu0 %v651
  %2692 = vmatpush1.msra.mxu0 %v650
  %2693 = vmatprep.subr.mxu0 %v635
  %2694 = vmatpush1.msra.mxu0 %v634
  %2695 = vmatprep.subr.mxu0 %v619
  %2696 = vmatpush1.msra.mxu0 %v618
  %2697 = vmatprep.subr.mxu0 %v603
  %2698 = vmatpush1.msra.mxu0 %v602
  %2699 = vmatprep.subr.mxu0 %v587
  %2700 = vmatpush1.msra.mxu0 %v586
  %2701 = vmatprep.subr.mxu0 %v571
  %2702 = vmatpush1.msra.mxu0 %v570
  %2703 = vmatprep.subr.mxu0 %v555
  %2704 = vmatpush1.msra.mxu0 %v554
  %2705 = vmatprep.subr.mxu0 %v1051
  %2706 = vmatpush2.msra.mxu0 %v1050
  %2707 = vmatprep.subr.mxu0 %v1035
  %2708 = vmatpush2.msra.mxu0 %v1034
  %2709 = vmatprep.subr.mxu0 %v1019
  %2710 = vmatpush2.msra.mxu0 %v1018
  %2711 = vmatprep.subr.mxu0 %v1003
  %2712 = vmatpush2.msra.mxu0 %v1002
  %2713 = vmatprep.subr.mxu0 %v987
  %2714 = vmatpush2.msra.mxu0 %v986
  %2715 = vmatprep.subr.mxu0 %v971
  %2716 = vmatpush2.msra.mxu0 %v970
  %2717 = vmatprep.subr.mxu0 %v955
  %2718 = vmatpush2.msra.mxu0 %v954
  %2719 = vmatprep.subr.mxu0 %v939
  %2720 = vmatpush2.msra.mxu0 %v938
  %2721 = vmatprep.subr.mxu0 %v923
  %2722 = vmatpush2.msra.mxu0 %v922
  %2723 = vmatprep.subr.mxu0 %v907
  %2724 = vmatpush2.msra.mxu0 %v906
  %2725 = vmatprep.subr.mxu0 %v891
  %2726 = vmatpush2.msra.mxu0 %v890
  %2727 = vmatprep.subr.mxu0 %v875
  %2728 = vmatpush2.msra.mxu0 %v874
  %2729 = vmatprep.subr.mxu0 %v859
  %2730 = vmatpush2.msra.mxu0 %v858
  %2731 = vmatprep.subr.mxu0 %v843
  %2732 = vmatpush2.msra.mxu0 %v842
  %2733 = vmatprep.subr.mxu0 %v827
  %2734 = vmatpush2.msra.mxu0 %v826
  %2735 = vmatprep.subr.mxu0 %v811
  %2736 = vmatpush2.msra.mxu0 %v810
  %2737 = vmatprep.mubr.f32.mxu0 %v35
  %2738 = vmatmul.mubr.f32.gmra.mxu0 %v34
  %v2739 = vpop.f32.mrf.mxu0
  %v2740 = vadd.f32 %v2669, %v2739
  %v2741 = vpop.f32.mrf.mxu0
  %v2742 = vadd.f32 %v2671, %v2741
  %2743 = vdwg.mxu0
  %2744 = vmatprep.subr.mxu0 %v1307
  %2745 = vmatpush1.msra.mxu0 %v1306
  %2746 = vmatprep.subr.mxu0 %v1291
  %2747 = vmatpush1.msra.mxu0 %v1290
  %2748 = vmatprep.subr.mxu0 %v1275
  %2749 = vmatpush1.msra.mxu0 %v1274
  %2750 = vmatprep.subr.mxu0 %v1259
  %2751 = vmatpush1.msra.mxu0 %v1258
  %2752 = vmatprep.subr.mxu0 %v1243
  %2753 = vmatpush1.msra.mxu0 %v1242
  %2754 = vmatprep.subr.mxu0 %v1227
  %2755 = vmatpush1.msra.mxu0 %v1226
  %2756 = vmatprep.subr.mxu0 %v1211
  %2757 = vmatpush1.msra.mxu0 %v1210
  %2758 = vmatprep.subr.mxu0 %v1195
  %2759 = vmatpush1.msra.mxu0 %v1194
  %2760 = vmatprep.subr.mxu0 %v1179
  %2761 = vmatpush1.msra.mxu0 %v1178
  %2762 = vmatprep.subr.mxu0 %v1163
  %2763 = vmatpush1.msra.mxu0 %v1162
  %2764 = vmatprep.subr.mxu0 %v1147
  %2765 = vmatpush1.msra.mxu0 %v1146
  %2766 = vmatprep.subr.mxu0 %v1131
  %2767 = vmatpush1.msra.mxu0 %v1130
  %2768 = vmatprep.subr.mxu0 %v1115
  %2769 = vmatpush1.msra.mxu0 %v1114
  %2770 = vmatprep.subr.mxu0 %v1099
  %2771 = vmatpush1.msra.mxu0 %v1098
  %2772 = vmatprep.subr.mxu0 %v1083
  %2773 = vmatpush1.msra.mxu0 %v1082
  %2774 = vmatprep.subr.mxu0 %v1067
  %2775 = vmatpush1.msra.mxu0 %v1066
  %2776 = vmatprep.subr.mxu0 %v1563
  %2777 = vmatpush2.msra.mxu0 %v1562
  %2778 = vmatprep.subr.mxu0 %v1547
  %2779 = vmatpush2.msra.mxu0 %v1546
  %2780 = vmatprep.subr.mxu0 %v1531
  %2781 = vmatpush2.msra.mxu0 %v1530
  %2782 = vmatprep.subr.mxu0 %v1515
  %2783 = vmatpush2.msra.mxu0 %v1514
  %2784 = vmatprep.subr.mxu0 %v1499
  %2785 = vmatpush2.msra.mxu0 %v1498
  %2786 = vmatprep.subr.mxu0 %v1483
  %2787 = vmatpush2.msra.mxu0 %v1482
  %2788 = vmatprep.subr.mxu0 %v1467
  %2789 = vmatpush2.msra.mxu0 %v1466
  %2790 = vmatprep.subr.mxu0 %v1451
  %2791 = vmatpush2.msra.mxu0 %v1450
  %2792 = vmatprep.subr.mxu0 %v1435
  %2793 = vmatpush2.msra.mxu0 %v1434
  %2794 = vmatprep.subr.mxu0 %v1419
  %2795 = vmatpush2.msra.mxu0 %v1418
  %2796 = vmatprep.subr.mxu0 %v1403
  %2797 = vmatpush2.msra.mxu0 %v1402
  %2798 = vmatprep.subr.mxu0 %v1387
  %2799 = vmatpush2.msra.mxu0 %v1386
  %2800 = vmatprep.subr.mxu0 %v1371
  %2801 = vmatpush2.msra.mxu0 %v1370
  %2802 = vmatprep.subr.mxu0 %v1355
  %2803 = vmatpush2.msra.mxu0 %v1354
  %2804 = vmatprep.subr.mxu0 %v1339
  %2805 = vmatpush2.msra.mxu0 %v1338
  %2806 = vmatprep.subr.mxu0 %v1323
  %2807 = vmatpush2.msra.mxu0 %v1322
  %2808 = vmatprep.mubr.f32.mxu0 %v37
  %2809 = vmatmul.mubr.f32.gmra.mxu0 %v36
  %v2810 = vpop.f32.mrf.mxu0
  %v2811 = vadd.f32 %v2740, %v2810
  %v2812 = vpop.f32.mrf.mxu0
  %v2813 = vadd.f32 %v2742, %v2812
  %2814 = vdwg.mxu0
  %2815 = vmatprep.subr.mxu0 %v1819
  %2816 = vmatpush1.msra.mxu0 %v1818
  %2817 = vmatprep.subr.mxu0 %v1803
  %2818 = vmatpush1.msra.mxu0 %v1802
  %2819 = vmatprep.subr.mxu0 %v1787
  %2820 = vmatpush1.msra.mxu0 %v1786
  %2821 = vmatprep.subr.mxu0 %v1771
  %2822 = vmatpush1.msra.mxu0 %v1770
  %2823 = vmatprep.subr.mxu0 %v1755
  %2824 = vmatpush1.msra.mxu0 %v1754
  %2825 = vmatprep.subr.mxu0 %v1739
  %2826 = vmatpush1.msra.mxu0 %v1738
  %2827 = vmatprep.subr.mxu0 %v1723
  %2828 = vmatpush1.msra.mxu0 %v1722
  %2829 = vmatprep.subr.mxu0 %v1707
  %2830 = vmatpush1.msra.mxu0 %v1706
  %2831 = vmatprep.subr.mxu0 %v1691
  %2832 = vmatpush1.msra.mxu0 %v1690
  %2833 = vmatprep.subr.mxu0 %v1675
  %2834 = vmatpush1.msra.mxu0 %v1674
  %2835 = vmatprep.subr.mxu0 %v1659
  %2836 = vmatpush1.msra.mxu0 %v1658
  %2837 = vmatprep.subr.mxu0 %v1643
  %2838 = vmatpush1.msra.mxu0 %v1642
  %2839 = vmatprep.subr.mxu0 %v1627
  %2840 = vmatpush1.msra.mxu0 %v1626
  %2841 = vmatprep.subr.mxu0 %v1611
  %2842 = vmatpush1.msra.mxu0 %v1610
  %2843 = vmatprep.subr.mxu0 %v1595
  %2844 = vmatpush1.msra.mxu0 %v1594
  %2845 = vmatprep.subr.mxu0 %v1579
  %2846 = vmatpush1.msra.mxu0 %v1578
  %2847 = vmatprep.subr.mxu0 %v2075
  %2848 = vmatpush2.msra.mxu0 %v2074
  %2849 = vmatprep.subr.mxu0 %v2059
  %2850 = vmatpush2.msra.mxu0 %v2058
  %2851 = vmatprep.subr.mxu0 %v2043
  %2852 = vmatpush2.msra.mxu0 %v2042
  %2853 = vmatprep.subr.mxu0 %v2027
  %2854 = vmatpush2.msra.mxu0 %v2026
  %2855 = vmatprep.subr.mxu0 %v2011
  %2856 = vmatpush2.msra.mxu0 %v2010
  %2857 = vmatprep.subr.mxu0 %v1995
  %2858 = vmatpush2.msra.mxu0 %v1994
  %2859 = vmatprep.subr.mxu0 %v1979
  %2860 = vmatpush2.msra.mxu0 %v1978
  %2861 = vmatprep.subr.mxu0 %v1963
  %2862 = vmatpush2.msra.mxu0 %v1962
  %2863 = vmatprep.subr.mxu0 %v1947
  %2864 = vmatpush2.msra.mxu0 %v1946
  %2865 = vmatprep.subr.mxu0 %v1931
  %2866 = vmatpush2.msra.mxu0 %v1930
  %2867 = vmatprep.subr.mxu0 %v1915
  %2868 = vmatpush2.msra.mxu0 %v1914
  %2869 = vmatprep.subr.mxu0 %v1899
  %2870 = vmatpush2.msra.mxu0 %v1898
  %2871 = vmatprep.subr.mxu0 %v1883
  %2872 = vmatpush2.msra.mxu0 %v1882
  %2873 = vmatprep.subr.mxu0 %v1867
  %2874 = vmatpush2.msra.mxu0 %v1866
  %2875 = vmatprep.subr.mxu0 %v1851
  %2876 = vmatpush2.msra.mxu0 %v1850
  %2877 = vmatprep.subr.mxu0 %v1835
  %2878 = vmatpush2.msra.mxu0 %v1834
  %2879 = vmatprep.mubr.f32.mxu0 %v39
  %2880 = vmatmul.mubr.f32.gmra.mxu0 %v38
  %v2881 = vpop.f32.mrf.mxu0
  %v2882 = vadd.f32 %v2811, %v2881
  %v2883 = vpop.f32.mrf.mxu0
  %v2884 = vadd.f32 %v2813, %v2883
  %2885 = vdwg.mxu0
  %2886 = vmatprep.subr.mxu0 %v2331
  %2887 = vmatpush1.msra.mxu0 %v2330
  %2888 = vmatprep.subr.mxu0 %v2315
  %2889 = vmatpush1.msra.mxu0 %v2314
  %2890 = vmatprep.subr.mxu0 %v2299
  %2891 = vmatpush1.msra.mxu0 %v2298
  %2892 = vmatprep.subr.mxu0 %v2283
  %2893 = vmatpush1.msra.mxu0 %v2282
  %2894 = vmatprep.subr.mxu0 %v2267
  %2895 = vmatpush1.msra.mxu0 %v2266
  %2896 = vmatprep.subr.mxu0 %v2251
  %2897 = vmatpush1.msra.mxu0 %v2250
  %2898 = vmatprep.subr.mxu0 %v2235
  %2899 = vmatpush1.msra.mxu0 %v2234
  %2900 = vmatprep.subr.mxu0 %v2219
  %2901 = vmatpush1.msra.mxu0 %v2218
  %2902 = vmatprep.subr.mxu0 %v2203
  %2903 = vmatpush1.msra.mxu0 %v2202
  %2904 = vmatprep.subr.mxu0 %v2187
  %2905 = vmatpush1.msra.mxu0 %v2186
  %2906 = vmatprep.subr.mxu0 %v2171
  %2907 = vmatpush1.msra.mxu0 %v2170
  %2908 = vmatprep.subr.mxu0 %v2155
  %2909 = vmatpush1.msra.mxu0 %v2154
  %2910 = vmatprep.subr.mxu0 %v2139
  %2911 = vmatpush1.msra.mxu0 %v2138
  %2912 = vmatprep.subr.mxu0 %v2123
  %2913 = vmatpush1.msra.mxu0 %v2122
  %2914 = vmatprep.subr.mxu0 %v2107
  %2915 = vmatpush1.msra.mxu0 %v2106
  %2916 = vmatprep.subr.mxu0 %v2091
  %2917 = vmatpush1.msra.mxu0 %v2090
  %2918 = vmatprep.subr.mxu0 %v2587
  %2919 = vmatpush2.msra.mxu0 %v2586
  %2920 = vmatprep.subr.mxu0 %v2571
  %2921 = vmatpush2.msra.mxu0 %v2570
  %2922 = vmatprep.subr.mxu0 %v2555
  %2923 = vmatpush2.msra.mxu0 %v2554
  %2924 = vmatprep.subr.mxu0 %v2539
  %2925 = vmatpush2.msra.mxu0 %v2538
  %2926 = vmatprep.subr.mxu0 %v2523
  %2927 = vmatpush2.msra.mxu0 %v2522
  %2928 = vmatprep.subr.mxu0 %v2507
  %2929 = vmatpush2.msra.mxu0 %v2506
  %2930 = vmatprep.subr.mxu0 %v2491
  %2931 = vmatpush2.msra.mxu0 %v2490
  %2932 = vmatprep.subr.mxu0 %v2475
  %2933 = vmatpush2.msra.mxu0 %v2474
  %2934 = vmatprep.subr.mxu0 %v2459
  %2935 = vmatpush2.msra.mxu0 %v2458
  %2936 = vmatprep.subr.mxu0 %v2443
  %2937 = vmatpush2.msra.mxu0 %v2442
  %2938 = vmatprep.subr.mxu0 %v2427
  %2939 = vmatpush2.msra.mxu0 %v2426
  %2940 = vmatprep.subr.mxu0 %v2411
  %2941 = vmatpush2.msra.mxu0 %v2410
  %2942 = vmatprep.subr.mxu0 %v2395
  %2943 = vmatpush2.msra.mxu0 %v2394
  %2944 = vmatprep.subr.mxu0 %v2379
  %2945 = vmatpush2.msra.mxu0 %v2378
  %2946 = vmatprep.subr.mxu0 %v2363
  %2947 = vmatpush2.msra.mxu0 %v2362
  %2948 = vmatprep.subr.mxu0 %v2347
  %2949 = vmatpush2.msra.mxu0 %v2346
  %2950 = vmatprep.mubr.f32.mxu0 %v41
  %2951 = vmatmul.mubr.f32.gmra.mxu0 %v40
  %v2952 = vpop.f32.mrf.mxu0
  %v2953 = vadd.f32 %v2882, %v2952
  %v2954 = vpop.f32.mrf.mxu0
  %v2955 = vadd.f32 %v2884, %v2954
  %2956 = vdwg.mxu0
  %2957 = vmatprep.subr.mxu0 %v285
  %2958 = vmatpush1.msra.mxu0 %v284
  %2959 = vmatprep.subr.mxu0 %v269
  %2960 = vmatpush1.msra.mxu0 %v268
  %2961 = vmatprep.subr.mxu0 %v253
  %2962 = vmatpush1.msra.mxu0 %v252
  %2963 = vmatprep.subr.mxu0 %v237
  %2964 = vmatpush1.msra.mxu0 %v236
  %2965 = vmatprep.subr.mxu0 %v221
  %2966 = vmatpush1.msra.mxu0 %v220
  %2967 = vmatprep.subr.mxu0 %v205
  %2968 = vmatpush1.msra.mxu0 %v204
  %2969 = vmatprep.subr.mxu0 %v189
  %2970 = vmatpush1.msra.mxu0 %v188
  %2971 = vmatprep.subr.mxu0 %v173
  %2972 = vmatpush1.msra.mxu0 %v172
  %2973 = vmatprep.subr.mxu0 %v157
  %2974 = vmatpush1.msra.mxu0 %v156
  %2975 = vmatprep.subr.mxu0 %v141
  %2976 = vmatpush1.msra.mxu0 %v140
  %2977 = vmatprep.subr.mxu0 %v125
  %2978 = vmatpush1.msra.mxu0 %v124
  %2979 = vmatprep.subr.mxu0 %v109
  %2980 = vmatpush1.msra.mxu0 %v108
  %2981 = vmatprep.subr.mxu0 %v93
  %2982 = vmatpush1.msra.mxu0 %v92
  %2983 = vmatprep.subr.mxu0 %v77
  %2984 = vmatpush1.msra.mxu0 %v76
  %2985 = vmatprep.subr.mxu0 %v61
  %2986 = vmatpush1.msra.mxu0 %v60
  %2987 = vmatprep.subr.mxu0 %v45
  %2988 = vmatpush1.msra.mxu0 %v44
  %2989 = vmatprep.subr.mxu0 %v541
  %2990 = vmatpush2.msra.mxu0 %v540
  %2991 = vmatprep.subr.mxu0 %v525
  %2992 = vmatpush2.msra.mxu0 %v524
  %2993 = vmatprep.subr.mxu0 %v509
  %2994 = vmatpush2.msra.mxu0 %v508
  %2995 = vmatprep.subr.mxu0 %v493
  %2996 = vmatpush2.msra.mxu0 %v492
  %2997 = vmatprep.subr.mxu0 %v477
  %2998 = vmatpush2.msra.mxu0 %v476
  %2999 = vmatprep.subr.mxu0 %v461
  %3000 = vmatpush2.msra.mxu0 %v460
  %3001 = vmatprep.subr.mxu0 %v445
  %3002 = vmatpush2.msra.mxu0 %v444
  %3003 = vmatprep.subr.mxu0 %v429
  %3004 = vmatpush2.msra.mxu0 %v428
  %3005 = vmatprep.subr.mxu0 %v413
  %3006 = vmatpush2.msra.mxu0 %v412
  %3007 = vmatprep.subr.mxu0 %v397
  %3008 = vmatpush2.msra.mxu0 %v396
  %3009 = vmatprep.subr.mxu0 %v381
  %3010 = vmatpush2.msra.mxu0 %v380
  %3011 = vmatprep.subr.mxu0 %v365
  %3012 = vmatpush2.msra.mxu0 %v364
  %3013 = vmatprep.subr.mxu0 %v349
  %3014 = vmatpush2.msra.mxu0 %v348
  %3015 = vmatprep.subr.mxu0 %v333
  %3016 = vmatpush2.msra.mxu0 %v332
  %3017 = vmatprep.subr.mxu0 %v317
  %3018 = vmatpush2.msra.mxu0 %v316
  %3019 = vmatprep.subr.mxu0 %v301
  %3020 = vmatpush2.msra.mxu0 %v300
  %3021 = vmatprep.mubr.f32.mxu0 %v33
  %3022 = vmatmul.mubr.f32.gmra.mxu0 %v32
  %v3023 = vpop.f32.mrf.mxu0
  %v3024 = vadd.f32 0.0, %v3023
  %v3025 = vpop.f32.mrf.mxu0
  %v3026 = vadd.f32 0.0, %v3025
  %3027 = vdwg.mxu0
  %3028 = vmatprep.subr.mxu0 %v797
  %3029 = vmatpush1.msra.mxu0 %v796
  %3030 = vmatprep.subr.mxu0 %v781
  %3031 = vmatpush1.msra.mxu0 %v780
  %3032 = vmatprep.subr.mxu0 %v765
  %3033 = vmatpush1.msra.mxu0 %v764
  %3034 = vmatprep.subr.mxu0 %v749
  %3035 = vmatpush1.msra.mxu0 %v748
  %3036 = vmatprep.subr.mxu0 %v733
  %3037 = vmatpush1.msra.mxu0 %v732
  %3038 = vmatprep.subr.mxu0 %v717
  %3039 = vmatpush1.msra.mxu0 %v716
  %3040 = vmatprep.subr.mxu0 %v701
  %3041 = vmatpush1.msra.mxu0 %v700
  %3042 = vmatprep.subr.mxu0 %v685
  %3043 = vmatpush1.msra.mxu0 %v684
  %3044 = vmatprep.subr.mxu0 %v669
  %3045 = vmatpush1.msra.mxu0 %v668
  %3046 = vmatprep.subr.mxu0 %v653
  %3047 = vmatpush1.msra.mxu0 %v652
  %3048 = vmatprep.subr.mxu0 %v637
  %3049 = vmatpush1.msra.mxu0 %v636
  %3050 = vmatprep.subr.mxu0 %v621
  %3051 = vmatpush1.msra.mxu0 %v620
  %3052 = vmatprep.subr.mxu0 %v605
  %3053 = vmatpush1.msra.mxu0 %v604
  %3054 = vmatprep.subr.mxu0 %v589
  %3055 = vmatpush1.msra.mxu0 %v588
  %3056 = vmatprep.subr.mxu0 %v573
  %3057 = vmatpush1.msra.mxu0 %v572
  %3058 = vmatprep.subr.mxu0 %v557
  %3059 = vmatpush1.msra.mxu0 %v556
  %3060 = vmatprep.subr.mxu0 %v1053
  %3061 = vmatpush2.msra.mxu0 %v1052
  %3062 = vmatprep.subr.mxu0 %v1037
  %3063 = vmatpush2.msra.mxu0 %v1036
  %3064 = vmatprep.subr.mxu0 %v1021
  %3065 = vmatpush2.msra.mxu0 %v1020
  %3066 = vmatprep.subr.mxu0 %v1005
  %3067 = vmatpush2.msra.mxu0 %v1004
  %3068 = vmatprep.subr.mxu0 %v989
  %3069 = vmatpush2.msra.mxu0 %v988
  %3070 = vmatprep.subr.mxu0 %v973
  %3071 = vmatpush2.msra.mxu0 %v972
  %3072 = vmatprep.subr.mxu0 %v957
  %3073 = vmatpush2.msra.mxu0 %v956
  %3074 = vmatprep.subr.mxu0 %v941
  %3075 = vmatpush2.msra.mxu0 %v940
  %3076 = vmatprep.subr.mxu0 %v925
  %3077 = vmatpush2.msra.mxu0 %v924
  %3078 = vmatprep.subr.mxu0 %v909
  %3079 = vmatpush2.msra.mxu0 %v908
  %3080 = vmatprep.subr.mxu0 %v893
  %3081 = vmatpush2.msra.mxu0 %v892
  %3082 = vmatprep.subr.mxu0 %v877
  %3083 = vmatpush2.msra.mxu0 %v876
  %3084 = vmatprep.subr.mxu0 %v861
  %3085 = vmatpush2.msra.mxu0 %v860
  %3086 = vmatprep.subr.mxu0 %v845
  %3087 = vmatpush2.msra.mxu0 %v844
  %3088 = vmatprep.subr.mxu0 %v829
  %3089 = vmatpush2.msra.mxu0 %v828
  %3090 = vmatprep.subr.mxu0 %v813
  %3091 = vmatpush2.msra.mxu0 %v812
  %3092 = vmatprep.mubr.f32.mxu0 %v35
  %3093 = vmatmul.mubr.f32.gmra.mxu0 %v34
  %v3094 = vpop.f32.mrf.mxu0
  %v3095 = vadd.f32 %v3024, %v3094
  %v3096 = vpop.f32.mrf.mxu0
  %v3097 = vadd.f32 %v3026, %v3096
  %3098 = vdwg.mxu0
  %3099 = vmatprep.subr.mxu0 %v1309
  %3100 = vmatpush1.msra.mxu0 %v1308
  %3101 = vmatprep.subr.mxu0 %v1293
  %3102 = vmatpush1.msra.mxu0 %v1292
  %3103 = vmatprep.subr.mxu0 %v1277
  %3104 = vmatpush1.msra.mxu0 %v1276
  %3105 = vmatprep.subr.mxu0 %v1261
  %3106 = vmatpush1.msra.mxu0 %v1260
  %3107 = vmatprep.subr.mxu0 %v1245
  %3108 = vmatpush1.msra.mxu0 %v1244
  %3109 = vmatprep.subr.mxu0 %v1229
  %3110 = vmatpush1.msra.mxu0 %v1228
  %3111 = vmatprep.subr.mxu0 %v1213
  %3112 = vmatpush1.msra.mxu0 %v1212
  %3113 = vmatprep.subr.mxu0 %v1197
  %3114 = vmatpush1.msra.mxu0 %v1196
  %3115 = vmatprep.subr.mxu0 %v1181
  %3116 = vmatpush1.msra.mxu0 %v1180
  %3117 = vmatprep.subr.mxu0 %v1165
  %3118 = vmatpush1.msra.mxu0 %v1164
  %3119 = vmatprep.subr.mxu0 %v1149
  %3120 = vmatpush1.msra.mxu0 %v1148
  %3121 = vmatprep.subr.mxu0 %v1133
  %3122 = vmatpush1.msra.mxu0 %v1132
  %3123 = vmatprep.subr.mxu0 %v1117
  %3124 = vmatpush1.msra.mxu0 %v1116
  %3125 = vmatprep.subr.mxu0 %v1101
  %3126 = vmatpush1.msra.mxu0 %v1100
  %3127 = vmatprep.subr.mxu0 %v1085
  %3128 = vmatpush1.msra.mxu0 %v1084
  %3129 = vmatprep.subr.mxu0 %v1069
  %3130 = vmatpush1.msra.mxu0 %v1068
  %3131 = vmatprep.subr.mxu0 %v1565
  %3132 = vmatpush2.msra.mxu0 %v1564
  %3133 = vmatprep.subr.mxu0 %v1549
  %3134 = vmatpush2.msra.mxu0 %v1548
  %3135 = vmatprep.subr.mxu0 %v1533
  %3136 = vmatpush2.msra.mxu0 %v1532
  %3137 = vmatprep.subr.mxu0 %v1517
  %3138 = vmatpush2.msra.mxu0 %v1516
  %3139 = vmatprep.subr.mxu0 %v1501
  %3140 = vmatpush2.msra.mxu0 %v1500
  %3141 = vmatprep.subr.mxu0 %v1485
  %3142 = vmatpush2.msra.mxu0 %v1484
  %3143 = vmatprep.subr.mxu0 %v1469
  %3144 = vmatpush2.msra.mxu0 %v1468
  %3145 = vmatprep.subr.mxu0 %v1453
  %3146 = vmatpush2.msra.mxu0 %v1452
  %3147 = vmatprep.subr.mxu0 %v1437
  %3148 = vmatpush2.msra.mxu0 %v1436
  %3149 = vmatprep.subr.mxu0 %v1421
  %3150 = vmatpush2.msra.mxu0 %v1420
  %3151 = vmatprep.subr.mxu0 %v1405
  %3152 = vmatpush2.msra.mxu0 %v1404
  %3153 = vmatprep.subr.mxu0 %v1389
  %3154 = vmatpush2.msra.mxu0 %v1388
  %3155 = vmatprep.subr.mxu0 %v1373
  %3156 = vmatpush2.msra.mxu0 %v1372
  %3157 = vmatprep.subr.mxu0 %v1357
  %3158 = vmatpush2.msra.mxu0 %v1356
  %3159 = vmatprep.subr.mxu0 %v1341
  %3160 = vmatpush2.msra.mxu0 %v1340
  %3161 = vmatprep.subr.mxu0 %v1325
  %3162 = vmatpush2.msra.mxu0 %v1324
  %3163 = vmatprep.mubr.f32.mxu0 %v37
  %3164 = vmatmul.mubr.f32.gmra.mxu0 %v36
  %v3165 = vpop.f32.mrf.mxu0
  %v3166 = vadd.f32 %v3095, %v3165
  %v3167 = vpop.f32.mrf.mxu0
  %v3168 = vadd.f32 %v3097, %v3167
  %3169 = vdwg.mxu0
  %3170 = vmatprep.subr.mxu0 %v1821
  %3171 = vmatpush1.msra.mxu0 %v1820
  %3172 = vmatprep.subr.mxu0 %v1805
  %3173 = vmatpush1.msra.mxu0 %v1804
  %3174 = vmatprep.subr.mxu0 %v1789
  %3175 = vmatpush1.msra.mxu0 %v1788
  %3176 = vmatprep.subr.mxu0 %v1773
  %3177 = vmatpush1.msra.mxu0 %v1772
  %3178 = vmatprep.subr.mxu0 %v1757
  %3179 = vmatpush1.msra.mxu0 %v1756
  %3180 = vmatprep.subr.mxu0 %v1741
  %3181 = vmatpush1.msra.mxu0 %v1740
  %3182 = vmatprep.subr.mxu0 %v1725
  %3183 = vmatpush1.msra.mxu0 %v1724
  %3184 = vmatprep.subr.mxu0 %v1709
  %3185 = vmatpush1.msra.mxu0 %v1708
  %3186 = vmatprep.subr.mxu0 %v1693
  %3187 = vmatpush1.msra.mxu0 %v1692
  %3188 = vmatprep.subr.mxu0 %v1677
  %3189 = vmatpush1.msra.mxu0 %v1676
  %3190 = vmatprep.subr.mxu0 %v1661
  %3191 = vmatpush1.msra.mxu0 %v1660
  %3192 = vmatprep.subr.mxu0 %v1645
  %3193 = vmatpush1.msra.mxu0 %v1644
  %3194 = vmatprep.subr.mxu0 %v1629
  %3195 = vmatpush1.msra.mxu0 %v1628
  %3196 = vmatprep.subr.mxu0 %v1613
  %3197 = vmatpush1.msra.mxu0 %v1612
  %3198 = vmatprep.subr.mxu0 %v1597
  %3199 = vmatpush1.msra.mxu0 %v1596
  %3200 = vmatprep.subr.mxu0 %v1581
  %3201 = vmatpush1.msra.mxu0 %v1580
  %3202 = vmatprep.subr.mxu0 %v2077
  %3203 = vmatpush2.msra.mxu0 %v2076
  %3204 = vmatprep.subr.mxu0 %v2061
  %3205 = vmatpush2.msra.mxu0 %v2060
  %3206 = vmatprep.subr.mxu0 %v2045
  %3207 = vmatpush2.msra.mxu0 %v2044
  %3208 = vmatprep.subr.mxu0 %v2029
  %3209 = vmatpush2.msra.mxu0 %v2028
  %3210 = vmatprep.subr.mxu0 %v2013
  %3211 = vmatpush2.msra.mxu0 %v2012
  %3212 = vmatprep.subr.mxu0 %v1997
  %3213 = vmatpush2.msra.mxu0 %v1996
  %3214 = vmatprep.subr.mxu0 %v1981
  %3215 = vmatpush2.msra.mxu0 %v1980
  %3216 = vmatprep.subr.mxu0 %v1965
  %3217 = vmatpush2.msra.mxu0 %v1964
  %3218 = vmatprep.subr.mxu0 %v1949
  %3219 = vmatpush2.msra.mxu0 %v1948
  %3220 = vmatprep.subr.mxu0 %v1933
  %3221 = vmatpush2.msra.mxu0 %v1932
  %3222 = vmatprep.subr.mxu0 %v1917
  %3223 = vmatpush2.msra.mxu0 %v1916
  %3224 = vmatprep.subr.mxu0 %v1901
  %3225 = vmatpush2.msra.mxu0 %v1900
  %3226 = vmatprep.subr.mxu0 %v1885
  %3227 = vmatpush2.msra.mxu0 %v1884
  %3228 = vmatprep.subr.mxu0 %v1869
  %3229 = vmatpush2.msra.mxu0 %v1868
  %3230 = vmatprep.subr.mxu0 %v1853
  %3231 = vmatpush2.msra.mxu0 %v1852
  %3232 = vmatprep.subr.mxu0 %v1837
  %3233 = vmatpush2.msra.mxu0 %v1836
  %3234 = vmatprep.mubr.f32.mxu0 %v39
  %3235 = vmatmul.mubr.f32.gmra.mxu0 %v38
  %v3236 = vpop.f32.mrf.mxu0
  %v3237 = vadd.f32 %v3166, %v3236
  %v3238 = vpop.f32.mrf.mxu0
  %v3239 = vadd.f32 %v3168, %v3238
  %3240 = vdwg.mxu0
  %3241 = vmatprep.subr.mxu0 %v2333
  %3242 = vmatpush1.msra.mxu0 %v2332
  %3243 = vmatprep.subr.mxu0 %v2317
  %3244 = vmatpush1.msra.mxu0 %v2316
  %3245 = vmatprep.subr.mxu0 %v2301
  %3246 = vmatpush1.msra.mxu0 %v2300
  %3247 = vmatprep.subr.mxu0 %v2285
  %3248 = vmatpush1.msra.mxu0 %v2284
  %3249 = vmatprep.subr.mxu0 %v2269
  %3250 = vmatpush1.msra.mxu0 %v2268
  %3251 = vmatprep.subr.mxu0 %v2253
  %3252 = vmatpush1.msra.mxu0 %v2252
  %3253 = vmatprep.subr.mxu0 %v2237
  %3254 = vmatpush1.msra.mxu0 %v2236
  %3255 = vmatprep.subr.mxu0 %v2221
  %3256 = vmatpush1.msra.mxu0 %v2220
  %3257 = vmatprep.subr.mxu0 %v2205
  %3258 = vmatpush1.msra.mxu0 %v2204
  %3259 = vmatprep.subr.mxu0 %v2189
  %3260 = vmatpush1.msra.mxu0 %v2188
  %3261 = vmatprep.subr.mxu0 %v2173
  %3262 = vmatpush1.msra.mxu0 %v2172
  %3263 = vmatprep.subr.mxu0 %v2157
  %3264 = vmatpush1.msra.mxu0 %v2156
  %3265 = vmatprep.subr.mxu0 %v2141
  %3266 = vmatpush1.msra.mxu0 %v2140
  %3267 = vmatprep.subr.mxu0 %v2125
  %3268 = vmatpush1.msra.mxu0 %v2124
  %3269 = vmatprep.subr.mxu0 %v2109
  %3270 = vmatpush1.msra.mxu0 %v2108
  %3271 = vmatprep.subr.mxu0 %v2093
  %3272 = vmatpush1.msra.mxu0 %v2092
  %3273 = vmatprep.subr.mxu0 %v2589
  %3274 = vmatpush2.msra.mxu0 %v2588
  %3275 = vmatprep.subr.mxu0 %v2573
  %3276 = vmatpush2.msra.mxu0 %v2572
  %3277 = vmatprep.subr.mxu0 %v2557
  %3278 = vmatpush2.msra.mxu0 %v2556
  %3279 = vmatprep.subr.mxu0 %v2541
  %3280 = vmatpush2.msra.mxu0 %v2540
  %3281 = vmatprep.subr.mxu0 %v2525
  %3282 = vmatpush2.msra.mxu0 %v2524
  %3283 = vmatprep.subr.mxu0 %v2509
  %3284 = vmatpush2.msra.mxu0 %v2508
  %3285 = vmatprep.subr.mxu0 %v2493
  %3286 = vmatpush2.msra.mxu0 %v2492
  %3287 = vmatprep.subr.mxu0 %v2477
  %3288 = vmatpush2.msra.mxu0 %v2476
  %3289 = vmatprep.subr.mxu0 %v2461
  %3290 = vmatpush2.msra.mxu0 %v2460
  %3291 = vmatprep.subr.mxu0 %v2445
  %3292 = vmatpush2.msra.mxu0 %v2444
  %3293 = vmatprep.subr.mxu0 %v2429
  %3294 = vmatpush2.msra.mxu0 %v2428
  %3295 = vmatprep.subr.mxu0 %v2413
  %3296 = vmatpush2.msra.mxu0 %v2412
  %3297 = vmatprep.subr.mxu0 %v2397
  %3298 = vmatpush2.msra.mxu0 %v2396
  %3299 = vmatprep.subr.mxu0 %v2381
  %3300 = vmatpush2.msra.mxu0 %v2380
  %3301 = vmatprep.subr.mxu0 %v2365
  %3302 = vmatpush2.msra.mxu0 %v2364
  %3303 = vmatprep.subr.mxu0 %v2349
  %3304 = vmatpush2.msra.mxu0 %v2348
  %3305 = vmatprep.mubr.f32.mxu0 %v41
  %3306 = vmatmul.mubr.f32.gmra.mxu0 %v40
  %v3307 = vpop.f32.mrf.mxu0
  %v3308 = vadd.f32 %v3237, %v3307
  %v3309 = vpop.f32.mrf.mxu0
  %v3310 = vadd.f32 %v3239, %v3309
  %3311 = vdwg.mxu0
  %3312 = vmatprep.subr.mxu0 %v287
  %3313 = vmatpush1.msra.mxu0 %v286
  %3314 = vmatprep.subr.mxu0 %v271
  %3315 = vmatpush1.msra.mxu0 %v270
  %3316 = vmatprep.subr.mxu0 %v255
  %3317 = vmatpush1.msra.mxu0 %v254
  %3318 = vmatprep.subr.mxu0 %v239
  %3319 = vmatpush1.msra.mxu0 %v238
  %3320 = vmatprep.subr.mxu0 %v223
  %3321 = vmatpush1.msra.mxu0 %v222
  %3322 = vmatprep.subr.mxu0 %v207
  %3323 = vmatpush1.msra.mxu0 %v206
  %3324 = vmatprep.subr.mxu0 %v191
  %3325 = vmatpush1.msra.mxu0 %v190
  %3326 = vmatprep.subr.mxu0 %v175
  %3327 = vmatpush1.msra.mxu0 %v174
  %3328 = vmatprep.subr.mxu0 %v159
  %3329 = vmatpush1.msra.mxu0 %v158
  %3330 = vmatprep.subr.mxu0 %v143
  %3331 = vmatpush1.msra.mxu0 %v142
  %3332 = vmatprep.subr.mxu0 %v127
  %3333 = vmatpush1.msra.mxu0 %v126
  %3334 = vmatprep.subr.mxu0 %v111
  %3335 = vmatpush1.msra.mxu0 %v110
  %3336 = vmatprep.subr.mxu0 %v95
  %3337 = vmatpush1.msra.mxu0 %v94
  %3338 = vmatprep.subr.mxu0 %v79
  %3339 = vmatpush1.msra.mxu0 %v78
  %3340 = vmatprep.subr.mxu0 %v63
  %3341 = vmatpush1.msra.mxu0 %v62
  %3342 = vmatprep.subr.mxu0 %v47
  %3343 = vmatpush1.msra.mxu0 %v46
  %3344 = vmatprep.subr.mxu0 %v543
  %3345 = vmatpush2.msra.mxu0 %v542
  %3346 = vmatprep.subr.mxu0 %v527
  %3347 = vmatpush2.msra.mxu0 %v526
  %3348 = vmatprep.subr.mxu0 %v511
  %3349 = vmatpush2.msra.mxu0 %v510
  %3350 = vmatprep.subr.mxu0 %v495
  %3351 = vmatpush2.msra.mxu0 %v494
  %3352 = vmatprep.subr.mxu0 %v479
  %3353 = vmatpush2.msra.mxu0 %v478
  %3354 = vmatprep.subr.mxu0 %v463
  %3355 = vmatpush2.msra.mxu0 %v462
  %3356 = vmatprep.subr.mxu0 %v447
  %3357 = vmatpush2.msra.mxu0 %v446
  %3358 = vmatprep.subr.mxu0 %v431
  %3359 = vmatpush2.msra.mxu0 %v430
  %3360 = vmatprep.subr.mxu0 %v415
  %3361 = vmatpush2.msra.mxu0 %v414
  %3362 = vmatprep.subr.mxu0 %v399
  %3363 = vmatpush2.msra.mxu0 %v398
  %3364 = vmatprep.subr.mxu0 %v383
  %3365 = vmatpush2.msra.mxu0 %v382
  %3366 = vmatprep.subr.mxu0 %v367
  %3367 = vmatpush2.msra.mxu0 %v366
  %3368 = vmatprep.subr.mxu0 %v351
  %3369 = vmatpush2.msra.mxu0 %v350
  %3370 = vmatprep.subr.mxu0 %v335
  %3371 = vmatpush2.msra.mxu0 %v334
  %3372 = vmatprep.subr.mxu0 %v319
  %3373 = vmatpush2.msra.mxu0 %v318
  %3374 = vmatprep.subr.mxu0 %v303
  %3375 = vmatpush2.msra.mxu0 %v302
  %3376 = vmatprep.mubr.f32.mxu0 %v33
  %3377 = vmatmul.mubr.f32.gmra.mxu0 %v32
  %v3378 = vpop.f32.mrf.mxu0
  %v3379 = vadd.f32 0.0, %v3378
  %v3380 = vpop.f32.mrf.mxu0
  %v3381 = vadd.f32 0.0, %v3380
  %3382 = vdwg.mxu0
  %3383 = vmatprep.subr.mxu0 %v799
  %3384 = vmatpush1.msra.mxu0 %v798
  %3385 = vmatprep.subr.mxu0 %v783
  %3386 = vmatpush1.msra.mxu0 %v782
  %3387 = vmatprep.subr.mxu0 %v767
  %3388 = vmatpush1.msra.mxu0 %v766
  %3389 = vmatprep.subr.mxu0 %v751
  %3390 = vmatpush1.msra.mxu0 %v750
  %3391 = vmatprep.subr.mxu0 %v735
  %3392 = vmatpush1.msra.mxu0 %v734
  %3393 = vmatprep.subr.mxu0 %v719
  %3394 = vmatpush1.msra.mxu0 %v718
  %3395 = vmatprep.subr.mxu0 %v703
  %3396 = vmatpush1.msra.mxu0 %v702
  %3397 = vmatprep.subr.mxu0 %v687
  %3398 = vmatpush1.msra.mxu0 %v686
  %3399 = vmatprep.subr.mxu0 %v671
  %3400 = vmatpush1.msra.mxu0 %v670
  %3401 = vmatprep.subr.mxu0 %v655
  %3402 = vmatpush1.msra.mxu0 %v654
  %3403 = vmatprep.subr.mxu0 %v639
  %3404 = vmatpush1.msra.mxu0 %v638
  %3405 = vmatprep.subr.mxu0 %v623
  %3406 = vmatpush1.msra.mxu0 %v622
  %3407 = vmatprep.subr.mxu0 %v607
  %3408 = vmatpush1.msra.mxu0 %v606
  %3409 = vmatprep.subr.mxu0 %v591
  %3410 = vmatpush1.msra.mxu0 %v590
  %3411 = vmatprep.subr.mxu0 %v575
  %3412 = vmatpush1.msra.mxu0 %v574
  %3413 = vmatprep.subr.mxu0 %v559
  %3414 = vmatpush1.msra.mxu0 %v558
  %3415 = vmatprep.subr.mxu0 %v1055
  %3416 = vmatpush2.msra.mxu0 %v1054
  %3417 = vmatprep.subr.mxu0 %v1039
  %3418 = vmatpush2.msra.mxu0 %v1038
  %3419 = vmatprep.subr.mxu0 %v1023
  %3420 = vmatpush2.msra.mxu0 %v1022
  %3421 = vmatprep.subr.mxu0 %v1007
  %3422 = vmatpush2.msra.mxu0 %v1006
  %3423 = vmatprep.subr.mxu0 %v991
  %3424 = vmatpush2.msra.mxu0 %v990
  %3425 = vmatprep.subr.mxu0 %v975
  %3426 = vmatpush2.msra.mxu0 %v974
  %3427 = vmatprep.subr.mxu0 %v959
  %3428 = vmatpush2.msra.mxu0 %v958
  %3429 = vmatprep.subr.mxu0 %v943
  %3430 = vmatpush2.msra.mxu0 %v942
  %3431 = vmatprep.subr.mxu0 %v927
  %3432 = vmatpush2.msra.mxu0 %v926
  %3433 = vmatprep.subr.mxu0 %v911
  %3434 = vmatpush2.msra.mxu0 %v910
  %3435 = vmatprep.subr.mxu0 %v895
  %3436 = vmatpush2.msra.mxu0 %v894
  %3437 = vmatprep.subr.mxu0 %v879
  %3438 = vmatpush2.msra.mxu0 %v878
  %3439 = vmatprep.subr.mxu0 %v863
  %3440 = vmatpush2.msra.mxu0 %v862
  %3441 = vmatprep.subr.mxu0 %v847
  %3442 = vmatpush2.msra.mxu0 %v846
  %3443 = vmatprep.subr.mxu0 %v831
  %3444 = vmatpush2.msra.mxu0 %v830
  %3445 = vmatprep.subr.mxu0 %v815
  %3446 = vmatpush2.msra.mxu0 %v814
  %3447 = vmatprep.mubr.f32.mxu0 %v35
  %3448 = vmatmul.mubr.f32.gmra.mxu0 %v34
  %v3449 = vpop.f32.mrf.mxu0
  %v3450 = vadd.f32 %v3379, %v3449
  %v3451 = vpop.f32.mrf.mxu0
  %v3452 = vadd.f32 %v3381, %v3451
  %3453 = vdwg.mxu0
  %3454 = vmatprep.subr.mxu0 %v1311
  %3455 = vmatpush1.msra.mxu0 %v1310
  %3456 = vmatprep.subr.mxu0 %v1295
  %3457 = vmatpush1.msra.mxu0 %v1294
  %3458 = vmatprep.subr.mxu0 %v1279
  %3459 = vmatpush1.msra.mxu0 %v1278
  %3460 = vmatprep.subr.mxu0 %v1263
  %3461 = vmatpush1.msra.mxu0 %v1262
  %3462 = vmatprep.subr.mxu0 %v1247
  %3463 = vmatpush1.msra.mxu0 %v1246
  %3464 = vmatprep.subr.mxu0 %v1231
  %3465 = vmatpush1.msra.mxu0 %v1230
  %3466 = vmatprep.subr.mxu0 %v1215
  %3467 = vmatpush1.msra.mxu0 %v1214
  %3468 = vmatprep.subr.mxu0 %v1199
  %3469 = vmatpush1.msra.mxu0 %v1198
  %3470 = vmatprep.subr.mxu0 %v1183
  %3471 = vmatpush1.msra.mxu0 %v1182
  %3472 = vmatprep.subr.mxu0 %v1167
  %3473 = vmatpush1.msra.mxu0 %v1166
  %3474 = vmatprep.subr.mxu0 %v1151
  %3475 = vmatpush1.msra.mxu0 %v1150
  %3476 = vmatprep.subr.mxu0 %v1135
  %3477 = vmatpush1.msra.mxu0 %v1134
  %3478 = vmatprep.subr.mxu0 %v1119
  %3479 = vmatpush1.msra.mxu0 %v1118
  %3480 = vmatprep.subr.mxu0 %v1103
  %3481 = vmatpush1.msra.mxu0 %v1102
  %3482 = vmatprep.subr.mxu0 %v1087
  %3483 = vmatpush1.msra.mxu0 %v1086
  %3484 = vmatprep.subr.mxu0 %v1071
  %3485 = vmatpush1.msra.mxu0 %v1070
  %3486 = vmatprep.subr.mxu0 %v1567
  %3487 = vmatpush2.msra.mxu0 %v1566
  %3488 = vmatprep.subr.mxu0 %v1551
  %3489 = vmatpush2.msra.mxu0 %v1550
  %3490 = vmatprep.subr.mxu0 %v1535
  %3491 = vmatpush2.msra.mxu0 %v1534
  %3492 = vmatprep.subr.mxu0 %v1519
  %3493 = vmatpush2.msra.mxu0 %v1518
  %3494 = vmatprep.subr.mxu0 %v1503
  %3495 = vmatpush2.msra.mxu0 %v1502
  %3496 = vmatprep.subr.mxu0 %v1487
  %3497 = vmatpush2.msra.mxu0 %v1486
  %3498 = vmatprep.subr.mxu0 %v1471
  %3499 = vmatpush2.msra.mxu0 %v1470
  %3500 = vmatprep.subr.mxu0 %v1455
  %3501 = vmatpush2.msra.mxu0 %v1454
  %3502 = vmatprep.subr.mxu0 %v1439
  %3503 = vmatpush2.msra.mxu0 %v1438
  %3504 = vmatprep.subr.mxu0 %v1423
  %3505 = vmatpush2.msra.mxu0 %v1422
  %3506 = vmatprep.subr.mxu0 %v1407
  %3507 = vmatpush2.msra.mxu0 %v1406
  %3508 = vmatprep.subr.mxu0 %v1391
  %3509 = vmatpush2.msra.mxu0 %v1390
  %3510 = vmatprep.subr.mxu0 %v1375
  %3511 = vmatpush2.msra.mxu0 %v1374
  %3512 = vmatprep.subr.mxu0 %v1359
  %3513 = vmatpush2.msra.mxu0 %v1358
  %3514 = vmatprep.subr.mxu0 %v1343
  %3515 = vmatpush2.msra.mxu0 %v1342
  %3516 = vmatprep.subr.mxu0 %v1327
  %3517 = vmatpush2.msra.mxu0 %v1326
  %3518 = vmatprep.mubr.f32.mxu0 %v37
  %3519 = vmatmul.mubr.f32.gmra.mxu0 %v36
  %v3520 = vpop.f32.mrf.mxu0
  %v3521 = vadd.f32 %v3450, %v3520
  %v3522 = vpop.f32.mrf.mxu0
  %v3523 = vadd.f32 %v3452, %v3522
  %3524 = vdwg.mxu0
  %3525 = vmatprep.subr.mxu0 %v1823
  %3526 = vmatpush1.msra.mxu0 %v1822
  %3527 = vmatprep.subr.mxu0 %v1807
  %3528 = vmatpush1.msra.mxu0 %v1806
  %3529 = vmatprep.subr.mxu0 %v1791
  %3530 = vmatpush1.msra.mxu0 %v1790
  %3531 = vmatprep.subr.mxu0 %v1775
  %3532 = vmatpush1.msra.mxu0 %v1774
  %3533 = vmatprep.subr.mxu0 %v1759
  %3534 = vmatpush1.msra.mxu0 %v1758
  %3535 = vmatprep.subr.mxu0 %v1743
  %3536 = vmatpush1.msra.mxu0 %v1742
  %3537 = vmatprep.subr.mxu0 %v1727
  %3538 = vmatpush1.msra.mxu0 %v1726
  %3539 = vmatprep.subr.mxu0 %v1711
  %3540 = vmatpush1.msra.mxu0 %v1710
  %3541 = vmatprep.subr.mxu0 %v1695
  %3542 = vmatpush1.msra.mxu0 %v1694
  %3543 = vmatprep.subr.mxu0 %v1679
  %3544 = vmatpush1.msra.mxu0 %v1678
  %3545 = vmatprep.subr.mxu0 %v1663
  %3546 = vmatpush1.msra.mxu0 %v1662
  %3547 = vmatprep.subr.mxu0 %v1647
  %3548 = vmatpush1.msra.mxu0 %v1646
  %3549 = vmatprep.subr.mxu0 %v1631
  %3550 = vmatpush1.msra.mxu0 %v1630
  %3551 = vmatprep.subr.mxu0 %v1615
  %3552 = vmatpush1.msra.mxu0 %v1614
  %3553 = vmatprep.subr.mxu0 %v1599
  %3554 = vmatpush1.msra.mxu0 %v1598
  %3555 = vmatprep.subr.mxu0 %v1583
  %3556 = vmatpush1.msra.mxu0 %v1582
  %3557 = vmatprep.subr.mxu0 %v2079
  %3558 = vmatpush2.msra.mxu0 %v2078
  %3559 = vmatprep.subr.mxu0 %v2063
  %3560 = vmatpush2.msra.mxu0 %v2062
  %3561 = vmatprep.subr.mxu0 %v2047
  %3562 = vmatpush2.msra.mxu0 %v2046
  %3563 = vmatprep.subr.mxu0 %v2031
  %3564 = vmatpush2.msra.mxu0 %v2030
  %3565 = vmatprep.subr.mxu0 %v2015
  %3566 = vmatpush2.msra.mxu0 %v2014
  %3567 = vmatprep.subr.mxu0 %v1999
  %3568 = vmatpush2.msra.mxu0 %v1998
  %3569 = vmatprep.subr.mxu0 %v1983
  %3570 = vmatpush2.msra.mxu0 %v1982
  %3571 = vmatprep.subr.mxu0 %v1967
  %3572 = vmatpush2.msra.mxu0 %v1966
  %3573 = vmatprep.subr.mxu0 %v1951
  %3574 = vmatpush2.msra.mxu0 %v1950
  %3575 = vmatprep.subr.mxu0 %v1935
  %3576 = vmatpush2.msra.mxu0 %v1934
  %3577 = vmatprep.subr.mxu0 %v1919
  %3578 = vmatpush2.msra.mxu0 %v1918
  %3579 = vmatprep.subr.mxu0 %v1903
  %3580 = vmatpush2.msra.mxu0 %v1902
  %3581 = vmatprep.subr.mxu0 %v1887
  %3582 = vmatpush2.msra.mxu0 %v1886
  %3583 = vmatprep.subr.mxu0 %v1871
  %3584 = vmatpush2.msra.mxu0 %v1870
  %3585 = vmatprep.subr.mxu0 %v1855
  %3586 = vmatpush2.msra.mxu0 %v1854
  %3587 = vmatprep.subr.mxu0 %v1839
  %3588 = vmatpush2.msra.mxu0 %v1838
  %3589 = vmatprep.mubr.f32.mxu0 %v39
  %3590 = vmatmul.mubr.f32.gmra.mxu0 %v38
  %v3591 = vpop.f32.mrf.mxu0
  %v3592 = vadd.f32 %v3521, %v3591
  %v3593 = vpop.f32.mrf.mxu0
  %v3594 = vadd.f32 %v3523, %v3593
  %3595 = vdwg.mxu0
  %3596 = vmatprep.subr.mxu0 %v2335
  %3597 = vmatpush1.msra.mxu0 %v2334
  %3598 = vmatprep.subr.mxu0 %v2319
  %3599 = vmatpush1.msra.mxu0 %v2318
  %3600 = vmatprep.subr.mxu0 %v2303
  %3601 = vmatpush1.msra.mxu0 %v2302
  %3602 = vmatprep.subr.mxu0 %v2287
  %3603 = vmatpush1.msra.mxu0 %v2286
  %3604 = vmatprep.subr.mxu0 %v2271
  %3605 = vmatpush1.msra.mxu0 %v2270
  %3606 = vmatprep.subr.mxu0 %v2255
  %3607 = vmatpush1.msra.mxu0 %v2254
  %3608 = vmatprep.subr.mxu0 %v2239
  %3609 = vmatpush1.msra.mxu0 %v2238
  %3610 = vmatprep.subr.mxu0 %v2223
  %3611 = vmatpush1.msra.mxu0 %v2222
  %3612 = vmatprep.subr.mxu0 %v2207
  %3613 = vmatpush1.msra.mxu0 %v2206
  %3614 = vmatprep.subr.mxu0 %v2191
  %3615 = vmatpush1.msra.mxu0 %v2190
  %3616 = vmatprep.subr.mxu0 %v2175
  %3617 = vmatpush1.msra.mxu0 %v2174
  %3618 = vmatprep.subr.mxu0 %v2159
  %3619 = vmatpush1.msra.mxu0 %v2158
  %3620 = vmatprep.subr.mxu0 %v2143
  %3621 = vmatpush1.msra.mxu0 %v2142
  %3622 = vmatprep.subr.mxu0 %v2127
  %3623 = vmatpush1.msra.mxu0 %v2126
  %3624 = vmatprep.subr.mxu0 %v2111
  %3625 = vmatpush1.msra.mxu0 %v2110
  %3626 = vmatprep.subr.mxu0 %v2095
  %3627 = vmatpush1.msra.mxu0 %v2094
  %3628 = vmatprep.subr.mxu0 %v2591
  %3629 = vmatpush2.msra.mxu0 %v2590
  %3630 = vmatprep.subr.mxu0 %v2575
  %3631 = vmatpush2.msra.mxu0 %v2574
  %3632 = vmatprep.subr.mxu0 %v2559
  %3633 = vmatpush2.msra.mxu0 %v2558
  %3634 = vmatprep.subr.mxu0 %v2543
  %3635 = vmatpush2.msra.mxu0 %v2542
  %3636 = vmatprep.subr.mxu0 %v2527
  %3637 = vmatpush2.msra.mxu0 %v2526
  %3638 = vmatprep.subr.mxu0 %v2511
  %3639 = vmatpush2.msra.mxu0 %v2510
  %3640 = vmatprep.subr.mxu0 %v2495
  %3641 = vmatpush2.msra.mxu0 %v2494
  %3642 = vmatprep.subr.mxu0 %v2479
  %3643 = vmatpush2.msra.mxu0 %v2478
  %3644 = vmatprep.subr.mxu0 %v2463
  %3645 = vmatpush2.msra.mxu0 %v2462
  %3646 = vmatprep.subr.mxu0 %v2447
  %3647 = vmatpush2.msra.mxu0 %v2446
  %3648 = vmatprep.subr.mxu0 %v2431
  %3649 = vmatpush2.msra.mxu0 %v2430
  %3650 = vmatprep.subr.mxu0 %v2415
  %3651 = vmatpush2.msra.mxu0 %v2414
  %3652 = vmatprep.subr.mxu0 %v2399
  %3653 = vmatpush2.msra.mxu0 %v2398
  %3654 = vmatprep.subr.mxu0 %v2383
  %3655 = vmatpush2.msra.mxu0 %v2382
  %3656 = vmatprep.subr.mxu0 %v2367
  %3657 = vmatpush2.msra.mxu0 %v2366
  %3658 = vmatprep.subr.mxu0 %v2351
  %3659 = vmatpush2.msra.mxu0 %v2350
  %3660 = vmatprep.mubr.f32.mxu0 %v41
  %3661 = vmatmul.mubr.f32.gmra.mxu0 %v40
  %v3662 = vpop.f32.mrf.mxu0
  %v3663 = vadd.f32 %v3592, %v3662
  %v3664 = vpop.f32.mrf.mxu0
  %v3665 = vadd.f32 %v3594, %v3664
  %3666 = vdwg.mxu0
  %3667 = vmatprep.subr.mxu0 %v289
  %3668 = vmatpush1.msra.mxu0 %v288
  %3669 = vmatprep.subr.mxu0 %v273
  %3670 = vmatpush1.msra.mxu0 %v272
  %3671 = vmatprep.subr.mxu0 %v257
  %3672 = vmatpush1.msra.mxu0 %v256
  %3673 = vmatprep.subr.mxu0 %v241
  %3674 = vmatpush1.msra.mxu0 %v240
  %3675 = vmatprep.subr.mxu0 %v225
  %3676 = vmatpush1.msra.mxu0 %v224
  %3677 = vmatprep.subr.mxu0 %v209
  %3678 = vmatpush1.msra.mxu0 %v208
  %3679 = vmatprep.subr.mxu0 %v193
  %3680 = vmatpush1.msra.mxu0 %v192
  %3681 = vmatprep.subr.mxu0 %v177
  %3682 = vmatpush1.msra.mxu0 %v176
  %3683 = vmatprep.subr.mxu0 %v161
  %3684 = vmatpush1.msra.mxu0 %v160
  %3685 = vmatprep.subr.mxu0 %v145
  %3686 = vmatpush1.msra.mxu0 %v144
  %3687 = vmatprep.subr.mxu0 %v129
  %3688 = vmatpush1.msra.mxu0 %v128
  %3689 = vmatprep.subr.mxu0 %v113
  %3690 = vmatpush1.msra.mxu0 %v112
  %3691 = vmatprep.subr.mxu0 %v97
  %3692 = vmatpush1.msra.mxu0 %v96
  %3693 = vmatprep.subr.mxu0 %v81
  %3694 = vmatpush1.msra.mxu0 %v80
  %3695 = vmatprep.subr.mxu0 %v65
  %3696 = vmatpush1.msra.mxu0 %v64
  %3697 = vmatprep.subr.mxu0 %v49
  %3698 = vmatpush1.msra.mxu0 %v48
  %3699 = vmatprep.subr.mxu0 %v545
  %3700 = vmatpush2.msra.mxu0 %v544
  %3701 = vmatprep.subr.mxu0 %v529
  %3702 = vmatpush2.msra.mxu0 %v528
  %3703 = vmatprep.subr.mxu0 %v513
  %3704 = vmatpush2.msra.mxu0 %v512
  %3705 = vmatprep.subr.mxu0 %v497
  %3706 = vmatpush2.msra.mxu0 %v496
  %3707 = vmatprep.subr.mxu0 %v481
  %3708 = vmatpush2.msra.mxu0 %v480
  %3709 = vmatprep.subr.mxu0 %v465
  %3710 = vmatpush2.msra.mxu0 %v464
  %3711 = vmatprep.subr.mxu0 %v449
  %3712 = vmatpush2.msra.mxu0 %v448
  %3713 = vmatprep.subr.mxu0 %v433
  %3714 = vmatpush2.msra.mxu0 %v432
  %3715 = vmatprep.subr.mxu0 %v417
  %3716 = vmatpush2.msra.mxu0 %v416
  %3717 = vmatprep.subr.mxu0 %v401
  %3718 = vmatpush2.msra.mxu0 %v400
  %3719 = vmatprep.subr.mxu0 %v385
  %3720 = vmatpush2.msra.mxu0 %v384
  %3721 = vmatprep.subr.mxu0 %v369
  %3722 = vmatpush2.msra.mxu0 %v368
  %3723 = vmatprep.subr.mxu0 %v353
  %3724 = vmatpush2.msra.mxu0 %v352
  %3725 = vmatprep.subr.mxu0 %v337
  %3726 = vmatpush2.msra.mxu0 %v336
  %3727 = vmatprep.subr.mxu0 %v321
  %3728 = vmatpush2.msra.mxu0 %v320
  %3729 = vmatprep.subr.mxu0 %v305
  %3730 = vmatpush2.msra.mxu0 %v304
  %3731 = vmatprep.mubr.f32.mxu0 %v33
  %3732 = vmatmul.mubr.f32.gmra.mxu0 %v32
  %v3733 = vpop.f32.mrf.mxu0
  %v3734 = vadd.f32 0.0, %v3733
  %v3735 = vpop.f32.mrf.mxu0
  %v3736 = vadd.f32 0.0, %v3735
  %3737 = vdwg.mxu0
  %3738 = vmatprep.subr.mxu0 %v801
  %3739 = vmatpush1.msra.mxu0 %v800
  %3740 = vmatprep.subr.mxu0 %v785
  %3741 = vmatpush1.msra.mxu0 %v784
  %3742 = vmatprep.subr.mxu0 %v769
  %3743 = vmatpush1.msra.mxu0 %v768
  %3744 = vmatprep.subr.mxu0 %v753
  %3745 = vmatpush1.msra.mxu0 %v752
  %3746 = vmatprep.subr.mxu0 %v737
  %3747 = vmatpush1.msra.mxu0 %v736
  %3748 = vmatprep.subr.mxu0 %v721
  %3749 = vmatpush1.msra.mxu0 %v720
  %3750 = vmatprep.subr.mxu0 %v705
  %3751 = vmatpush1.msra.mxu0 %v704
  %3752 = vmatprep.subr.mxu0 %v689
  %3753 = vmatpush1.msra.mxu0 %v688
  %3754 = vmatprep.subr.mxu0 %v673
  %3755 = vmatpush1.msra.mxu0 %v672
  %3756 = vmatprep.subr.mxu0 %v657
  %3757 = vmatpush1.msra.mxu0 %v656
  %3758 = vmatprep.subr.mxu0 %v641
  %3759 = vmatpush1.msra.mxu0 %v640
  %3760 = vmatprep.subr.mxu0 %v625
  %3761 = vmatpush1.msra.mxu0 %v624
  %3762 = vmatprep.subr.mxu0 %v609
  %3763 = vmatpush1.msra.mxu0 %v608
  %3764 = vmatprep.subr.mxu0 %v593
  %3765 = vmatpush1.msra.mxu0 %v592
  %3766 = vmatprep.subr.mxu0 %v577
  %3767 = vmatpush1.msra.mxu0 %v576
  %3768 = vmatprep.subr.mxu0 %v561
  %3769 = vmatpush1.msra.mxu0 %v560
  %3770 = vmatprep.subr.mxu0 %v1057
  %3771 = vmatpush2.msra.mxu0 %v1056
  %3772 = vmatprep.subr.mxu0 %v1041
  %3773 = vmatpush2.msra.mxu0 %v1040
  %3774 = vmatprep.subr.mxu0 %v1025
  %3775 = vmatpush2.msra.mxu0 %v1024
  %3776 = vmatprep.subr.mxu0 %v1009
  %3777 = vmatpush2.msra.mxu0 %v1008
  %3778 = vmatprep.subr.mxu0 %v993
  %3779 = vmatpush2.msra.mxu0 %v992
  %3780 = vmatprep.subr.mxu0 %v977
  %3781 = vmatpush2.msra.mxu0 %v976
  %3782 = vmatprep.subr.mxu0 %v961
  %3783 = vmatpush2.msra.mxu0 %v960
  %3784 = vmatprep.subr.mxu0 %v945
  %3785 = vmatpush2.msra.mxu0 %v944
  %3786 = vmatprep.subr.mxu0 %v929
  %3787 = vmatpush2.msra.mxu0 %v928
  %3788 = vmatprep.subr.mxu0 %v913
  %3789 = vmatpush2.msra.mxu0 %v912
  %3790 = vmatprep.subr.mxu0 %v897
  %3791 = vmatpush2.msra.mxu0 %v896
  %3792 = vmatprep.subr.mxu0 %v881
  %3793 = vmatpush2.msra.mxu0 %v880
  %3794 = vmatprep.subr.mxu0 %v865
  %3795 = vmatpush2.msra.mxu0 %v864
  %3796 = vmatprep.subr.mxu0 %v849
  %3797 = vmatpush2.msra.mxu0 %v848
  %3798 = vmatprep.subr.mxu0 %v833
  %3799 = vmatpush2.msra.mxu0 %v832
  %3800 = vmatprep.subr.mxu0 %v817
  %3801 = vmatpush2.msra.mxu0 %v816
  %3802 = vmatprep.mubr.f32.mxu0 %v35
  %3803 = vmatmul.mubr.f32.gmra.mxu0 %v34
  %v3804 = vpop.f32.mrf.mxu0
  %v3805 = vadd.f32 %v3734, %v3804
  %v3806 = vpop.f32.mrf.mxu0
  %v3807 = vadd.f32 %v3736, %v3806
  %3808 = vdwg.mxu0
  %3809 = vmatprep.subr.mxu0 %v1313
  %3810 = vmatpush1.msra.mxu0 %v1312
  %3811 = vmatprep.subr.mxu0 %v1297
  %3812 = vmatpush1.msra.mxu0 %v1296
  %3813 = vmatprep.subr.mxu0 %v1281
  %3814 = vmatpush1.msra.mxu0 %v1280
  %3815 = vmatprep.subr.mxu0 %v1265
  %3816 = vmatpush1.msra.mxu0 %v1264
  %3817 = vmatprep.subr.mxu0 %v1249
  %3818 = vmatpush1.msra.mxu0 %v1248
  %3819 = vmatprep.subr.mxu0 %v1233
  %3820 = vmatpush1.msra.mxu0 %v1232
  %3821 = vmatprep.subr.mxu0 %v1217
  %3822 = vmatpush1.msra.mxu0 %v1216
  %3823 = vmatprep.subr.mxu0 %v1201
  %3824 = vmatpush1.msra.mxu0 %v1200
  %3825 = vmatprep.subr.mxu0 %v1185
  %3826 = vmatpush1.msra.mxu0 %v1184
  %3827 = vmatprep.subr.mxu0 %v1169
  %3828 = vmatpush1.msra.mxu0 %v1168
  %3829 = vmatprep.subr.mxu0 %v1153
  %3830 = vmatpush1.msra.mxu0 %v1152
  %3831 = vmatprep.subr.mxu0 %v1137
  %3832 = vmatpush1.msra.mxu0 %v1136
  %3833 = vmatprep.subr.mxu0 %v1121
  %3834 = vmatpush1.msra.mxu0 %v1120
  %3835 = vmatprep.subr.mxu0 %v1105
  %3836 = vmatpush1.msra.mxu0 %v1104
  %3837 = vmatprep.subr.mxu0 %v1089
  %3838 = vmatpush1.msra.mxu0 %v1088
  %3839 = vmatprep.subr.mxu0 %v1073
  %3840 = vmatpush1.msra.mxu0 %v1072
  %3841 = vmatprep.subr.mxu0 %v1569
  %3842 = vmatpush2.msra.mxu0 %v1568
  %3843 = vmatprep.subr.mxu0 %v1553
  %3844 = vmatpush2.msra.mxu0 %v1552
  %3845 = vmatprep.subr.mxu0 %v1537
  %3846 = vmatpush2.msra.mxu0 %v1536
  %3847 = vmatprep.subr.mxu0 %v1521
  %3848 = vmatpush2.msra.mxu0 %v1520
  %3849 = vmatprep.subr.mxu0 %v1505
  %3850 = vmatpush2.msra.mxu0 %v1504
  %3851 = vmatprep.subr.mxu0 %v1489
  %3852 = vmatpush2.msra.mxu0 %v1488
  %3853 = vmatprep.subr.mxu0 %v1473
  %3854 = vmatpush2.msra.mxu0 %v1472
  %3855 = vmatprep.subr.mxu0 %v1457
  %3856 = vmatpush2.msra.mxu0 %v1456
  %3857 = vmatprep.subr.mxu0 %v1441
  %3858 = vmatpush2.msra.mxu0 %v1440
  %3859 = vmatprep.subr.mxu0 %v1425
  %3860 = vmatpush2.msra.mxu0 %v1424
  %3861 = vmatprep.subr.mxu0 %v1409
  %3862 = vmatpush2.msra.mxu0 %v1408
  %3863 = vmatprep.subr.mxu0 %v1393
  %3864 = vmatpush2.msra.mxu0 %v1392
  %3865 = vmatprep.subr.mxu0 %v1377
  %3866 = vmatpush2.msra.mxu0 %v1376
  %3867 = vmatprep.subr.mxu0 %v1361
  %3868 = vmatpush2.msra.mxu0 %v1360
  %3869 = vmatprep.subr.mxu0 %v1345
  %3870 = vmatpush2.msra.mxu0 %v1344
  %3871 = vmatprep.subr.mxu0 %v1329
  %3872 = vmatpush2.msra.mxu0 %v1328
  %3873 = vmatprep.mubr.f32.mxu0 %v37
  %3874 = vmatmul.mubr.f32.gmra.mxu0 %v36
  %v3875 = vpop.f32.mrf.mxu0
  %v3876 = vadd.f32 %v3805, %v3875
  %v3877 = vpop.f32.mrf.mxu0
  %v3878 = vadd.f32 %v3807, %v3877
  %3879 = vdwg.mxu0
  %3880 = vmatprep.subr.mxu0 %v1825
  %3881 = vmatpush1.msra.mxu0 %v1824
  %3882 = vmatprep.subr.mxu0 %v1809
  %3883 = vmatpush1.msra.mxu0 %v1808
  %3884 = vmatprep.subr.mxu0 %v1793
  %3885 = vmatpush1.msra.mxu0 %v1792
  %3886 = vmatprep.subr.mxu0 %v1777
  %3887 = vmatpush1.msra.mxu0 %v1776
  %3888 = vmatprep.subr.mxu0 %v1761
  %3889 = vmatpush1.msra.mxu0 %v1760
  %3890 = vmatprep.subr.mxu0 %v1745
  %3891 = vmatpush1.msra.mxu0 %v1744
  %3892 = vmatprep.subr.mxu0 %v1729
  %3893 = vmatpush1.msra.mxu0 %v1728
  %3894 = vmatprep.subr.mxu0 %v1713
  %3895 = vmatpush1.msra.mxu0 %v1712
  %3896 = vmatprep.subr.mxu0 %v1697
  %3897 = vmatpush1.msra.mxu0 %v1696
  %3898 = vmatprep.subr.mxu0 %v1681
  %3899 = vmatpush1.msra.mxu0 %v1680
  %3900 = vmatprep.subr.mxu0 %v1665
  %3901 = vmatpush1.msra.mxu0 %v1664
  %3902 = vmatprep.subr.mxu0 %v1649
  %3903 = vmatpush1.msra.mxu0 %v1648
  %3904 = vmatprep.subr.mxu0 %v1633
  %3905 = vmatpush1.msra.mxu0 %v1632
  %3906 = vmatprep.subr.mxu0 %v1617
  %3907 = vmatpush1.msra.mxu0 %v1616
  %3908 = vmatprep.subr.mxu0 %v1601
  %3909 = vmatpush1.msra.mxu0 %v1600
  %3910 = vmatprep.subr.mxu0 %v1585
  %3911 = vmatpush1.msra.mxu0 %v1584
  %3912 = vmatprep.subr.mxu0 %v2081
  %3913 = vmatpush2.msra.mxu0 %v2080
  %3914 = vmatprep.subr.mxu0 %v2065
  %3915 = vmatpush2.msra.mxu0 %v2064
  %3916 = vmatprep.subr.mxu0 %v2049
  %3917 = vmatpush2.msra.mxu0 %v2048
  %3918 = vmatprep.subr.mxu0 %v2033
  %3919 = vmatpush2.msra.mxu0 %v2032
  %3920 = vmatprep.subr.mxu0 %v2017
  %3921 = vmatpush2.msra.mxu0 %v2016
  %3922 = vmatprep.subr.mxu0 %v2001
  %3923 = vmatpush2.msra.mxu0 %v2000
  %3924 = vmatprep.subr.mxu0 %v1985
  %3925 = vmatpush2.msra.mxu0 %v1984
  %3926 = vmatprep.subr.mxu0 %v1969
  %3927 = vmatpush2.msra.mxu0 %v1968
  %3928 = vmatprep.subr.mxu0 %v1953
  %3929 = vmatpush2.msra.mxu0 %v1952
  %3930 = vmatprep.subr.mxu0 %v1937
  %3931 = vmatpush2.msra.mxu0 %v1936
  %3932 = vmatprep.subr.mxu0 %v1921
  %3933 = vmatpush2.msra.mxu0 %v1920
  %3934 = vmatprep.subr.mxu0 %v1905
  %3935 = vmatpush2.msra.mxu0 %v1904
  %3936 = vmatprep.subr.mxu0 %v1889
  %3937 = vmatpush2.msra.mxu0 %v1888
  %3938 = vmatprep.subr.mxu0 %v1873
  %3939 = vmatpush2.msra.mxu0 %v1872
  %3940 = vmatprep.subr.mxu0 %v1857
  %3941 = vmatpush2.msra.mxu0 %v1856
  %3942 = vmatprep.subr.mxu0 %v1841
  %3943 = vmatpush2.msra.mxu0 %v1840
  %3944 = vmatprep.mubr.f32.mxu0 %v39
  %3945 = vmatmul.mubr.f32.gmra.mxu0 %v38
  %v3946 = vpop.f32.mrf.mxu0
  %v3947 = vadd.f32 %v3876, %v3946
  %v3948 = vpop.f32.mrf.mxu0
  %v3949 = vadd.f32 %v3878, %v3948
  %3950 = vdwg.mxu0
  %3951 = vmatprep.subr.mxu0 %v2337
  %3952 = vmatpush1.msra.mxu0 %v2336
  %3953 = vmatprep.subr.mxu0 %v2321
  %3954 = vmatpush1.msra.mxu0 %v2320
  %3955 = vmatprep.subr.mxu0 %v2305
  %3956 = vmatpush1.msra.mxu0 %v2304
  %3957 = vmatprep.subr.mxu0 %v2289
  %3958 = vmatpush1.msra.mxu0 %v2288
  %3959 = vmatprep.subr.mxu0 %v2273
  %3960 = vmatpush1.msra.mxu0 %v2272
  %3961 = vmatprep.subr.mxu0 %v2257
  %3962 = vmatpush1.msra.mxu0 %v2256
  %3963 = vmatprep.subr.mxu0 %v2241
  %3964 = vmatpush1.msra.mxu0 %v2240
  %3965 = vmatprep.subr.mxu0 %v2225
  %3966 = vmatpush1.msra.mxu0 %v2224
  %3967 = vmatprep.subr.mxu0 %v2209
  %3968 = vmatpush1.msra.mxu0 %v2208
  %3969 = vmatprep.subr.mxu0 %v2193
  %3970 = vmatpush1.msra.mxu0 %v2192
  %3971 = vmatprep.subr.mxu0 %v2177
  %3972 = vmatpush1.msra.mxu0 %v2176
  %3973 = vmatprep.subr.mxu0 %v2161
  %3974 = vmatpush1.msra.mxu0 %v2160
  %3975 = vmatprep.subr.mxu0 %v2145
  %3976 = vmatpush1.msra.mxu0 %v2144
  %3977 = vmatprep.subr.mxu0 %v2129
  %3978 = vmatpush1.msra.mxu0 %v2128
  %3979 = vmatprep.subr.mxu0 %v2113
  %3980 = vmatpush1.msra.mxu0 %v2112
  %3981 = vmatprep.subr.mxu0 %v2097
  %3982 = vmatpush1.msra.mxu0 %v2096
  %3983 = vmatprep.subr.mxu0 %v2593
  %3984 = vmatpush2.msra.mxu0 %v2592
  %3985 = vmatprep.subr.mxu0 %v2577
  %3986 = vmatpush2.msra.mxu0 %v2576
  %3987 = vmatprep.subr.mxu0 %v2561
  %3988 = vmatpush2.msra.mxu0 %v2560
  %3989 = vmatprep.subr.mxu0 %v2545
  %3990 = vmatpush2.msra.mxu0 %v2544
  %3991 = vmatprep.subr.mxu0 %v2529
  %3992 = vmatpush2.msra.mxu0 %v2528
  %3993 = vmatprep.subr.mxu0 %v2513
  %3994 = vmatpush2.msra.mxu0 %v2512
  %3995 = vmatprep.subr.mxu0 %v2497
  %3996 = vmatpush2.msra.mxu0 %v2496
  %3997 = vmatprep.subr.mxu0 %v2481
  %3998 = vmatpush2.msra.mxu0 %v2480
  %3999 = vmatprep.subr.mxu0 %v2465
  %4000 = vmatpush2.msra.mxu0 %v2464
  %4001 = vmatprep.subr.mxu0 %v2449
  %4002 = vmatpush2.msra.mxu0 %v2448
  %4003 = vmatprep.subr.mxu0 %v2433
  %4004 = vmatpush2.msra.mxu0 %v2432
  %4005 = vmatprep.subr.mxu0 %v2417
  %4006 = vmatpush2.msra.mxu0 %v2416
  %4007 = vmatprep.subr.mxu0 %v2401
  %4008 = vmatpush2.msra.mxu0 %v2400
  %4009 = vmatprep.subr.mxu0 %v2385
  %4010 = vmatpush2.msra.mxu0 %v2384
  %4011 = vmatprep.subr.mxu0 %v2369
  %4012 = vmatpush2.msra.mxu0 %v2368
  %4013 = vmatprep.subr.mxu0 %v2353
  %4014 = vmatpush2.msra.mxu0 %v2352
  %4015 = vmatprep.mubr.f32.mxu0 %v41
  %4016 = vmatmul.mubr.f32.gmra.mxu0 %v40
  %v4017 = vpop.f32.mrf.mxu0
  %v4018 = vadd.f32 %v3947, %v4017
  %v4019 = vpop.f32.mrf.mxu0
  %v4020 = vadd.f32 %v3949, %v4019
  %4021 = vdwg.mxu0
  %4022 = vmatprep.subr.mxu0 %v291
  %4023 = vmatpush1.msra.mxu0 %v290
  %4024 = vmatprep.subr.mxu0 %v275
  %4025 = vmatpush1.msra.mxu0 %v274
  %4026 = vmatprep.subr.mxu0 %v259
  %4027 = vmatpush1.msra.mxu0 %v258
  %4028 = vmatprep.subr.mxu0 %v243
  %4029 = vmatpush1.msra.mxu0 %v242
  %4030 = vmatprep.subr.mxu0 %v227
  %4031 = vmatpush1.msra.mxu0 %v226
  %4032 = vmatprep.subr.mxu0 %v211
  %4033 = vmatpush1.msra.mxu0 %v210
  %4034 = vmatprep.subr.mxu0 %v195
  %4035 = vmatpush1.msra.mxu0 %v194
  %4036 = vmatprep.subr.mxu0 %v179
  %4037 = vmatpush1.msra.mxu0 %v178
  %4038 = vmatprep.subr.mxu0 %v163
  %4039 = vmatpush1.msra.mxu0 %v162
  %4040 = vmatprep.subr.mxu0 %v147
  %4041 = vmatpush1.msra.mxu0 %v146
  %4042 = vmatprep.subr.mxu0 %v131
  %4043 = vmatpush1.msra.mxu0 %v130
  %4044 = vmatprep.subr.mxu0 %v115
  %4045 = vmatpush1.msra.mxu0 %v114
  %4046 = vmatprep.subr.mxu0 %v99
  %4047 = vmatpush1.msra.mxu0 %v98
  %4048 = vmatprep.subr.mxu0 %v83
  %4049 = vmatpush1.msra.mxu0 %v82
  %4050 = vmatprep.subr.mxu0 %v67
  %4051 = vmatpush1.msra.mxu0 %v66
  %4052 = vmatprep.subr.mxu0 %v51
  %4053 = vmatpush1.msra.mxu0 %v50
  %4054 = vmatprep.subr.mxu0 %v547
  %4055 = vmatpush2.msra.mxu0 %v546
  %4056 = vmatprep.subr.mxu0 %v531
  %4057 = vmatpush2.msra.mxu0 %v530
  %4058 = vmatprep.subr.mxu0 %v515
  %4059 = vmatpush2.msra.mxu0 %v514
  %4060 = vmatprep.subr.mxu0 %v499
  %4061 = vmatpush2.msra.mxu0 %v498
  %4062 = vmatprep.subr.mxu0 %v483
  %4063 = vmatpush2.msra.mxu0 %v482
  %4064 = vmatprep.subr.mxu0 %v467
  %4065 = vmatpush2.msra.mxu0 %v466
  %4066 = vmatprep.subr.mxu0 %v451
  %4067 = vmatpush2.msra.mxu0 %v450
  %4068 = vmatprep.subr.mxu0 %v435
  %4069 = vmatpush2.msra.mxu0 %v434
  %4070 = vmatprep.subr.mxu0 %v419
  %4071 = vmatpush2.msra.mxu0 %v418
  %4072 = vmatprep.subr.mxu0 %v403
  %4073 = vmatpush2.msra.mxu0 %v402
  %4074 = vmatprep.subr.mxu0 %v387
  %4075 = vmatpush2.msra.mxu0 %v386
  %4076 = vmatprep.subr.mxu0 %v371
  %4077 = vmatpush2.msra.mxu0 %v370
  %4078 = vmatprep.subr.mxu0 %v355
  %4079 = vmatpush2.msra.mxu0 %v354
  %4080 = vmatprep.subr.mxu0 %v339
  %4081 = vmatpush2.msra.mxu0 %v338
  %4082 = vmatprep.subr.mxu0 %v323
  %4083 = vmatpush2.msra.mxu0 %v322
  %4084 = vmatprep.subr.mxu0 %v307
  %4085 = vmatpush2.msra.mxu0 %v306
  %4086 = vmatprep.mubr.f32.mxu0 %v33
  %4087 = vmatmul.mubr.f32.gmra.mxu0 %v32
  %v4088 = vpop.f32.mrf.mxu0
  %v4089 = vadd.f32 0.0, %v4088
  %v4090 = vpop.f32.mrf.mxu0
  %v4091 = vadd.f32 0.0, %v4090
  %4092 = vdwg.mxu0
  %4093 = vmatprep.subr.mxu0 %v803
  %4094 = vmatpush1.msra.mxu0 %v802
  %4095 = vmatprep.subr.mxu0 %v787
  %4096 = vmatpush1.msra.mxu0 %v786
  %4097 = vmatprep.subr.mxu0 %v771
  %4098 = vmatpush1.msra.mxu0 %v770
  %4099 = vmatprep.subr.mxu0 %v755
  %4100 = vmatpush1.msra.mxu0 %v754
  %4101 = vmatprep.subr.mxu0 %v739
  %4102 = vmatpush1.msra.mxu0 %v738
  %4103 = vmatprep.subr.mxu0 %v723
  %4104 = vmatpush1.msra.mxu0 %v722
  %4105 = vmatprep.subr.mxu0 %v707
  %4106 = vmatpush1.msra.mxu0 %v706
  %4107 = vmatprep.subr.mxu0 %v691
  %4108 = vmatpush1.msra.mxu0 %v690
  %4109 = vmatprep.subr.mxu0 %v675
  %4110 = vmatpush1.msra.mxu0 %v674
  %4111 = vmatprep.subr.mxu0 %v659
  %4112 = vmatpush1.msra.mxu0 %v658
  %4113 = vmatprep.subr.mxu0 %v643
  %4114 = vmatpush1.msra.mxu0 %v642
  %4115 = vmatprep.subr.mxu0 %v627
  %4116 = vmatpush1.msra.mxu0 %v626
  %4117 = vmatprep.subr.mxu0 %v611
  %4118 = vmatpush1.msra.mxu0 %v610
  %4119 = vmatprep.subr.mxu0 %v595
  %4120 = vmatpush1.msra.mxu0 %v594
  %4121 = vmatprep.subr.mxu0 %v579
  %4122 = vmatpush1.msra.mxu0 %v578
  %4123 = vmatprep.subr.mxu0 %v563
  %4124 = vmatpush1.msra.mxu0 %v562
  %4125 = vmatprep.subr.mxu0 %v1059
  %4126 = vmatpush2.msra.mxu0 %v1058
  %4127 = vmatprep.subr.mxu0 %v1043
  %4128 = vmatpush2.msra.mxu0 %v1042
  %4129 = vmatprep.subr.mxu0 %v1027
  %4130 = vmatpush2.msra.mxu0 %v1026
  %4131 = vmatprep.subr.mxu0 %v1011
  %4132 = vmatpush2.msra.mxu0 %v1010
  %4133 = vmatprep.subr.mxu0 %v995
  %4134 = vmatpush2.msra.mxu0 %v994
  %4135 = vmatprep.subr.mxu0 %v979
  %4136 = vmatpush2.msra.mxu0 %v978
  %4137 = vmatprep.subr.mxu0 %v963
  %4138 = vmatpush2.msra.mxu0 %v962
  %4139 = vmatprep.subr.mxu0 %v947
  %4140 = vmatpush2.msra.mxu0 %v946
  %4141 = vmatprep.subr.mxu0 %v931
  %4142 = vmatpush2.msra.mxu0 %v930
  %4143 = vmatprep.subr.mxu0 %v915
  %4144 = vmatpush2.msra.mxu0 %v914
  %4145 = vmatprep.subr.mxu0 %v899
  %4146 = vmatpush2.msra.mxu0 %v898
  %4147 = vmatprep.subr.mxu0 %v883
  %4148 = vmatpush2.msra.mxu0 %v882
  %4149 = vmatprep.subr.mxu0 %v867
  %4150 = vmatpush2.msra.mxu0 %v866
  %4151 = vmatprep.subr.mxu0 %v851
  %4152 = vmatpush2.msra.mxu0 %v850
  %4153 = vmatprep.subr.mxu0 %v835
  %4154 = vmatpush2.msra.mxu0 %v834
  %4155 = vmatprep.subr.mxu0 %v819
  %4156 = vmatpush2.msra.mxu0 %v818
  %4157 = vmatprep.mubr.f32.mxu0 %v35
  %4158 = vmatmul.mubr.f32.gmra.mxu0 %v34
  %v4159 = vpop.f32.mrf.mxu0
  %v4160 = vadd.f32 %v4089, %v4159
  %v4161 = vpop.f32.mrf.mxu0
  %v4162 = vadd.f32 %v4091, %v4161
  %4163 = vdwg.mxu0
  %4164 = vmatprep.subr.mxu0 %v1315
  %4165 = vmatpush1.msra.mxu0 %v1314
  %4166 = vmatprep.subr.mxu0 %v1299
  %4167 = vmatpush1.msra.mxu0 %v1298
  %4168 = vmatprep.subr.mxu0 %v1283
  %4169 = vmatpush1.msra.mxu0 %v1282
  %4170 = vmatprep.subr.mxu0 %v1267
  %4171 = vmatpush1.msra.mxu0 %v1266
  %4172 = vmatprep.subr.mxu0 %v1251
  %4173 = vmatpush1.msra.mxu0 %v1250
  %4174 = vmatprep.subr.mxu0 %v1235
  %4175 = vmatpush1.msra.mxu0 %v1234
  %4176 = vmatprep.subr.mxu0 %v1219
  %4177 = vmatpush1.msra.mxu0 %v1218
  %4178 = vmatprep.subr.mxu0 %v1203
  %4179 = vmatpush1.msra.mxu0 %v1202
  %4180 = vmatprep.subr.mxu0 %v1187
  %4181 = vmatpush1.msra.mxu0 %v1186
  %4182 = vmatprep.subr.mxu0 %v1171
  %4183 = vmatpush1.msra.mxu0 %v1170
  %4184 = vmatprep.subr.mxu0 %v1155
  %4185 = vmatpush1.msra.mxu0 %v1154
  %4186 = vmatprep.subr.mxu0 %v1139
  %4187 = vmatpush1.msra.mxu0 %v1138
  %4188 = vmatprep.subr.mxu0 %v1123
  %4189 = vmatpush1.msra.mxu0 %v1122
  %4190 = vmatprep.subr.mxu0 %v1107
  %4191 = vmatpush1.msra.mxu0 %v1106
  %4192 = vmatprep.subr.mxu0 %v1091
  %4193 = vmatpush1.msra.mxu0 %v1090
  %4194 = vmatprep.subr.mxu0 %v1075
  %4195 = vmatpush1.msra.mxu0 %v1074
  %4196 = vmatprep.subr.mxu0 %v1571
  %4197 = vmatpush2.msra.mxu0 %v1570
  %4198 = vmatprep.subr.mxu0 %v1555
  %4199 = vmatpush2.msra.mxu0 %v1554
  %4200 = vmatprep.subr.mxu0 %v1539
  %4201 = vmatpush2.msra.mxu0 %v1538
  %4202 = vmatprep.subr.mxu0 %v1523
  %4203 = vmatpush2.msra.mxu0 %v1522
  %4204 = vmatprep.subr.mxu0 %v1507
  %4205 = vmatpush2.msra.mxu0 %v1506
  %4206 = vmatprep.subr.mxu0 %v1491
  %4207 = vmatpush2.msra.mxu0 %v1490
  %4208 = vmatprep.subr.mxu0 %v1475
  %4209 = vmatpush2.msra.mxu0 %v1474
  %4210 = vmatprep.subr.mxu0 %v1459
  %4211 = vmatpush2.msra.mxu0 %v1458
  %4212 = vmatprep.subr.mxu0 %v1443
  %4213 = vmatpush2.msra.mxu0 %v1442
  %4214 = vmatprep.subr.mxu0 %v1427
  %4215 = vmatpush2.msra.mxu0 %v1426
  %4216 = vmatprep.subr.mxu0 %v1411
  %4217 = vmatpush2.msra.mxu0 %v1410
  %4218 = vmatprep.subr.mxu0 %v1395
  %4219 = vmatpush2.msra.mxu0 %v1394
  %4220 = vmatprep.subr.mxu0 %v1379
  %4221 = vmatpush2.msra.mxu0 %v1378
  %4222 = vmatprep.subr.mxu0 %v1363
  %4223 = vmatpush2.msra.mxu0 %v1362
  %4224 = vmatprep.subr.mxu0 %v1347
  %4225 = vmatpush2.msra.mxu0 %v1346
  %4226 = vmatprep.subr.mxu0 %v1331
  %4227 = vmatpush2.msra.mxu0 %v1330
  %4228 = vmatprep.mubr.f32.mxu0 %v37
  %4229 = vmatmul.mubr.f32.gmra.mxu0 %v36
  %v4230 = vpop.f32.mrf.mxu0
  %v4231 = vadd.f32 %v4160, %v4230
  %v4232 = vpop.f32.mrf.mxu0
  %v4233 = vadd.f32 %v4162, %v4232
  %4234 = vdwg.mxu0
  %4235 = vmatprep.subr.mxu0 %v1827
  %4236 = vmatpush1.msra.mxu0 %v1826
  %4237 = vmatprep.subr.mxu0 %v1811
  %4238 = vmatpush1.msra.mxu0 %v1810
  %4239 = vmatprep.subr.mxu0 %v1795
  %4240 = vmatpush1.msra.mxu0 %v1794
  %4241 = vmatprep.subr.mxu0 %v1779
  %4242 = vmatpush1.msra.mxu0 %v1778
  %4243 = vmatprep.subr.mxu0 %v1763
  %4244 = vmatpush1.msra.mxu0 %v1762
  %4245 = vmatprep.subr.mxu0 %v1747
  %4246 = vmatpush1.msra.mxu0 %v1746
  %4247 = vmatprep.subr.mxu0 %v1731
  %4248 = vmatpush1.msra.mxu0 %v1730
  %4249 = vmatprep.subr.mxu0 %v1715
  %4250 = vmatpush1.msra.mxu0 %v1714
  %4251 = vmatprep.subr.mxu0 %v1699
  %4252 = vmatpush1.msra.mxu0 %v1698
  %4253 = vmatprep.subr.mxu0 %v1683
  %4254 = vmatpush1.msra.mxu0 %v1682
  %4255 = vmatprep.subr.mxu0 %v1667
  %4256 = vmatpush1.msra.mxu0 %v1666
  %4257 = vmatprep.subr.mxu0 %v1651
  %4258 = vmatpush1.msra.mxu0 %v1650
  %4259 = vmatprep.subr.mxu0 %v1635
  %4260 = vmatpush1.msra.mxu0 %v1634
  %4261 = vmatprep.subr.mxu0 %v1619
  %4262 = vmatpush1.msra.mxu0 %v1618
  %4263 = vmatprep.subr.mxu0 %v1603
  %4264 = vmatpush1.msra.mxu0 %v1602
  %4265 = vmatprep.subr.mxu0 %v1587
  %4266 = vmatpush1.msra.mxu0 %v1586
  %4267 = vmatprep.subr.mxu0 %v2083
  %4268 = vmatpush2.msra.mxu0 %v2082
  %4269 = vmatprep.subr.mxu0 %v2067
  %4270 = vmatpush2.msra.mxu0 %v2066
  %4271 = vmatprep.subr.mxu0 %v2051
  %4272 = vmatpush2.msra.mxu0 %v2050
  %4273 = vmatprep.subr.mxu0 %v2035
  %4274 = vmatpush2.msra.mxu0 %v2034
  %4275 = vmatprep.subr.mxu0 %v2019
  %4276 = vmatpush2.msra.mxu0 %v2018
  %4277 = vmatprep.subr.mxu0 %v2003
  %4278 = vmatpush2.msra.mxu0 %v2002
  %4279 = vmatprep.subr.mxu0 %v1987
  %4280 = vmatpush2.msra.mxu0 %v1986
  %4281 = vmatprep.subr.mxu0 %v1971
  %4282 = vmatpush2.msra.mxu0 %v1970
  %4283 = vmatprep.subr.mxu0 %v1955
  %4284 = vmatpush2.msra.mxu0 %v1954
  %4285 = vmatprep.subr.mxu0 %v1939
  %4286 = vmatpush2.msra.mxu0 %v1938
  %4287 = vmatprep.subr.mxu0 %v1923
  %4288 = vmatpush2.msra.mxu0 %v1922
  %4289 = vmatprep.subr.mxu0 %v1907
  %4290 = vmatpush2.msra.mxu0 %v1906
  %4291 = vmatprep.subr.mxu0 %v1891
  %4292 = vmatpush2.msra.mxu0 %v1890
  %4293 = vmatprep.subr.mxu0 %v1875
  %4294 = vmatpush2.msra.mxu0 %v1874
  %4295 = vmatprep.subr.mxu0 %v1859
  %4296 = vmatpush2.msra.mxu0 %v1858
  %4297 = vmatprep.subr.mxu0 %v1843
  %4298 = vmatpush2.msra.mxu0 %v1842
  %4299 = vmatprep.mubr.f32.mxu0 %v39
  %4300 = vmatmul.mubr.f32.gmra.mxu0 %v38
  %v4301 = vpop.f32.mrf.mxu0
  %v4302 = vadd.f32 %v4231, %v4301
  %v4303 = vpop.f32.mrf.mxu0
  %v4304 = vadd.f32 %v4233, %v4303
  %4305 = vdwg.mxu0
  %4306 = vmatprep.subr.mxu0 %v2339
  %4307 = vmatpush1.msra.mxu0 %v2338
  %4308 = vmatprep.subr.mxu0 %v2323
  %4309 = vmatpush1.msra.mxu0 %v2322
  %4310 = vmatprep.subr.mxu0 %v2307
  %4311 = vmatpush1.msra.mxu0 %v2306
  %4312 = vmatprep.subr.mxu0 %v2291
  %4313 = vmatpush1.msra.mxu0 %v2290
  %4314 = vmatprep.subr.mxu0 %v2275
  %4315 = vmatpush1.msra.mxu0 %v2274
  %4316 = vmatprep.subr.mxu0 %v2259
  %4317 = vmatpush1.msra.mxu0 %v2258
  %4318 = vmatprep.subr.mxu0 %v2243
  %4319 = vmatpush1.msra.mxu0 %v2242
  %4320 = vmatprep.subr.mxu0 %v2227
  %4321 = vmatpush1.msra.mxu0 %v2226
  %4322 = vmatprep.subr.mxu0 %v2211
  %4323 = vmatpush1.msra.mxu0 %v2210
  %4324 = vmatprep.subr.mxu0 %v2195
  %4325 = vmatpush1.msra.mxu0 %v2194
  %4326 = vmatprep.subr.mxu0 %v2179
  %4327 = vmatpush1.msra.mxu0 %v2178
  %4328 = vmatprep.subr.mxu0 %v2163
  %4329 = vmatpush1.msra.mxu0 %v2162
  %4330 = vmatprep.subr.mxu0 %v2147
  %4331 = vmatpush1.msra.mxu0 %v2146
  %4332 = vmatprep.subr.mxu0 %v2131
  %4333 = vmatpush1.msra.mxu0 %v2130
  %4334 = vmatprep.subr.mxu0 %v2115
  %4335 = vmatpush1.msra.mxu0 %v2114
  %4336 = vmatprep.subr.mxu0 %v2099
  %4337 = vmatpush1.msra.mxu0 %v2098
  %4338 = vmatprep.subr.mxu0 %v2595
  %4339 = vmatpush2.msra.mxu0 %v2594
  %4340 = vmatprep.subr.mxu0 %v2579
  %4341 = vmatpush2.msra.mxu0 %v2578
  %4342 = vmatprep.subr.mxu0 %v2563
  %4343 = vmatpush2.msra.mxu0 %v2562
  %4344 = vmatprep.subr.mxu0 %v2547
  %4345 = vmatpush2.msra.mxu0 %v2546
  %4346 = vmatprep.subr.mxu0 %v2531
  %4347 = vmatpush2.msra.mxu0 %v2530
  %4348 = vmatprep.subr.mxu0 %v2515
  %4349 = vmatpush2.msra.mxu0 %v2514
  %4350 = vmatprep.subr.mxu0 %v2499
  %4351 = vmatpush2.msra.mxu0 %v2498
  %4352 = vmatprep.subr.mxu0 %v2483
  %4353 = vmatpush2.msra.mxu0 %v2482
  %4354 = vmatprep.subr.mxu0 %v2467
  %4355 = vmatpush2.msra.mxu0 %v2466
  %4356 = vmatprep.subr.mxu0 %v2451
  %4357 = vmatpush2.msra.mxu0 %v2450
  %4358 = vmatprep.subr.mxu0 %v2435
  %4359 = vmatpush2.msra.mxu0 %v2434
  %4360 = vmatprep.subr.mxu0 %v2419
  %4361 = vmatpush2.msra.mxu0 %v2418
  %4362 = vmatprep.subr.mxu0 %v2403
  %4363 = vmatpush2.msra.mxu0 %v2402
  %4364 = vmatprep.subr.mxu0 %v2387
  %4365 = vmatpush2.msra.mxu0 %v2386
  %4366 = vmatprep.subr.mxu0 %v2371
  %4367 = vmatpush2.msra.mxu0 %v2370
  %4368 = vmatprep.subr.mxu0 %v2355
  %4369 = vmatpush2.msra.mxu0 %v2354
  %4370 = vmatprep.mubr.f32.mxu0 %v41
  %4371 = vmatmul.mubr.f32.gmra.mxu0 %v40
  %v4372 = vpop.f32.mrf.mxu0
  %v4373 = vadd.f32 %v4302, %v4372
  %v4374 = vpop.f32.mrf.mxu0
  %v4375 = vadd.f32 %v4304, %v4374
  %4376 = vdwg.mxu0
  %4377 = vmatprep.subr.mxu0 %v293
  %4378 = vmatpush1.msra.mxu0 %v292
  %4379 = vmatprep.subr.mxu0 %v277
  %4380 = vmatpush1.msra.mxu0 %v276
  %4381 = vmatprep.subr.mxu0 %v261
  %4382 = vmatpush1.msra.mxu0 %v260
  %4383 = vmatprep.subr.mxu0 %v245
  %4384 = vmatpush1.msra.mxu0 %v244
  %4385 = vmatprep.subr.mxu0 %v229
  %4386 = vmatpush1.msra.mxu0 %v228
  %4387 = vmatprep.subr.mxu0 %v213
  %4388 = vmatpush1.msra.mxu0 %v212
  %4389 = vmatprep.subr.mxu0 %v197
  %4390 = vmatpush1.msra.mxu0 %v196
  %4391 = vmatprep.subr.mxu0 %v181
  %4392 = vmatpush1.msra.mxu0 %v180
  %4393 = vmatprep.subr.mxu0 %v165
  %4394 = vmatpush1.msra.mxu0 %v164
  %4395 = vmatprep.subr.mxu0 %v149
  %4396 = vmatpush1.msra.mxu0 %v148
  %4397 = vmatprep.subr.mxu0 %v133
  %4398 = vmatpush1.msra.mxu0 %v132
  %4399 = vmatprep.subr.mxu0 %v117
  %4400 = vmatpush1.msra.mxu0 %v116
  %4401 = vmatprep.subr.mxu0 %v101
  %4402 = vmatpush1.msra.mxu0 %v100
  %4403 = vmatprep.subr.mxu0 %v85
  %4404 = vmatpush1.msra.mxu0 %v84
  %4405 = vmatprep.subr.mxu0 %v69
  %4406 = vmatpush1.msra.mxu0 %v68
  %4407 = vmatprep.subr.mxu0 %v53
  %4408 = vmatpush1.msra.mxu0 %v52
  %4409 = vmatprep.subr.mxu0 %v549
  %4410 = vmatpush2.msra.mxu0 %v548
  %4411 = vmatprep.subr.mxu0 %v533
  %4412 = vmatpush2.msra.mxu0 %v532
  %4413 = vmatprep.subr.mxu0 %v517
  %4414 = vmatpush2.msra.mxu0 %v516
  %4415 = vmatprep.subr.mxu0 %v501
  %4416 = vmatpush2.msra.mxu0 %v500
  %4417 = vmatprep.subr.mxu0 %v485
  %4418 = vmatpush2.msra.mxu0 %v484
  %4419 = vmatprep.subr.mxu0 %v469
  %4420 = vmatpush2.msra.mxu0 %v468
  %4421 = vmatprep.subr.mxu0 %v453
  %4422 = vmatpush2.msra.mxu0 %v452
  %4423 = vmatprep.subr.mxu0 %v437
  %4424 = vmatpush2.msra.mxu0 %v436
  %4425 = vmatprep.subr.mxu0 %v421
  %4426 = vmatpush2.msra.mxu0 %v420
  %4427 = vmatprep.subr.mxu0 %v405
  %4428 = vmatpush2.msra.mxu0 %v404
  %4429 = vmatprep.subr.mxu0 %v389
  %4430 = vmatpush2.msra.mxu0 %v388
  %4431 = vmatprep.subr.mxu0 %v373
  %4432 = vmatpush2.msra.mxu0 %v372
  %4433 = vmatprep.subr.mxu0 %v357
  %4434 = vmatpush2.msra.mxu0 %v356
  %4435 = vmatprep.subr.mxu0 %v341
  %4436 = vmatpush2.msra.mxu0 %v340
  %4437 = vmatprep.subr.mxu0 %v325
  %4438 = vmatpush2.msra.mxu0 %v324
  %4439 = vmatprep.subr.mxu0 %v309
  %4440 = vmatpush2.msra.mxu0 %v308
  %4441 = vmatprep.mubr.f32.mxu0 %v33
  %4442 = vmatmul.mubr.f32.gmra.mxu0 %v32
  %v4443 = vpop.f32.mrf.mxu0
  %v4444 = vadd.f32 0.0, %v4443
  %v4445 = vpop.f32.mrf.mxu0
  %v4446 = vadd.f32 0.0, %v4445
  %4447 = vdwg.mxu0
  %4448 = vmatprep.subr.mxu0 %v805
  %4449 = vmatpush1.msra.mxu0 %v804
  %4450 = vmatprep.subr.mxu0 %v789
  %4451 = vmatpush1.msra.mxu0 %v788
  %4452 = vmatprep.subr.mxu0 %v773
  %4453 = vmatpush1.msra.mxu0 %v772
  %4454 = vmatprep.subr.mxu0 %v757
  %4455 = vmatpush1.msra.mxu0 %v756
  %4456 = vmatprep.subr.mxu0 %v741
  %4457 = vmatpush1.msra.mxu0 %v740
  %4458 = vmatprep.subr.mxu0 %v725
  %4459 = vmatpush1.msra.mxu0 %v724
  %4460 = vmatprep.subr.mxu0 %v709
  %4461 = vmatpush1.msra.mxu0 %v708
  %4462 = vmatprep.subr.mxu0 %v693
  %4463 = vmatpush1.msra.mxu0 %v692
  %4464 = vmatprep.subr.mxu0 %v677
  %4465 = vmatpush1.msra.mxu0 %v676
  %4466 = vmatprep.subr.mxu0 %v661
  %4467 = vmatpush1.msra.mxu0 %v660
  %4468 = vmatprep.subr.mxu0 %v645
  %4469 = vmatpush1.msra.mxu0 %v644
  %4470 = vmatprep.subr.mxu0 %v629
  %4471 = vmatpush1.msra.mxu0 %v628
  %4472 = vmatprep.subr.mxu0 %v613
  %4473 = vmatpush1.msra.mxu0 %v612
  %4474 = vmatprep.subr.mxu0 %v597
  %4475 = vmatpush1.msra.mxu0 %v596
  %4476 = vmatprep.subr.mxu0 %v581
  %4477 = vmatpush1.msra.mxu0 %v580
  %4478 = vmatprep.subr.mxu0 %v565
  %4479 = vmatpush1.msra.mxu0 %v564
  %4480 = vmatprep.subr.mxu0 %v1061
  %4481 = vmatpush2.msra.mxu0 %v1060
  %4482 = vmatprep.subr.mxu0 %v1045
  %4483 = vmatpush2.msra.mxu0 %v1044
  %4484 = vmatprep.subr.mxu0 %v1029
  %4485 = vmatpush2.msra.mxu0 %v1028
  %4486 = vmatprep.subr.mxu0 %v1013
  %4487 = vmatpush2.msra.mxu0 %v1012
  %4488 = vmatprep.subr.mxu0 %v997
  %4489 = vmatpush2.msra.mxu0 %v996
  %4490 = vmatprep.subr.mxu0 %v981
  %4491 = vmatpush2.msra.mxu0 %v980
  %4492 = vmatprep.subr.mxu0 %v965
  %4493 = vmatpush2.msra.mxu0 %v964
  %4494 = vmatprep.subr.mxu0 %v949
  %4495 = vmatpush2.msra.mxu0 %v948
  %4496 = vmatprep.subr.mxu0 %v933
  %4497 = vmatpush2.msra.mxu0 %v932
  %4498 = vmatprep.subr.mxu0 %v917
  %4499 = vmatpush2.msra.mxu0 %v916
  %4500 = vmatprep.subr.mxu0 %v901
  %4501 = vmatpush2.msra.mxu0 %v900
  %4502 = vmatprep.subr.mxu0 %v885
  %4503 = vmatpush2.msra.mxu0 %v884
  %4504 = vmatprep.subr.mxu0 %v869
  %4505 = vmatpush2.msra.mxu0 %v868
  %4506 = vmatprep.subr.mxu0 %v853
  %4507 = vmatpush2.msra.mxu0 %v852
  %4508 = vmatprep.subr.mxu0 %v837
  %4509 = vmatpush2.msra.mxu0 %v836
  %4510 = vmatprep.subr.mxu0 %v821
  %4511 = vmatpush2.msra.mxu0 %v820
  %4512 = vmatprep.mubr.f32.mxu0 %v35
  %4513 = vmatmul.mubr.f32.gmra.mxu0 %v34
  %v4514 = vpop.f32.mrf.mxu0
  %v4515 = vadd.f32 %v4444, %v4514
  %v4516 = vpop.f32.mrf.mxu0
  %v4517 = vadd.f32 %v4446, %v4516
  %4518 = vdwg.mxu0
  %4519 = vmatprep.subr.mxu0 %v1317
  %4520 = vmatpush1.msra.mxu0 %v1316
  %4521 = vmatprep.subr.mxu0 %v1301
  %4522 = vmatpush1.msra.mxu0 %v1300
  %4523 = vmatprep.subr.mxu0 %v1285
  %4524 = vmatpush1.msra.mxu0 %v1284
  %4525 = vmatprep.subr.mxu0 %v1269
  %4526 = vmatpush1.msra.mxu0 %v1268
  %4527 = vmatprep.subr.mxu0 %v1253
  %4528 = vmatpush1.msra.mxu0 %v1252
  %4529 = vmatprep.subr.mxu0 %v1237
  %4530 = vmatpush1.msra.mxu0 %v1236
  %4531 = vmatprep.subr.mxu0 %v1221
  %4532 = vmatpush1.msra.mxu0 %v1220
  %4533 = vmatprep.subr.mxu0 %v1205
  %4534 = vmatpush1.msra.mxu0 %v1204
  %4535 = vmatprep.subr.mxu0 %v1189
  %4536 = vmatpush1.msra.mxu0 %v1188
  %4537 = vmatprep.subr.mxu0 %v1173
  %4538 = vmatpush1.msra.mxu0 %v1172
  %4539 = vmatprep.subr.mxu0 %v1157
  %4540 = vmatpush1.msra.mxu0 %v1156
  %4541 = vmatprep.subr.mxu0 %v1141
  %4542 = vmatpush1.msra.mxu0 %v1140
  %4543 = vmatprep.subr.mxu0 %v1125
  %4544 = vmatpush1.msra.mxu0 %v1124
  %4545 = vmatprep.subr.mxu0 %v1109
  %4546 = vmatpush1.msra.mxu0 %v1108
  %4547 = vmatprep.subr.mxu0 %v1093
  %4548 = vmatpush1.msra.mxu0 %v1092
  %4549 = vmatprep.subr.mxu0 %v1077
  %4550 = vmatpush1.msra.mxu0 %v1076
  %4551 = vmatprep.subr.mxu0 %v1573
  %4552 = vmatpush2.msra.mxu0 %v1572
  %4553 = vmatprep.subr.mxu0 %v1557
  %4554 = vmatpush2.msra.mxu0 %v1556
  %4555 = vmatprep.subr.mxu0 %v1541
  %4556 = vmatpush2.msra.mxu0 %v1540
  %4557 = vmatprep.subr.mxu0 %v1525
  %4558 = vmatpush2.msra.mxu0 %v1524
  %4559 = vmatprep.subr.mxu0 %v1509
  %4560 = vmatpush2.msra.mxu0 %v1508
  %4561 = vmatprep.subr.mxu0 %v1493
  %4562 = vmatpush2.msra.mxu0 %v1492
  %4563 = vmatprep.subr.mxu0 %v1477
  %4564 = vmatpush2.msra.mxu0 %v1476
  %4565 = vmatprep.subr.mxu0 %v1461
  %4566 = vmatpush2.msra.mxu0 %v1460
  %4567 = vmatprep.subr.mxu0 %v1445
  %4568 = vmatpush2.msra.mxu0 %v1444
  %4569 = vmatprep.subr.mxu0 %v1429
  %4570 = vmatpush2.msra.mxu0 %v1428
  %4571 = vmatprep.subr.mxu0 %v1413
  %4572 = vmatpush2.msra.mxu0 %v1412
  %4573 = vmatprep.subr.mxu0 %v1397
  %4574 = vmatpush2.msra.mxu0 %v1396
  %4575 = vmatprep.subr.mxu0 %v1381
  %4576 = vmatpush2.msra.mxu0 %v1380
  %4577 = vmatprep.subr.mxu0 %v1365
  %4578 = vmatpush2.msra.mxu0 %v1364
  %4579 = vmatprep.subr.mxu0 %v1349
  %4580 = vmatpush2.msra.mxu0 %v1348
  %4581 = vmatprep.subr.mxu0 %v1333
  %4582 = vmatpush2.msra.mxu0 %v1332
  %4583 = vmatprep.mubr.f32.mxu0 %v37
  %4584 = vmatmul.mubr.f32.gmra.mxu0 %v36
  %v4585 = vpop.f32.mrf.mxu0
  %v4586 = vadd.f32 %v4515, %v4585
  %v4587 = vpop.f32.mrf.mxu0
  %v4588 = vadd.f32 %v4517, %v4587
  %4589 = vdwg.mxu0
  %4590 = vmatprep.subr.mxu0 %v1829
  %4591 = vmatpush1.msra.mxu0 %v1828
  %4592 = vmatprep.subr.mxu0 %v1813
  %4593 = vmatpush1.msra.mxu0 %v1812
  %4594 = vmatprep.subr.mxu0 %v1797
  %4595 = vmatpush1.msra.mxu0 %v1796
  %4596 = vmatprep.subr.mxu0 %v1781
  %4597 = vmatpush1.msra.mxu0 %v1780
  %4598 = vmatprep.subr.mxu0 %v1765
  %4599 = vmatpush1.msra.mxu0 %v1764
  %4600 = vmatprep.subr.mxu0 %v1749
  %4601 = vmatpush1.msra.mxu0 %v1748
  %4602 = vmatprep.subr.mxu0 %v1733
  %4603 = vmatpush1.msra.mxu0 %v1732
  %4604 = vmatprep.subr.mxu0 %v1717
  %4605 = vmatpush1.msra.mxu0 %v1716
  %4606 = vmatprep.subr.mxu0 %v1701
  %4607 = vmatpush1.msra.mxu0 %v1700
  %4608 = vmatprep.subr.mxu0 %v1685
  %4609 = vmatpush1.msra.mxu0 %v1684
  %4610 = vmatprep.subr.mxu0 %v1669
  %4611 = vmatpush1.msra.mxu0 %v1668
  %4612 = vmatprep.subr.mxu0 %v1653
  %4613 = vmatpush1.msra.mxu0 %v1652
  %4614 = vmatprep.subr.mxu0 %v1637
  %4615 = vmatpush1.msra.mxu0 %v1636
  %4616 = vmatprep.subr.mxu0 %v1621
  %4617 = vmatpush1.msra.mxu0 %v1620
  %4618 = vmatprep.subr.mxu0 %v1605
  %4619 = vmatpush1.msra.mxu0 %v1604
  %4620 = vmatprep.subr.mxu0 %v1589
  %4621 = vmatpush1.msra.mxu0 %v1588
  %4622 = vmatprep.subr.mxu0 %v2085
  %4623 = vmatpush2.msra.mxu0 %v2084
  %4624 = vmatprep.subr.mxu0 %v2069
  %4625 = vmatpush2.msra.mxu0 %v2068
  %4626 = vmatprep.subr.mxu0 %v2053
  %4627 = vmatpush2.msra.mxu0 %v2052
  %4628 = vmatprep.subr.mxu0 %v2037
  %4629 = vmatpush2.msra.mxu0 %v2036
  %4630 = vmatprep.subr.mxu0 %v2021
  %4631 = vmatpush2.msra.mxu0 %v2020
  %4632 = vmatprep.subr.mxu0 %v2005
  %4633 = vmatpush2.msra.mxu0 %v2004
  %4634 = vmatprep.subr.mxu0 %v1989
  %4635 = vmatpush2.msra.mxu0 %v1988
  %4636 = vmatprep.subr.mxu0 %v1973
  %4637 = vmatpush2.msra.mxu0 %v1972
  %4638 = vmatprep.subr.mxu0 %v1957
  %4639 = vmatpush2.msra.mxu0 %v1956
  %4640 = vmatprep.subr.mxu0 %v1941
  %4641 = vmatpush2.msra.mxu0 %v1940
  %4642 = vmatprep.subr.mxu0 %v1925
  %4643 = vmatpush2.msra.mxu0 %v1924
  %4644 = vmatprep.subr.mxu0 %v1909
  %4645 = vmatpush2.msra.mxu0 %v1908
  %4646 = vmatprep.subr.mxu0 %v1893
  %4647 = vmatpush2.msra.mxu0 %v1892
  %4648 = vmatprep.subr.mxu0 %v1877
  %4649 = vmatpush2.msra.mxu0 %v1876
  %4650 = vmatprep.subr.mxu0 %v1861
  %4651 = vmatpush2.msra.mxu0 %v1860
  %4652 = vmatprep.subr.mxu0 %v1845
  %4653 = vmatpush2.msra.mxu0 %v1844
  %4654 = vmatprep.mubr.f32.mxu0 %v39
  %4655 = vmatmul.mubr.f32.gmra.mxu0 %v38
  %v4656 = vpop.f32.mrf.mxu0
  %v4657 = vadd.f32 %v4586, %v4656
  %v4658 = vpop.f32.mrf.mxu0
  %v4659 = vadd.f32 %v4588, %v4658
  %4660 = vdwg.mxu0
  %4661 = vmatprep.subr.mxu0 %v2341
  %4662 = vmatpush1.msra.mxu0 %v2340
  %4663 = vmatprep.subr.mxu0 %v2325
  %4664 = vmatpush1.msra.mxu0 %v2324
  %4665 = vmatprep.subr.mxu0 %v2309
  %4666 = vmatpush1.msra.mxu0 %v2308
  %4667 = vmatprep.subr.mxu0 %v2293
  %4668 = vmatpush1.msra.mxu0 %v2292
  %4669 = vmatprep.subr.mxu0 %v2277
  %4670 = vmatpush1.msra.mxu0 %v2276
  %4671 = vmatprep.subr.mxu0 %v2261
  %4672 = vmatpush1.msra.mxu0 %v2260
  %4673 = vmatprep.subr.mxu0 %v2245
  %4674 = vmatpush1.msra.mxu0 %v2244
  %4675 = vmatprep.subr.mxu0 %v2229
  %4676 = vmatpush1.msra.mxu0 %v2228
  %4677 = vmatprep.subr.mxu0 %v2213
  %4678 = vmatpush1.msra.mxu0 %v2212
  %4679 = vmatprep.subr.mxu0 %v2197
  %4680 = vmatpush1.msra.mxu0 %v2196
  %4681 = vmatprep.subr.mxu0 %v2181
  %4682 = vmatpush1.msra.mxu0 %v2180
  %4683 = vmatprep.subr.mxu0 %v2165
  %4684 = vmatpush1.msra.mxu0 %v2164
  %4685 = vmatprep.subr.mxu0 %v2149
  %4686 = vmatpush1.msra.mxu0 %v2148
  %4687 = vmatprep.subr.mxu0 %v2133
  %4688 = vmatpush1.msra.mxu0 %v2132
  %4689 = vmatprep.subr.mxu0 %v2117
  %4690 = vmatpush1.msra.mxu0 %v2116
  %4691 = vmatprep.subr.mxu0 %v2101
  %4692 = vmatpush1.msra.mxu0 %v2100
  %4693 = vmatprep.subr.mxu0 %v2597
  %4694 = vmatpush2.msra.mxu0 %v2596
  %4695 = vmatprep.subr.mxu0 %v2581
  %4696 = vmatpush2.msra.mxu0 %v2580
  %4697 = vmatprep.subr.mxu0 %v2565
  %4698 = vmatpush2.msra.mxu0 %v2564
  %4699 = vmatprep.subr.mxu0 %v2549
  %4700 = vmatpush2.msra.mxu0 %v2548
  %4701 = vmatprep.subr.mxu0 %v2533
  %4702 = vmatpush2.msra.mxu0 %v2532
  %4703 = vmatprep.subr.mxu0 %v2517
  %4704 = vmatpush2.msra.mxu0 %v2516
  %4705 = vmatprep.subr.mxu0 %v2501
  %4706 = vmatpush2.msra.mxu0 %v2500
  %4707 = vmatprep.subr.mxu0 %v2485
  %4708 = vmatpush2.msra.mxu0 %v2484
  %4709 = vmatprep.subr.mxu0 %v2469
  %4710 = vmatpush2.msra.mxu0 %v2468
  %4711 = vmatprep.subr.mxu0 %v2453
  %4712 = vmatpush2.msra.mxu0 %v2452
  %4713 = vmatprep.subr.mxu0 %v2437
  %4714 = vmatpush2.msra.mxu0 %v2436
  %4715 = vmatprep.subr.mxu0 %v2421
  %4716 = vmatpush2.msra.mxu0 %v2420
  %4717 = vmatprep.subr.mxu0 %v2405
  %4718 = vmatpush2.msra.mxu0 %v2404
  %4719 = vmatprep.subr.mxu0 %v2389
  %4720 = vmatpush2.msra.mxu0 %v2388
  %4721 = vmatprep.subr.mxu0 %v2373
  %4722 = vmatpush2.msra.mxu0 %v2372
  %4723 = vmatprep.subr.mxu0 %v2357
  %4724 = vmatpush2.msra.mxu0 %v2356
  %4725 = vmatprep.mubr.f32.mxu0 %v41
  %4726 = vmatmul.mubr.f32.gmra.mxu0 %v40
  %v4727 = vpop.f32.mrf.mxu0
  %v4728 = vadd.f32 %v4657, %v4727
  %v4729 = vpop.f32.mrf.mxu0
  %v4730 = vadd.f32 %v4659, %v4729
  %4731 = vdwg.mxu0
  %4732 = vmatprep.subr.mxu0 %v295
  %4733 = vmatpush1.msra.mxu0 %v294
  %4734 = vmatprep.subr.mxu0 %v279
  %4735 = vmatpush1.msra.mxu0 %v278
  %4736 = vmatprep.subr.mxu0 %v263
  %4737 = vmatpush1.msra.mxu0 %v262
  %4738 = vmatprep.subr.mxu0 %v247
  %4739 = vmatpush1.msra.mxu0 %v246
  %4740 = vmatprep.subr.mxu0 %v231
  %4741 = vmatpush1.msra.mxu0 %v230
  %4742 = vmatprep.subr.mxu0 %v215
  %4743 = vmatpush1.msra.mxu0 %v214
  %4744 = vmatprep.subr.mxu0 %v199
  %4745 = vmatpush1.msra.mxu0 %v198
  %4746 = vmatprep.subr.mxu0 %v183
  %4747 = vmatpush1.msra.mxu0 %v182
  %4748 = vmatprep.subr.mxu0 %v167
  %4749 = vmatpush1.msra.mxu0 %v166
  %4750 = vmatprep.subr.mxu0 %v151
  %4751 = vmatpush1.msra.mxu0 %v150
  %4752 = vmatprep.subr.mxu0 %v135
  %4753 = vmatpush1.msra.mxu0 %v134
  %4754 = vmatprep.subr.mxu0 %v119
  %4755 = vmatpush1.msra.mxu0 %v118
  %4756 = vmatprep.subr.mxu0 %v103
  %4757 = vmatpush1.msra.mxu0 %v102
  %4758 = vmatprep.subr.mxu0 %v87
  %4759 = vmatpush1.msra.mxu0 %v86
  %4760 = vmatprep.subr.mxu0 %v71
  %4761 = vmatpush1.msra.mxu0 %v70
  %4762 = vmatprep.subr.mxu0 %v55
  %4763 = vmatpush1.msra.mxu0 %v54
  %4764 = vmatprep.subr.mxu0 %v551
  %4765 = vmatpush2.msra.mxu0 %v550
  %4766 = vmatprep.subr.mxu0 %v535
  %4767 = vmatpush2.msra.mxu0 %v534
  %4768 = vmatprep.subr.mxu0 %v519
  %4769 = vmatpush2.msra.mxu0 %v518
  %4770 = vmatprep.subr.mxu0 %v503
  %4771 = vmatpush2.msra.mxu0 %v502
  %4772 = vmatprep.subr.mxu0 %v487
  %4773 = vmatpush2.msra.mxu0 %v486
  %4774 = vmatprep.subr.mxu0 %v471
  %4775 = vmatpush2.msra.mxu0 %v470
  %4776 = vmatprep.subr.mxu0 %v455
  %4777 = vmatpush2.msra.mxu0 %v454
  %4778 = vmatprep.subr.mxu0 %v439
  %4779 = vmatpush2.msra.mxu0 %v438
  %4780 = vmatprep.subr.mxu0 %v423
  %4781 = vmatpush2.msra.mxu0 %v422
  %4782 = vmatprep.subr.mxu0 %v407
  %4783 = vmatpush2.msra.mxu0 %v406
  %4784 = vmatprep.subr.mxu0 %v391
  %4785 = vmatpush2.msra.mxu0 %v390
  %4786 = vmatprep.subr.mxu0 %v375
  %4787 = vmatpush2.msra.mxu0 %v374
  %4788 = vmatprep.subr.mxu0 %v359
  %4789 = vmatpush2.msra.mxu0 %v358
  %4790 = vmatprep.subr.mxu0 %v343
  %4791 = vmatpush2.msra.mxu0 %v342
  %4792 = vmatprep.subr.mxu0 %v327
  %4793 = vmatpush2.msra.mxu0 %v326
  %4794 = vmatprep.subr.mxu0 %v311
  %4795 = vmatpush2.msra.mxu0 %v310
  %4796 = vmatprep.mubr.f32.mxu0 %v33
  %4797 = vmatmul.mubr.f32.gmra.mxu0 %v32
  %v4798 = vpop.f32.mrf.mxu0
  %v4799 = vadd.f32 0.0, %v4798
  %v4800 = vpop.f32.mrf.mxu0
  %v4801 = vadd.f32 0.0, %v4800
  %4802 = vdwg.mxu0
  %4803 = vmatprep.subr.mxu0 %v807
  %4804 = vmatpush1.msra.mxu0 %v806
  %4805 = vmatprep.subr.mxu0 %v791
  %4806 = vmatpush1.msra.mxu0 %v790
  %4807 = vmatprep.subr.mxu0 %v775
  %4808 = vmatpush1.msra.mxu0 %v774
  %4809 = vmatprep.subr.mxu0 %v759
  %4810 = vmatpush1.msra.mxu0 %v758
  %4811 = vmatprep.subr.mxu0 %v743
  %4812 = vmatpush1.msra.mxu0 %v742
  %4813 = vmatprep.subr.mxu0 %v727
  %4814 = vmatpush1.msra.mxu0 %v726
  %4815 = vmatprep.subr.mxu0 %v711
  %4816 = vmatpush1.msra.mxu0 %v710
  %4817 = vmatprep.subr.mxu0 %v695
  %4818 = vmatpush1.msra.mxu0 %v694
  %4819 = vmatprep.subr.mxu0 %v679
  %4820 = vmatpush1.msra.mxu0 %v678
  %4821 = vmatprep.subr.mxu0 %v663
  %4822 = vmatpush1.msra.mxu0 %v662
  %4823 = vmatprep.subr.mxu0 %v647
  %4824 = vmatpush1.msra.mxu0 %v646
  %4825 = vmatprep.subr.mxu0 %v631
  %4826 = vmatpush1.msra.mxu0 %v630
  %4827 = vmatprep.subr.mxu0 %v615
  %4828 = vmatpush1.msra.mxu0 %v614
  %4829 = vmatprep.subr.mxu0 %v599
  %4830 = vmatpush1.msra.mxu0 %v598
  %4831 = vmatprep.subr.mxu0 %v583
  %4832 = vmatpush1.msra.mxu0 %v582
  %4833 = vmatprep.subr.mxu0 %v567
  %4834 = vmatpush1.msra.mxu0 %v566
  %4835 = vmatprep.subr.mxu0 %v1063
  %4836 = vmatpush2.msra.mxu0 %v1062
  %4837 = vmatprep.subr.mxu0 %v1047
  %4838 = vmatpush2.msra.mxu0 %v1046
  %4839 = vmatprep.subr.mxu0 %v1031
  %4840 = vmatpush2.msra.mxu0 %v1030
  %4841 = vmatprep.subr.mxu0 %v1015
  %4842 = vmatpush2.msra.mxu0 %v1014
  %4843 = vmatprep.subr.mxu0 %v999
  %4844 = vmatpush2.msra.mxu0 %v998
  %4845 = vmatprep.subr.mxu0 %v983
  %4846 = vmatpush2.msra.mxu0 %v982
  %4847 = vmatprep.subr.mxu0 %v967
  %4848 = vmatpush2.msra.mxu0 %v966
  %4849 = vmatprep.subr.mxu0 %v951
  %4850 = vmatpush2.msra.mxu0 %v950
  %4851 = vmatprep.subr.mxu0 %v935
  %4852 = vmatpush2.msra.mxu0 %v934
  %4853 = vmatprep.subr.mxu0 %v919
  %4854 = vmatpush2.msra.mxu0 %v918
  %4855 = vmatprep.subr.mxu0 %v903
  %4856 = vmatpush2.msra.mxu0 %v902
  %4857 = vmatprep.subr.mxu0 %v887
  %4858 = vmatpush2.msra.mxu0 %v886
  %4859 = vmatprep.subr.mxu0 %v871
  %4860 = vmatpush2.msra.mxu0 %v870
  %4861 = vmatprep.subr.mxu0 %v855
  %4862 = vmatpush2.msra.mxu0 %v854
  %4863 = vmatprep.subr.mxu0 %v839
  %4864 = vmatpush2.msra.mxu0 %v838
  %4865 = vmatprep.subr.mxu0 %v823
  %4866 = vmatpush2.msra.mxu0 %v822
  %4867 = vmatprep.mubr.f32.mxu0 %v35
  %4868 = vmatmul.mubr.f32.gmra.mxu0 %v34
  %v4869 = vpop.f32.mrf.mxu0
  %v4870 = vadd.f32 %v4799, %v4869
  %v4871 = vpop.f32.mrf.mxu0
  %v4872 = vadd.f32 %v4801, %v4871
  %4873 = vdwg.mxu0
  %4874 = vmatprep.subr.mxu0 %v1319
  %4875 = vmatpush1.msra.mxu0 %v1318
  %4876 = vmatprep.subr.mxu0 %v1303
  %4877 = vmatpush1.msra.mxu0 %v1302
  %4878 = vmatprep.subr.mxu0 %v1287
  %4879 = vmatpush1.msra.mxu0 %v1286
  %4880 = vmatprep.subr.mxu0 %v1271
  %4881 = vmatpush1.msra.mxu0 %v1270
  %4882 = vmatprep.subr.mxu0 %v1255
  %4883 = vmatpush1.msra.mxu0 %v1254
  %4884 = vmatprep.subr.mxu0 %v1239
  %4885 = vmatpush1.msra.mxu0 %v1238
  %4886 = vmatprep.subr.mxu0 %v1223
  %4887 = vmatpush1.msra.mxu0 %v1222
  %4888 = vmatprep.subr.mxu0 %v1207
  %4889 = vmatpush1.msra.mxu0 %v1206
  %4890 = vmatprep.subr.mxu0 %v1191
  %4891 = vmatpush1.msra.mxu0 %v1190
  %4892 = vmatprep.subr.mxu0 %v1175
  %4893 = vmatpush1.msra.mxu0 %v1174
  %4894 = vmatprep.subr.mxu0 %v1159
  %4895 = vmatpush1.msra.mxu0 %v1158
  %4896 = vmatprep.subr.mxu0 %v1143
  %4897 = vmatpush1.msra.mxu0 %v1142
  %4898 = vmatprep.subr.mxu0 %v1127
  %4899 = vmatpush1.msra.mxu0 %v1126
  %4900 = vmatprep.subr.mxu0 %v1111
  %4901 = vmatpush1.msra.mxu0 %v1110
  %4902 = vmatprep.subr.mxu0 %v1095
  %4903 = vmatpush1.msra.mxu0 %v1094
  %4904 = vmatprep.subr.mxu0 %v1079
  %4905 = vmatpush1.msra.mxu0 %v1078
  %4906 = vmatprep.subr.mxu0 %v1575
  %4907 = vmatpush2.msra.mxu0 %v1574
  %4908 = vmatprep.subr.mxu0 %v1559
  %4909 = vmatpush2.msra.mxu0 %v1558
  %4910 = vmatprep.subr.mxu0 %v1543
  %4911 = vmatpush2.msra.mxu0 %v1542
  %4912 = vmatprep.subr.mxu0 %v1527
  %4913 = vmatpush2.msra.mxu0 %v1526
  %4914 = vmatprep.subr.mxu0 %v1511
  %4915 = vmatpush2.msra.mxu0 %v1510
  %4916 = vmatprep.subr.mxu0 %v1495
  %4917 = vmatpush2.msra.mxu0 %v1494
  %4918 = vmatprep.subr.mxu0 %v1479
  %4919 = vmatpush2.msra.mxu0 %v1478
  %4920 = vmatprep.subr.mxu0 %v1463
  %4921 = vmatpush2.msra.mxu0 %v1462
  %4922 = vmatprep.subr.mxu0 %v1447
  %4923 = vmatpush2.msra.mxu0 %v1446
  %4924 = vmatprep.subr.mxu0 %v1431
  %4925 = vmatpush2.msra.mxu0 %v1430
  %4926 = vmatprep.subr.mxu0 %v1415
  %4927 = vmatpush2.msra.mxu0 %v1414
  %4928 = vmatprep.subr.mxu0 %v1399
  %4929 = vmatpush2.msra.mxu0 %v1398
  %4930 = vmatprep.subr.mxu0 %v1383
  %4931 = vmatpush2.msra.mxu0 %v1382
  %4932 = vmatprep.subr.mxu0 %v1367
  %4933 = vmatpush2.msra.mxu0 %v1366
  %4934 = vmatprep.subr.mxu0 %v1351
  %4935 = vmatpush2.msra.mxu0 %v1350
  %4936 = vmatprep.subr.mxu0 %v1335
  %4937 = vmatpush2.msra.mxu0 %v1334
  %4938 = vmatprep.mubr.f32.mxu0 %v37
  %4939 = vmatmul.mubr.f32.gmra.mxu0 %v36
  %v4940 = vpop.f32.mrf.mxu0
  %v4941 = vadd.f32 %v4870, %v4940
  %v4942 = vpop.f32.mrf.mxu0
  %v4943 = vadd.f32 %v4872, %v4942
  %4944 = vdwg.mxu0
  %4945 = vmatprep.subr.mxu0 %v1831
  %4946 = vmatpush1.msra.mxu0 %v1830
  %4947 = vmatprep.subr.mxu0 %v1815
  %4948 = vmatpush1.msra.mxu0 %v1814
  %4949 = vmatprep.subr.mxu0 %v1799
  %4950 = vmatpush1.msra.mxu0 %v1798
  %4951 = vmatprep.subr.mxu0 %v1783
  %4952 = vmatpush1.msra.mxu0 %v1782
  %4953 = vmatprep.subr.mxu0 %v1767
  %4954 = vmatpush1.msra.mxu0 %v1766
  %4955 = vmatprep.subr.mxu0 %v1751
  %4956 = vmatpush1.msra.mxu0 %v1750
  %4957 = vmatprep.subr.mxu0 %v1735
  %4958 = vmatpush1.msra.mxu0 %v1734
  %4959 = vmatprep.subr.mxu0 %v1719
  %4960 = vmatpush1.msra.mxu0 %v1718
  %4961 = vmatprep.subr.mxu0 %v1703
  %4962 = vmatpush1.msra.mxu0 %v1702
  %4963 = vmatprep.subr.mxu0 %v1687
  %4964 = vmatpush1.msra.mxu0 %v1686
  %4965 = vmatprep.subr.mxu0 %v1671
  %4966 = vmatpush1.msra.mxu0 %v1670
  %4967 = vmatprep.subr.mxu0 %v1655
  %4968 = vmatpush1.msra.mxu0 %v1654
  %4969 = vmatprep.subr.mxu0 %v1639
  %4970 = vmatpush1.msra.mxu0 %v1638
  %4971 = vmatprep.subr.mxu0 %v1623
  %4972 = vmatpush1.msra.mxu0 %v1622
  %4973 = vmatprep.subr.mxu0 %v1607
  %4974 = vmatpush1.msra.mxu0 %v1606
  %4975 = vmatprep.subr.mxu0 %v1591
  %4976 = vmatpush1.msra.mxu0 %v1590
  %4977 = vmatprep.subr.mxu0 %v2087
  %4978 = vmatpush2.msra.mxu0 %v2086
  %4979 = vmatprep.subr.mxu0 %v2071
  %4980 = vmatpush2.msra.mxu0 %v2070
  %4981 = vmatprep.subr.mxu0 %v2055
  %4982 = vmatpush2.msra.mxu0 %v2054
  %4983 = vmatprep.subr.mxu0 %v2039
  %4984 = vmatpush2.msra.mxu0 %v2038
  %4985 = vmatprep.subr.mxu0 %v2023
  %4986 = vmatpush2.msra.mxu0 %v2022
  %4987 = vmatprep.subr.mxu0 %v2007
  %4988 = vmatpush2.msra.mxu0 %v2006
  %4989 = vmatprep.subr.mxu0 %v1991
  %4990 = vmatpush2.msra.mxu0 %v1990
  %4991 = vmatprep.subr.mxu0 %v1975
  %4992 = vmatpush2.msra.mxu0 %v1974
  %4993 = vmatprep.subr.mxu0 %v1959
  %4994 = vmatpush2.msra.mxu0 %v1958
  %4995 = vmatprep.subr.mxu0 %v1943
  %4996 = vmatpush2.msra.mxu0 %v1942
  %4997 = vmatprep.subr.mxu0 %v1927
  %4998 = vmatpush2.msra.mxu0 %v1926
  %4999 = vmatprep.subr.mxu0 %v1911
  %5000 = vmatpush2.msra.mxu0 %v1910
  %5001 = vmatprep.subr.mxu0 %v1895
  %5002 = vmatpush2.msra.mxu0 %v1894
  %5003 = vmatprep.subr.mxu0 %v1879
  %5004 = vmatpush2.msra.mxu0 %v1878
  %5005 = vmatprep.subr.mxu0 %v1863
  %5006 = vmatpush2.msra.mxu0 %v1862
  %5007 = vmatprep.subr.mxu0 %v1847
  %5008 = vmatpush2.msra.mxu0 %v1846
  %5009 = vmatprep.mubr.f32.mxu0 %v39
  %5010 = vmatmul.mubr.f32.gmra.mxu0 %v38
  %v5011 = vpop.f32.mrf.mxu0
  %v5012 = vadd.f32 %v4941, %v5011
  %v5013 = vpop.f32.mrf.mxu0
  %v5014 = vadd.f32 %v4943, %v5013
  %5015 = vdwg.mxu0
  %5016 = vmatprep.subr.mxu0 %v2343
  %5017 = vmatpush1.msra.mxu0 %v2342
  %5018 = vmatprep.subr.mxu0 %v2327
  %5019 = vmatpush1.msra.mxu0 %v2326
  %5020 = vmatprep.subr.mxu0 %v2311
  %5021 = vmatpush1.msra.mxu0 %v2310
  %5022 = vmatprep.subr.mxu0 %v2295
  %5023 = vmatpush1.msra.mxu0 %v2294
  %5024 = vmatprep.subr.mxu0 %v2279
  %5025 = vmatpush1.msra.mxu0 %v2278
  %5026 = vmatprep.subr.mxu0 %v2263
  %5027 = vmatpush1.msra.mxu0 %v2262
  %5028 = vmatprep.subr.mxu0 %v2247
  %5029 = vmatpush1.msra.mxu0 %v2246
  %5030 = vmatprep.subr.mxu0 %v2231
  %5031 = vmatpush1.msra.mxu0 %v2230
  %5032 = vmatprep.subr.mxu0 %v2215
  %5033 = vmatpush1.msra.mxu0 %v2214
  %5034 = vmatprep.subr.mxu0 %v2199
  %5035 = vmatpush1.msra.mxu0 %v2198
  %5036 = vmatprep.subr.mxu0 %v2183
  %5037 = vmatpush1.msra.mxu0 %v2182
  %5038 = vmatprep.subr.mxu0 %v2167
  %5039 = vmatpush1.msra.mxu0 %v2166
  %5040 = vmatprep.subr.mxu0 %v2151
  %5041 = vmatpush1.msra.mxu0 %v2150
  %5042 = vmatprep.subr.mxu0 %v2135
  %5043 = vmatpush1.msra.mxu0 %v2134
  %5044 = vmatprep.subr.mxu0 %v2119
  %5045 = vmatpush1.msra.mxu0 %v2118
  %5046 = vmatprep.subr.mxu0 %v2103
  %5047 = vmatpush1.msra.mxu0 %v2102
  %5048 = vmatprep.subr.mxu0 %v2599
  %5049 = vmatpush2.msra.mxu0 %v2598
  %5050 = vmatprep.subr.mxu0 %v2583
  %5051 = vmatpush2.msra.mxu0 %v2582
  %5052 = vmatprep.subr.mxu0 %v2567
  %5053 = vmatpush2.msra.mxu0 %v2566
  %5054 = vmatprep.subr.mxu0 %v2551
  %5055 = vmatpush2.msra.mxu0 %v2550
  %5056 = vmatprep.subr.mxu0 %v2535
  %5057 = vmatpush2.msra.mxu0 %v2534
  %5058 = vmatprep.subr.mxu0 %v2519
  %5059 = vmatpush2.msra.mxu0 %v2518
  %5060 = vmatprep.subr.mxu0 %v2503
  %5061 = vmatpush2.msra.mxu0 %v2502
  %5062 = vmatprep.subr.mxu0 %v2487
  %5063 = vmatpush2.msra.mxu0 %v2486
  %5064 = vmatprep.subr.mxu0 %v2471
  %5065 = vmatpush2.msra.mxu0 %v2470
  %5066 = vmatprep.subr.mxu0 %v2455
  %5067 = vmatpush2.msra.mxu0 %v2454
  %5068 = vmatprep.subr.mxu0 %v2439
  %5069 = vmatpush2.msra.mxu0 %v2438
  %5070 = vmatprep.subr.mxu0 %v2423
  %5071 = vmatpush2.msra.mxu0 %v2422
  %5072 = vmatprep.subr.mxu0 %v2407
  %5073 = vmatpush2.msra.mxu0 %v2406
  %5074 = vmatprep.subr.mxu0 %v2391
  %5075 = vmatpush2.msra.mxu0 %v2390
  %5076 = vmatprep.subr.mxu0 %v2375
  %5077 = vmatpush2.msra.mxu0 %v2374
  %5078 = vmatprep.subr.mxu0 %v2359
  %5079 = vmatpush2.msra.mxu0 %v2358
  %5080 = vmatprep.mubr.f32.mxu0 %v41
  %5081 = vmatmul.mubr.f32.gmra.mxu0 %v40
  %v5082 = vpop.f32.mrf.mxu0
  %v5083 = vadd.f32 %v5012, %v5082
  %v5084 = vpop.f32.mrf.mxu0
  %v5085 = vadd.f32 %v5014, %v5084
  %5086 = vdwg.mxu0
  %5087 = vmatprep.subr.mxu0 %v297
  %5088 = vmatpush1.msra.mxu0 %v296
  %5089 = vmatprep.subr.mxu0 %v281
  %5090 = vmatpush1.msra.mxu0 %v280
  %5091 = vmatprep.subr.mxu0 %v265
  %5092 = vmatpush1.msra.mxu0 %v264
  %5093 = vmatprep.subr.mxu0 %v249
  %5094 = vmatpush1.msra.mxu0 %v248
  %5095 = vmatprep.subr.mxu0 %v233
  %5096 = vmatpush1.msra.mxu0 %v232
  %5097 = vmatprep.subr.mxu0 %v217
  %5098 = vmatpush1.msra.mxu0 %v216
  %5099 = vmatprep.subr.mxu0 %v201
  %5100 = vmatpush1.msra.mxu0 %v200
  %5101 = vmatprep.subr.mxu0 %v185
  %5102 = vmatpush1.msra.mxu0 %v184
  %5103 = vmatprep.subr.mxu0 %v169
  %5104 = vmatpush1.msra.mxu0 %v168
  %5105 = vmatprep.subr.mxu0 %v153
  %5106 = vmatpush1.msra.mxu0 %v152
  %5107 = vmatprep.subr.mxu0 %v137
  %5108 = vmatpush1.msra.mxu0 %v136
  %5109 = vmatprep.subr.mxu0 %v121
  %5110 = vmatpush1.msra.mxu0 %v120
  %5111 = vmatprep.subr.mxu0 %v105
  %5112 = vmatpush1.msra.mxu0 %v104
  %5113 = vmatprep.subr.mxu0 %v89
  %5114 = vmatpush1.msra.mxu0 %v88
  %5115 = vmatprep.subr.mxu0 %v73
  %5116 = vmatpush1.msra.mxu0 %v72
  %5117 = vmatprep.subr.mxu0 %v57
  %5118 = vmatpush1.msra.mxu0 %v56
  %5119 = vmatprep.subr.mxu0 %v553
  %5120 = vmatpush2.msra.mxu0 %v552
  %5121 = vmatprep.subr.mxu0 %v537
  %5122 = vmatpush2.msra.mxu0 %v536
  %5123 = vmatprep.subr.mxu0 %v521
  %5124 = vmatpush2.msra.mxu0 %v520
  %5125 = vmatprep.subr.mxu0 %v505
  %5126 = vmatpush2.msra.mxu0 %v504
  %5127 = vmatprep.subr.mxu0 %v489
  %5128 = vmatpush2.msra.mxu0 %v488
  %5129 = vmatprep.subr.mxu0 %v473
  %5130 = vmatpush2.msra.mxu0 %v472
  %5131 = vmatprep.subr.mxu0 %v457
  %5132 = vmatpush2.msra.mxu0 %v456
  %5133 = vmatprep.subr.mxu0 %v441
  %5134 = vmatpush2.msra.mxu0 %v440
  %5135 = vmatprep.subr.mxu0 %v425
  %5136 = vmatpush2.msra.mxu0 %v424
  %5137 = vmatprep.subr.mxu0 %v409
  %5138 = vmatpush2.msra.mxu0 %v408
  %5139 = vmatprep.subr.mxu0 %v393
  %5140 = vmatpush2.msra.mxu0 %v392
  %5141 = vmatprep.subr.mxu0 %v377
  %5142 = vmatpush2.msra.mxu0 %v376
  %5143 = vmatprep.subr.mxu0 %v361
  %5144 = vmatpush2.msra.mxu0 %v360
  %5145 = vmatprep.subr.mxu0 %v345
  %5146 = vmatpush2.msra.mxu0 %v344
  %5147 = vmatprep.subr.mxu0 %v329
  %5148 = vmatpush2.msra.mxu0 %v328
  %5149 = vmatprep.subr.mxu0 %v313
  %5150 = vmatpush2.msra.mxu0 %v312
  %5151 = vmatprep.mubr.f32.mxu0 %v33
  %5152 = vmatmul.mubr.f32.gmra.mxu0 %v32
  %v5153 = vpop.f32.mrf.mxu0
  %v5154 = vadd.f32 0.0, %v5153
  %v5155 = vpop.f32.mrf.mxu0
  %v5156 = vadd.f32 0.0, %v5155
  %5157 = vdwg.mxu0
  %5158 = vmatprep.subr.mxu0 %v809
  %5159 = vmatpush1.msra.mxu0 %v808
  %5160 = vmatprep.subr.mxu0 %v793
  %5161 = vmatpush1.msra.mxu0 %v792
  %5162 = vmatprep.subr.mxu0 %v777
  %5163 = vmatpush1.msra.mxu0 %v776
  %5164 = vmatprep.subr.mxu0 %v761
  %5165 = vmatpush1.msra.mxu0 %v760
  %5166 = vmatprep.subr.mxu0 %v745
  %5167 = vmatpush1.msra.mxu0 %v744
  %5168 = vmatprep.subr.mxu0 %v729
  %5169 = vmatpush1.msra.mxu0 %v728
  %5170 = vmatprep.subr.mxu0 %v713
  %5171 = vmatpush1.msra.mxu0 %v712
  %5172 = vmatprep.subr.mxu0 %v697
  %5173 = vmatpush1.msra.mxu0 %v696
  %5174 = vmatprep.subr.mxu0 %v681
  %5175 = vmatpush1.msra.mxu0 %v680
  %5176 = vmatprep.subr.mxu0 %v665
  %5177 = vmatpush1.msra.mxu0 %v664
  %5178 = vmatprep.subr.mxu0 %v649
  %5179 = vmatpush1.msra.mxu0 %v648
  %5180 = vmatprep.subr.mxu0 %v633
  %5181 = vmatpush1.msra.mxu0 %v632
  %5182 = vmatprep.subr.mxu0 %v617
  %5183 = vmatpush1.msra.mxu0 %v616
  %5184 = vmatprep.subr.mxu0 %v601
  %5185 = vmatpush1.msra.mxu0 %v600
  %5186 = vmatprep.subr.mxu0 %v585
  %5187 = vmatpush1.msra.mxu0 %v584
  %5188 = vmatprep.subr.mxu0 %v569
  %5189 = vmatpush1.msra.mxu0 %v568
  %5190 = vmatprep.subr.mxu0 %v1065
  %5191 = vmatpush2.msra.mxu0 %v1064
  %5192 = vmatprep.subr.mxu0 %v1049
  %5193 = vmatpush2.msra.mxu0 %v1048
  %5194 = vmatprep.subr.mxu0 %v1033
  %5195 = vmatpush2.msra.mxu0 %v1032
  %5196 = vmatprep.subr.mxu0 %v1017
  %5197 = vmatpush2.msra.mxu0 %v1016
  %5198 = vmatprep.subr.mxu0 %v1001
  %5199 = vmatpush2.msra.mxu0 %v1000
  %5200 = vmatprep.subr.mxu0 %v985
  %5201 = vmatpush2.msra.mxu0 %v984
  %5202 = vmatprep.subr.mxu0 %v969
  %5203 = vmatpush2.msra.mxu0 %v968
  %5204 = vmatprep.subr.mxu0 %v953
  %5205 = vmatpush2.msra.mxu0 %v952
  %5206 = vmatprep.subr.mxu0 %v937
  %5207 = vmatpush2.msra.mxu0 %v936
  %5208 = vmatprep.subr.mxu0 %v921
  %5209 = vmatpush2.msra.mxu0 %v920
  %5210 = vmatprep.subr.mxu0 %v905
  %5211 = vmatpush2.msra.mxu0 %v904
  %5212 = vmatprep.subr.mxu0 %v889
  %5213 = vmatpush2.msra.mxu0 %v888
  %5214 = vmatprep.subr.mxu0 %v873
  %5215 = vmatpush2.msra.mxu0 %v872
  %5216 = vmatprep.subr.mxu0 %v857
  %5217 = vmatpush2.msra.mxu0 %v856
  %5218 = vmatprep.subr.mxu0 %v841
  %5219 = vmatpush2.msra.mxu0 %v840
  %5220 = vmatprep.subr.mxu0 %v825
  %5221 = vmatpush2.msra.mxu0 %v824
  %5222 = vmatprep.mubr.f32.mxu0 %v35
  %5223 = vmatmul.mubr.f32.gmra.mxu0 %v34
  %v5224 = vpop.f32.mrf.mxu0
  %v5225 = vadd.f32 %v5154, %v5224
  %v5226 = vpop.f32.mrf.mxu0
  %v5227 = vadd.f32 %v5156, %v5226
  %5228 = vdwg.mxu0
  %5229 = vmatprep.subr.mxu0 %v1321
  %5230 = vmatpush1.msra.mxu0 %v1320
  %5231 = vmatprep.subr.mxu0 %v1305
  %5232 = vmatpush1.msra.mxu0 %v1304
  %5233 = vmatprep.subr.mxu0 %v1289
  %5234 = vmatpush1.msra.mxu0 %v1288
  %5235 = vmatprep.subr.mxu0 %v1273
  %5236 = vmatpush1.msra.mxu0 %v1272
  %5237 = vmatprep.subr.mxu0 %v1257
  %5238 = vmatpush1.msra.mxu0 %v1256
  %5239 = vmatprep.subr.mxu0 %v1241
  %5240 = vmatpush1.msra.mxu0 %v1240
  %5241 = vmatprep.subr.mxu0 %v1225
  %5242 = vmatpush1.msra.mxu0 %v1224
  %5243 = vmatprep.subr.mxu0 %v1209
  %5244 = vmatpush1.msra.mxu0 %v1208
  %5245 = vmatprep.subr.mxu0 %v1193
  %5246 = vmatpush1.msra.mxu0 %v1192
  %5247 = vmatprep.subr.mxu0 %v1177
  %5248 = vmatpush1.msra.mxu0 %v1176
  %5249 = vmatprep.subr.mxu0 %v1161
  %5250 = vmatpush1.msra.mxu0 %v1160
  %5251 = vmatprep.subr.mxu0 %v1145
  %5252 = vmatpush1.msra.mxu0 %v1144
  %5253 = vmatprep.subr.mxu0 %v1129
  %5254 = vmatpush1.msra.mxu0 %v1128
  %5255 = vmatprep.subr.mxu0 %v1113
  %5256 = vmatpush1.msra.mxu0 %v1112
  %5257 = vmatprep.subr.mxu0 %v1097
  %5258 = vmatpush1.msra.mxu0 %v1096
  %5259 = vmatprep.subr.mxu0 %v1081
  %5260 = vmatpush1.msra.mxu0 %v1080
  %5261 = vmatprep.subr.mxu0 %v1577
  %5262 = vmatpush2.msra.mxu0 %v1576
  %5263 = vmatprep.subr.mxu0 %v1561
  %5264 = vmatpush2.msra.mxu0 %v1560
  %5265 = vmatprep.subr.mxu0 %v1545
  %5266 = vmatpush2.msra.mxu0 %v1544
  %5267 = vmatprep.subr.mxu0 %v1529
  %5268 = vmatpush2.msra.mxu0 %v1528
  %5269 = vmatprep.subr.mxu0 %v1513
  %5270 = vmatpush2.msra.mxu0 %v1512
  %5271 = vmatprep.subr.mxu0 %v1497
  %5272 = vmatpush2.msra.mxu0 %v1496
  %5273 = vmatprep.subr.mxu0 %v1481
  %5274 = vmatpush2.msra.mxu0 %v1480
  %5275 = vmatprep.subr.mxu0 %v1465
  %5276 = vmatpush2.msra.mxu0 %v1464
  %5277 = vmatprep.subr.mxu0 %v1449
  %5278 = vmatpush2.msra.mxu0 %v1448
  %5279 = vmatprep.subr.mxu0 %v1433
  %5280 = vmatpush2.msra.mxu0 %v1432
  %5281 = vmatprep.subr.mxu0 %v1417
  %5282 = vmatpush2.msra.mxu0 %v1416
  %5283 = vmatprep.subr.mxu0 %v1401
  %5284 = vmatpush2.msra.mxu0 %v1400
  %5285 = vmatprep.subr.mxu0 %v1385
  %5286 = vmatpush2.msra.mxu0 %v1384
  %5287 = vmatprep.subr.mxu0 %v1369
  %5288 = vmatpush2.msra.mxu0 %v1368
  %5289 = vmatprep.subr.mxu0 %v1353
  %5290 = vmatpush2.msra.mxu0 %v1352
  %5291 = vmatprep.subr.mxu0 %v1337
  %5292 = vmatpush2.msra.mxu0 %v1336
  %5293 = vmatprep.mubr.f32.mxu0 %v37
  %5294 = vmatmul.mubr.f32.gmra.mxu0 %v36
  %v5295 = vpop.f32.mrf.mxu0
  %v5296 = vadd.f32 %v5225, %v5295
  %v5297 = vpop.f32.mrf.mxu0
  %v5298 = vadd.f32 %v5227, %v5297
  %5299 = vdwg.mxu0
  %5300 = vmatprep.subr.mxu0 %v1833
  %5301 = vmatpush1.msra.mxu0 %v1832
  %5302 = vmatprep.subr.mxu0 %v1817
  %5303 = vmatpush1.msra.mxu0 %v1816
  %5304 = vmatprep.subr.mxu0 %v1801
  %5305 = vmatpush1.msra.mxu0 %v1800
  %5306 = vmatprep.subr.mxu0 %v1785
  %5307 = vmatpush1.msra.mxu0 %v1784
  %5308 = vmatprep.subr.mxu0 %v1769
  %5309 = vmatpush1.msra.mxu0 %v1768
  %5310 = vmatprep.subr.mxu0 %v1753
  %5311 = vmatpush1.msra.mxu0 %v1752
  %5312 = vmatprep.subr.mxu0 %v1737
  %5313 = vmatpush1.msra.mxu0 %v1736
  %5314 = vmatprep.subr.mxu0 %v1721
  %5315 = vmatpush1.msra.mxu0 %v1720
  %5316 = vmatprep.subr.mxu0 %v1705
  %5317 = vmatpush1.msra.mxu0 %v1704
  %5318 = vmatprep.subr.mxu0 %v1689
  %5319 = vmatpush1.msra.mxu0 %v1688
  %5320 = vmatprep.subr.mxu0 %v1673
  %5321 = vmatpush1.msra.mxu0 %v1672
  %5322 = vmatprep.subr.mxu0 %v1657
  %5323 = vmatpush1.msra.mxu0 %v1656
  %5324 = vmatprep.subr.mxu0 %v1641
  %5325 = vmatpush1.msra.mxu0 %v1640
  %5326 = vmatprep.subr.mxu0 %v1625
  %5327 = vmatpush1.msra.mxu0 %v1624
  %5328 = vmatprep.subr.mxu0 %v1609
  %5329 = vmatpush1.msra.mxu0 %v1608
  %5330 = vmatprep.subr.mxu0 %v1593
  %5331 = vmatpush1.msra.mxu0 %v1592
  %5332 = vmatprep.subr.mxu0 %v2089
  %5333 = vmatpush2.msra.mxu0 %v2088
  %5334 = vmatprep.subr.mxu0 %v2073
  %5335 = vmatpush2.msra.mxu0 %v2072
  %5336 = vmatprep.subr.mxu0 %v2057
  %5337 = vmatpush2.msra.mxu0 %v2056
  %5338 = vmatprep.subr.mxu0 %v2041
  %5339 = vmatpush2.msra.mxu0 %v2040
  %5340 = vmatprep.subr.mxu0 %v2025
  %5341 = vmatpush2.msra.mxu0 %v2024
  %5342 = vmatprep.subr.mxu0 %v2009
  %5343 = vmatpush2.msra.mxu0 %v2008
  %5344 = vmatprep.subr.mxu0 %v1993
  %5345 = vmatpush2.msra.mxu0 %v1992
  %5346 = vmatprep.subr.mxu0 %v1977
  %5347 = vmatpush2.msra.mxu0 %v1976
  %5348 = vmatprep.subr.mxu0 %v1961
  %5349 = vmatpush2.msra.mxu0 %v1960
  %5350 = vmatprep.subr.mxu0 %v1945
  %5351 = vmatpush2.msra.mxu0 %v1944
  %5352 = vmatprep.subr.mxu0 %v1929
  %5353 = vmatpush2.msra.mxu0 %v1928
  %5354 = vmatprep.subr.mxu0 %v1913
  %5355 = vmatpush2.msra.mxu0 %v1912
  %5356 = vmatprep.subr.mxu0 %v1897
  %5357 = vmatpush2.msra.mxu0 %v1896
  %5358 = vmatprep.subr.mxu0 %v1881
  %5359 = vmatpush2.msra.mxu0 %v1880
  %5360 = vmatprep.subr.mxu0 %v1865
  %5361 = vmatpush2.msra.mxu0 %v1864
  %5362 = vmatprep.subr.mxu0 %v1849
  %5363 = vmatpush2.msra.mxu0 %v1848
  %5364 = vmatprep.mubr.f32.mxu0 %v39
  %5365 = vmatmul.mubr.f32.gmra.mxu0 %v38
  %v5366 = vpop.f32.mrf.mxu0
  %v5367 = vadd.f32 %v5296, %v5366
  %v5368 = vpop.f32.mrf.mxu0
  %v5369 = vadd.f32 %v5298, %v5368
  %5370 = vdwg.mxu0
  %5371 = vmatprep.subr.mxu0 %v2345
  %5372 = vmatpush1.msra.mxu0 %v2344
  %5373 = vmatprep.subr.mxu0 %v2329
  %5374 = vmatpush1.msra.mxu0 %v2328
  %5375 = vmatprep.subr.mxu0 %v2313
  %5376 = vmatpush1.msra.mxu0 %v2312
  %5377 = vmatprep.subr.mxu0 %v2297
  %5378 = vmatpush1.msra.mxu0 %v2296
  %5379 = vmatprep.subr.mxu0 %v2281
  %5380 = vmatpush1.msra.mxu0 %v2280
  %5381 = vmatprep.subr.mxu0 %v2265
  %5382 = vmatpush1.msra.mxu0 %v2264
  %5383 = vmatprep.subr.mxu0 %v2249
  %5384 = vmatpush1.msra.mxu0 %v2248
  %5385 = vmatprep.subr.mxu0 %v2233
  %5386 = vmatpush1.msra.mxu0 %v2232
  %5387 = vmatprep.subr.mxu0 %v2217
  %5388 = vmatpush1.msra.mxu0 %v2216
  %5389 = vmatprep.subr.mxu0 %v2201
  %5390 = vmatpush1.msra.mxu0 %v2200
  %5391 = vmatprep.subr.mxu0 %v2185
  %5392 = vmatpush1.msra.mxu0 %v2184
  %5393 = vmatprep.subr.mxu0 %v2169
  %5394 = vmatpush1.msra.mxu0 %v2168
  %5395 = vmatprep.subr.mxu0 %v2153
  %5396 = vmatpush1.msra.mxu0 %v2152
  %5397 = vmatprep.subr.mxu0 %v2137
  %5398 = vmatpush1.msra.mxu0 %v2136
  %5399 = vmatprep.subr.mxu0 %v2121
  %5400 = vmatpush1.msra.mxu0 %v2120
  %5401 = vmatprep.subr.mxu0 %v2105
  %5402 = vmatpush1.msra.mxu0 %v2104
  %5403 = vmatprep.subr.mxu0 %v2601
  %5404 = vmatpush2.msra.mxu0 %v2600
  %5405 = vmatprep.subr.mxu0 %v2585
  %5406 = vmatpush2.msra.mxu0 %v2584
  %5407 = vmatprep.subr.mxu0 %v2569
  %5408 = vmatpush2.msra.mxu0 %v2568
  %5409 = vmatprep.subr.mxu0 %v2553
  %5410 = vmatpush2.msra.mxu0 %v2552
  %5411 = vmatprep.subr.mxu0 %v2537
  %5412 = vmatpush2.msra.mxu0 %v2536
  %5413 = vmatprep.subr.mxu0 %v2521
  %5414 = vmatpush2.msra.mxu0 %v2520
  %5415 = vmatprep.subr.mxu0 %v2505
  %5416 = vmatpush2.msra.mxu0 %v2504
  %5417 = vmatprep.subr.mxu0 %v2489
  %5418 = vmatpush2.msra.mxu0 %v2488
  %5419 = vmatprep.subr.mxu0 %v2473
  %5420 = vmatpush2.msra.mxu0 %v2472
  %5421 = vmatprep.subr.mxu0 %v2457
  %5422 = vmatpush2.msra.mxu0 %v2456
  %5423 = vmatprep.subr.mxu0 %v2441
  %5424 = vmatpush2.msra.mxu0 %v2440
  %5425 = vmatprep.subr.mxu0 %v2425
  %5426 = vmatpush2.msra.mxu0 %v2424
  %5427 = vmatprep.subr.mxu0 %v2409
  %5428 = vmatpush2.msra.mxu0 %v2408
  %5429 = vmatprep.subr.mxu0 %v2393
  %5430 = vmatpush2.msra.mxu0 %v2392
  %5431 = vmatprep.subr.mxu0 %v2377
  %5432 = vmatpush2.msra.mxu0 %v2376
  %5433 = vmatprep.subr.mxu0 %v2361
  %5434 = vmatpush2.msra.mxu0 %v2360
  %5435 = vmatprep.mubr.f32.mxu0 %v41
  %5436 = vmatmul.mubr.f32.gmra.mxu0 %v40
  %v5437 = vpop.f32.mrf.mxu0
  %v5438 = vadd.f32 %v5367, %v5437
  %v5439 = vpop.f32.mrf.mxu0
  %v5440 = vadd.f32 %v5369, %v5439
  %5441 = vdwg.mxu0
  %v5442 = vmax.f32 %v2953, %v3663
  %v5443 = vmax.f32 %v2955, %v3665
  %v5444 = vmax.f32 %v3308, %v4018
  %v5445 = vmax.f32 %v3310, %v4020
  %v5446 = vmax.f32 %v4373, %v5083
  %v5447 = vmax.f32 %v4375, %v5085
  %v5448 = vmax.f32 %v4728, %v5438
  %v5449 = vmax.f32 %v4730, %v5440
  %v5450 = vmax.f32 %v5442, %v5446
  %v5451 = vmax.f32 %v5443, %v5447
  %v5452 = vmax.f32 %v5444, %v5448
  %v5453 = vmax.f32 %v5445, %v5449
  %v5454 = vld [vmem:[%s2] sm:$0xf]
  %v5456 = vlaneseq
  %v5457 = vshrl.u32 %v5456, 7
  %v5458 = vsub.s32 0, %v5457
  %v5459 = vrot.slane %v5454, %v5458
  %v5460 = vlaneseq
  %v5461 = vshrl.u32 %v5460, 7
  %v5462 = vsub.s32 1, %v5461
  %v5463 = vrot.slane %v5454, %v5462
  %v5464 = vlaneseq
  %v5465 = vshrl.u32 %v5464, 7
  %v5466 = vsub.s32 2, %v5465
  %v5467 = vrot.slane %v5454, %v5466
  %v5468 = vlaneseq
  %v5469 = vshrl.u32 %v5468, 7
  %v5470 = vsub.s32 3, %v5469
  %v5471 = vrot.slane %v5454, %v5470
  %v5476 = vadd.f32 %v5450, %v5459
  %v5477 = vadd.f32 %v5451, %v5463
  %v5478 = vadd.f32 %v5452, %v5467
  %v5479 = vadd.f32 %v5453, %v5471
  %v5480 = vmax.f32 %v5476, 0.0
  %v5481 = vmax.f32 %v5477, 0.0
  %v5482 = vmax.f32 %v5478, 0.0
  %v5483 = vmax.f32 %v5479, 0.0
  %v5484 = vld [vmem:[%s3] sm:$0xff]
  %v5485 = vld [vmem:[%s3 + $0x8] sm:$0xff]
  %v5486 = vld [vmem:[%s3 + $0x10] sm:$0xff]
  %v5487 = vld [vmem:[%s3 + $0x18] sm:$0xff]
  %v5488 = vld [vmem:[%s3 + $0x20] sm:$0xff]
  %v5489 = vld [vmem:[%s3 + $0x28] sm:$0xff]
  %v5490 = vld [vmem:[%s3 + $0x30] sm:$0xff]
  %v5491 = vld [vmem:[%s3 + $0x38] sm:$0xff]
  %v5492 = vld [vmem:[%s3 + $0x40] sm:$0xff]
  %v5493 = vld [vmem:[%s3 + $0x48] sm:$0xff]
  %v5494 = vld [vmem:[%s3 + $0x50] sm:$0xff]
  %v5495 = vld [vmem:[%s3 + $0x58] sm:$0xff]
  %v5496 = vld [vmem:[%s3 + $0x60] sm:$0xff]
  %v5497 = vld [vmem:[%s3 + $0x68] sm:$0xff]
  %v5498 = vld [vmem:[%s3 + $0x70] sm:$0xff]
  %v5499 = vld [vmem:[%s3 + $0x78] sm:$0xff]
  %v5500 = vld [vmem:[%s3 + $0x80] sm:$0xff]
  %v5501 = vld [vmem:[%s3 + $0x88] sm:$0xff]
  %v5502 = vld [vmem:[%s3 + $0x90] sm:$0xff]
  %v5503 = vld [vmem:[%s3 + $0x98] sm:$0xff]
  %v5504 = vld [vmem:[%s3 + $0xa0] sm:$0xff]
  %v5505 = vld [vmem:[%s3 + $0xa8] sm:$0xff]
  %v5506 = vld [vmem:[%s3 + $0xb0] sm:$0xff]
  %v5507 = vld [vmem:[%s3 + $0xb8] sm:$0xff]
  %v5508 = vld [vmem:[%s3 + $0xc0] sm:$0xff]
  %v5509 = vld [vmem:[%s3 + $0xc8] sm:$0xff]
  %v5510 = vld [vmem:[%s3 + $0xd0] sm:$0xff]
  %v5511 = vld [vmem:[%s3 + $0xd8] sm:$0xff]
  %v5512 = vld [vmem:[%s3 + $0xe0] sm:$0xff]
  %v5513 = vld [vmem:[%s3 + $0xe8] sm:$0xff]
  %v5514 = vld [vmem:[%s3 + $0xf0] sm:$0xff]
  %v5515 = vld [vmem:[%s3 + $0xf8] sm:$0xff]
  %v5516 = vld [vmem:[%s3 + $0x100] sm:$0xff]
  %v5517 = vld [vmem:[%s3 + $0x108] sm:$0xff]
  %v5518 = vld [vmem:[%s3 + $0x110] sm:$0xff]
  %v5519 = vld [vmem:[%s3 + $0x118] sm:$0xff]
  %v5520 = vld [vmem:[%s3 + $0x120] sm:$0xff]
  %v5521 = vld [vmem:[%s3 + $0x128] sm:$0xff]
  %v5522 = vld [vmem:[%s3 + $0x130] sm:$0xff]
  %v5523 = vld [vmem:[%s3 + $0x138] sm:$0xff]
  %v5524 = vld [vmem:[%s3 + $0x140] sm:$0xff]
  %v5525 = vld [vmem:[%s3 + $0x148] sm:$0xff]
  %v5526 = vld [vmem:[%s3 + $0x150] sm:$0xff]
  %v5527 = vld [vmem:[%s3 + $0x158] sm:$0xff]
  %v5528 = vld [vmem:[%s3 + $0x160] sm:$0xff]
  %v5529 = vld [vmem:[%s3 + $0x168] sm:$0xff]
  %v5530 = vld [vmem:[%s3 + $0x170] sm:$0xff]
  %v5531 = vld [vmem:[%s3 + $0x178] sm:$0xff]
  %v5532 = vld [vmem:[%s3 + $0x180] sm:$0xff]
  %v5533 = vld [vmem:[%s3 + $0x188] sm:$0xff]
  %v5534 = vld [vmem:[%s3 + $0x190] sm:$0xff]
  %v5535 = vld [vmem:[%s3 + $0x198] sm:$0xff]
  %v5536 = vld [vmem:[%s3 + $0x1a0] sm:$0xff]
  %v5537 = vld [vmem:[%s3 + $0x1a8] sm:$0xff]
  %v5538 = vld [vmem:[%s3 + $0x1b0] sm:$0xff]
  %v5539 = vld [vmem:[%s3 + $0x1b8] sm:$0xff]
  %v5540 = vld [vmem:[%s3 + $0x1c0] sm:$0xff]
  %v5541 = vld [vmem:[%s3 + $0x1c8] sm:$0xff]
  %v5542 = vld [vmem:[%s3 + $0x1d0] sm:$0xff]
  %v5543 = vld [vmem:[%s3 + $0x1d8] sm:$0xff]
  %v5544 = vld [vmem:[%s3 + $0x1e0] sm:$0xff]
  %v5545 = vld [vmem:[%s3 + $0x1e8] sm:$0xff]
  %v5546 = vld [vmem:[%s3 + $0x1f0] sm:$0xff]
  %v5547 = vld [vmem:[%s3 + $0x1f8] sm:$0xff]
  %v5548 = vld [vmem:[%s4] sm:$0x1]
  %v5550 = vlaneseq
  %v5551 = vshrl.u32 %v5550, 7
  %v5552 = vsub.s32 0, %v5551
  %v5553 = vrot.slane %v5548, %v5552
  %5555 = vmatprep.subr.mxu0 0.0
  %5556 = vmatpush1.msra.mxu0 %v5499
  %5557 = vmatprep.subr.mxu0 0.0
  %5558 = vmatpush1.msra.mxu0 %v5498
  %5559 = vmatprep.subr.mxu0 0.0
  %5560 = vmatpush1.msra.mxu0 %v5497
  %5561 = vmatprep.subr.mxu0 0.0
  %5562 = vmatpush1.msra.mxu0 %v5496
  %5563 = vmatprep.subr.mxu0 0.0
  %5564 = vmatpush1.msra.mxu0 %v5495
  %5565 = vmatprep.subr.mxu0 0.0
  %5566 = vmatpush1.msra.mxu0 %v5494
  %5567 = vmatprep.subr.mxu0 0.0
  %5568 = vmatpush1.msra.mxu0 %v5493
  %5569 = vmatprep.subr.mxu0 0.0
  %5570 = vmatpush1.msra.mxu0 %v5492
  %5571 = vmatprep.subr.mxu0 0.0
  %5572 = vmatpush1.msra.mxu0 %v5491
  %5573 = vmatprep.subr.mxu0 0.0
  %5574 = vmatpush1.msra.mxu0 %v5490
  %5575 = vmatprep.subr.mxu0 0.0
  %5576 = vmatpush1.msra.mxu0 %v5489
  %5577 = vmatprep.subr.mxu0 0.0
  %5578 = vmatpush1.msra.mxu0 %v5488
  %5579 = vmatprep.subr.mxu0 0.0
  %5580 = vmatpush1.msra.mxu0 %v5487
  %5581 = vmatprep.subr.mxu0 0.0
  %5582 = vmatpush1.msra.mxu0 %v5486
  %5583 = vmatprep.subr.mxu0 0.0
  %5584 = vmatpush1.msra.mxu0 %v5485
  %5585 = vmatprep.subr.mxu0 0.0
  %5586 = vmatpush1.msra.mxu0 %v5484
  %5587 = vmatprep.subr.mxu0 0.0
  %5588 = vmatpush2.msra.mxu0 %v5515
  %5589 = vmatprep.subr.mxu0 0.0
  %5590 = vmatpush2.msra.mxu0 %v5514
  %5591 = vmatprep.subr.mxu0 0.0
  %5592 = vmatpush2.msra.mxu0 %v5513
  %5593 = vmatprep.subr.mxu0 0.0
  %5594 = vmatpush2.msra.mxu0 %v5512
  %5595 = vmatprep.subr.mxu0 0.0
  %5596 = vmatpush2.msra.mxu0 %v5511
  %5597 = vmatprep.subr.mxu0 0.0
  %5598 = vmatpush2.msra.mxu0 %v5510
  %5599 = vmatprep.subr.mxu0 0.0
  %5600 = vmatpush2.msra.mxu0 %v5509
  %5601 = vmatprep.subr.mxu0 0.0
  %5602 = vmatpush2.msra.mxu0 %v5508
  %5603 = vmatprep.subr.mxu0 0.0
  %5604 = vmatpush2.msra.mxu0 %v5507
  %5605 = vmatprep.subr.mxu0 0.0
  %5606 = vmatpush2.msra.mxu0 %v5506
  %5607 = vmatprep.subr.mxu0 0.0
  %5608 = vmatpush2.msra.mxu0 %v5505
  %5609 = vmatprep.subr.mxu0 0.0
  %5610 = vmatpush2.msra.mxu0 %v5504
  %5611 = vmatprep.subr.mxu0 0.0
  %5612 = vmatpush2.msra.mxu0 %v5503
  %5613 = vmatprep.subr.mxu0 0.0
  %5614 = vmatpush2.msra.mxu0 %v5502
  %5615 = vmatprep.subr.mxu0 0.0
  %5616 = vmatpush2.msra.mxu0 %v5501
  %5617 = vmatprep.subr.mxu0 0.0
  %5618 = vmatpush2.msra.mxu0 %v5500
  %5619 = vmatprep.mubr.f32.mxu0 %v5481
  %5620 = vmatmul.mubr.f32.gmra.mxu0 %v5480
  %v5621 = vpop.f32.mrf.mxu0
  %v5622 = vadd.f32 %v5553, %v5621
  %v5623 = vpop.f32.mrf.mxu0
  %5624 = vdwg.mxu0
  %5625 = vmatprep.subr.mxu0 0.0
  %5626 = vmatpush1.msra.mxu0 %v5531
  %5627 = vmatprep.subr.mxu0 0.0
  %5628 = vmatpush1.msra.mxu0 %v5530
  %5629 = vmatprep.subr.mxu0 0.0
  %5630 = vmatpush1.msra.mxu0 %v5529
  %5631 = vmatprep.subr.mxu0 0.0
  %5632 = vmatpush1.msra.mxu0 %v5528
  %5633 = vmatprep.subr.mxu0 0.0
  %5634 = vmatpush1.msra.mxu0 %v5527
  %5635 = vmatprep.subr.mxu0 0.0
  %5636 = vmatpush1.msra.mxu0 %v5526
  %5637 = vmatprep.subr.mxu0 0.0
  %5638 = vmatpush1.msra.mxu0 %v5525
  %5639 = vmatprep.subr.mxu0 0.0
  %5640 = vmatpush1.msra.mxu0 %v5524
  %5641 = vmatprep.subr.mxu0 0.0
  %5642 = vmatpush1.msra.mxu0 %v5523
  %5643 = vmatprep.subr.mxu0 0.0
  %5644 = vmatpush1.msra.mxu0 %v5522
  %5645 = vmatprep.subr.mxu0 0.0
  %5646 = vmatpush1.msra.mxu0 %v5521
  %5647 = vmatprep.subr.mxu0 0.0
  %5648 = vmatpush1.msra.mxu0 %v5520
  %5649 = vmatprep.subr.mxu0 0.0
  %5650 = vmatpush1.msra.mxu0 %v5519
  %5651 = vmatprep.subr.mxu0 0.0
  %5652 = vmatpush1.msra.mxu0 %v5518
  %5653 = vmatprep.subr.mxu0 0.0
  %5654 = vmatpush1.msra.mxu0 %v5517
  %5655 = vmatprep.subr.mxu0 0.0
  %5656 = vmatpush1.msra.mxu0 %v5516
  %5657 = vmatprep.subr.mxu0 0.0
  %5658 = vmatpush2.msra.mxu0 %v5547
  %5659 = vmatprep.subr.mxu0 0.0
  %5660 = vmatpush2.msra.mxu0 %v5546
  %5661 = vmatprep.subr.mxu0 0.0
  %5662 = vmatpush2.msra.mxu0 %v5545
  %5663 = vmatprep.subr.mxu0 0.0
  %5664 = vmatpush2.msra.mxu0 %v5544
  %5665 = vmatprep.subr.mxu0 0.0
  %5666 = vmatpush2.msra.mxu0 %v5543
  %5667 = vmatprep.subr.mxu0 0.0
  %5668 = vmatpush2.msra.mxu0 %v5542
  %5669 = vmatprep.subr.mxu0 0.0
  %5670 = vmatpush2.msra.mxu0 %v5541
  %5671 = vmatprep.subr.mxu0 0.0
  %5672 = vmatpush2.msra.mxu0 %v5540
  %5673 = vmatprep.subr.mxu0 0.0
  %5674 = vmatpush2.msra.mxu0 %v5539
  %5675 = vmatprep.subr.mxu0 0.0
  %5676 = vmatpush2.msra.mxu0 %v5538
  %5677 = vmatprep.subr.mxu0 0.0
  %5678 = vmatpush2.msra.mxu0 %v5537
  %5679 = vmatprep.subr.mxu0 0.0
  %5680 = vmatpush2.msra.mxu0 %v5536
  %5681 = vmatprep.subr.mxu0 0.0
  %5682 = vmatpush2.msra.mxu0 %v5535
  %5683 = vmatprep.subr.mxu0 0.0
  %5684 = vmatpush2.msra.mxu0 %v5534
  %5685 = vmatprep.subr.mxu0 0.0
  %5686 = vmatpush2.msra.mxu0 %v5533
  %5687 = vmatprep.subr.mxu0 0.0
  %5688 = vmatpush2.msra.mxu0 %v5532
  %5689 = vmatprep.mubr.f32.mxu0 %v5483
  %5690 = vmatmul.mubr.f32.gmra.mxu0 %v5482
  %v5691 = vpop.f32.mrf.mxu0
  %v5692 = vadd.f32 %v5622, %v5691
  %v5693 = vpop.f32.mrf.mxu0
  %5694 = vdwg.mxu0
  %v5695 = vmax.f32 %v5692, 0.0
  %v5696 = vld [vmem:[%s5] sm:$0xff]
  %v5697 = vld [vmem:[%s5 + $0x8] sm:$0xff]
  %v5698 = vld [vmem:[%s5 + $0x10] sm:$0xff]
  %v5699 = vld [vmem:[%s5 + $0x18] sm:$0xff]
  %v5700 = vld [vmem:[%s5 + $0x20] sm:$0xff]
  %v5701 = vld [vmem:[%s5 + $0x28] sm:$0xff]
  %v5702 = vld [vmem:[%s5 + $0x30] sm:$0xff]
  %v5703 = vld [vmem:[%s5 + $0x38] sm:$0xff]
  %v5704 = vld [vmem:[%s5 + $0x40] sm:$0xff]
  %v5705 = vld [vmem:[%s5 + $0x48] sm:$0xff]
  %v5706 = vld [vmem:[%s5 + $0x50] sm:$0xff]
  %v5707 = vld [vmem:[%s5 + $0x58] sm:$0xff]
  %v5708 = vld [vmem:[%s5 + $0x60] sm:$0xff]
  %v5709 = vld [vmem:[%s5 + $0x68] sm:$0xff]
  %v5710 = vld [vmem:[%s5 + $0x70] sm:$0xff]
  %v5711 = vld [vmem:[%s5 + $0x78] sm:$0xff]
  %v5712 = vld [vmem:[%s6] sm:$0x1]
  %v5714 = vlaneseq
  %v5715 = vshrl.u32 %v5714, 7
  %v5716 = vsub.s32 0, %v5715
  %v5717 = vrot.slane %v5712, %v5716
  %5719 = vmatprep.subr.mxu0 0.0
  %5720 = vmatpush1.msra.mxu0 %v5711
  %5721 = vmatprep.subr.mxu0 0.0
  %5722 = vmatpush1.msra.mxu0 %v5710
  %5723 = vmatprep.subr.mxu0 0.0
  %5724 = vmatpush1.msra.mxu0 %v5709
  %5725 = vmatprep.subr.mxu0 0.0
  %5726 = vmatpush1.msra.mxu0 %v5708
  %5727 = vmatprep.subr.mxu0 0.0
  %5728 = vmatpush1.msra.mxu0 %v5707
  %5729 = vmatprep.subr.mxu0 0.0
  %5730 = vmatpush1.msra.mxu0 %v5706
  %5731 = vmatprep.subr.mxu0 0.0
  %5732 = vmatpush1.msra.mxu0 %v5705
  %5733 = vmatprep.subr.mxu0 0.0
  %5734 = vmatpush1.msra.mxu0 %v5704
  %5735 = vmatprep.subr.mxu0 0.0
  %5736 = vmatpush1.msra.mxu0 %v5703
  %5737 = vmatprep.subr.mxu0 0.0
  %5738 = vmatpush1.msra.mxu0 %v5702
  %5739 = vmatprep.subr.mxu0 0.0
  %5740 = vmatpush1.msra.mxu0 %v5701
  %5741 = vmatprep.subr.mxu0 0.0
  %5742 = vmatpush1.msra.mxu0 %v5700
  %5743 = vmatprep.subr.mxu0 0.0
  %5744 = vmatpush1.msra.mxu0 %v5699
  %5745 = vmatprep.subr.mxu0 0.0
  %5746 = vmatpush1.msra.mxu0 %v5698
  %5747 = vmatprep.subr.mxu0 0.0
  %5748 = vmatpush1.msra.mxu0 %v5697
  %5749 = vmatprep.subr.mxu0 0.0
  %5750 = vmatpush1.msra.mxu0 %v5696
  %5751 = vmatprep.subr.mxu0 0.0
  %5752 = vmatpush2.msra.mxu0 0.0
  %5753 = vmatprep.subr.mxu0 0.0
  %5754 = vmatpush2.msra.mxu0 0.0
  %5755 = vmatprep.subr.mxu0 0.0
  %5756 = vmatpush2.msra.mxu0 0.0
  %5757 = vmatprep.subr.mxu0 0.0
  %5758 = vmatpush2.msra.mxu0 0.0
  %5759 = vmatprep.subr.mxu0 0.0
  %5760 = vmatpush2.msra.mxu0 0.0
  %5761 = vmatprep.subr.mxu0 0.0
  %5762 = vmatpush2.msra.mxu0 0.0
  %5763 = vmatprep.subr.mxu0 0.0
  %5764 = vmatpush2.msra.mxu0 0.0
  %5765 = vmatprep.subr.mxu0 0.0
  %5766 = vmatpush2.msra.mxu0 0.0
  %5767 = vmatprep.subr.mxu0 0.0
  %5768 = vmatpush2.msra.mxu0 0.0
  %5769 = vmatprep.subr.mxu0 0.0
  %5770 = vmatpush2.msra.mxu0 0.0
  %5771 = vmatprep.subr.mxu0 0.0
  %5772 = vmatpush2.msra.mxu0 0.0
  %5773 = vmatprep.subr.mxu0 0.0
  %5774 = vmatpush2.msra.mxu0 0.0
  %5775 = vmatprep.subr.mxu0 0.0
  %5776 = vmatpush2.msra.mxu0 0.0
  %5777 = vmatprep.subr.mxu0 0.0
  %5778 = vmatpush2.msra.mxu0 0.0
  %5779 = vmatprep.subr.mxu0 0.0
  %5780 = vmatpush2.msra.mxu0 0.0
  %5781 = vmatprep.subr.mxu0 0.0
  %5782 = vmatpush2.msra.mxu0 0.0
  %5783 = vmatprep.mubr.f32.mxu0 0.0
  %5784 = vmatmul.mubr.f32.gmra.mxu0 %v5695
  %v5785 = vpop.f32.mrf.mxu0
  %v5786 = vadd.f32 %v5717, %v5785
  %v5787 = vpop.f32.mrf.mxu0
  %5788 = vdwg.mxu0
  %v5789 = vmax.f32 %v5786, 0.0
  %v5790 = vld [vmem:[%s7] sm:$0xff]
  %v5791 = vld [vmem:[%s7 + $0x8] sm:$0xff]
  %v5792 = vld [vmem:[%s7 + $0x10] sm:$0xff]
  %v5793 = vld [vmem:[%s7 + $0x18] sm:$0xff]
  %v5794 = vld [vmem:[%s7 + $0x20] sm:$0xff]
  %v5795 = vld [vmem:[%s7 + $0x28] sm:$0xff]
  %v5796 = vld [vmem:[%s7 + $0x30] sm:$0xff]
  %v5797 = vld [vmem:[%s7 + $0x38] sm:$0xff]
  %v5798 = vld [vmem:[%s7 + $0x40] sm:$0xff]
  %v5799 = vld [vmem:[%s7 + $0x48] sm:$0xff]
  %v5800 = vld [vmem:[%s7 + $0x50] sm:$0xff]
  %v5801 = vld [vmem:[%s7 + $0x58] sm:$0xff]
  %v5802 = vld [vmem:[%s7 + $0x60] sm:$0xff]
  %v5803 = vld [vmem:[%s7 + $0x68] sm:$0xff]
  %v5804 = vld [vmem:[%s7 + $0x70] sm:$0xff]
  %v5805 = vld [vmem:[%s7 + $0x78] sm:$0xff]
  %v5806 = vld [vmem:[%s8] sm:$0x1]
  %v5808 = vlaneseq
  %v5809 = vshrl.u32 %v5808, 7
  %v5810 = vsub.s32 0, %v5809
  %v5811 = vrot.slane %v5806, %v5810
  %5813 = vmatprep.subr.mxu0 0.0
  %5814 = vmatpush1.msra.mxu0 %v5805
  %5815 = vmatprep.subr.mxu0 0.0
  %5816 = vmatpush1.msra.mxu0 %v5804
  %5817 = vmatprep.subr.mxu0 0.0
  %5818 = vmatpush1.msra.mxu0 %v5803
  %5819 = vmatprep.subr.mxu0 0.0
  %5820 = vmatpush1.msra.mxu0 %v5802
  %5821 = vmatprep.subr.mxu0 0.0
  %5822 = vmatpush1.msra.mxu0 %v5801
  %5823 = vmatprep.subr.mxu0 0.0
  %5824 = vmatpush1.msra.mxu0 %v5800
  %5825 = vmatprep.subr.mxu0 0.0
  %5826 = vmatpush1.msra.mxu0 %v5799
  %5827 = vmatprep.subr.mxu0 0.0
  %5828 = vmatpush1.msra.mxu0 %v5798
  %5829 = vmatprep.subr.mxu0 0.0
  %5830 = vmatpush1.msra.mxu0 %v5797
  %5831 = vmatprep.subr.mxu0 0.0
  %5832 = vmatpush1.msra.mxu0 %v5796
  %5833 = vmatprep.subr.mxu0 0.0
  %5834 = vmatpush1.msra.mxu0 %v5795
  %5835 = vmatprep.subr.mxu0 0.0
  %5836 = vmatpush1.msra.mxu0 %v5794
  %5837 = vmatprep.subr.mxu0 0.0
  %5838 = vmatpush1.msra.mxu0 %v5793
  %5839 = vmatprep.subr.mxu0 0.0
  %5840 = vmatpush1.msra.mxu0 %v5792
  %5841 = vmatprep.subr.mxu0 0.0
  %5842 = vmatpush1.msra.mxu0 %v5791
  %5843 = vmatprep.subr.mxu0 0.0
  %5844 = vmatpush1.msra.mxu0 %v5790
  %5845 = vmatprep.subr.mxu0 0.0
  %5846 = vmatpush2.msra.mxu0 0.0
  %5847 = vmatprep.subr.mxu0 0.0
  %5848 = vmatpush2.msra.mxu0 0.0
  %5849 = vmatprep.subr.mxu0 0.0
  %5850 = vmatpush2.msra.mxu0 0.0
  %5851 = vmatprep.subr.mxu0 0.0
  %5852 = vmatpush2.msra.mxu0 0.0
  %5853 = vmatprep.subr.mxu0 0.0
  %5854 = vmatpush2.msra.mxu0 0.0
  %5855 = vmatprep.subr.mxu0 0.0
  %5856 = vmatpush2.msra.mxu0 0.0
  %5857 = vmatprep.subr.mxu0 0.0
  %5858 = vmatpush2.msra.mxu0 0.0
  %5859 = vmatprep.subr.mxu0 0.0
  %5860 = vmatpush2.msra.mxu0 0.0
  %5861 = vmatprep.subr.mxu0 0.0
  %5862 = vmatpush2.msra.mxu0 0.0
  %5863 = vmatprep.subr.mxu0 0.0
  %5864 = vmatpush2.msra.mxu0 0.0
  %5865 = vmatprep.subr.mxu0 0.0
  %5866 = vmatpush2.msra.mxu0 0.0
  %5867 = vmatprep.subr.mxu0 0.0
  %5868 = vmatpush2.msra.mxu0 0.0
  %5869 = vmatprep.subr.mxu0 0.0
  %5870 = vmatpush2.msra.mxu0 0.0
  %5871 = vmatprep.subr.mxu0 0.0
  %5872 = vmatpush2.msra.mxu0 0.0
  %5873 = vmatprep.subr.mxu0 0.0
  %5874 = vmatpush2.msra.mxu0 0.0
  %5875 = vmatprep.subr.mxu0 0.0
  %5876 = vmatpush2.msra.mxu0 0.0
  %5877 = vmatprep.mubr.f32.mxu0 0.0
  %5878 = vmatmul.mubr.f32.gmra.mxu0 %v5789
  %v5879 = vpop.f32.mrf.mxu0
  %v5880 = vadd.f32 %v5811, %v5879
  %v5881 = vpop.f32.mrf.mxu0
  %5882 = vdwg.mxu0
  %5883 = vst [vmem:[%s9] sm:$0xff] %v5880
  // Predicated region
  $region38: #{net_forward.3} parent=0 // pred_check
    _
  $region39: #{net_forward.3} parent=0 // pred_check_branch
    %5885 = sbr.rel (0) target = $region41
  $region40: #{net_forward.3} parent=0 // pred_region
    _
  $region41: #{net_forward.3} parent=0 // pred_fallthru
    _
  // Predicated region
  $region42: #{net_forward.3} parent=0 // pred_check
    _
  $region43: #{net_forward.3} parent=0 // pred_check_branch
    %5887 = sbr.rel (0) target = $region45
  $region44: #{net_forward.3} parent=0 // pred_region
    _
  $region45: #{net_forward.3} parent=0 // pred_fallthru
    _

</llo_original>
